<compile_context>
chip_gen: v5e
topology: v5e:2x2
jax: 0.10.0
libtpu: 0.0.40
codegen_flags: <defaults>
</compile_context>

<pallas_src>
import functools

import jax
import jax.numpy as jnp
from jax.experimental import pallas as pl
from jax.experimental.pallas import tpu as pltpu


CPAD = 128   # lane width: every intermediate activation carries channels padded to 128
EPS = 1e-5   # PyTorch BatchNorm2d default


# ----------------------------- Pallas kernels --------------------------------
# bf16 operands feed the MXU (f32 accumulation); bias / residual / ReLU epilogue
# stays in f32 on the VPU (v5e has no bf16 VPU datapath).

def _mm_bias_kernel(x_ref, w_ref, b_ref, o_ref, *, relu):
    acc = jnp.dot(x_ref[...], w_ref[...], preferred_element_type=jnp.float32)
    y = acc + b_ref[...]
    if relu:
        y = jnp.maximum(y, 0.0)
    o_ref[...] = y


def _mm_bias_res_kernel(x_ref, w_ref, b_ref, r_ref, o_ref, *, relu):
    acc = jnp.dot(x_ref[...], w_ref[...], preferred_element_type=jnp.float32)
    y = acc + b_ref[...] + r_ref[...]
    if relu:
        y = jnp.maximum(y, 0.0)
    o_ref[...] = y


# --------------------------- Pallas call wrapper ------------------------------

def _choose_tm(M):
    """Row-tile size: big tiles for HBM efficiency, but expose >= 2 grid steps
    whenever M allows so a 2-TensorCore chip (v7x) can split the 'parallel' axis."""
    if M >= 1024:
        return 512
    if M >= 16:
        return max(8, (M // 2) // 8 * 8)
    return M  # tiny layers (M == 8 here): single step


def matmul_bias(x_bf16, w_bf16, bias_f32, res=None, relu=False):
    """y = maybe_relu(x @ w + bias [+ res]); x/w bf16 on the MXU, f32 accumulate
    and f32 epilogue. BN scale is pre-folded into w; Cout is padded to a multiple
    of 128 so output stores are lane-dense."""
    M, K = x_bf16.shape
    Cout = w_bf16.shape[1]
    TM = _choose_tm(M)
    grid = (pl.cdiv(M, TM),)

    in_specs = [
        pl.BlockSpec((TM, K), lambda i: (i, 0)),
        pl.BlockSpec((K, Cout), lambda i: (0, 0)),
        pl.BlockSpec((1, Cout), lambda i: (0, 0)),
    ]
    args = [x_bf16, w_bf16, bias_f32]
    if res is not None:
        in_specs.append(pl.BlockSpec((TM, Cout), lambda i: (i, 0)))
        args.append(res.astype(jnp.float32))
        kernel = functools.partial(_mm_bias_res_kernel, relu=relu)
    else:
        kernel = functools.partial(_mm_bias_kernel, relu=relu)

    # TODO(synk): for real ResNet widths/inputs add K-tiling (extra 'arbitrary'
    # grid axis + f32 accumulator scratch) so full-K blocks don't outgrow v7x's
    # 64 MiB VMEM; at these shapes the double-buffered full-K blocks are < 3 MiB.
    return pl.pallas_call(
        kernel,
        grid=grid,
        in_specs=in_specs,
        out_specs=pl.BlockSpec((TM, Cout), lambda i: (i, 0)),
        out_shape=jax.ShapeDtypeStruct((M, Cout), jnp.float32),
        compiler_params=pltpu.CompilerParams(dimension_semantics=("parallel",)),
    )(*args)


# ------------------------------ model pieces ----------------------------------

def _im2col(x_nhwc, kh, kw, stride, pad):
    """(N,H,W,C) -> (N*Ho*Wo, kh*kw*C) patches in bf16 (tap order (i, j, c))."""
    N, H, W, C = x_nhwc.shape
    xp = jnp.pad(x_nhwc, ((0, 0), (pad, pad), (pad, pad), (0, 0)))
    Ho = (H + 2 * pad - kh) // stride + 1
    Wo = (W + 2 * pad - kw) // stride + 1
    cols = []
    for i in range(kh):
        for j in range(kw):
            cols.append(xp[:, i:i + (Ho - 1) * stride + 1:stride,
                           j:j + (Wo - 1) * stride + 1:stride, :])
    patches = jnp.concatenate(cols, axis=-1)
    # TODO(synk): patches are still materialized in HBM (kh*kw inflation, halved by
    # bf16); an in-kernel per-tap gather (extra grid axis + accumulator) would
    # remove this for larger shapes.
    return patches.reshape(N * Ho * Wo, kh * kw * C).astype(jnp.bfloat16), (N, Ho, Wo)


def conv_bn(x_nhwc, layer, kh, kw, stride, pad, relu, res=None):
    """Conv2d(bias=False) + BatchNorm2d(eval) [+ residual] [+ ReLU] as one fused
    Pallas matmul (BN scale already folded into layer['w'])."""
    patches, (N, Ho, Wo) = _im2col(x_nhwc, kh, kw, stride, pad)
    cout = layer["w"].shape[1]
    res_flat = None if res is None else res.reshape(N * Ho * Wo, cout)
    y = matmul_bias(patches, layer["w"], layer["b"], res=res_flat, relu=relu)
    return y.reshape(N, Ho, Wo, cout)


def maxpool2d(x_nhwc, k, stride, pad):
    """nn.MaxPool2d(k, stride, pad) as an XLA-fused max over window taps
    (a dedicated Pallas call here is pure launch/DMA overhead at these sizes)."""
    N, H, W, C = x_nhwc.shape
    xp = jnp.pad(x_nhwc, ((0, 0), (pad, pad), (pad, pad), (0, 0)),
                 constant_values=-jnp.inf)
    Ho = (H + 2 * pad - k) // stride + 1
    Wo = (W + 2 * pad - k) // stride + 1
    out = None
    for i in range(k):
        for j in range(k):
            tap = xp[:, i:i + (Ho - 1) * stride + 1:stride,
                     j:j + (Wo - 1) * stride + 1:stride, :]
            out = tap if out is None else jnp.maximum(out, tap)
    return out


def basic_block(x, p, stride):
    identity = x
    out = conv_bn(x, p["conv1"], 3, 3, stride=stride, pad=1, relu=True)
    if "down" in p:
        identity = conv_bn(x, p["down"], 1, 1, stride=stride, pad=0, relu=False)
    # residual add happens before the final ReLU (fused in the Pallas epilogue)
    out = conv_bn(out, p["conv2"], 3, 3, stride=1, pad=1, relu=True, res=identity)
    return out


def rnet_forward(x_nchw, prep):
    x = jnp.transpose(x_nchw, (0, 2, 3, 1)).astype(jnp.float32)  # NCHW -> NHWC
    x = conv_bn(x, prep["conv1"], 7, 7, stride=2, pad=3, relu=True)   # C padded to 128
    x = maxpool2d(x, 3, 2, 1)
    x = basic_block(x, prep["layer1"], stride=1)
    x = basic_block(x, prep["layer2"], stride=2)
    x = basic_block(x, prep["layer3"], stride=2)
    # x.view(-1, 512): drop channel padding (no-op: layer3 width == 128) and
    # flatten in PyTorch NCHW element order (c, h, w).
    x = x[..., :128]
    N, H, W, C = x.shape
    x = jnp.transpose(x, (0, 3, 1, 2)).reshape(-1, 512)
    # fc: (2, 512) @ (512, 10) + bias — folded into a plain XLA dot (a Pallas call
    # here would be a single mostly-masked vreg plus launch + HBM round-trip cost).
    return x @ prep["fc_w_t"] + prep["fc_b"]


# ------------------ one-time parameter preparation (outside jit) ---------------

def _fold_conv_bn(conv_w, bn, cin_pad, cout_pad=CPAD):
    """PyTorch conv (Cout,Cin,KH,KW) + BN running stats -> BN-folded, channel-padded
    bf16 weight matrix (KH*KW*cin_pad, cout_pad) and f32 bias (1, cout_pad)."""
    cout, cin, kh, kw = conv_w.shape
    scale = bn["gamma"] / jnp.sqrt(bn["var"] + EPS)
    bias = bn["beta"] - bn["mean"] * scale
    # (KH,KW,Cin,Cout) matches the im2col tap order (i, j, c); fold BN scale in.
    w = jnp.transpose(conv_w, (2, 3, 1, 0)) * scale
    w = jnp.pad(w, ((0, 0), (0, 0), (0, cin_pad - cin), (0, cout_pad - cout)))
    return dict(
        w=w.reshape(kh * kw * cin_pad, cout_pad).astype(jnp.bfloat16),
        b=jnp.pad(bias, (0, cout_pad - cout)).reshape(1, cout_pad).astype(jnp.float32),
    )


def prepare_params(params):
    """One-time prep: transpose/reshape conv weights, fold BN scale/bias into them,
    zero-pad channels to 128 lanes, cast weights to bf16."""
    def block(p):
        out = dict(conv1=_fold_conv_bn(p["conv1_w"], p["bn1"], CPAD),
                   conv2=_fold_conv_bn(p["conv2_w"], p["bn2"], CPAD))
        if "down_w" in p:
            out["down"] = _fold_conv_bn(p["down_w"], p["down_bn"], CPAD)
        return out

    return dict(
        conv1=_fold_conv_bn(params["conv1_w"], params["bn1"], cin_pad=3),
        layer1=block(params["layer1"]),
        layer2=block(params["layer2"]),
        layer3=block(params["layer3"]),
        fc_w_t=params["fc_w"].T.astype(jnp.float32),
        fc_b=params["fc_b"].astype(jnp.float32),
    )


# ------------------------- deterministic parameters ---------------------------

def make_bn_params(key, c):
    k1, k2, k3, k4 = jax.random.split(key, 4)
    return dict(
        gamma=1.0 + 0.1 * jax.random.normal(k1, (c,), jnp.float32),
        beta=0.1 * jax.random.normal(k2, (c,), jnp.float32),
        mean=0.1 * jax.random.normal(k3, (c,), jnp.float32),
        var=1.0 + 0.1 * jax.random.uniform(k4, (c,), jnp.float32),
    )


def make_block_params(key, cin, cout, downsample):
    ks = jax.random.split(key, 6)
    p = dict(
        conv1_w=0.1 * jax.random.normal(ks[0], (cout, cin, 3, 3), jnp.float32),
        bn1=make_bn_params(ks[1], cout),
        conv2_w=0.1 * jax.random.normal(ks[2], (cout, cout, 3, 3), jnp.float32),
        bn2=make_bn_params(ks[3], cout),
    )
    if downsample:
        p["down_w"] = 0.1 * jax.random.normal(ks[4], (cout, cin, 1, 1), jnp.float32)
        p["down_bn"] = make_bn_params(ks[5], cout)
    return p


def make_params(key):
    ks = jax.random.split(key, 7)
    return dict(
        conv1_w=0.1 * jax.random.normal(ks[0], (32, 3, 7, 7), jnp.float32),
        bn1=make_bn_params(ks[1], 32),
        layer1=make_block_params(ks[2], 32, 32, downsample=False),
        layer2=make_block_params(ks[3], 32, 64, downsample=True),
        layer3=make_block_params(ks[4], 64, 128, downsample=True),
        fc_w=0.1 * jax.random.normal(ks[5], (10, 512), jnp.float32),
        fc_b=0.1 * jax.random.normal(ks[6], (10,), jnp.float32),
    )


if __name__ == "__main__":
    key = jax.random.PRNGKey(0)
    pkey, xkey = jax.random.split(key)
    params = make_params(pkey)
    prep = prepare_params(params)  # one-time: BN fold, transpose, channel pad, bf16 cast
    # PyTorch NCHW input; 2x3x32x32 -> layer3 output 2x128x2x2 -> view(-1, 512)
    x = jax.random.normal(xkey, (2, 3, 32, 32), jnp.float32)
    out = jax.jit(rnet_forward)(x, prep)
    out = jax.block_until_ready(out)
    assert out.shape == (2, 10) and out.dtype == jnp.float32
    print("KERNEL_OK")
</pallas_src>

<mosaic_0001>
module attributes {stable_mosaic.version = 11 : i64} {
  func.func @_mm_bias_kernel(%arg0: i32, %arg1: memref<256x147xbf16, #tpu.memory_space<vmem>>, %arg2: memref<147x128xbf16, #tpu.memory_space<vmem>>, %arg3: memref<1x128xf32, #tpu.memory_space<vmem>>, %arg4: memref<256x128xf32, #tpu.memory_space<vmem>>) attributes {dimension_semantics = [#tpu.dimension_semantics<parallel>], iteration_bounds = array<i64: 2>, scalar_prefetch = 0 : i64, scratch_operands = 0 : i64, tpu.core_type = #tpu.core_type<tc>, window_params = [{transform_indices = @transform_0, window_bounds = array<i64: 256, 147>}, {pipeline_mode = #tpu.pipeline_mode<synchronous>, transform_indices = @transform_1, window_bounds = array<i64: 147, 128>}, {pipeline_mode = #tpu.pipeline_mode<synchronous>, transform_indices = @transform_2, window_bounds = array<i64: 1, 128>}, {transform_indices = @transform_3, window_bounds = array<i64: 256, 128>}]} {
    %c0 = arith.constant 0 : index
    %c0_0 = arith.constant 0 : index
    %0 = vector.load %arg1[%c0, %c0_0] : memref<256x147xbf16, #tpu.memory_space<vmem>>, vector<256x147xbf16>
    %c0_1 = arith.constant 0 : index
    %c0_2 = arith.constant 0 : index
    %1 = vector.load %arg2[%c0_1, %c0_2] : memref<147x128xbf16, #tpu.memory_space<vmem>>, vector<147x128xbf16>
    %cst = arith.constant dense<0.000000e+00> : vector<256x128xf32>
    %2 = tpu.matmul %0, %1, %cst {dimension_numbers = #tpu.dot_dimension_numbers<[1], [0], [0], [1], [0, 0, 1, 1], [], []>} : vector<256x147xbf16>, vector<147x128xbf16>, vector<256x128xf32> -> vector<256x128xf32>
    %c0_3 = arith.constant 0 : index
    %c0_4 = arith.constant 0 : index
    %3 = vector.load %arg3[%c0_3, %c0_4] : memref<1x128xf32, #tpu.memory_space<vmem>>, vector<1x128xf32>
    %4 = vector.broadcast %3 : vector<1x128xf32> to vector<256x128xf32>
    %5 = arith.addf %2, %4 : vector<256x128xf32>
    %cst_5 = arith.constant 0.000000e+00 : f32
    %6 = vector.broadcast %cst_5 : f32 to vector<256x128xf32>
    %7 = arith.maximumf %5, %6 : vector<256x128xf32>
    %c0_6 = arith.constant 0 : index
    %c0_7 = arith.constant 0 : index
    %8 = vector.load %arg4[%c0_6, %c0_7] : memref<256x128xf32, #tpu.memory_space<vmem>>, vector<256x128xf32>
    tpu.vector_store %arg4[%c0_6, %c0_7], %7 {strides = array<i32>} : memref<256x128xf32, #tpu.memory_space<vmem>>, vector<256x128xf32>,
    return
  }
  func.func @transform_0(%arg0: i32) -> (i32, i32) {
    %c0_i32 = arith.constant 0 : i32
    %c0_i32_0 = arith.constant 0 : i32
    return %arg0, %c0_i32 : i32, i32
  }
  func.func @transform_1(%arg0: i32) -> (i32, i32) {
    %c0_i32 = arith.constant 0 : i32
    %c0_i32_0 = arith.constant 0 : i32
    %c0_i32_1 = arith.constant 0 : i32
    return %c0_i32, %c0_i32_0 : i32, i32
  }
  func.func @transform_2(%arg0: i32) -> (i32, i32) {
    %c0_i32 = arith.constant 0 : i32
    %c0_i32_0 = arith.constant 0 : i32
    %c0_i32_1 = arith.constant 0 : i32
    return %c0_i32, %c0_i32_0 : i32, i32
  }
  func.func @transform_3(%arg0: i32) -> (i32, i32) {
    %c0_i32 = arith.constant 0 : i32
    %c0_i32_0 = arith.constant 0 : i32
    return %arg0, %c0_i32 : i32, i32
  }
}

module attributes {stable_mosaic.version = 11 : i64} {
  func.func @_mm_bias_kernel(%arg0: i32, %arg1: memref<64x1152xbf16, #tpu.memory_space<vmem>>, %arg2: memref<1152x128xbf16, #tpu.memory_space<vmem>>, %arg3: memref<1x128xf32, #tpu.memory_space<vmem>>, %arg4: memref<64x128xf32, #tpu.memory_space<vmem>>) attributes {dimension_semantics = [#tpu.dimension_semantics<parallel>], iteration_bounds = array<i64: 2>, scalar_prefetch = 0 : i64, scratch_operands = 0 : i64, tpu.core_type = #tpu.core_type<tc>, window_params = [{transform_indices = @transform_0, window_bounds = array<i64: 64, 1152>}, {pipeline_mode = #tpu.pipeline_mode<synchronous>, transform_indices = @transform_1, window_bounds = array<i64: 1152, 128>}, {pipeline_mode = #tpu.pipeline_mode<synchronous>, transform_indices = @transform_2, window_bounds = array<i64: 1, 128>}, {transform_indices = @transform_3, window_bounds = array<i64: 64, 128>}]} {
    %c0 = arith.constant 0 : index
    %c0_0 = arith.constant 0 : index
    %0 = vector.load %arg1[%c0, %c0_0] : memref<64x1152xbf16, #tpu.memory_space<vmem>>, vector<64x1152xbf16>
    %c0_1 = arith.constant 0 : index
    %c0_2 = arith.constant 0 : index
    %1 = vector.load %arg2[%c0_1, %c0_2] : memref<1152x128xbf16, #tpu.memory_space<vmem>>, vector<1152x128xbf16>
    %cst = arith.constant dense<0.000000e+00> : vector<64x128xf32>
    %2 = tpu.matmul %0, %1, %cst {dimension_numbers = #tpu.dot_dimension_numbers<[1], [0], [0], [1], [0, 0, 1, 1], [], []>} : vector<64x1152xbf16>, vector<1152x128xbf16>, vector<64x128xf32> -> vector<64x128xf32>
    %c0_3 = arith.constant 0 : index
    %c0_4 = arith.constant 0 : index
    %3 = vector.load %arg3[%c0_3, %c0_4] : memref<1x128xf32, #tpu.memory_space<vmem>>, vector<1x128xf32>
    %4 = vector.broadcast %3 : vector<1x128xf32> to vector<64x128xf32>
    %5 = arith.addf %2, %4 : vector<64x128xf32>
    %cst_5 = arith.constant 0.000000e+00 : f32
    %6 = vector.broadcast %cst_5 : f32 to vector<64x128xf32>
    %7 = arith.maximumf %5, %6 : vector<64x128xf32>
    %c0_6 = arith.constant 0 : index
    %c0_7 = arith.constant 0 : index
    %8 = vector.load %arg4[%c0_6, %c0_7] : memref<64x128xf32, #tpu.memory_space<vmem>>, vector<64x128xf32>
    tpu.vector_store %arg4[%c0_6, %c0_7], %7 {strides = array<i32>} : memref<64x128xf32, #tpu.memory_space<vmem>>, vector<64x128xf32>,
    return
  }
  func.func @transform_0(%arg0: i32) -> (i32, i32) {
    %c0_i32 = arith.constant 0 : i32
    %c0_i32_0 = arith.constant 0 : i32
    return %arg0, %c0_i32 : i32, i32
  }
  func.func @transform_1(%arg0: i32) -> (i32, i32) {
    %c0_i32 = arith.constant 0 : i32
    %c0_i32_0 = arith.constant 0 : i32
    %c0_i32_1 = arith.constant 0 : i32
    return %c0_i32, %c0_i32_0 : i32, i32
  }
  func.func @transform_2(%arg0: i32) -> (i32, i32) {
    %c0_i32 = arith.constant 0 : i32
    %c0_i32_0 = arith.constant 0 : i32
    %c0_i32_1 = arith.constant 0 : i32
    return %c0_i32, %c0_i32_0 : i32, i32
  }
  func.func @transform_3(%arg0: i32) -> (i32, i32) {
    %c0_i32 = arith.constant 0 : i32
    %c0_i32_0 = arith.constant 0 : i32
    return %arg0, %c0_i32 : i32, i32
  }
}

module attributes {stable_mosaic.version = 11 : i64} {
  func.func @_mm_bias_res_kernel(%arg0: i32, %arg1: memref<64x1152xbf16, #tpu.memory_space<vmem>>, %arg2: memref<1152x128xbf16, #tpu.memory_space<vmem>>, %arg3: memref<1x128xf32, #tpu.memory_space<vmem>>, %arg4: memref<64x128xf32, #tpu.memory_space<vmem>>, %arg5: memref<64x128xf32, #tpu.memory_space<vmem>>) attributes {dimension_semantics = [#tpu.dimension_semantics<parallel>], iteration_bounds = array<i64: 2>, scalar_prefetch = 0 : i64, scratch_operands = 0 : i64, tpu.core_type = #tpu.core_type<tc>, window_params = [{transform_indices = @transform_0, window_bounds = array<i64: 64, 1152>}, {pipeline_mode = #tpu.pipeline_mode<synchronous>, transform_indices = @transform_1, window_bounds = array<i64: 1152, 128>}, {pipeline_mode = #tpu.pipeline_mode<synchronous>, transform_indices = @transform_2, window_bounds = array<i64: 1, 128>}, {transform_indices = @transform_3, window_bounds = array<i64: 64, 128>}, {transform_indices = @transform_4, window_bounds = array<i64: 64, 128>}]} {
    %c0 = arith.constant 0 : index
    %c0_0 = arith.constant 0 : index
    %0 = vector.load %arg1[%c0, %c0_0] : memref<64x1152xbf16, #tpu.memory_space<vmem>>, vector<64x1152xbf16>
    %c0_1 = arith.constant 0 : index
    %c0_2 = arith.constant 0 : index
    %1 = vector.load %arg2[%c0_1, %c0_2] : memref<1152x128xbf16, #tpu.memory_space<vmem>>, vector<1152x128xbf16>
    %cst = arith.constant dense<0.000000e+00> : vector<64x128xf32>
    %2 = tpu.matmul %0, %1, %cst {dimension_numbers = #tpu.dot_dimension_numbers<[1], [0], [0], [1], [0, 0, 1, 1], [], []>} : vector<64x1152xbf16>, vector<1152x128xbf16>, vector<64x128xf32> -> vector<64x128xf32>
    %c0_3 = arith.constant 0 : index
    %c0_4 = arith.constant 0 : index
    %3 = vector.load %arg3[%c0_3, %c0_4] : memref<1x128xf32, #tpu.memory_space<vmem>>, vector<1x128xf32>
    %4 = vector.broadcast %3 : vector<1x128xf32> to vector<64x128xf32>
    %5 = arith.addf %2, %4 : vector<64x128xf32>
    %c0_5 = arith.constant 0 : index
    %c0_6 = arith.constant 0 : index
    %6 = vector.load %arg4[%c0_5, %c0_6] : memref<64x128xf32, #tpu.memory_space<vmem>>, vector<64x128xf32>
    %7 = arith.addf %5, %6 : vector<64x128xf32>
    %cst_7 = arith.constant 0.000000e+00 : f32
    %8 = vector.broadcast %cst_7 : f32 to vector<64x128xf32>
    %9 = arith.maximumf %7, %8 : vector<64x128xf32>
    %c0_8 = arith.constant 0 : index
    %c0_9 = arith.constant 0 : index
    %10 = vector.load %arg5[%c0_8, %c0_9] : memref<64x128xf32, #tpu.memory_space<vmem>>, vector<64x128xf32>
    tpu.vector_store %arg5[%c0_8, %c0_9], %9 {strides = array<i32>} : memref<64x128xf32, #tpu.memory_space<vmem>>, vector<64x128xf32>,
    return
  }
  func.func @transform_0(%arg0: i32) -> (i32, i32) {
    %c0_i32 = arith.constant 0 : i32
    %c0_i32_0 = arith.constant 0 : i32
    return %arg0, %c0_i32 : i32, i32
  }
  func.func @transform_1(%arg0: i32) -> (i32, i32) {
    %c0_i32 = arith.constant 0 : i32
    %c0_i32_0 = arith.constant 0 : i32
    %c0_i32_1 = arith.constant 0 : i32
    return %c0_i32, %c0_i32_0 : i32, i32
  }
  func.func @transform_2(%arg0: i32) -> (i32, i32) {
    %c0_i32 = arith.constant 0 : i32
    %c0_i32_0 = arith.constant 0 : i32
    %c0_i32_1 = arith.constant 0 : i32
    return %c0_i32, %c0_i32_0 : i32, i32
  }
  func.func @transform_3(%arg0: i32) -> (i32, i32) {
    %c0_i32 = arith.constant 0 : i32
    %c0_i32_0 = arith.constant 0 : i32
    return %arg0, %c0_i32 : i32, i32
  }
  func.func @transform_4(%arg0: i32) -> (i32, i32) {
    %c0_i32 = arith.constant 0 : i32
    %c0_i32_0 = arith.constant 0 : i32
    return %arg0, %c0_i32 : i32, i32
  }
}

module attributes {stable_mosaic.version = 11 : i64} {
  func.func @_mm_bias_kernel(%arg0: i32, %arg1: memref<16x128xbf16, #tpu.memory_space<vmem>>, %arg2: memref<128x128xbf16, #tpu.memory_space<vmem>>, %arg3: memref<1x128xf32, #tpu.memory_space<vmem>>, %arg4: memref<16x128xf32, #tpu.memory_space<vmem>>) attributes {dimension_semantics = [#tpu.dimension_semantics<parallel>], iteration_bounds = array<i64: 2>, scalar_prefetch = 0 : i64, scratch_operands = 0 : i64, tpu.core_type = #tpu.core_type<tc>, window_params = [{transform_indices = @transform_0, window_bounds = array<i64: 16, 128>}, {pipeline_mode = #tpu.pipeline_mode<synchronous>, transform_indices = @transform_1, window_bounds = array<i64: 128, 128>}, {pipeline_mode = #tpu.pipeline_mode<synchronous>, transform_indices = @transform_2, window_bounds = array<i64: 1, 128>}, {transform_indices = @transform_3, window_bounds = array<i64: 16, 128>}]} {
    %c0 = arith.constant 0 : index
    %c0_0 = arith.constant 0 : index
    %0 = vector.load %arg1[%c0, %c0_0] : memref<16x128xbf16, #tpu.memory_space<vmem>>, vector<16x128xbf16>
    %c0_1 = arith.constant 0 : index
    %c0_2 = arith.constant 0 : index
    %1 = vector.load %arg2[%c0_1, %c0_2] : memref<128x128xbf16, #tpu.memory_space<vmem>>, vector<128x128xbf16>
    %cst = arith.constant dense<0.000000e+00> : vector<16x128xf32>
    %2 = tpu.matmul %0, %1, %cst {dimension_numbers = #tpu.dot_dimension_numbers<[1], [0], [0], [1], [0, 0, 1, 1], [], []>} : vector<16x128xbf16>, vector<128x128xbf16>, vector<16x128xf32> -> vector<16x128xf32>
    %c0_3 = arith.constant 0 : index
    %c0_4 = arith.constant 0 : index
    %3 = vector.load %arg3[%c0_3, %c0_4] : memref<1x128xf32, #tpu.memory_space<vmem>>, vector<1x128xf32>
    %4 = vector.broadcast %3 : vector<1x128xf32> to vector<16x128xf32>
    %5 = arith.addf %2, %4 : vector<16x128xf32>
    %c0_5 = arith.constant 0 : index
    %c0_6 = arith.constant 0 : index
    %6 = vector.load %arg4[%c0_5, %c0_6] : memref<16x128xf32, #tpu.memory_space<vmem>>, vector<16x128xf32>
    tpu.vector_store %arg4[%c0_5, %c0_6], %5 {strides = array<i32>} : memref<16x128xf32, #tpu.memory_space<vmem>>, vector<16x128xf32>,
    return
  }
  func.func @transform_0(%arg0: i32) -> (i32, i32) {
    %c0_i32 = arith.constant 0 : i32
    %c0_i32_0 = arith.constant 0 : i32
    return %arg0, %c0_i32 : i32, i32
  }
  func.func @transform_1(%arg0: i32) -> (i32, i32) {
    %c0_i32 = arith.constant 0 : i32
    %c0_i32_0 = arith.constant 0 : i32
    %c0_i32_1 = arith.constant 0 : i32
    return %c0_i32, %c0_i32_0 : i32, i32
  }
  func.func @transform_2(%arg0: i32) -> (i32, i32) {
    %c0_i32 = arith.constant 0 : i32
    %c0_i32_0 = arith.constant 0 : i32
    %c0_i32_1 = arith.constant 0 : i32
    return %c0_i32, %c0_i32_0 : i32, i32
  }
  func.func @transform_3(%arg0: i32) -> (i32, i32) {
    %c0_i32 = arith.constant 0 : i32
    %c0_i32_0 = arith.constant 0 : i32
    return %arg0, %c0_i32 : i32, i32
  }
}

module attributes {stable_mosaic.version = 11 : i64} {
  func.func @_mm_bias_kernel(%arg0: i32, %arg1: memref<16x1152xbf16, #tpu.memory_space<vmem>>, %arg2: memref<1152x128xbf16, #tpu.memory_space<vmem>>, %arg3: memref<1x128xf32, #tpu.memory_space<vmem>>, %arg4: memref<16x128xf32, #tpu.memory_space<vmem>>) attributes {dimension_semantics = [#tpu.dimension_semantics<parallel>], iteration_bounds = array<i64: 2>, scalar_prefetch = 0 : i64, scratch_operands = 0 : i64, tpu.core_type = #tpu.core_type<tc>, window_params = [{transform_indices = @transform_0, window_bounds = array<i64: 16, 1152>}, {pipeline_mode = #tpu.pipeline_mode<synchronous>, transform_indices = @transform_1, window_bounds = array<i64: 1152, 128>}, {pipeline_mode = #tpu.pipeline_mode<synchronous>, transform_indices = @transform_2, window_bounds = array<i64: 1, 128>}, {transform_indices = @transform_3, window_bounds = array<i64: 16, 128>}]} {
    %c0 = arith.constant 0 : index
    %c0_0 = arith.constant 0 : index
    %0 = vector.load %arg1[%c0, %c0_0] : memref<16x1152xbf16, #tpu.memory_space<vmem>>, vector<16x1152xbf16>
    %c0_1 = arith.constant 0 : index
    %c0_2 = arith.constant 0 : index
    %1 = vector.load %arg2[%c0_1, %c0_2] : memref<1152x128xbf16, #tpu.memory_space<vmem>>, vector<1152x128xbf16>
    %cst = arith.constant dense<0.000000e+00> : vector<16x128xf32>
    %2 = tpu.matmul %0, %1, %cst {dimension_numbers = #tpu.dot_dimension_numbers<[1], [0], [0], [1], [0, 0, 1, 1], [], []>} : vector<16x1152xbf16>, vector<1152x128xbf16>, vector<16x128xf32> -> vector<16x128xf32>
    %c0_3 = arith.constant 0 : index
    %c0_4 = arith.constant 0 : index
    %3 = vector.load %arg3[%c0_3, %c0_4] : memref<1x128xf32, #tpu.memory_space<vmem>>, vector<1x128xf32>
    %4 = vector.broadcast %3 : vector<1x128xf32> to vector<16x128xf32>
    %5 = arith.addf %2, %4 : vector<16x128xf32>
    %cst_5 = arith.constant 0.000000e+00 : f32
    %6 = vector.broadcast %cst_5 : f32 to vector<16x128xf32>
    %7 = arith.maximumf %5, %6 : vector<16x128xf32>
    %c0_6 = arith.constant 0 : index
    %c0_7 = arith.constant 0 : index
    %8 = vector.load %arg4[%c0_6, %c0_7] : memref<16x128xf32, #tpu.memory_space<vmem>>, vector<16x128xf32>
    tpu.vector_store %arg4[%c0_6, %c0_7], %7 {strides = array<i32>} : memref<16x128xf32, #tpu.memory_space<vmem>>, vector<16x128xf32>,
    return
  }
  func.func @transform_0(%arg0: i32) -> (i32, i32) {
    %c0_i32 = arith.constant 0 : i32
    %c0_i32_0 = arith.constant 0 : i32
    return %arg0, %c0_i32 : i32, i32
  }
  func.func @transform_1(%arg0: i32) -> (i32, i32) {
    %c0_i32 = arith.constant 0 : i32
    %c0_i32_0 = arith.constant 0 : i32
    %c0_i32_1 = arith.constant 0 : i32
    return %c0_i32, %c0_i32_0 : i32, i32
  }
  func.func @transform_2(%arg0: i32) -> (i32, i32) {
    %c0_i32 = arith.constant 0 : i32
    %c0_i32_0 = arith.constant 0 : i32
    %c0_i32_1 = arith.constant 0 : i32
    return %c0_i32, %c0_i32_0 : i32, i32
  }
  func.func @transform_3(%arg0: i32) -> (i32, i32) {
    %c0_i32 = arith.constant 0 : i32
    %c0_i32_0 = arith.constant 0 : i32
    return %arg0, %c0_i32 : i32, i32
  }
}

module attributes {stable_mosaic.version = 11 : i64} {
  func.func @_mm_bias_res_kernel(%arg0: i32, %arg1: memref<16x1152xbf16, #tpu.memory_space<vmem>>, %arg2: memref<1152x128xbf16, #tpu.memory_space<vmem>>, %arg3: memref<1x128xf32, #tpu.memory_space<vmem>>, %arg4: memref<16x128xf32, #tpu.memory_space<vmem>>, %arg5: memref<16x128xf32, #tpu.memory_space<vmem>>) attributes {dimension_semantics = [#tpu.dimension_semantics<parallel>], iteration_bounds = array<i64: 2>, scalar_prefetch = 0 : i64, scratch_operands = 0 : i64, tpu.core_type = #tpu.core_type<tc>, window_params = [{transform_indices = @transform_0, window_bounds = array<i64: 16, 1152>}, {pipeline_mode = #tpu.pipeline_mode<synchronous>, transform_indices = @transform_1, window_bounds = array<i64: 1152, 128>}, {pipeline_mode = #tpu.pipeline_mode<synchronous>, transform_indices = @transform_2, window_bounds = array<i64: 1, 128>}, {transform_indices = @transform_3, window_bounds = array<i64: 16, 128>}, {transform_indices = @transform_4, window_bounds = array<i64: 16, 128>}]} {
    %c0 = arith.constant 0 : index
    %c0_0 = arith.constant 0 : index
    %0 = vector.load %arg1[%c0, %c0_0] : memref<16x1152xbf16, #tpu.memory_space<vmem>>, vector<16x1152xbf16>
    %c0_1 = arith.constant 0 : index
    %c0_2 = arith.constant 0 : index
    %1 = vector.load %arg2[%c0_1, %c0_2] : memref<1152x128xbf16, #tpu.memory_space<vmem>>, vector<1152x128xbf16>
    %cst = arith.constant dense<0.000000e+00> : vector<16x128xf32>
    %2 = tpu.matmul %0, %1, %cst {dimension_numbers = #tpu.dot_dimension_numbers<[1], [0], [0], [1], [0, 0, 1, 1], [], []>} : vector<16x1152xbf16>, vector<1152x128xbf16>, vector<16x128xf32> -> vector<16x128xf32>
    %c0_3 = arith.constant 0 : index
    %c0_4 = arith.constant 0 : index
    %3 = vector.load %arg3[%c0_3, %c0_4] : memref<1x128xf32, #tpu.memory_space<vmem>>, vector<1x128xf32>
    %4 = vector.broadcast %3 : vector<1x128xf32> to vector<16x128xf32>
    %5 = arith.addf %2, %4 : vector<16x128xf32>
    %c0_5 = arith.constant 0 : index
    %c0_6 = arith.constant 0 : index
    %6 = vector.load %arg4[%c0_5, %c0_6] : memref<16x128xf32, #tpu.memory_space<vmem>>, vector<16x128xf32>
    %7 = arith.addf %5, %6 : vector<16x128xf32>
    %cst_7 = arith.constant 0.000000e+00 : f32
    %8 = vector.broadcast %cst_7 : f32 to vector<16x128xf32>
    %9 = arith.maximumf %7, %8 : vector<16x128xf32>
    %c0_8 = arith.constant 0 : index
    %c0_9 = arith.constant 0 : index
    %10 = vector.load %arg5[%c0_8, %c0_9] : memref<16x128xf32, #tpu.memory_space<vmem>>, vector<16x128xf32>
    tpu.vector_store %arg5[%c0_8, %c0_9], %9 {strides = array<i32>} : memref<16x128xf32, #tpu.memory_space<vmem>>, vector<16x128xf32>,
    return
  }
  func.func @transform_0(%arg0: i32) -> (i32, i32) {
    %c0_i32 = arith.constant 0 : i32
    %c0_i32_0 = arith.constant 0 : i32
    return %arg0, %c0_i32 : i32, i32
  }
  func.func @transform_1(%arg0: i32) -> (i32, i32) {
    %c0_i32 = arith.constant 0 : i32
    %c0_i32_0 = arith.constant 0 : i32
    %c0_i32_1 = arith.constant 0 : i32
    return %c0_i32, %c0_i32_0 : i32, i32
  }
  func.func @transform_2(%arg0: i32) -> (i32, i32) {
    %c0_i32 = arith.constant 0 : i32
    %c0_i32_0 = arith.constant 0 : i32
    %c0_i32_1 = arith.constant 0 : i32
    return %c0_i32, %c0_i32_0 : i32, i32
  }
  func.func @transform_3(%arg0: i32) -> (i32, i32) {
    %c0_i32 = arith.constant 0 : i32
    %c0_i32_0 = arith.constant 0 : i32
    return %arg0, %c0_i32 : i32, i32
  }
  func.func @transform_4(%arg0: i32) -> (i32, i32) {
    %c0_i32 = arith.constant 0 : i32
    %c0_i32_0 = arith.constant 0 : i32
    return %arg0, %c0_i32 : i32, i32
  }
}

module attributes {stable_mosaic.version = 11 : i64} {
  func.func @_mm_bias_kernel(%arg0: i32, %arg1: memref<8x128xbf16, #tpu.memory_space<vmem>>, %arg2: memref<128x128xbf16, #tpu.memory_space<vmem>>, %arg3: memref<1x128xf32, #tpu.memory_space<vmem>>, %arg4: memref<8x128xf32, #tpu.memory_space<vmem>>) attributes {dimension_semantics = [#tpu.dimension_semantics<parallel>], iteration_bounds = array<i64: 1>, scalar_prefetch = 0 : i64, scratch_operands = 0 : i64, tpu.core_type = #tpu.core_type<tc>, window_params = [{transform_indices = @transform_0, window_bounds = array<i64: 8, 128>}, {pipeline_mode = #tpu.pipeline_mode<synchronous>, transform_indices = @transform_1, window_bounds = array<i64: 128, 128>}, {pipeline_mode = #tpu.pipeline_mode<synchronous>, transform_indices = @transform_2, window_bounds = array<i64: 1, 128>}, {transform_indices = @transform_3, window_bounds = array<i64: 8, 128>}]} {
    %c0 = arith.constant 0 : index
    %c0_0 = arith.constant 0 : index
    %0 = vector.load %arg1[%c0, %c0_0] : memref<8x128xbf16, #tpu.memory_space<vmem>>, vector<8x128xbf16>
    %c0_1 = arith.constant 0 : index
    %c0_2 = arith.constant 0 : index
    %1 = vector.load %arg2[%c0_1, %c0_2] : memref<128x128xbf16, #tpu.memory_space<vmem>>, vector<128x128xbf16>
    %cst = arith.constant dense<0.000000e+00> : vector<8x128xf32>
    %2 = tpu.matmul %0, %1, %cst {dimension_numbers = #tpu.dot_dimension_numbers<[1], [0], [0], [1], [0, 0, 1, 1], [], []>} : vector<8x128xbf16>, vector<128x128xbf16>, vector<8x128xf32> -> vector<8x128xf32>
    %c0_3 = arith.constant 0 : index
    %c0_4 = arith.constant 0 : index
    %3 = vector.load %arg3[%c0_3, %c0_4] : memref<1x128xf32, #tpu.memory_space<vmem>>, vector<1x128xf32>
    %4 = vector.broadcast %3 : vector<1x128xf32> to vector<8x128xf32>
    %5 = arith.addf %2, %4 : vector<8x128xf32>
    %c0_5 = arith.constant 0 : index
    %c0_6 = arith.constant 0 : index
    %6 = vector.load %arg4[%c0_5, %c0_6] : memref<8x128xf32, #tpu.memory_space<vmem>>, vector<8x128xf32>
    tpu.vector_store %arg4[%c0_5, %c0_6], %5 {strides = array<i32>} : memref<8x128xf32, #tpu.memory_space<vmem>>, vector<8x128xf32>,
    return
  }
  func.func @transform_0(%arg0: i32) -> (i32, i32) {
    %c0_i32 = arith.constant 0 : i32
    %c0_i32_0 = arith.constant 0 : i32
    return %arg0, %c0_i32 : i32, i32
  }
  func.func @transform_1(%arg0: i32) -> (i32, i32) {
    %c0_i32 = arith.constant 0 : i32
    %c0_i32_0 = arith.constant 0 : i32
    %c0_i32_1 = arith.constant 0 : i32
    return %c0_i32, %c0_i32_0 : i32, i32
  }
  func.func @transform_2(%arg0: i32) -> (i32, i32) {
    %c0_i32 = arith.constant 0 : i32
    %c0_i32_0 = arith.constant 0 : i32
    %c0_i32_1 = arith.constant 0 : i32
    return %c0_i32, %c0_i32_0 : i32, i32
  }
  func.func @transform_3(%arg0: i32) -> (i32, i32) {
    %c0_i32 = arith.constant 0 : i32
    %c0_i32_0 = arith.constant 0 : i32
    return %arg0, %c0_i32 : i32, i32
  }
}

module attributes {stable_mosaic.version = 11 : i64} {
  func.func @_mm_bias_kernel(%arg0: i32, %arg1: memref<8x1152xbf16, #tpu.memory_space<vmem>>, %arg2: memref<1152x128xbf16, #tpu.memory_space<vmem>>, %arg3: memref<1x128xf32, #tpu.memory_space<vmem>>, %arg4: memref<8x128xf32, #tpu.memory_space<vmem>>) attributes {dimension_semantics = [#tpu.dimension_semantics<parallel>], iteration_bounds = array<i64: 1>, scalar_prefetch = 0 : i64, scratch_operands = 0 : i64, tpu.core_type = #tpu.core_type<tc>, window_params = [{transform_indices = @transform_0, window_bounds = array<i64: 8, 1152>}, {pipeline_mode = #tpu.pipeline_mode<synchronous>, transform_indices = @transform_1, window_bounds = array<i64: 1152, 128>}, {pipeline_mode = #tpu.pipeline_mode<synchronous>, transform_indices = @transform_2, window_bounds = array<i64: 1, 128>}, {transform_indices = @transform_3, window_bounds = array<i64: 8, 128>}]} {
    %c0 = arith.constant 0 : index
    %c0_0 = arith.constant 0 : index
    %0 = vector.load %arg1[%c0, %c0_0] : memref<8x1152xbf16, #tpu.memory_space<vmem>>, vector<8x1152xbf16>
    %c0_1 = arith.constant 0 : index
    %c0_2 = arith.constant 0 : index
    %1 = vector.load %arg2[%c0_1, %c0_2] : memref<1152x128xbf16, #tpu.memory_space<vmem>>, vector<1152x128xbf16>
    %cst = arith.constant dense<0.000000e+00> : vector<8x128xf32>
    %2 = tpu.matmul %0, %1, %cst {dimension_numbers = #tpu.dot_dimension_numbers<[1], [0], [0], [1], [0, 0, 1, 1], [], []>} : vector<8x1152xbf16>, vector<1152x128xbf16>, vector<8x128xf32> -> vector<8x128xf32>
    %c0_3 = arith.constant 0 : index
    %c0_4 = arith.constant 0 : index
    %3 = vector.load %arg3[%c0_3, %c0_4] : memref<1x128xf32, #tpu.memory_space<vmem>>, vector<1x128xf32>
    %4 = vector.broadcast %3 : vector<1x128xf32> to vector<8x128xf32>
    %5 = arith.addf %2, %4 : vector<8x128xf32>
    %cst_5 = arith.constant 0.000000e+00 : f32
    %6 = vector.broadcast %cst_5 : f32 to vector<8x128xf32>
    %7 = arith.maximumf %5, %6 : vector<8x128xf32>
    %c0_6 = arith.constant 0 : index
    %c0_7 = arith.constant 0 : index
    %8 = vector.load %arg4[%c0_6, %c0_7] : memref<8x128xf32, #tpu.memory_space<vmem>>, vector<8x128xf32>
    tpu.vector_store %arg4[%c0_6, %c0_7], %7 {strides = array<i32>} : memref<8x128xf32, #tpu.memory_space<vmem>>, vector<8x128xf32>,
    return
  }
  func.func @transform_0(%arg0: i32) -> (i32, i32) {
    %c0_i32 = arith.constant 0 : i32
    %c0_i32_0 = arith.constant 0 : i32
    return %arg0, %c0_i32 : i32, i32
  }
  func.func @transform_1(%arg0: i32) -> (i32, i32) {
    %c0_i32 = arith.constant 0 : i32
    %c0_i32_0 = arith.constant 0 : i32
    %c0_i32_1 = arith.constant 0 : i32
    return %c0_i32, %c0_i32_0 : i32, i32
  }
  func.func @transform_2(%arg0: i32) -> (i32, i32) {
    %c0_i32 = arith.constant 0 : i32
    %c0_i32_0 = arith.constant 0 : i32
    %c0_i32_1 = arith.constant 0 : i32
    return %c0_i32, %c0_i32_0 : i32, i32
  }
  func.func @transform_3(%arg0: i32) -> (i32, i32) {
    %c0_i32 = arith.constant 0 : i32
    %c0_i32_0 = arith.constant 0 : i32
    return %arg0, %c0_i32 : i32, i32
  }
}

module attributes {stable_mosaic.version = 11 : i64} {
  func.func @_mm_bias_res_kernel(%arg0: i32, %arg1: memref<8x1152xbf16, #tpu.memory_space<vmem>>, %arg2: memref<1152x128xbf16, #tpu.memory_space<vmem>>, %arg3: memref<1x128xf32, #tpu.memory_space<vmem>>, %arg4: memref<8x128xf32, #tpu.memory_space<vmem>>, %arg5: memref<8x128xf32, #tpu.memory_space<vmem>>) attributes {dimension_semantics = [#tpu.dimension_semantics<parallel>], iteration_bounds = array<i64: 1>, scalar_prefetch = 0 : i64, scratch_operands = 0 : i64, tpu.core_type = #tpu.core_type<tc>, window_params = [{transform_indices = @transform_0, window_bounds = array<i64: 8, 1152>}, {pipeline_mode = #tpu.pipeline_mode<synchronous>, transform_indices = @transform_1, window_bounds = array<i64: 1152, 128>}, {pipeline_mode = #tpu.pipeline_mode<synchronous>, transform_indices = @transform_2, window_bounds = array<i64: 1, 128>}, {transform_indices = @transform_3, window_bounds = array<i64: 8, 128>}, {transform_indices = @transform_4, window_bounds = array<i64: 8, 128>}]} {
    %c0 = arith.constant 0 : index
    %c0_0 = arith.constant 0 : index
    %0 = vector.load %arg1[%c0, %c0_0] : memref<8x1152xbf16, #tpu.memory_space<vmem>>, vector<8x1152xbf16>
    %c0_1 = arith.constant 0 : index
    %c0_2 = arith.constant 0 : index
    %1 = vector.load %arg2[%c0_1, %c0_2] : memref<1152x128xbf16, #tpu.memory_space<vmem>>, vector<1152x128xbf16>
    %cst = arith.constant dense<0.000000e+00> : vector<8x128xf32>
    %2 = tpu.matmul %0, %1, %cst {dimension_numbers = #tpu.dot_dimension_numbers<[1], [0], [0], [1], [0, 0, 1, 1], [], []>} : vector<8x1152xbf16>, vector<1152x128xbf16>, vector<8x128xf32> -> vector<8x128xf32>
    %c0_3 = arith.constant 0 : index
    %c0_4 = arith.constant 0 : index
    %3 = vector.load %arg3[%c0_3, %c0_4] : memref<1x128xf32, #tpu.memory_space<vmem>>, vector<1x128xf32>
    %4 = vector.broadcast %3 : vector<1x128xf32> to vector<8x128xf32>
    %5 = arith.addf %2, %4 : vector<8x128xf32>
    %c0_5 = arith.constant 0 : index
    %c0_6 = arith.constant 0 : index
    %6 = vector.load %arg4[%c0_5, %c0_6] : memref<8x128xf32, #tpu.memory_space<vmem>>, vector<8x128xf32>
    %7 = arith.addf %5, %6 : vector<8x128xf32>
    %cst_7 = arith.constant 0.000000e+00 : f32
    %8 = vector.broadcast %cst_7 : f32 to vector<8x128xf32>
    %9 = arith.maximumf %7, %8 : vector<8x128xf32>
    %c0_8 = arith.constant 0 : index
    %c0_9 = arith.constant 0 : index
    %10 = vector.load %arg5[%c0_8, %c0_9] : memref<8x128xf32, #tpu.memory_space<vmem>>, vector<8x128xf32>
    tpu.vector_store %arg5[%c0_8, %c0_9], %9 {strides = array<i32>} : memref<8x128xf32, #tpu.memory_space<vmem>>, vector<8x128xf32>,
    return
  }
  func.func @transform_0(%arg0: i32) -> (i32, i32) {
    %c0_i32 = arith.constant 0 : i32
    %c0_i32_0 = arith.constant 0 : i32
    return %arg0, %c0_i32 : i32, i32
  }
  func.func @transform_1(%arg0: i32) -> (i32, i32) {
    %c0_i32 = arith.constant 0 : i32
    %c0_i32_0 = arith.constant 0 : i32
    %c0_i32_1 = arith.constant 0 : i32
    return %c0_i32, %c0_i32_0 : i32, i32
  }
  func.func @transform_2(%arg0: i32) -> (i32, i32) {
    %c0_i32 = arith.constant 0 : i32
    %c0_i32_0 = arith.constant 0 : i32
    %c0_i32_1 = arith.constant 0 : i32
    return %c0_i32, %c0_i32_0 : i32, i32
  }
  func.func @transform_3(%arg0: i32) -> (i32, i32) {
    %c0_i32 = arith.constant 0 : i32
    %c0_i32_0 = arith.constant 0 : i32
    return %arg0, %c0_i32 : i32, i32
  }
  func.func @transform_4(%arg0: i32) -> (i32, i32) {
    %c0_i32 = arith.constant 0 : i32
    %c0_i32_0 = arith.constant 0 : i32
    return %arg0, %c0_i32 : i32, i32
  }
}

</mosaic_0001>

<llo_original>
// kernel: rnet_forward.9
$region0: #{rnet_forward.9}
  #allocation0 [shape = 'u32[]', space=smem, size = 0x4, offset = 0x4, fixed_abs, tag = 'smem constant byte address 0x4 - core index']
  #allocation1 [shape = 'u32[72,128]{1,0:T(1,128)}', space=vmem, size = 0x9000, scoped, tag = 'internal scratch']
  %s0 = inlined_call_operand.vmem [shape: bf16[512,147], index: 0, kind: input, shape index: {}]
  %s1 = inlined_call_operand.vmem [shape: bf16[147,128], index: 1, kind: input, shape index: {}]
  %s2 = inlined_call_operand.vmem [shape: f32[1,128], index: 2, kind: input, shape index: {}]
  %s3 = inlined_call_operand.vmem [shape: f32[512,128], index: 3, kind: output, shape index: {}]
  %s4 = sld [smem:[#allocation0]]
  $region45: #{rnet_forward.9} parent=0
    _
  %s6 = ssub.s32 1, %s4
  %s7 = scalar_select 0, %s6, %s4
  loop: start=0, step=1, limit=4
  $region2: #{rnet_forward.9} parent=0 // loop_pre_header
    _
  $region3: #{rnet_forward.9} parent=0 // loop_header
    %s9 = sphi 0, %s13
    %p10 = scmp.ge.s32.totalorder %s9, 4
    %s19 = sphi 0, %s21
    %s22 = sphi 0, %s19
    %s23 = sphi 0, %s22
    %s39 = sphi 0, %s23
    %s43 = sphi 0, %s43
    %s45 = sphi 0, %s43
    %s46 = sphi 0, %s45
    %s60 = sphi 0, %s46
    %s64 = sphi 0, %s64
    %s66 = sphi 0, %s64
    %s67 = sphi 0, %s66
    %s81 = sphi 0, %s67
    %s87 = sphi 0, %s89
    %s90 = sphi 0, %s87
    %s91 = sphi 0, %s90
    %s107 = sphi 0, %s91
  $region4: #{rnet_forward.9} parent=0 // loop_header_branch
    %12 = sbr.rel (%p10) target = $region8
  $region5: #{rnet_forward.9} parent=0 // loop_body
    %s14 = ssub.s32 %s9, 1
    %s15 = ssub.s32 %s9, 2
    %s16 = sadd.s32 %s9, 1
    %s17 = ssub.s32 %s9, %s16
    %p18 = scmp.eq.s32.totalorder %s17, 0
    %s20 = sadd.s32 %s19, 1
    %s21 = scalar_select %p18, %s19, %s20
    %p24 = pneg %p18
    %p25 = scmp.eq.s32.totalorder %s9, 1
    %p26 = por %p24, %p25
    %p27 = scmp.ne.s32.totalorder %s19, %s22
    %p28 = scmp.eq.s32.totalorder %s9, 0
    %p29 = por %p27, %p28
    %p30 = scmp.ne.s32.totalorder %s19, %s22
    %p31 = scmp.eq.s32.totalorder %s14, 1
    %p32 = por %p30, %p31
    %p33 = scmp.ne.s32.totalorder %s22, %s23
    %p34 = scmp.eq.s32.totalorder %s14, 0
    %p35 = por %p33, %p34
    %p36 = scmp.ne.s32.totalorder %s22, %s23
    %p37 = scmp.eq.s32.totalorder %s15, 1
    %p38 = por %p36, %p37
    %p40 = scmp.ne.s32.totalorder %s23, %s39
    %p41 = scmp.eq.s32.totalorder %s15, 0
    %p42 = por %p40, %p41
    %s44 = sadd.s32 %s43, 1
    %p47 = scmp.eq.s32.totalorder %s9, 1
    %p48 = scmp.ne.s32.totalorder %s43, %s45
    %p49 = scmp.eq.s32.totalorder %s9, 0
    %p50 = por %p48, %p49
    %p51 = scmp.ne.s32.totalorder %s43, %s45
    %p52 = scmp.eq.s32.totalorder %s14, 1
    %p53 = por %p51, %p52
    %p54 = scmp.ne.s32.totalorder %s45, %s46
    %p55 = scmp.eq.s32.totalorder %s14, 0
    %p56 = por %p54, %p55
    %p57 = scmp.ne.s32.totalorder %s45, %s46
    %p58 = scmp.eq.s32.totalorder %s15, 1
    %p59 = por %p57, %p58
    %p61 = scmp.ne.s32.totalorder %s46, %s60
    %p62 = scmp.eq.s32.totalorder %s15, 0
    %p63 = por %p61, %p62
    %s65 = sadd.s32 %s64, 1
    %p68 = scmp.eq.s32.totalorder %s9, 1
    %p69 = scmp.ne.s32.totalorder %s64, %s66
    %p70 = scmp.eq.s32.totalorder %s9, 0
    %p71 = por %p69, %p70
    %p72 = scmp.ne.s32.totalorder %s64, %s66
    %p73 = scmp.eq.s32.totalorder %s14, 1
    %p74 = por %p72, %p73
    %p75 = scmp.ne.s32.totalorder %s66, %s67
    %p76 = scmp.eq.s32.totalorder %s14, 0
    %p77 = por %p75, %p76
    %p78 = scmp.ne.s32.totalorder %s66, %s67
    %p79 = scmp.eq.s32.totalorder %s15, 1
    %p80 = por %p78, %p79
    %p82 = scmp.ne.s32.totalorder %s67, %s81
    %p83 = scmp.eq.s32.totalorder %s15, 0
    %p84 = por %p82, %p83
    %s85 = ssub.s32 %s9, %s16
    %p86 = scmp.eq.s32.totalorder %s85, 0
    %s88 = sadd.s32 %s87, 1
    %s89 = scalar_select %p86, %s87, %s88
    %p92 = pneg %p86
    %p93 = scmp.eq.s32.totalorder %s9, 1
    %p94 = por %p92, %p93
    %p95 = scmp.ne.s32.totalorder %s87, %s90
    %p96 = scmp.eq.s32.totalorder %s9, 0
    %p97 = por %p95, %p96
    %p98 = scmp.ne.s32.totalorder %s87, %s90
    %p99 = scmp.eq.s32.totalorder %s14, 1
    %p100 = por %p98, %p99
    %p101 = scmp.ne.s32.totalorder %s90, %s91
    %p102 = scmp.eq.s32.totalorder %s14, 0
    %p103 = por %p101, %p102
    %p104 = scmp.ne.s32.totalorder %s90, %s91
    %p105 = scmp.eq.s32.totalorder %s15, 1
    %p106 = por %p104, %p105
    %p108 = scmp.ne.s32.totalorder %s91, %s107
    %p109 = scmp.eq.s32.totalorder %s15, 0
    %p110 = por %p108, %p109
    %p111 = scmp.le.s32.totalorder 1, %s9
    %p112 = scmp.lt.s32.totalorder %s9, 3
    %p113 = pnand %p111, %p112
    %p114 = pneg %p113
    // Predicated region
    $region9: #{rnet_forward.9} parent=5 // pred_check
      _
    $region10: #{rnet_forward.9} parent=5 // pred_check_branch
      %116 = sbr.rel (%p113) target = $region12
    $region11: #{rnet_forward.9} parent=5 // pred_region
      %s117 = ssub.s32 %s9, 1
      // Predicated region
      $region13: #{rnet_forward.9} parent=11 // pred_check
        %p118 = pneg %p56
      $region14: #{rnet_forward.9} parent=11 // pred_check_branch
        %120 = sbr.rel (%p118) target = $region16
      $region15: #{rnet_forward.9} parent=11 // pred_region
        _
      $region16: #{rnet_forward.9} parent=11 // pred_fallthru
        _
      // Predicated region
      $region17: #{rnet_forward.9} parent=11 // pred_check
        %p121 = pneg %p77
      $region18: #{rnet_forward.9} parent=11 // pred_check_branch
        %123 = sbr.rel (%p121) target = $region20
      $region19: #{rnet_forward.9} parent=11 // pred_region
        _
      $region20: #{rnet_forward.9} parent=11 // pred_fallthru
        _
    $region12: #{rnet_forward.9} parent=5 // pred_fallthru
      _
    %p124 = scmp.lt.s32.totalorder %s9, 2
    // Predicated region
    $region21: #{rnet_forward.9} parent=5 // pred_check
      %p125 = pneg %p124
    $region22: #{rnet_forward.9} parent=5 // pred_check_branch
      %127 = sbr.rel (%p125) target = $region24
    $region23: #{rnet_forward.9} parent=5 // pred_region
      // Predicated region
      $region25: #{rnet_forward.9} parent=23 // pred_check
        %p128 = pneg %p29
      $region26: #{rnet_forward.9} parent=23 // pred_check_branch
        %130 = sbr.rel (%p128) target = $region28
      $region27: #{rnet_forward.9} parent=23 // pred_region
        %s131 = smul.u32 32, %s9
        %p132 = scmp.lt.s32.totalorder %s131, 63
        %s133 = scalar_select %p132, %s131, 63
        %s134 = smul.addr %s133, 2
        %s135 = smul.addr %s134, 4
        %s136 = scalar_lea.vmem %s0, %s135
        %s137 = smul.u32 32, %s9
      $region28: #{rnet_forward.9} parent=23 // pred_fallthru
        _
    $region24: #{rnet_forward.9} parent=5 // pred_fallthru
      _
    %p138 = scmp.le.s32.totalorder 1, %s9
    %p139 = scmp.lt.s32.totalorder %s9, 3
    %p140 = pnand %p138, %p139
    %p141 = pneg %p140
    // Predicated region
    $region29: #{rnet_forward.9} parent=5 // pred_check
      _
    $region30: #{rnet_forward.9} parent=5 // pred_check_branch
      %143 = sbr.rel (%p140) target = $region32
    $region31: #{rnet_forward.9} parent=5 // pred_region
      %s144 = ssub.s32 %s9, 1
      %s145 = smul.u32 32, %s14
      %p146 = scmp.lt.s32.totalorder %s145, 63
      %s147 = scalar_select %p146, %s145, 63
      %s148 = smul.addr %s147, 2
      %s149 = smul.addr %s148, 4
      %s150 = scalar_lea.vmem %s0, %s149
      %p151 = pneg %p35
      %p152 = pneg %p32
      %p153 = pneg %p56
      %p154 = pneg %p53
      %p155 = pneg %p77
      %p156 = pneg %p74
      %p157 = pneg %p103
      %p158 = pneg %p100
      %s159 = smul.u32 32, %s14
      %p160 = scmp.lt.s32.totalorder %s159, 63
      %s161 = scalar_select %p160, %s159, 63
      %s162 = smul.addr %s161, 8
      %s163 = scalar_lea.vmem %s3, %s162
      %s164 = smul.u32 32, %s14
      %p165 = scmp.lt.s32.totalorder %s164, 63
      %s166 = scalar_select %p165, %s164, 63
      %s167 = smul.addr %s166, 2
      %s168 = smul.addr %s167, 4
      %s169 = scalar_lea.vmem %s0, %s168
      %s170 = smul.u32 32, %s14
      %s171 = smul.u32 32, %s14
      %p172 = scmp.lt.s32.totalorder %s171, 63
      %s173 = scalar_select %p172, %s171, 63
      %s174 = smul.addr %s173, 8
      %s175 = scalar_lea.vmem %s3, %s174
      %s176 = smul.u32 32, %s14
      %v178 = vld [vmem:[%s169] sm:$0xff]
      %v179 = vld [vmem:[%s169 + $0x8] sm:$0xff]
      %v180 = vld [vmem:[%s169 + $0x10] sm:$0xff]
      %v181 = vld [vmem:[%s169 + $0x18] sm:$0xff]
      %v182 = vld [vmem:[%s169 + $0x20] sm:$0xff]
      %v183 = vld [vmem:[%s169 + $0x28] sm:$0xff]
      %v184 = vld [vmem:[%s169 + $0x30] sm:$0xff]
      %v185 = vld [vmem:[%s169 + $0x38] sm:$0xff]
      %v186 = vld [vmem:[%s169 + $0x40] sm:$0xff]
      %v187 = vld [vmem:[%s169 + $0x48] sm:$0xff]
      %v188 = vld [vmem:[%s169 + $0x50] sm:$0xff]
      %v189 = vld [vmem:[%s169 + $0x58] sm:$0xff]
      %v190 = vld [vmem:[%s169 + $0x60] sm:$0xff]
      %v191 = vld [vmem:[%s169 + $0x68] sm:$0xff]
      %v192 = vld [vmem:[%s169 + $0x70] sm:$0xff]
      %v193 = vld [vmem:[%s169 + $0x78] sm:$0xff]
      %v194 = vld [vmem:[%s169 + $0x80] sm:$0xff]
      %v195 = vld [vmem:[%s169 + $0x88] sm:$0xff]
      %v196 = vld [vmem:[%s169 + $0x90] sm:$0xff]
      %v197 = vld [vmem:[%s169 + $0x98] sm:$0xff]
      %v198 = vld [vmem:[%s169 + $0xa0] sm:$0xff]
      %v199 = vld [vmem:[%s169 + $0xa8] sm:$0xff]
      %v200 = vld [vmem:[%s169 + $0xb0] sm:$0xff]
      %v201 = vld [vmem:[%s169 + $0xb8] sm:$0xff]
      %v202 = vld [vmem:[%s169 + $0xc0] sm:$0xff]
      %v203 = vld [vmem:[%s169 + $0xc8] sm:$0xff]
      %v204 = vld [vmem:[%s169 + $0xd0] sm:$0xff]
      %v205 = vld [vmem:[%s169 + $0xd8] sm:$0xff]
      %v206 = vld [vmem:[%s169 + $0xe0] sm:$0xff]
      %v207 = vld [vmem:[%s169 + $0xe8] sm:$0xff]
      %v208 = vld [vmem:[%s169 + $0xf0] sm:$0xff]
      %v209 = vld [vmem:[%s169 + $0xf8] sm:$0xff]
      %v210 = vld [vmem:[%s1] sm:$0xf]
      %v211 = vld [vmem:[%s1 + $0x4] sm:$0xf]
      %v212 = vld [vmem:[%s1 + $0x8] sm:$0xf]
      %v213 = vld [vmem:[%s1 + $0xc] sm:$0xf]
      %v214 = vld [vmem:[%s1 + $0x10] sm:$0xf]
      %v215 = vld [vmem:[%s1 + $0x14] sm:$0xf]
      %v216 = vld [vmem:[%s1 + $0x18] sm:$0xf]
      %v217 = vld [vmem:[%s1 + $0x1c] sm:$0xf]
      %v218 = vld [vmem:[%s1 + $0x20] sm:$0xf]
      %v219 = vld [vmem:[%s1 + $0x24] sm:$0xf]
      %v220 = vld [vmem:[%s1 + $0x28] sm:$0xf]
      %v221 = vld [vmem:[%s1 + $0x2c] sm:$0xf]
      %v222 = vld [vmem:[%s1 + $0x30] sm:$0xf]
      %v223 = vld [vmem:[%s1 + $0x34] sm:$0xf]
      %v224 = vld [vmem:[%s1 + $0x38] sm:$0xf]
      %v225 = vld [vmem:[%s1 + $0x3c] sm:$0xf]
      %v226 = vld [vmem:[%s1 + $0x40] sm:$0xf]
      %v227 = vld [vmem:[%s1 + $0x44] sm:$0xf]
      %v228 = vld [vmem:[%s1 + $0x48] sm:$0x3]
      %v229 = vld [vmem:[%s2] sm:$0x1]
      %v231 = vperm.slane %v229, 0
      %v265 = vunpack.c.l.b16 %v178
      %v266 = vunpack.c.h.b16 %v178
      %v267 = vunpack.c.l.b16 %v179
      %v268 = vunpack.c.h.b16 %v179
      %v269 = vunpack.c.l.b16 %v180
      %v270 = vunpack.c.h.b16 %v180
      %v271 = vunpack.c.l.b16 %v181
      %v272 = vunpack.c.h.b16 %v181
      %v273 = vunpack.c.l.b16 %v182
      %v274 = vunpack.c.h.b16 %v182
      %v275 = vunpack.c.l.b16 %v183
      %v276 = vunpack.c.h.b16 %v183
      %v277 = vunpack.c.l.b16 %v184
      %v278 = vunpack.c.h.b16 %v184
      %v279 = vunpack.c.l.b16 %v185
      %v280 = vunpack.c.h.b16 %v185
      %v281 = vunpack.c.l.b16 %v186
      %v282 = vunpack.c.h.b16 %v186
      %v283 = vunpack.c.l.b16 %v187
      %v284 = vunpack.c.h.b16 %v187
      %v285 = vunpack.c.l.b16 %v188
      %v286 = vunpack.c.h.b16 %v188
      %v287 = vunpack.c.l.b16 %v189
      %v288 = vunpack.c.h.b16 %v189
      %v289 = vunpack.c.l.b16 %v190
      %v290 = vunpack.c.h.b16 %v190
      %v291 = vunpack.c.l.b16 %v191
      %v292 = vunpack.c.h.b16 %v191
      %v293 = vunpack.c.l.b16 %v192
      %v294 = vunpack.c.h.b16 %v192
      %v295 = vunpack.c.l.b16 %v193
      %v296 = vunpack.c.h.b16 %v193
      %v297 = vunpack.c.l.b16 %v194
      %v298 = vunpack.c.h.b16 %v194
      %v299 = vunpack.c.l.b16 %v195
      %v300 = vunpack.c.h.b16 %v195
      %v301 = vunpack.c.l.b16 %v196
      %v302 = vunpack.c.h.b16 %v196
      %v303 = vunpack.c.l.b16 %v197
      %v304 = vunpack.c.h.b16 %v197
      %v305 = vunpack.c.l.b16 %v198
      %v306 = vunpack.c.h.b16 %v198
      %v307 = vunpack.c.l.b16 %v199
      %v308 = vunpack.c.h.b16 %v199
      %v309 = vunpack.c.l.b16 %v200
      %v310 = vunpack.c.h.b16 %v200
      %v311 = vunpack.c.l.b16 %v201
      %v312 = vunpack.c.h.b16 %v201
      %v313 = vunpack.c.l.b16 %v202
      %v314 = vunpack.c.h.b16 %v202
      %v315 = vunpack.c.l.b16 %v203
      %v316 = vunpack.c.h.b16 %v203
      %v317 = vunpack.c.l.b16 %v204
      %v318 = vunpack.c.h.b16 %v204
      %v319 = vunpack.c.l.b16 %v205
      %v320 = vunpack.c.h.b16 %v205
      %v321 = vunpack.c.l.b16 %v206
      %v322 = vunpack.c.h.b16 %v206
      %v323 = vunpack.c.l.b16 %v207
      %v324 = vunpack.c.h.b16 %v207
      %v325 = vunpack.c.l.b16 %v208
      %v326 = vunpack.c.h.b16 %v208
      %v327 = vunpack.c.l.b16 %v209
      %v328 = vunpack.c.h.b16 %v209
      %v329 = vpack.c.b16 %v267, %v265
      %v330 = vpack.c.b16 %v268, %v266
      %v331 = vpack.c.b16 %v271, %v269
      %v332 = vpack.c.b16 %v272, %v270
      %v333 = vpack.c.b16 %v275, %v273
      %v334 = vpack.c.b16 %v276, %v274
      %v335 = vpack.c.b16 %v279, %v277
      %v336 = vpack.c.b16 %v280, %v278
      %v337 = vpack.c.b16 %v283, %v281
      %v338 = vpack.c.b16 %v284, %v282
      %v339 = vpack.c.b16 %v287, %v285
      %v340 = vpack.c.b16 %v288, %v286
      %v341 = vpack.c.b16 %v291, %v289
      %v342 = vpack.c.b16 %v292, %v290
      %v343 = vpack.c.b16 %v295, %v293
      %v344 = vpack.c.b16 %v296, %v294
      %v345 = vpack.c.b16 %v299, %v297
      %v346 = vpack.c.b16 %v300, %v298
      %v347 = vpack.c.b16 %v303, %v301
      %v348 = vpack.c.b16 %v304, %v302
      %v349 = vpack.c.b16 %v307, %v305
      %v350 = vpack.c.b16 %v308, %v306
      %v351 = vpack.c.b16 %v311, %v309
      %v352 = vpack.c.b16 %v312, %v310
      %v353 = vpack.c.b16 %v315, %v313
      %v354 = vpack.c.b16 %v316, %v314
      %v355 = vpack.c.b16 %v319, %v317
      %v356 = vpack.c.b16 %v320, %v318
      %v357 = vpack.c.b16 %v323, %v321
      %v358 = vpack.c.b16 %v324, %v322
      %v359 = vpack.c.b16 %v327, %v325
      %v360 = vpack.c.b16 %v328, %v326
      %v396 = vunpack.c.l.b16 %v210
      %v397 = vunpack.c.l.b16 %v211
      %v398 = vunpack.c.l.b16 %v212
      %v399 = vunpack.c.l.b16 %v213
      %v400 = vunpack.c.l.b16 %v214
      %v401 = vunpack.c.l.b16 %v215
      %v402 = vunpack.c.l.b16 %v216
      %v403 = vunpack.c.l.b16 %v217
      %v404 = vunpack.c.l.b16 %v218
      %v405 = vunpack.c.l.b16 %v219
      %v406 = vunpack.c.l.b16 %v220
      %v407 = vunpack.c.l.b16 %v221
      %v408 = vunpack.c.l.b16 %v222
      %v409 = vunpack.c.l.b16 %v223
      %v410 = vunpack.c.l.b16 %v224
      %v411 = vunpack.c.l.b16 %v225
      %v412 = vunpack.c.l.b16 %v226
      %v413 = vunpack.c.l.b16 %v227
      %v414 = vunpack.c.l.b16 %v228
      %v415 = vpack.c.b16 %v397, %v396
      %v416 = vpack.c.b16 %v399, %v398
      %v417 = vpack.c.b16 %v401, %v400
      %v418 = vpack.c.b16 %v403, %v402
      %v419 = vpack.c.b16 %v405, %v404
      %v420 = vpack.c.b16 %v407, %v406
      %v421 = vpack.c.b16 %v409, %v408
      %v422 = vpack.c.b16 %v411, %v410
      %v423 = vpack.c.b16 %v413, %v412
      %v424 = vpack.c.b16 %v414, %v414
      %vm434 = vcmask 154624
      %v436 = vsel %vm434, %v330, 0
      %v439 = vsel %vm434, %v332, 0
      %v442 = vsel %vm434, %v334, 0
      %v445 = vsel %vm434, %v336, 0
      %v448 = vsel %vm434, %v338, 0
      %v451 = vsel %vm434, %v340, 0
      %v454 = vsel %vm434, %v342, 0
      %v457 = vsel %vm434, %v344, 0
      %v460 = vsel %vm434, %v346, 0
      %v463 = vsel %vm434, %v348, 0
      %v466 = vsel %vm434, %v350, 0
      %v469 = vsel %vm434, %v352, 0
      %v472 = vsel %vm434, %v354, 0
      %v475 = vsel %vm434, %v356, 0
      %v478 = vsel %vm434, %v358, 0
      %v481 = vsel %vm434, %v360, 0
      %vm483 = vcmask 1040384
      %vm484 = vcmask 1041408
      %v485 = vsel %vm483, 4294967295, 65535
      %v486 = vsel %vm484, %v485, 0
      %v488 = vand.u32 %v424, %v486
      %490 = vmatpush.bf16.msra.mxu0 %v422
      %491 = vmatpush.bf16.msra.mxu0 %v421
      %492 = vmatpush.bf16.msra.mxu0 %v420
      %493 = vmatpush.bf16.msra.mxu0 %v419
      %494 = vmatpush.bf16.msra.mxu0 %v418
      %495 = vmatpush.bf16.msra.mxu0 %v417
      %496 = vmatpush.bf16.msra.mxu0 %v416
      %497 = vmatpush.bf16.msra.mxu0 %v415
      %498 = vmatmul.bf16.gmra.mxu0 %v329
      %v499 = vpop.f32.mrf.mxu0
      %v500 = vadd.f32 %v231, %v499
      %v501 = vpop.f32.mrf.mxu0
      %v502 = vadd.f32 %v231, %v501
      %503 = vmatmul.bf16.gmra.mxu0 %v331
      %v504 = vpop.f32.mrf.mxu0
      %v505 = vadd.f32 %v231, %v504
      %v506 = vpop.f32.mrf.mxu0
      %v507 = vadd.f32 %v231, %v506
      %508 = vmatmul.bf16.gmra.mxu0 %v333
      %v509 = vpop.f32.mrf.mxu0
      %v510 = vadd.f32 %v231, %v509
      %v511 = vpop.f32.mrf.mxu0
      %v512 = vadd.f32 %v231, %v511
      %513 = vmatmul.bf16.gmra.mxu0 %v335
      %v514 = vpop.f32.mrf.mxu0
      %v515 = vadd.f32 %v231, %v514
      %v516 = vpop.f32.mrf.mxu0
      %v517 = vadd.f32 %v231, %v516
      %518 = vmatmul.bf16.gmra.mxu0 %v337
      %v519 = vpop.f32.mrf.mxu0
      %v520 = vadd.f32 %v231, %v519
      %v521 = vpop.f32.mrf.mxu0
      %v522 = vadd.f32 %v231, %v521
      %523 = vmatmul.bf16.gmra.mxu0 %v339
      %v524 = vpop.f32.mrf.mxu0
      %v525 = vadd.f32 %v231, %v524
      %v526 = vpop.f32.mrf.mxu0
      %v527 = vadd.f32 %v231, %v526
      %528 = vmatmul.bf16.gmra.mxu0 %v341
      %v529 = vpop.f32.mrf.mxu0
      %v530 = vadd.f32 %v231, %v529
      %v531 = vpop.f32.mrf.mxu0
      %v532 = vadd.f32 %v231, %v531
      %533 = vmatmul.bf16.gmra.mxu0 %v343
      %v534 = vpop.f32.mrf.mxu0
      %v535 = vadd.f32 %v231, %v534
      %v536 = vpop.f32.mrf.mxu0
      %v537 = vadd.f32 %v231, %v536
      %538 = vmatmul.bf16.gmra.mxu0 %v345
      %v539 = vpop.f32.mrf.mxu0
      %v540 = vadd.f32 %v231, %v539
      %v541 = vpop.f32.mrf.mxu0
      %v542 = vadd.f32 %v231, %v541
      %543 = vmatmul.bf16.gmra.mxu0 %v347
      %v544 = vpop.f32.mrf.mxu0
      %v545 = vadd.f32 %v231, %v544
      %v546 = vpop.f32.mrf.mxu0
      %v547 = vadd.f32 %v231, %v546
      %548 = vmatmul.bf16.gmra.mxu0 %v349
      %v549 = vpop.f32.mrf.mxu0
      %v550 = vadd.f32 %v231, %v549
      %v551 = vpop.f32.mrf.mxu0
      %v552 = vadd.f32 %v231, %v551
      %553 = vmatmul.bf16.gmra.mxu0 %v351
      %v554 = vpop.f32.mrf.mxu0
      %v555 = vadd.f32 %v231, %v554
      %v556 = vpop.f32.mrf.mxu0
      %v557 = vadd.f32 %v231, %v556
      %558 = vmatmul.bf16.gmra.mxu0 %v353
      %v559 = vpop.f32.mrf.mxu0
      %v560 = vadd.f32 %v231, %v559
      %v561 = vpop.f32.mrf.mxu0
      %v562 = vadd.f32 %v231, %v561
      %563 = vmatmul.bf16.gmra.mxu0 %v355
      %v564 = vpop.f32.mrf.mxu0
      %v565 = vadd.f32 %v231, %v564
      %v566 = vpop.f32.mrf.mxu0
      %v567 = vadd.f32 %v231, %v566
      %568 = vmatmul.bf16.gmra.mxu0 %v357
      %v569 = vpop.f32.mrf.mxu0
      %v570 = vadd.f32 %v231, %v569
      %v571 = vpop.f32.mrf.mxu0
      %v572 = vadd.f32 %v231, %v571
      %573 = vmatmul.bf16.gmra.mxu0 %v359
      %v574 = vpop.f32.mrf.mxu0
      %v575 = vadd.f32 %v231, %v574
      %v576 = vpop.f32.mrf.mxu0
      %v577 = vadd.f32 %v231, %v576
      %578 = vdwg.mxu0
      %579 = vmatpush.bf16.msra.mxu0 0
      %580 = vmatpush.bf16.msra.mxu0 0
      %581 = vmatpush.bf16.msra.mxu0 0
      %582 = vmatpush.bf16.msra.mxu0 0
      %583 = vmatpush.bf16.msra.mxu0 0
      %584 = vmatpush.bf16.msra.mxu0 0
      %585 = vmatpush.bf16.msra.mxu0 %v488
      %586 = vmatpush.bf16.msra.mxu0 %v423
      %587 = vmatmul.bf16.gmra.mxu0 %v436
      %v588 = vpop.f32.mrf.mxu0
      %v589 = vadd.f32 %v500, %v588
      %v590 = vpop.f32.mrf.mxu0
      %v591 = vadd.f32 %v502, %v590
      %592 = vmatmul.bf16.gmra.mxu0 %v439
      %v593 = vpop.f32.mrf.mxu0
      %v594 = vadd.f32 %v505, %v593
      %v595 = vpop.f32.mrf.mxu0
      %v596 = vadd.f32 %v507, %v595
      %597 = vmatmul.bf16.gmra.mxu0 %v442
      %v598 = vpop.f32.mrf.mxu0
      %v599 = vadd.f32 %v510, %v598
      %v600 = vpop.f32.mrf.mxu0
      %v601 = vadd.f32 %v512, %v600
      %602 = vmatmul.bf16.gmra.mxu0 %v445
      %v603 = vpop.f32.mrf.mxu0
      %v604 = vadd.f32 %v515, %v603
      %v605 = vpop.f32.mrf.mxu0
      %v606 = vadd.f32 %v517, %v605
      %607 = vmatmul.bf16.gmra.mxu0 %v448
      %v608 = vpop.f32.mrf.mxu0
      %v609 = vadd.f32 %v520, %v608
      %v610 = vpop.f32.mrf.mxu0
      %v611 = vadd.f32 %v522, %v610
      %612 = vmatmul.bf16.gmra.mxu0 %v451
      %v613 = vpop.f32.mrf.mxu0
      %v614 = vadd.f32 %v525, %v613
      %v615 = vpop.f32.mrf.mxu0
      %v616 = vadd.f32 %v527, %v615
      %617 = vmatmul.bf16.gmra.mxu0 %v454
      %v618 = vpop.f32.mrf.mxu0
      %v619 = vadd.f32 %v530, %v618
      %v620 = vpop.f32.mrf.mxu0
      %v621 = vadd.f32 %v532, %v620
      %622 = vmatmul.bf16.gmra.mxu0 %v457
      %v623 = vpop.f32.mrf.mxu0
      %v624 = vadd.f32 %v535, %v623
      %v625 = vpop.f32.mrf.mxu0
      %v626 = vadd.f32 %v537, %v625
      %627 = vmatmul.bf16.gmra.mxu0 %v460
      %v628 = vpop.f32.mrf.mxu0
      %v629 = vadd.f32 %v540, %v628
      %v630 = vpop.f32.mrf.mxu0
      %v631 = vadd.f32 %v542, %v630
      %632 = vmatmul.bf16.gmra.mxu0 %v463
      %v633 = vpop.f32.mrf.mxu0
      %v634 = vadd.f32 %v545, %v633
      %v635 = vpop.f32.mrf.mxu0
      %v636 = vadd.f32 %v547, %v635
      %637 = vmatmul.bf16.gmra.mxu0 %v466
      %v638 = vpop.f32.mrf.mxu0
      %v639 = vadd.f32 %v550, %v638
      %v640 = vpop.f32.mrf.mxu0
      %v641 = vadd.f32 %v552, %v640
      %642 = vmatmul.bf16.gmra.mxu0 %v469
      %v643 = vpop.f32.mrf.mxu0
      %v644 = vadd.f32 %v555, %v643
      %v645 = vpop.f32.mrf.mxu0
      %v646 = vadd.f32 %v557, %v645
      %647 = vmatmul.bf16.gmra.mxu0 %v472
      %v648 = vpop.f32.mrf.mxu0
      %v649 = vadd.f32 %v560, %v648
      %v650 = vpop.f32.mrf.mxu0
      %v651 = vadd.f32 %v562, %v650
      %652 = vmatmul.bf16.gmra.mxu0 %v475
      %v653 = vpop.f32.mrf.mxu0
      %v654 = vadd.f32 %v565, %v653
      %v655 = vpop.f32.mrf.mxu0
      %v656 = vadd.f32 %v567, %v655
      %657 = vmatmul.bf16.gmra.mxu0 %v478
      %v658 = vpop.f32.mrf.mxu0
      %v659 = vadd.f32 %v570, %v658
      %v660 = vpop.f32.mrf.mxu0
      %v661 = vadd.f32 %v572, %v660
      %662 = vmatmul.bf16.gmra.mxu0 %v481
      %v663 = vpop.f32.mrf.mxu0
      %v664 = vadd.f32 %v575, %v663
      %v665 = vpop.f32.mrf.mxu0
      %v666 = vadd.f32 %v577, %v665
      %667 = vdwg.mxu0
      %v668 = vmax.f32 %v589, 0.0
      %v669 = vmax.f32 %v591, 0.0
      %v670 = vmax.f32 %v594, 0.0
      %v671 = vmax.f32 %v596, 0.0
      %v672 = vmax.f32 %v599, 0.0
      %v673 = vmax.f32 %v601, 0.0
      %v674 = vmax.f32 %v604, 0.0
      %v675 = vmax.f32 %v606, 0.0
      %v676 = vmax.f32 %v609, 0.0
      %v677 = vmax.f32 %v611, 0.0
      %v678 = vmax.f32 %v614, 0.0
      %v679 = vmax.f32 %v616, 0.0
      %v680 = vmax.f32 %v619, 0.0
      %v681 = vmax.f32 %v621, 0.0
      %v682 = vmax.f32 %v624, 0.0
      %v683 = vmax.f32 %v626, 0.0
      %v684 = vmax.f32 %v629, 0.0
      %v685 = vmax.f32 %v631, 0.0
      %v686 = vmax.f32 %v634, 0.0
      %v687 = vmax.f32 %v636, 0.0
      %v688 = vmax.f32 %v639, 0.0
      %v689 = vmax.f32 %v641, 0.0
      %v690 = vmax.f32 %v644, 0.0
      %v691 = vmax.f32 %v646, 0.0
      %v692 = vmax.f32 %v649, 0.0
      %v693 = vmax.f32 %v651, 0.0
      %v694 = vmax.f32 %v654, 0.0
      %v695 = vmax.f32 %v656, 0.0
      %v696 = vmax.f32 %v659, 0.0
      %v697 = vmax.f32 %v661, 0.0
      %v698 = vmax.f32 %v664, 0.0
      %v699 = vmax.f32 %v666, 0.0
      %700 = vst [vmem:[%s175] sm:$0xff] %v668
      %701 = vst [vmem:[%s175 + $0x8] sm:$0xff] %v669
      %702 = vst [vmem:[%s175 + $0x10] sm:$0xff] %v670
      %703 = vst [vmem:[%s175 + $0x18] sm:$0xff] %v671
      %704 = vst [vmem:[%s175 + $0x20] sm:$0xff] %v672
      %705 = vst [vmem:[%s175 + $0x28] sm:$0xff] %v673
      %706 = vst [vmem:[%s175 + $0x30] sm:$0xff] %v674
      %707 = vst [vmem:[%s175 + $0x38] sm:$0xff] %v675
      %708 = vst [vmem:[%s175 + $0x40] sm:$0xff] %v676
      %709 = vst [vmem:[%s175 + $0x48] sm:$0xff] %v677
      %710 = vst [vmem:[%s175 + $0x50] sm:$0xff] %v678
      %711 = vst [vmem:[%s175 + $0x58] sm:$0xff] %v679
      %712 = vst [vmem:[%s175 + $0x60] sm:$0xff] %v680
      %713 = vst [vmem:[%s175 + $0x68] sm:$0xff] %v681
      %714 = vst [vmem:[%s175 + $0x70] sm:$0xff] %v682
      %715 = vst [vmem:[%s175 + $0x78] sm:$0xff] %v683
      %716 = vst [vmem:[%s175 + $0x80] sm:$0xff] %v684
      %717 = vst [vmem:[%s175 + $0x88] sm:$0xff] %v685
      %718 = vst [vmem:[%s175 + $0x90] sm:$0xff] %v686
      %719 = vst [vmem:[%s175 + $0x98] sm:$0xff] %v687
      %720 = vst [vmem:[%s175 + $0xa0] sm:$0xff] %v688
      %721 = vst [vmem:[%s175 + $0xa8] sm:$0xff] %v689
      %722 = vst [vmem:[%s175 + $0xb0] sm:$0xff] %v690
      %723 = vst [vmem:[%s175 + $0xb8] sm:$0xff] %v691
      %724 = vst [vmem:[%s175 + $0xc0] sm:$0xff] %v692
      %725 = vst [vmem:[%s175 + $0xc8] sm:$0xff] %v693
      %726 = vst [vmem:[%s175 + $0xd0] sm:$0xff] %v694
      %727 = vst [vmem:[%s175 + $0xd8] sm:$0xff] %v695
      %728 = vst [vmem:[%s175 + $0xe0] sm:$0xff] %v696
      %729 = vst [vmem:[%s175 + $0xe8] sm:$0xff] %v697
      %730 = vst [vmem:[%s175 + $0xf0] sm:$0xff] %v698
      %731 = vst [vmem:[%s175 + $0xf8] sm:$0xff] %v699
      %s732 = smul.u32 32, %s14
      %p733 = scmp.lt.s32.totalorder %s732, 63
      %s734 = scalar_select %p733, %s732, 63
      %s735 = smul.addr %s734, 8
      %s736 = scalar_lea.vmem %s3, %s735
      // Predicated region
      $region33: #{rnet_forward.9} parent=31 // pred_check
        %p737 = pneg %p100
      $region34: #{rnet_forward.9} parent=31 // pred_check_branch
        %739 = sbr.rel (%p737) target = $region36
      $region35: #{rnet_forward.9} parent=31 // pred_region
        %s740 = smul.u32 32, %s14
      $region36: #{rnet_forward.9} parent=31 // pred_fallthru
        _
    $region32: #{rnet_forward.9} parent=5 // pred_fallthru
      _
    %p741 = scmp.le.s32.totalorder 2, %s9
    // Predicated region
    $region37: #{rnet_forward.9} parent=5 // pred_check
      %p742 = pneg %p741
    $region38: #{rnet_forward.9} parent=5 // pred_check_branch
      %744 = sbr.rel (%p742) target = $region40
    $region39: #{rnet_forward.9} parent=5 // pred_region
      %s745 = ssub.s32 %s9, 2
      // Predicated region
      $region41: #{rnet_forward.9} parent=39 // pred_check
        %p746 = pneg %p106
      $region42: #{rnet_forward.9} parent=39 // pred_check_branch
        %748 = sbr.rel (%p746) target = $region44
      $region43: #{rnet_forward.9} parent=39 // pred_region
        %s749 = smul.u32 32, %s15
        %p750 = scmp.lt.s32.totalorder %s749, 63
        %s751 = scalar_select %p750, %s749, 63
        %s752 = smul.addr %s751, 8
        %s753 = scalar_lea.vmem %s3, %s752
      $region44: #{rnet_forward.9} parent=39 // pred_fallthru
        _
    $region40: #{rnet_forward.9} parent=5 // pred_fallthru
      _
  $region6: #{rnet_forward.9} parent=0 // loop_footer
    %s13 = sadd.s32 1, %s9
  $region7: #{rnet_forward.9} parent=0 // loop_footer_branch
    %8 = sbr.rel target = $region3
  $region8: #{rnet_forward.9} parent=0 // loop_exit
    _

// kernel: rnet_forward.10
$region0: #{rnet_forward.10}
  #allocation0 [shape = 'u32[]', space=smem, size = 0x4, offset = 0x4, fixed_abs, tag = 'smem constant byte address 0x4 - core index']
  #allocation1 [shape = 'u32[72,128]{1,0:T(1,128)}', space=vmem, size = 0x9000, scoped, tag = 'internal scratch']
  %s0 = inlined_call_operand.vmem [shape: bf16[128,1152], index: 0, kind: input, shape index: {}]
  %s1 = inlined_call_operand.vmem [shape: bf16[1152,128], index: 1, kind: input, shape index: {}]
  %s2 = inlined_call_operand.vmem [shape: f32[1,128], index: 2, kind: input, shape index: {}]
  %s3 = inlined_call_operand.vmem [shape: f32[128,128], index: 3, kind: output, shape index: {}]
  %s4 = sld [smem:[#allocation0]]
  $region45: #{rnet_forward.10} parent=0
    _
  %s6 = ssub.s32 1, %s4
  %s7 = scalar_select 0, %s6, %s4
  loop: start=0, step=1, limit=4
  $region2: #{rnet_forward.10} parent=0 // loop_pre_header
    _
  $region3: #{rnet_forward.10} parent=0 // loop_header
    %s9 = sphi 0, %s13
    %p10 = scmp.ge.s32.totalorder %s9, 4
    %s19 = sphi 0, %s21
    %s22 = sphi 0, %s19
    %s23 = sphi 0, %s22
    %s39 = sphi 0, %s23
    %s43 = sphi 0, %s43
    %s45 = sphi 0, %s43
    %s46 = sphi 0, %s45
    %s60 = sphi 0, %s46
    %s64 = sphi 0, %s64
    %s66 = sphi 0, %s64
    %s67 = sphi 0, %s66
    %s81 = sphi 0, %s67
    %s87 = sphi 0, %s89
    %s90 = sphi 0, %s87
    %s91 = sphi 0, %s90
    %s107 = sphi 0, %s91
  $region4: #{rnet_forward.10} parent=0 // loop_header_branch
    %12 = sbr.rel (%p10) target = $region8
  $region5: #{rnet_forward.10} parent=0 // loop_body
    %s14 = ssub.s32 %s9, 1
    %s15 = ssub.s32 %s9, 2
    %s16 = sadd.s32 %s9, 1
    %s17 = ssub.s32 %s9, %s16
    %p18 = scmp.eq.s32.totalorder %s17, 0
    %s20 = sadd.s32 %s19, 1
    %s21 = scalar_select %p18, %s19, %s20
    %p24 = pneg %p18
    %p25 = scmp.eq.s32.totalorder %s9, 1
    %p26 = por %p24, %p25
    %p27 = scmp.ne.s32.totalorder %s19, %s22
    %p28 = scmp.eq.s32.totalorder %s9, 0
    %p29 = por %p27, %p28
    %p30 = scmp.ne.s32.totalorder %s19, %s22
    %p31 = scmp.eq.s32.totalorder %s14, 1
    %p32 = por %p30, %p31
    %p33 = scmp.ne.s32.totalorder %s22, %s23
    %p34 = scmp.eq.s32.totalorder %s14, 0
    %p35 = por %p33, %p34
    %p36 = scmp.ne.s32.totalorder %s22, %s23
    %p37 = scmp.eq.s32.totalorder %s15, 1
    %p38 = por %p36, %p37
    %p40 = scmp.ne.s32.totalorder %s23, %s39
    %p41 = scmp.eq.s32.totalorder %s15, 0
    %p42 = por %p40, %p41
    %s44 = sadd.s32 %s43, 1
    %p47 = scmp.eq.s32.totalorder %s9, 1
    %p48 = scmp.ne.s32.totalorder %s43, %s45
    %p49 = scmp.eq.s32.totalorder %s9, 0
    %p50 = por %p48, %p49
    %p51 = scmp.ne.s32.totalorder %s43, %s45
    %p52 = scmp.eq.s32.totalorder %s14, 1
    %p53 = por %p51, %p52
    %p54 = scmp.ne.s32.totalorder %s45, %s46
    %p55 = scmp.eq.s32.totalorder %s14, 0
    %p56 = por %p54, %p55
    %p57 = scmp.ne.s32.totalorder %s45, %s46
    %p58 = scmp.eq.s32.totalorder %s15, 1
    %p59 = por %p57, %p58
    %p61 = scmp.ne.s32.totalorder %s46, %s60
    %p62 = scmp.eq.s32.totalorder %s15, 0
    %p63 = por %p61, %p62
    %s65 = sadd.s32 %s64, 1
    %p68 = scmp.eq.s32.totalorder %s9, 1
    %p69 = scmp.ne.s32.totalorder %s64, %s66
    %p70 = scmp.eq.s32.totalorder %s9, 0
    %p71 = por %p69, %p70
    %p72 = scmp.ne.s32.totalorder %s64, %s66
    %p73 = scmp.eq.s32.totalorder %s14, 1
    %p74 = por %p72, %p73
    %p75 = scmp.ne.s32.totalorder %s66, %s67
    %p76 = scmp.eq.s32.totalorder %s14, 0
    %p77 = por %p75, %p76
    %p78 = scmp.ne.s32.totalorder %s66, %s67
    %p79 = scmp.eq.s32.totalorder %s15, 1
    %p80 = por %p78, %p79
    %p82 = scmp.ne.s32.totalorder %s67, %s81
    %p83 = scmp.eq.s32.totalorder %s15, 0
    %p84 = por %p82, %p83
    %s85 = ssub.s32 %s9, %s16
    %p86 = scmp.eq.s32.totalorder %s85, 0
    %s88 = sadd.s32 %s87, 1
    %s89 = scalar_select %p86, %s87, %s88
    %p92 = pneg %p86
    %p93 = scmp.eq.s32.totalorder %s9, 1
    %p94 = por %p92, %p93
    %p95 = scmp.ne.s32.totalorder %s87, %s90
    %p96 = scmp.eq.s32.totalorder %s9, 0
    %p97 = por %p95, %p96
    %p98 = scmp.ne.s32.totalorder %s87, %s90
    %p99 = scmp.eq.s32.totalorder %s14, 1
    %p100 = por %p98, %p99
    %p101 = scmp.ne.s32.totalorder %s90, %s91
    %p102 = scmp.eq.s32.totalorder %s14, 0
    %p103 = por %p101, %p102
    %p104 = scmp.ne.s32.totalorder %s90, %s91
    %p105 = scmp.eq.s32.totalorder %s15, 1
    %p106 = por %p104, %p105
    %p108 = scmp.ne.s32.totalorder %s91, %s107
    %p109 = scmp.eq.s32.totalorder %s15, 0
    %p110 = por %p108, %p109
    %p111 = scmp.le.s32.totalorder 1, %s9
    %p112 = scmp.lt.s32.totalorder %s9, 3
    %p113 = pnand %p111, %p112
    %p114 = pneg %p113
    // Predicated region
    $region9: #{rnet_forward.10} parent=5 // pred_check
      _
    $region10: #{rnet_forward.10} parent=5 // pred_check_branch
      %116 = sbr.rel (%p113) target = $region12
    $region11: #{rnet_forward.10} parent=5 // pred_region
      %s117 = ssub.s32 %s9, 1
      // Predicated region
      $region13: #{rnet_forward.10} parent=11 // pred_check
        %p118 = pneg %p56
      $region14: #{rnet_forward.10} parent=11 // pred_check_branch
        %120 = sbr.rel (%p118) target = $region16
      $region15: #{rnet_forward.10} parent=11 // pred_region
        _
      $region16: #{rnet_forward.10} parent=11 // pred_fallthru
        _
      // Predicated region
      $region17: #{rnet_forward.10} parent=11 // pred_check
        %p121 = pneg %p77
      $region18: #{rnet_forward.10} parent=11 // pred_check_branch
        %123 = sbr.rel (%p121) target = $region20
      $region19: #{rnet_forward.10} parent=11 // pred_region
        _
      $region20: #{rnet_forward.10} parent=11 // pred_fallthru
        _
    $region12: #{rnet_forward.10} parent=5 // pred_fallthru
      _
    %p124 = scmp.lt.s32.totalorder %s9, 2
    // Predicated region
    $region21: #{rnet_forward.10} parent=5 // pred_check
      %p125 = pneg %p124
    $region22: #{rnet_forward.10} parent=5 // pred_check_branch
      %127 = sbr.rel (%p125) target = $region24
    $region23: #{rnet_forward.10} parent=5 // pred_region
      // Predicated region
      $region25: #{rnet_forward.10} parent=23 // pred_check
        %p128 = pneg %p29
      $region26: #{rnet_forward.10} parent=23 // pred_check_branch
        %130 = sbr.rel (%p128) target = $region28
      $region27: #{rnet_forward.10} parent=23 // pred_region
        %s131 = smul.u32 8, %s9
        %p132 = scmp.lt.s32.totalorder %s131, 15
        %s133 = scalar_select %p132, %s131, 15
        %s134 = smul.addr %s133, 9
        %s135 = smul.addr %s134, 4
        %s136 = scalar_lea.vmem %s0, %s135
        %s137 = smul.u32 8, %s9
      $region28: #{rnet_forward.10} parent=23 // pred_fallthru
        _
    $region24: #{rnet_forward.10} parent=5 // pred_fallthru
      _
    %p138 = scmp.le.s32.totalorder 1, %s9
    %p139 = scmp.lt.s32.totalorder %s9, 3
    %p140 = pnand %p138, %p139
    %p141 = pneg %p140
    // Predicated region
    $region29: #{rnet_forward.10} parent=5 // pred_check
      _
    $region30: #{rnet_forward.10} parent=5 // pred_check_branch
      %143 = sbr.rel (%p140) target = $region32
    $region31: #{rnet_forward.10} parent=5 // pred_region
      %s144 = ssub.s32 %s9, 1
      %s145 = smul.u32 8, %s14
      %p146 = scmp.lt.s32.totalorder %s145, 15
      %s147 = scalar_select %p146, %s145, 15
      %s148 = smul.addr %s147, 9
      %s149 = smul.addr %s148, 4
      %s150 = scalar_lea.vmem %s0, %s149
      %p151 = pneg %p35
      %p152 = pneg %p32
      %p153 = pneg %p56
      %p154 = pneg %p53
      %p155 = pneg %p77
      %p156 = pneg %p74
      %p157 = pneg %p103
      %p158 = pneg %p100
      %s159 = smul.u32 8, %s14
      %p160 = scmp.lt.s32.totalorder %s159, 15
      %s161 = scalar_select %p160, %s159, 15
      %s162 = smul.addr %s161, 8
      %s163 = scalar_lea.vmem %s3, %s162
      %s164 = smul.u32 8, %s14
      %p165 = scmp.lt.s32.totalorder %s164, 15
      %s166 = scalar_select %p165, %s164, 15
      %s167 = smul.addr %s166, 9
      %s168 = smul.addr %s167, 4
      %s169 = scalar_lea.vmem %s0, %s168
      %s170 = smul.u32 8, %s14
      %s171 = smul.u32 8, %s14
      %p172 = scmp.lt.s32.totalorder %s171, 15
      %s173 = scalar_select %p172, %s171, 15
      %s174 = smul.addr %s173, 8
      %s175 = scalar_lea.vmem %s3, %s174
      %s176 = smul.u32 8, %s14
      %v177 = vld [vmem:[%s169] sm:$0xff]
      %v178 = vld [vmem:[%s169 + $0x8] sm:$0xff]
      %v179 = vld [vmem:[%s169 + $0x10] sm:$0xff]
      %v180 = vld [vmem:[%s169 + $0x18] sm:$0xff]
      %v181 = vld [vmem:[%s169 + $0x20] sm:$0xf]
      %v182 = vld [vmem:[%s169 + $0x24] sm:$0xff]
      %v183 = vld [vmem:[%s169 + $0x2c] sm:$0xff]
      %v184 = vld [vmem:[%s169 + $0x34] sm:$0xff]
      %v185 = vld [vmem:[%s169 + $0x3c] sm:$0xff]
      %v186 = vld [vmem:[%s169 + $0x44] sm:$0xf]
      %v187 = vld [vmem:[%s169 + $0x48] sm:$0xff]
      %v188 = vld [vmem:[%s169 + $0x50] sm:$0xff]
      %v189 = vld [vmem:[%s169 + $0x58] sm:$0xff]
      %v190 = vld [vmem:[%s169 + $0x60] sm:$0xff]
      %v191 = vld [vmem:[%s169 + $0x68] sm:$0xf]
      %v192 = vld [vmem:[%s169 + $0x6c] sm:$0xff]
      %v193 = vld [vmem:[%s169 + $0x74] sm:$0xff]
      %v194 = vld [vmem:[%s169 + $0x7c] sm:$0xff]
      %v195 = vld [vmem:[%s169 + $0x84] sm:$0xff]
      %v196 = vld [vmem:[%s169 + $0x8c] sm:$0xf]
      %v197 = vld [vmem:[%s169 + $0x90] sm:$0xff]
      %v198 = vld [vmem:[%s169 + $0x98] sm:$0xff]
      %v199 = vld [vmem:[%s169 + $0xa0] sm:$0xff]
      %v200 = vld [vmem:[%s169 + $0xa8] sm:$0xff]
      %v201 = vld [vmem:[%s169 + $0xb0] sm:$0xf]
      %v202 = vld [vmem:[%s169 + $0xb4] sm:$0xff]
      %v203 = vld [vmem:[%s169 + $0xbc] sm:$0xff]
      %v204 = vld [vmem:[%s169 + $0xc4] sm:$0xff]
      %v205 = vld [vmem:[%s169 + $0xcc] sm:$0xff]
      %v206 = vld [vmem:[%s169 + $0xd4] sm:$0xf]
      %v207 = vld [vmem:[%s169 + $0xd8] sm:$0xff]
      %v208 = vld [vmem:[%s169 + $0xe0] sm:$0xff]
      %v209 = vld [vmem:[%s169 + $0xe8] sm:$0xff]
      %v210 = vld [vmem:[%s169 + $0xf0] sm:$0xff]
      %v211 = vld [vmem:[%s169 + $0xf8] sm:$0xf]
      %v212 = vld [vmem:[%s169 + $0xfc] sm:$0xff]
      %v213 = vld [vmem:[%s169 + $0x104] sm:$0xff]
      %v214 = vld [vmem:[%s169 + $0x10c] sm:$0xff]
      %v215 = vld [vmem:[%s169 + $0x114] sm:$0xff]
      %v216 = vld [vmem:[%s169 + $0x11c] sm:$0xf]
      %v217 = vld [vmem:[%s1] sm:$0xf]
      %v218 = vld [vmem:[%s1 + $0x4] sm:$0xf]
      %v219 = vld [vmem:[%s1 + $0x8] sm:$0xf]
      %v220 = vld [vmem:[%s1 + $0xc] sm:$0xf]
      %v221 = vld [vmem:[%s1 + $0x10] sm:$0xf]
      %v222 = vld [vmem:[%s1 + $0x14] sm:$0xf]
      %v223 = vld [vmem:[%s1 + $0x18] sm:$0xf]
      %v224 = vld [vmem:[%s1 + $0x1c] sm:$0xf]
      %v225 = vld [vmem:[%s1 + $0x20] sm:$0xf]
      %v226 = vld [vmem:[%s1 + $0x24] sm:$0xf]
      %v227 = vld [vmem:[%s1 + $0x28] sm:$0xf]
      %v228 = vld [vmem:[%s1 + $0x2c] sm:$0xf]
      %v229 = vld [vmem:[%s1 + $0x30] sm:$0xf]
      %v230 = vld [vmem:[%s1 + $0x34] sm:$0xf]
      %v231 = vld [vmem:[%s1 + $0x38] sm:$0xf]
      %v232 = vld [vmem:[%s1 + $0x3c] sm:$0xf]
      %v233 = vld [vmem:[%s1 + $0x40] sm:$0xf]
      %v234 = vld [vmem:[%s1 + $0x44] sm:$0xf]
      %v235 = vld [vmem:[%s1 + $0x48] sm:$0xf]
      %v236 = vld [vmem:[%s1 + $0x4c] sm:$0xf]
      %v237 = vld [vmem:[%s1 + $0x50] sm:$0xf]
      %v238 = vld [vmem:[%s1 + $0x54] sm:$0xf]
      %v239 = vld [vmem:[%s1 + $0x58] sm:$0xf]
      %v240 = vld [vmem:[%s1 + $0x5c] sm:$0xf]
      %v241 = vld [vmem:[%s1 + $0x60] sm:$0xf]
      %v242 = vld [vmem:[%s1 + $0x64] sm:$0xf]
      %v243 = vld [vmem:[%s1 + $0x68] sm:$0xf]
      %v244 = vld [vmem:[%s1 + $0x6c] sm:$0xf]
      %v245 = vld [vmem:[%s1 + $0x70] sm:$0xf]
      %v246 = vld [vmem:[%s1 + $0x74] sm:$0xf]
      %v247 = vld [vmem:[%s1 + $0x78] sm:$0xf]
      %v248 = vld [vmem:[%s1 + $0x7c] sm:$0xf]
      %v249 = vld [vmem:[%s1 + $0x80] sm:$0xf]
      %v250 = vld [vmem:[%s1 + $0x84] sm:$0xf]
      %v251 = vld [vmem:[%s1 + $0x88] sm:$0xf]
      %v252 = vld [vmem:[%s1 + $0x8c] sm:$0xf]
      %v253 = vld [vmem:[%s1 + $0x90] sm:$0xf]
      %v254 = vld [vmem:[%s1 + $0x94] sm:$0xf]
      %v255 = vld [vmem:[%s1 + $0x98] sm:$0xf]
      %v256 = vld [vmem:[%s1 + $0x9c] sm:$0xf]
      %v257 = vld [vmem:[%s1 + $0xa0] sm:$0xf]
      %v258 = vld [vmem:[%s1 + $0xa4] sm:$0xf]
      %v259 = vld [vmem:[%s1 + $0xa8] sm:$0xf]
      %v260 = vld [vmem:[%s1 + $0xac] sm:$0xf]
      %v261 = vld [vmem:[%s1 + $0xb0] sm:$0xf]
      %v262 = vld [vmem:[%s1 + $0xb4] sm:$0xf]
      %v263 = vld [vmem:[%s1 + $0xb8] sm:$0xf]
      %v264 = vld [vmem:[%s1 + $0xbc] sm:$0xf]
      %v265 = vld [vmem:[%s1 + $0xc0] sm:$0xf]
      %v266 = vld [vmem:[%s1 + $0xc4] sm:$0xf]
      %v267 = vld [vmem:[%s1 + $0xc8] sm:$0xf]
      %v268 = vld [vmem:[%s1 + $0xcc] sm:$0xf]
      %v269 = vld [vmem:[%s1 + $0xd0] sm:$0xf]
      %v270 = vld [vmem:[%s1 + $0xd4] sm:$0xf]
      %v271 = vld [vmem:[%s1 + $0xd8] sm:$0xf]
      %v272 = vld [vmem:[%s1 + $0xdc] sm:$0xf]
      %v273 = vld [vmem:[%s1 + $0xe0] sm:$0xf]
      %v274 = vld [vmem:[%s1 + $0xe4] sm:$0xf]
      %v275 = vld [vmem:[%s1 + $0xe8] sm:$0xf]
      %v276 = vld [vmem:[%s1 + $0xec] sm:$0xf]
      %v277 = vld [vmem:[%s1 + $0xf0] sm:$0xf]
      %v278 = vld [vmem:[%s1 + $0xf4] sm:$0xf]
      %v279 = vld [vmem:[%s1 + $0xf8] sm:$0xf]
      %v280 = vld [vmem:[%s1 + $0xfc] sm:$0xf]
      %v281 = vld [vmem:[%s1 + $0x100] sm:$0xf]
      %v282 = vld [vmem:[%s1 + $0x104] sm:$0xf]
      %v283 = vld [vmem:[%s1 + $0x108] sm:$0xf]
      %v284 = vld [vmem:[%s1 + $0x10c] sm:$0xf]
      %v285 = vld [vmem:[%s1 + $0x110] sm:$0xf]
      %v286 = vld [vmem:[%s1 + $0x114] sm:$0xf]
      %v287 = vld [vmem:[%s1 + $0x118] sm:$0xf]
      %v288 = vld [vmem:[%s1 + $0x11c] sm:$0xf]
      %v289 = vld [vmem:[%s1 + $0x120] sm:$0xf]
      %v290 = vld [vmem:[%s1 + $0x124] sm:$0xf]
      %v291 = vld [vmem:[%s1 + $0x128] sm:$0xf]
      %v292 = vld [vmem:[%s1 + $0x12c] sm:$0xf]
      %v293 = vld [vmem:[%s1 + $0x130] sm:$0xf]
      %v294 = vld [vmem:[%s1 + $0x134] sm:$0xf]
      %v295 = vld [vmem:[%s1 + $0x138] sm:$0xf]
      %v296 = vld [vmem:[%s1 + $0x13c] sm:$0xf]
      %v297 = vld [vmem:[%s1 + $0x140] sm:$0xf]
      %v298 = vld [vmem:[%s1 + $0x144] sm:$0xf]
      %v299 = vld [vmem:[%s1 + $0x148] sm:$0xf]
      %v300 = vld [vmem:[%s1 + $0x14c] sm:$0xf]
      %v301 = vld [vmem:[%s1 + $0x150] sm:$0xf]
      %v302 = vld [vmem:[%s1 + $0x154] sm:$0xf]
      %v303 = vld [vmem:[%s1 + $0x158] sm:$0xf]
      %v304 = vld [vmem:[%s1 + $0x15c] sm:$0xf]
      %v305 = vld [vmem:[%s1 + $0x160] sm:$0xf]
      %v306 = vld [vmem:[%s1 + $0x164] sm:$0xf]
      %v307 = vld [vmem:[%s1 + $0x168] sm:$0xf]
      %v308 = vld [vmem:[%s1 + $0x16c] sm:$0xf]
      %v309 = vld [vmem:[%s1 + $0x170] sm:$0xf]
      %v310 = vld [vmem:[%s1 + $0x174] sm:$0xf]
      %v311 = vld [vmem:[%s1 + $0x178] sm:$0xf]
      %v312 = vld [vmem:[%s1 + $0x17c] sm:$0xf]
      %v313 = vld [vmem:[%s1 + $0x180] sm:$0xf]
      %v314 = vld [vmem:[%s1 + $0x184] sm:$0xf]
      %v315 = vld [vmem:[%s1 + $0x188] sm:$0xf]
      %v316 = vld [vmem:[%s1 + $0x18c] sm:$0xf]
      %v317 = vld [vmem:[%s1 + $0x190] sm:$0xf]
      %v318 = vld [vmem:[%s1 + $0x194] sm:$0xf]
      %v319 = vld [vmem:[%s1 + $0x198] sm:$0xf]
      %v320 = vld [vmem:[%s1 + $0x19c] sm:$0xf]
      %v321 = vld [vmem:[%s1 + $0x1a0] sm:$0xf]
      %v322 = vld [vmem:[%s1 + $0x1a4] sm:$0xf]
      %v323 = vld [vmem:[%s1 + $0x1a8] sm:$0xf]
      %v324 = vld [vmem:[%s1 + $0x1ac] sm:$0xf]
      %v325 = vld [vmem:[%s1 + $0x1b0] sm:$0xf]
      %v326 = vld [vmem:[%s1 + $0x1b4] sm:$0xf]
      %v327 = vld [vmem:[%s1 + $0x1b8] sm:$0xf]
      %v328 = vld [vmem:[%s1 + $0x1bc] sm:$0xf]
      %v329 = vld [vmem:[%s1 + $0x1c0] sm:$0xf]
      %v330 = vld [vmem:[%s1 + $0x1c4] sm:$0xf]
      %v331 = vld [vmem:[%s1 + $0x1c8] sm:$0xf]
      %v332 = vld [vmem:[%s1 + $0x1cc] sm:$0xf]
      %v333 = vld [vmem:[%s1 + $0x1d0] sm:$0xf]
      %v334 = vld [vmem:[%s1 + $0x1d4] sm:$0xf]
      %v335 = vld [vmem:[%s1 + $0x1d8] sm:$0xf]
      %v336 = vld [vmem:[%s1 + $0x1dc] sm:$0xf]
      %v337 = vld [vmem:[%s1 + $0x1e0] sm:$0xf]
      %v338 = vld [vmem:[%s1 + $0x1e4] sm:$0xf]
      %v339 = vld [vmem:[%s1 + $0x1e8] sm:$0xf]
      %v340 = vld [vmem:[%s1 + $0x1ec] sm:$0xf]
      %v341 = vld [vmem:[%s1 + $0x1f0] sm:$0xf]
      %v342 = vld [vmem:[%s1 + $0x1f4] sm:$0xf]
      %v343 = vld [vmem:[%s1 + $0x1f8] sm:$0xf]
      %v344 = vld [vmem:[%s1 + $0x1fc] sm:$0xf]
      %v345 = vld [vmem:[%s1 + $0x200] sm:$0xf]
      %v346 = vld [vmem:[%s1 + $0x204] sm:$0xf]
      %v347 = vld [vmem:[%s1 + $0x208] sm:$0xf]
      %v348 = vld [vmem:[%s1 + $0x20c] sm:$0xf]
      %v349 = vld [vmem:[%s1 + $0x210] sm:$0xf]
      %v350 = vld [vmem:[%s1 + $0x214] sm:$0xf]
      %v351 = vld [vmem:[%s1 + $0x218] sm:$0xf]
      %v352 = vld [vmem:[%s1 + $0x21c] sm:$0xf]
      %v353 = vld [vmem:[%s1 + $0x220] sm:$0xf]
      %v354 = vld [vmem:[%s1 + $0x224] sm:$0xf]
      %v355 = vld [vmem:[%s1 + $0x228] sm:$0xf]
      %v356 = vld [vmem:[%s1 + $0x22c] sm:$0xf]
      %v357 = vld [vmem:[%s1 + $0x230] sm:$0xf]
      %v358 = vld [vmem:[%s1 + $0x234] sm:$0xf]
      %v359 = vld [vmem:[%s1 + $0x238] sm:$0xf]
      %v360 = vld [vmem:[%s1 + $0x23c] sm:$0xf]
      %v361 = vld [vmem:[%s2] sm:$0x1]
      %v363 = vperm.slane %v361, 0
      %v405 = vunpack.c.l.b16 %v177
      %v406 = vunpack.c.h.b16 %v177
      %v407 = vunpack.c.l.b16 %v178
      %v408 = vunpack.c.h.b16 %v178
      %v409 = vunpack.c.l.b16 %v179
      %v410 = vunpack.c.h.b16 %v179
      %v411 = vunpack.c.l.b16 %v180
      %v412 = vunpack.c.h.b16 %v180
      %v413 = vunpack.c.l.b16 %v181
      %v414 = vunpack.c.l.b16 %v182
      %v415 = vunpack.c.h.b16 %v182
      %v416 = vunpack.c.l.b16 %v183
      %v417 = vunpack.c.h.b16 %v183
      %v418 = vunpack.c.l.b16 %v184
      %v419 = vunpack.c.h.b16 %v184
      %v420 = vunpack.c.l.b16 %v185
      %v421 = vunpack.c.h.b16 %v185
      %v422 = vunpack.c.l.b16 %v186
      %v423 = vunpack.c.l.b16 %v187
      %v424 = vunpack.c.h.b16 %v187
      %v425 = vunpack.c.l.b16 %v188
      %v426 = vunpack.c.h.b16 %v188
      %v427 = vunpack.c.l.b16 %v189
      %v428 = vunpack.c.h.b16 %v189
      %v429 = vunpack.c.l.b16 %v190
      %v430 = vunpack.c.h.b16 %v190
      %v431 = vunpack.c.l.b16 %v191
      %v432 = vunpack.c.l.b16 %v192
      %v433 = vunpack.c.h.b16 %v192
      %v434 = vunpack.c.l.b16 %v193
      %v435 = vunpack.c.h.b16 %v193
      %v436 = vunpack.c.l.b16 %v194
      %v437 = vunpack.c.h.b16 %v194
      %v438 = vunpack.c.l.b16 %v195
      %v439 = vunpack.c.h.b16 %v195
      %v440 = vunpack.c.l.b16 %v196
      %v441 = vunpack.c.l.b16 %v197
      %v442 = vunpack.c.h.b16 %v197
      %v443 = vunpack.c.l.b16 %v198
      %v444 = vunpack.c.h.b16 %v198
      %v445 = vunpack.c.l.b16 %v199
      %v446 = vunpack.c.h.b16 %v199
      %v447 = vunpack.c.l.b16 %v200
      %v448 = vunpack.c.h.b16 %v200
      %v449 = vunpack.c.l.b16 %v201
      %v450 = vunpack.c.l.b16 %v202
      %v451 = vunpack.c.h.b16 %v202
      %v452 = vunpack.c.l.b16 %v203
      %v453 = vunpack.c.h.b16 %v203
      %v454 = vunpack.c.l.b16 %v204
      %v455 = vunpack.c.h.b16 %v204
      %v456 = vunpack.c.l.b16 %v205
      %v457 = vunpack.c.h.b16 %v205
      %v458 = vunpack.c.l.b16 %v206
      %v459 = vunpack.c.l.b16 %v207
      %v460 = vunpack.c.h.b16 %v207
      %v461 = vunpack.c.l.b16 %v208
      %v462 = vunpack.c.h.b16 %v208
      %v463 = vunpack.c.l.b16 %v209
      %v464 = vunpack.c.h.b16 %v209
      %v465 = vunpack.c.l.b16 %v210
      %v466 = vunpack.c.h.b16 %v210
      %v467 = vunpack.c.l.b16 %v211
      %v468 = vunpack.c.l.b16 %v212
      %v469 = vunpack.c.h.b16 %v212
      %v470 = vunpack.c.l.b16 %v213
      %v471 = vunpack.c.h.b16 %v213
      %v472 = vunpack.c.l.b16 %v214
      %v473 = vunpack.c.h.b16 %v214
      %v474 = vunpack.c.l.b16 %v215
      %v475 = vunpack.c.h.b16 %v215
      %v476 = vunpack.c.l.b16 %v216
      %v477 = vpack.c.b16 %v414, %v405
      %v478 = vpack.c.b16 %v415, %v406
      %v479 = vpack.c.b16 %v416, %v407
      %v480 = vpack.c.b16 %v417, %v408
      %v481 = vpack.c.b16 %v418, %v409
      %v482 = vpack.c.b16 %v419, %v410
      %v483 = vpack.c.b16 %v420, %v411
      %v484 = vpack.c.b16 %v421, %v412
      %v485 = vpack.c.b16 %v422, %v413
      %v486 = vpack.c.b16 %v432, %v423
      %v487 = vpack.c.b16 %v433, %v424
      %v488 = vpack.c.b16 %v434, %v425
      %v489 = vpack.c.b16 %v435, %v426
      %v490 = vpack.c.b16 %v436, %v427
      %v491 = vpack.c.b16 %v437, %v428
      %v492 = vpack.c.b16 %v438, %v429
      %v493 = vpack.c.b16 %v439, %v430
      %v494 = vpack.c.b16 %v440, %v431
      %v495 = vpack.c.b16 %v450, %v441
      %v496 = vpack.c.b16 %v451, %v442
      %v497 = vpack.c.b16 %v452, %v443
      %v498 = vpack.c.b16 %v453, %v444
      %v499 = vpack.c.b16 %v454, %v445
      %v500 = vpack.c.b16 %v455, %v446
      %v501 = vpack.c.b16 %v456, %v447
      %v502 = vpack.c.b16 %v457, %v448
      %v503 = vpack.c.b16 %v458, %v449
      %v504 = vpack.c.b16 %v468, %v459
      %v505 = vpack.c.b16 %v469, %v460
      %v506 = vpack.c.b16 %v470, %v461
      %v507 = vpack.c.b16 %v471, %v462
      %v508 = vpack.c.b16 %v472, %v463
      %v509 = vpack.c.b16 %v473, %v464
      %v510 = vpack.c.b16 %v474, %v465
      %v511 = vpack.c.b16 %v475, %v466
      %v512 = vpack.c.b16 %v476, %v467
      %v693 = vunpack.c.l.b16 %v217
      %v694 = vunpack.c.l.b16 %v218
      %v695 = vunpack.c.l.b16 %v219
      %v696 = vunpack.c.l.b16 %v220
      %v697 = vunpack.c.l.b16 %v221
      %v698 = vunpack.c.l.b16 %v222
      %v699 = vunpack.c.l.b16 %v223
      %v700 = vunpack.c.l.b16 %v224
      %v701 = vunpack.c.l.b16 %v225
      %v702 = vunpack.c.l.b16 %v226
      %v703 = vunpack.c.l.b16 %v227
      %v704 = vunpack.c.l.b16 %v228
      %v705 = vunpack.c.l.b16 %v229
      %v706 = vunpack.c.l.b16 %v230
      %v707 = vunpack.c.l.b16 %v231
      %v708 = vunpack.c.l.b16 %v232
      %v709 = vunpack.c.l.b16 %v233
      %v710 = vunpack.c.l.b16 %v234
      %v711 = vunpack.c.l.b16 %v235
      %v712 = vunpack.c.l.b16 %v236
      %v713 = vunpack.c.l.b16 %v237
      %v714 = vunpack.c.l.b16 %v238
      %v715 = vunpack.c.l.b16 %v239
      %v716 = vunpack.c.l.b16 %v240
      %v717 = vunpack.c.l.b16 %v241
      %v718 = vunpack.c.l.b16 %v242
      %v719 = vunpack.c.l.b16 %v243
      %v720 = vunpack.c.l.b16 %v244
      %v721 = vunpack.c.l.b16 %v245
      %v722 = vunpack.c.l.b16 %v246
      %v723 = vunpack.c.l.b16 %v247
      %v724 = vunpack.c.l.b16 %v248
      %v725 = vunpack.c.l.b16 %v249
      %v726 = vunpack.c.l.b16 %v250
      %v727 = vunpack.c.l.b16 %v251
      %v728 = vunpack.c.l.b16 %v252
      %v729 = vunpack.c.l.b16 %v253
      %v730 = vunpack.c.l.b16 %v254
      %v731 = vunpack.c.l.b16 %v255
      %v732 = vunpack.c.l.b16 %v256
      %v733 = vunpack.c.l.b16 %v257
      %v734 = vunpack.c.l.b16 %v258
      %v735 = vunpack.c.l.b16 %v259
      %v736 = vunpack.c.l.b16 %v260
      %v737 = vunpack.c.l.b16 %v261
      %v738 = vunpack.c.l.b16 %v262
      %v739 = vunpack.c.l.b16 %v263
      %v740 = vunpack.c.l.b16 %v264
      %v741 = vunpack.c.l.b16 %v265
      %v742 = vunpack.c.l.b16 %v266
      %v743 = vunpack.c.l.b16 %v267
      %v744 = vunpack.c.l.b16 %v268
      %v745 = vunpack.c.l.b16 %v269
      %v746 = vunpack.c.l.b16 %v270
      %v747 = vunpack.c.l.b16 %v271
      %v748 = vunpack.c.l.b16 %v272
      %v749 = vunpack.c.l.b16 %v273
      %v750 = vunpack.c.l.b16 %v274
      %v751 = vunpack.c.l.b16 %v275
      %v752 = vunpack.c.l.b16 %v276
      %v753 = vunpack.c.l.b16 %v277
      %v754 = vunpack.c.l.b16 %v278
      %v755 = vunpack.c.l.b16 %v279
      %v756 = vunpack.c.l.b16 %v280
      %v757 = vunpack.c.l.b16 %v281
      %v758 = vunpack.c.l.b16 %v282
      %v759 = vunpack.c.l.b16 %v283
      %v760 = vunpack.c.l.b16 %v284
      %v761 = vunpack.c.l.b16 %v285
      %v762 = vunpack.c.l.b16 %v286
      %v763 = vunpack.c.l.b16 %v287
      %v764 = vunpack.c.l.b16 %v288
      %v765 = vunpack.c.l.b16 %v289
      %v766 = vunpack.c.l.b16 %v290
      %v767 = vunpack.c.l.b16 %v291
      %v768 = vunpack.c.l.b16 %v292
      %v769 = vunpack.c.l.b16 %v293
      %v770 = vunpack.c.l.b16 %v294
      %v771 = vunpack.c.l.b16 %v295
      %v772 = vunpack.c.l.b16 %v296
      %v773 = vunpack.c.l.b16 %v297
      %v774 = vunpack.c.l.b16 %v298
      %v775 = vunpack.c.l.b16 %v299
      %v776 = vunpack.c.l.b16 %v300
      %v777 = vunpack.c.l.b16 %v301
      %v778 = vunpack.c.l.b16 %v302
      %v779 = vunpack.c.l.b16 %v303
      %v780 = vunpack.c.l.b16 %v304
      %v781 = vunpack.c.l.b16 %v305
      %v782 = vunpack.c.l.b16 %v306
      %v783 = vunpack.c.l.b16 %v307
      %v784 = vunpack.c.l.b16 %v308
      %v785 = vunpack.c.l.b16 %v309
      %v786 = vunpack.c.l.b16 %v310
      %v787 = vunpack.c.l.b16 %v311
      %v788 = vunpack.c.l.b16 %v312
      %v789 = vunpack.c.l.b16 %v313
      %v790 = vunpack.c.l.b16 %v314
      %v791 = vunpack.c.l.b16 %v315
      %v792 = vunpack.c.l.b16 %v316
      %v793 = vunpack.c.l.b16 %v317
      %v794 = vunpack.c.l.b16 %v318
      %v795 = vunpack.c.l.b16 %v319
      %v796 = vunpack.c.l.b16 %v320
      %v797 = vunpack.c.l.b16 %v321
      %v798 = vunpack.c.l.b16 %v322
      %v799 = vunpack.c.l.b16 %v323
      %v800 = vunpack.c.l.b16 %v324
      %v801 = vunpack.c.l.b16 %v325
      %v802 = vunpack.c.l.b16 %v326
      %v803 = vunpack.c.l.b16 %v327
      %v804 = vunpack.c.l.b16 %v328
      %v805 = vunpack.c.l.b16 %v329
      %v806 = vunpack.c.l.b16 %v330
      %v807 = vunpack.c.l.b16 %v331
      %v808 = vunpack.c.l.b16 %v332
      %v809 = vunpack.c.l.b16 %v333
      %v810 = vunpack.c.l.b16 %v334
      %v811 = vunpack.c.l.b16 %v335
      %v812 = vunpack.c.l.b16 %v336
      %v813 = vunpack.c.l.b16 %v337
      %v814 = vunpack.c.l.b16 %v338
      %v815 = vunpack.c.l.b16 %v339
      %v816 = vunpack.c.l.b16 %v340
      %v817 = vunpack.c.l.b16 %v341
      %v818 = vunpack.c.l.b16 %v342
      %v819 = vunpack.c.l.b16 %v343
      %v820 = vunpack.c.l.b16 %v344
      %v821 = vunpack.c.l.b16 %v345
      %v822 = vunpack.c.l.b16 %v346
      %v823 = vunpack.c.l.b16 %v347
      %v824 = vunpack.c.l.b16 %v348
      %v825 = vunpack.c.l.b16 %v349
      %v826 = vunpack.c.l.b16 %v350
      %v827 = vunpack.c.l.b16 %v351
      %v828 = vunpack.c.l.b16 %v352
      %v829 = vunpack.c.l.b16 %v353
      %v830 = vunpack.c.l.b16 %v354
      %v831 = vunpack.c.l.b16 %v355
      %v832 = vunpack.c.l.b16 %v356
      %v833 = vunpack.c.l.b16 %v357
      %v834 = vunpack.c.l.b16 %v358
      %v835 = vunpack.c.l.b16 %v359
      %v836 = vunpack.c.l.b16 %v360
      %v837 = vpack.c.b16 %v694, %v693
      %v838 = vpack.c.b16 %v696, %v695
      %v839 = vpack.c.b16 %v698, %v697
      %v840 = vpack.c.b16 %v700, %v699
      %v841 = vpack.c.b16 %v702, %v701
      %v842 = vpack.c.b16 %v704, %v703
      %v843 = vpack.c.b16 %v706, %v705
      %v844 = vpack.c.b16 %v708, %v707
      %v845 = vpack.c.b16 %v710, %v709
      %v846 = vpack.c.b16 %v712, %v711
      %v847 = vpack.c.b16 %v714, %v713
      %v848 = vpack.c.b16 %v716, %v715
      %v849 = vpack.c.b16 %v718, %v717
      %v850 = vpack.c.b16 %v720, %v719
      %v851 = vpack.c.b16 %v722, %v721
      %v852 = vpack.c.b16 %v724, %v723
      %v853 = vpack.c.b16 %v726, %v725
      %v854 = vpack.c.b16 %v728, %v727
      %v855 = vpack.c.b16 %v730, %v729
      %v856 = vpack.c.b16 %v732, %v731
      %v857 = vpack.c.b16 %v734, %v733
      %v858 = vpack.c.b16 %v736, %v735
      %v859 = vpack.c.b16 %v738, %v737
      %v860 = vpack.c.b16 %v740, %v739
      %v861 = vpack.c.b16 %v742, %v741
      %v862 = vpack.c.b16 %v744, %v743
      %v863 = vpack.c.b16 %v746, %v745
      %v864 = vpack.c.b16 %v748, %v747
      %v865 = vpack.c.b16 %v750, %v749
      %v866 = vpack.c.b16 %v752, %v751
      %v867 = vpack.c.b16 %v754, %v753
      %v868 = vpack.c.b16 %v756, %v755
      %v869 = vpack.c.b16 %v758, %v757
      %v870 = vpack.c.b16 %v760, %v759
      %v871 = vpack.c.b16 %v762, %v761
      %v872 = vpack.c.b16 %v764, %v763
      %v873 = vpack.c.b16 %v766, %v765
      %v874 = vpack.c.b16 %v768, %v767
      %v875 = vpack.c.b16 %v770, %v769
      %v876 = vpack.c.b16 %v772, %v771
      %v877 = vpack.c.b16 %v774, %v773
      %v878 = vpack.c.b16 %v776, %v775
      %v879 = vpack.c.b16 %v778, %v777
      %v880 = vpack.c.b16 %v780, %v779
      %v881 = vpack.c.b16 %v782, %v781
      %v882 = vpack.c.b16 %v784, %v783
      %v883 = vpack.c.b16 %v786, %v785
      %v884 = vpack.c.b16 %v788, %v787
      %v885 = vpack.c.b16 %v790, %v789
      %v886 = vpack.c.b16 %v792, %v791
      %v887 = vpack.c.b16 %v794, %v793
      %v888 = vpack.c.b16 %v796, %v795
      %v889 = vpack.c.b16 %v798, %v797
      %v890 = vpack.c.b16 %v800, %v799
      %v891 = vpack.c.b16 %v802, %v801
      %v892 = vpack.c.b16 %v804, %v803
      %v893 = vpack.c.b16 %v806, %v805
      %v894 = vpack.c.b16 %v808, %v807
      %v895 = vpack.c.b16 %v810, %v809
      %v896 = vpack.c.b16 %v812, %v811
      %v897 = vpack.c.b16 %v814, %v813
      %v898 = vpack.c.b16 %v816, %v815
      %v899 = vpack.c.b16 %v818, %v817
      %v900 = vpack.c.b16 %v820, %v819
      %v901 = vpack.c.b16 %v822, %v821
      %v902 = vpack.c.b16 %v824, %v823
      %v903 = vpack.c.b16 %v826, %v825
      %v904 = vpack.c.b16 %v828, %v827
      %v905 = vpack.c.b16 %v830, %v829
      %v906 = vpack.c.b16 %v832, %v831
      %v907 = vpack.c.b16 %v834, %v833
      %v908 = vpack.c.b16 %v836, %v835
      %981 = vmatpush.bf16.msra.mxu0 %v844
      %982 = vmatpush.bf16.msra.mxu0 %v843
      %983 = vmatpush.bf16.msra.mxu0 %v842
      %984 = vmatpush.bf16.msra.mxu0 %v841
      %985 = vmatpush.bf16.msra.mxu0 %v840
      %986 = vmatpush.bf16.msra.mxu0 %v839
      %987 = vmatpush.bf16.msra.mxu0 %v838
      %988 = vmatpush.bf16.msra.mxu0 %v837
      %989 = vmatmul.bf16.gmra.mxu0 %v477
      %v990 = vpop.f32.mrf.mxu0
      %v991 = vadd.f32 %v363, %v990
      %v992 = vpop.f32.mrf.mxu0
      %v993 = vadd.f32 %v363, %v992
      %994 = vmatmul.bf16.gmra.mxu0 %v486
      %v995 = vpop.f32.mrf.mxu0
      %v996 = vadd.f32 %v363, %v995
      %v997 = vpop.f32.mrf.mxu0
      %v998 = vadd.f32 %v363, %v997
      %999 = vmatmul.bf16.gmra.mxu0 %v495
      %v1000 = vpop.f32.mrf.mxu0
      %v1001 = vadd.f32 %v363, %v1000
      %v1002 = vpop.f32.mrf.mxu0
      %v1003 = vadd.f32 %v363, %v1002
      %1004 = vmatmul.bf16.gmra.mxu0 %v504
      %v1005 = vpop.f32.mrf.mxu0
      %v1006 = vadd.f32 %v363, %v1005
      %v1007 = vpop.f32.mrf.mxu0
      %v1008 = vadd.f32 %v363, %v1007
      %1009 = vdwg.mxu0
      %1010 = vmatpush.bf16.msra.mxu0 %v852
      %1011 = vmatpush.bf16.msra.mxu0 %v851
      %1012 = vmatpush.bf16.msra.mxu0 %v850
      %1013 = vmatpush.bf16.msra.mxu0 %v849
      %1014 = vmatpush.bf16.msra.mxu0 %v848
      %1015 = vmatpush.bf16.msra.mxu0 %v847
      %1016 = vmatpush.bf16.msra.mxu0 %v846
      %1017 = vmatpush.bf16.msra.mxu0 %v845
      %1018 = vmatmul.bf16.gmra.mxu0 %v478
      %v1019 = vpop.f32.mrf.mxu0
      %v1020 = vadd.f32 %v991, %v1019
      %v1021 = vpop.f32.mrf.mxu0
      %v1022 = vadd.f32 %v993, %v1021
      %1023 = vmatmul.bf16.gmra.mxu0 %v487
      %v1024 = vpop.f32.mrf.mxu0
      %v1025 = vadd.f32 %v996, %v1024
      %v1026 = vpop.f32.mrf.mxu0
      %v1027 = vadd.f32 %v998, %v1026
      %1028 = vmatmul.bf16.gmra.mxu0 %v496
      %v1029 = vpop.f32.mrf.mxu0
      %v1030 = vadd.f32 %v1001, %v1029
      %v1031 = vpop.f32.mrf.mxu0
      %v1032 = vadd.f32 %v1003, %v1031
      %1033 = vmatmul.bf16.gmra.mxu0 %v505
      %v1034 = vpop.f32.mrf.mxu0
      %v1035 = vadd.f32 %v1006, %v1034
      %v1036 = vpop.f32.mrf.mxu0
      %v1037 = vadd.f32 %v1008, %v1036
      %1038 = vdwg.mxu0
      %1039 = vmatpush.bf16.msra.mxu0 %v860
      %1040 = vmatpush.bf16.msra.mxu0 %v859
      %1041 = vmatpush.bf16.msra.mxu0 %v858
      %1042 = vmatpush.bf16.msra.mxu0 %v857
      %1043 = vmatpush.bf16.msra.mxu0 %v856
      %1044 = vmatpush.bf16.msra.mxu0 %v855
      %1045 = vmatpush.bf16.msra.mxu0 %v854
      %1046 = vmatpush.bf16.msra.mxu0 %v853
      %1047 = vmatmul.bf16.gmra.mxu0 %v479
      %v1048 = vpop.f32.mrf.mxu0
      %v1049 = vadd.f32 %v1020, %v1048
      %v1050 = vpop.f32.mrf.mxu0
      %v1051 = vadd.f32 %v1022, %v1050
      %1052 = vmatmul.bf16.gmra.mxu0 %v488
      %v1053 = vpop.f32.mrf.mxu0
      %v1054 = vadd.f32 %v1025, %v1053
      %v1055 = vpop.f32.mrf.mxu0
      %v1056 = vadd.f32 %v1027, %v1055
      %1057 = vmatmul.bf16.gmra.mxu0 %v497
      %v1058 = vpop.f32.mrf.mxu0
      %v1059 = vadd.f32 %v1030, %v1058
      %v1060 = vpop.f32.mrf.mxu0
      %v1061 = vadd.f32 %v1032, %v1060
      %1062 = vmatmul.bf16.gmra.mxu0 %v506
      %v1063 = vpop.f32.mrf.mxu0
      %v1064 = vadd.f32 %v1035, %v1063
      %v1065 = vpop.f32.mrf.mxu0
      %v1066 = vadd.f32 %v1037, %v1065
      %1067 = vdwg.mxu0
      %1068 = vmatpush.bf16.msra.mxu0 %v868
      %1069 = vmatpush.bf16.msra.mxu0 %v867
      %1070 = vmatpush.bf16.msra.mxu0 %v866
      %1071 = vmatpush.bf16.msra.mxu0 %v865
      %1072 = vmatpush.bf16.msra.mxu0 %v864
      %1073 = vmatpush.bf16.msra.mxu0 %v863
      %1074 = vmatpush.bf16.msra.mxu0 %v862
      %1075 = vmatpush.bf16.msra.mxu0 %v861
      %1076 = vmatmul.bf16.gmra.mxu0 %v480
      %v1077 = vpop.f32.mrf.mxu0
      %v1078 = vadd.f32 %v1049, %v1077
      %v1079 = vpop.f32.mrf.mxu0
      %v1080 = vadd.f32 %v1051, %v1079
      %1081 = vmatmul.bf16.gmra.mxu0 %v489
      %v1082 = vpop.f32.mrf.mxu0
      %v1083 = vadd.f32 %v1054, %v1082
      %v1084 = vpop.f32.mrf.mxu0
      %v1085 = vadd.f32 %v1056, %v1084
      %1086 = vmatmul.bf16.gmra.mxu0 %v498
      %v1087 = vpop.f32.mrf.mxu0
      %v1088 = vadd.f32 %v1059, %v1087
      %v1089 = vpop.f32.mrf.mxu0
      %v1090 = vadd.f32 %v1061, %v1089
      %1091 = vmatmul.bf16.gmra.mxu0 %v507
      %v1092 = vpop.f32.mrf.mxu0
      %v1093 = vadd.f32 %v1064, %v1092
      %v1094 = vpop.f32.mrf.mxu0
      %v1095 = vadd.f32 %v1066, %v1094
      %1096 = vdwg.mxu0
      %1097 = vmatpush.bf16.msra.mxu0 %v876
      %1098 = vmatpush.bf16.msra.mxu0 %v875
      %1099 = vmatpush.bf16.msra.mxu0 %v874
      %1100 = vmatpush.bf16.msra.mxu0 %v873
      %1101 = vmatpush.bf16.msra.mxu0 %v872
      %1102 = vmatpush.bf16.msra.mxu0 %v871
      %1103 = vmatpush.bf16.msra.mxu0 %v870
      %1104 = vmatpush.bf16.msra.mxu0 %v869
      %1105 = vmatmul.bf16.gmra.mxu0 %v481
      %v1106 = vpop.f32.mrf.mxu0
      %v1107 = vadd.f32 %v1078, %v1106
      %v1108 = vpop.f32.mrf.mxu0
      %v1109 = vadd.f32 %v1080, %v1108
      %1110 = vmatmul.bf16.gmra.mxu0 %v490
      %v1111 = vpop.f32.mrf.mxu0
      %v1112 = vadd.f32 %v1083, %v1111
      %v1113 = vpop.f32.mrf.mxu0
      %v1114 = vadd.f32 %v1085, %v1113
      %1115 = vmatmul.bf16.gmra.mxu0 %v499
      %v1116 = vpop.f32.mrf.mxu0
      %v1117 = vadd.f32 %v1088, %v1116
      %v1118 = vpop.f32.mrf.mxu0
      %v1119 = vadd.f32 %v1090, %v1118
      %1120 = vmatmul.bf16.gmra.mxu0 %v508
      %v1121 = vpop.f32.mrf.mxu0
      %v1122 = vadd.f32 %v1093, %v1121
      %v1123 = vpop.f32.mrf.mxu0
      %v1124 = vadd.f32 %v1095, %v1123
      %1125 = vdwg.mxu0
      %1126 = vmatpush.bf16.msra.mxu0 %v884
      %1127 = vmatpush.bf16.msra.mxu0 %v883
      %1128 = vmatpush.bf16.msra.mxu0 %v882
      %1129 = vmatpush.bf16.msra.mxu0 %v881
      %1130 = vmatpush.bf16.msra.mxu0 %v880
      %1131 = vmatpush.bf16.msra.mxu0 %v879
      %1132 = vmatpush.bf16.msra.mxu0 %v878
      %1133 = vmatpush.bf16.msra.mxu0 %v877
      %1134 = vmatmul.bf16.gmra.mxu0 %v482
      %v1135 = vpop.f32.mrf.mxu0
      %v1136 = vadd.f32 %v1107, %v1135
      %v1137 = vpop.f32.mrf.mxu0
      %v1138 = vadd.f32 %v1109, %v1137
      %1139 = vmatmul.bf16.gmra.mxu0 %v491
      %v1140 = vpop.f32.mrf.mxu0
      %v1141 = vadd.f32 %v1112, %v1140
      %v1142 = vpop.f32.mrf.mxu0
      %v1143 = vadd.f32 %v1114, %v1142
      %1144 = vmatmul.bf16.gmra.mxu0 %v500
      %v1145 = vpop.f32.mrf.mxu0
      %v1146 = vadd.f32 %v1117, %v1145
      %v1147 = vpop.f32.mrf.mxu0
      %v1148 = vadd.f32 %v1119, %v1147
      %1149 = vmatmul.bf16.gmra.mxu0 %v509
      %v1150 = vpop.f32.mrf.mxu0
      %v1151 = vadd.f32 %v1122, %v1150
      %v1152 = vpop.f32.mrf.mxu0
      %v1153 = vadd.f32 %v1124, %v1152
      %1154 = vdwg.mxu0
      %1155 = vmatpush.bf16.msra.mxu0 %v892
      %1156 = vmatpush.bf16.msra.mxu0 %v891
      %1157 = vmatpush.bf16.msra.mxu0 %v890
      %1158 = vmatpush.bf16.msra.mxu0 %v889
      %1159 = vmatpush.bf16.msra.mxu0 %v888
      %1160 = vmatpush.bf16.msra.mxu0 %v887
      %1161 = vmatpush.bf16.msra.mxu0 %v886
      %1162 = vmatpush.bf16.msra.mxu0 %v885
      %1163 = vmatmul.bf16.gmra.mxu0 %v483
      %v1164 = vpop.f32.mrf.mxu0
      %v1165 = vadd.f32 %v1136, %v1164
      %v1166 = vpop.f32.mrf.mxu0
      %v1167 = vadd.f32 %v1138, %v1166
      %1168 = vmatmul.bf16.gmra.mxu0 %v492
      %v1169 = vpop.f32.mrf.mxu0
      %v1170 = vadd.f32 %v1141, %v1169
      %v1171 = vpop.f32.mrf.mxu0
      %v1172 = vadd.f32 %v1143, %v1171
      %1173 = vmatmul.bf16.gmra.mxu0 %v501
      %v1174 = vpop.f32.mrf.mxu0
      %v1175 = vadd.f32 %v1146, %v1174
      %v1176 = vpop.f32.mrf.mxu0
      %v1177 = vadd.f32 %v1148, %v1176
      %1178 = vmatmul.bf16.gmra.mxu0 %v510
      %v1179 = vpop.f32.mrf.mxu0
      %v1180 = vadd.f32 %v1151, %v1179
      %v1181 = vpop.f32.mrf.mxu0
      %v1182 = vadd.f32 %v1153, %v1181
      %1183 = vdwg.mxu0
      %1184 = vmatpush.bf16.msra.mxu0 %v900
      %1185 = vmatpush.bf16.msra.mxu0 %v899
      %1186 = vmatpush.bf16.msra.mxu0 %v898
      %1187 = vmatpush.bf16.msra.mxu0 %v897
      %1188 = vmatpush.bf16.msra.mxu0 %v896
      %1189 = vmatpush.bf16.msra.mxu0 %v895
      %1190 = vmatpush.bf16.msra.mxu0 %v894
      %1191 = vmatpush.bf16.msra.mxu0 %v893
      %1192 = vmatmul.bf16.gmra.mxu0 %v484
      %v1193 = vpop.f32.mrf.mxu0
      %v1194 = vadd.f32 %v1165, %v1193
      %v1195 = vpop.f32.mrf.mxu0
      %v1196 = vadd.f32 %v1167, %v1195
      %1197 = vmatmul.bf16.gmra.mxu0 %v493
      %v1198 = vpop.f32.mrf.mxu0
      %v1199 = vadd.f32 %v1170, %v1198
      %v1200 = vpop.f32.mrf.mxu0
      %v1201 = vadd.f32 %v1172, %v1200
      %1202 = vmatmul.bf16.gmra.mxu0 %v502
      %v1203 = vpop.f32.mrf.mxu0
      %v1204 = vadd.f32 %v1175, %v1203
      %v1205 = vpop.f32.mrf.mxu0
      %v1206 = vadd.f32 %v1177, %v1205
      %1207 = vmatmul.bf16.gmra.mxu0 %v511
      %v1208 = vpop.f32.mrf.mxu0
      %v1209 = vadd.f32 %v1180, %v1208
      %v1210 = vpop.f32.mrf.mxu0
      %v1211 = vadd.f32 %v1182, %v1210
      %1212 = vdwg.mxu0
      %1213 = vmatpush.bf16.msra.mxu0 %v908
      %1214 = vmatpush.bf16.msra.mxu0 %v907
      %1215 = vmatpush.bf16.msra.mxu0 %v906
      %1216 = vmatpush.bf16.msra.mxu0 %v905
      %1217 = vmatpush.bf16.msra.mxu0 %v904
      %1218 = vmatpush.bf16.msra.mxu0 %v903
      %1219 = vmatpush.bf16.msra.mxu0 %v902
      %1220 = vmatpush.bf16.msra.mxu0 %v901
      %1221 = vmatmul.bf16.gmra.mxu0 %v485
      %v1222 = vpop.f32.mrf.mxu0
      %v1223 = vadd.f32 %v1194, %v1222
      %v1224 = vpop.f32.mrf.mxu0
      %v1225 = vadd.f32 %v1196, %v1224
      %1226 = vmatmul.bf16.gmra.mxu0 %v494
      %v1227 = vpop.f32.mrf.mxu0
      %v1228 = vadd.f32 %v1199, %v1227
      %v1229 = vpop.f32.mrf.mxu0
      %v1230 = vadd.f32 %v1201, %v1229
      %1231 = vmatmul.bf16.gmra.mxu0 %v503
      %v1232 = vpop.f32.mrf.mxu0
      %v1233 = vadd.f32 %v1204, %v1232
      %v1234 = vpop.f32.mrf.mxu0
      %v1235 = vadd.f32 %v1206, %v1234
      %1236 = vmatmul.bf16.gmra.mxu0 %v512
      %v1237 = vpop.f32.mrf.mxu0
      %v1238 = vadd.f32 %v1209, %v1237
      %v1239 = vpop.f32.mrf.mxu0
      %v1240 = vadd.f32 %v1211, %v1239
      %1241 = vdwg.mxu0
      %v1242 = vmax.f32 %v1223, 0.0
      %v1243 = vmax.f32 %v1225, 0.0
      %v1244 = vmax.f32 %v1228, 0.0
      %v1245 = vmax.f32 %v1230, 0.0
      %v1246 = vmax.f32 %v1233, 0.0
      %v1247 = vmax.f32 %v1235, 0.0
      %v1248 = vmax.f32 %v1238, 0.0
      %v1249 = vmax.f32 %v1240, 0.0
      %1250 = vst [vmem:[%s175] sm:$0xff] %v1242
      %1251 = vst [vmem:[%s175 + $0x8] sm:$0xff] %v1243
      %1252 = vst [vmem:[%s175 + $0x10] sm:$0xff] %v1244
      %1253 = vst [vmem:[%s175 + $0x18] sm:$0xff] %v1245
      %1254 = vst [vmem:[%s175 + $0x20] sm:$0xff] %v1246
      %1255 = vst [vmem:[%s175 + $0x28] sm:$0xff] %v1247
      %1256 = vst [vmem:[%s175 + $0x30] sm:$0xff] %v1248
      %1257 = vst [vmem:[%s175 + $0x38] sm:$0xff] %v1249
      %s1258 = smul.u32 8, %s14
      %p1259 = scmp.lt.s32.totalorder %s1258, 15
      %s1260 = scalar_select %p1259, %s1258, 15
      %s1261 = smul.addr %s1260, 8
      %s1262 = scalar_lea.vmem %s3, %s1261
      // Predicated region
      $region33: #{rnet_forward.10} parent=31 // pred_check
        %p1263 = pneg %p100
      $region34: #{rnet_forward.10} parent=31 // pred_check_branch
        %1265 = sbr.rel (%p1263) target = $region36
      $region35: #{rnet_forward.10} parent=31 // pred_region
        %s1266 = smul.u32 8, %s14
      $region36: #{rnet_forward.10} parent=31 // pred_fallthru
        _
    $region32: #{rnet_forward.10} parent=5 // pred_fallthru
      _
    %p1267 = scmp.le.s32.totalorder 2, %s9
    // Predicated region
    $region37: #{rnet_forward.10} parent=5 // pred_check
      %p1268 = pneg %p1267
    $region38: #{rnet_forward.10} parent=5 // pred_check_branch
      %1270 = sbr.rel (%p1268) target = $region40
    $region39: #{rnet_forward.10} parent=5 // pred_region
      %s1271 = ssub.s32 %s9, 2
      // Predicated region
      $region41: #{rnet_forward.10} parent=39 // pred_check
        %p1272 = pneg %p106
      $region42: #{rnet_forward.10} parent=39 // pred_check_branch
        %1274 = sbr.rel (%p1272) target = $region44
      $region43: #{rnet_forward.10} parent=39 // pred_region
        %s1275 = smul.u32 8, %s15
        %p1276 = scmp.lt.s32.totalorder %s1275, 15
        %s1277 = scalar_select %p1276, %s1275, 15
        %s1278 = smul.addr %s1277, 8
        %s1279 = scalar_lea.vmem %s3, %s1278
      $region44: #{rnet_forward.10} parent=39 // pred_fallthru
        _
    $region40: #{rnet_forward.10} parent=5 // pred_fallthru
      _
  $region6: #{rnet_forward.10} parent=0 // loop_footer
    %s13 = sadd.s32 1, %s9
  $region7: #{rnet_forward.10} parent=0 // loop_footer_branch
    %8 = sbr.rel target = $region3
  $region8: #{rnet_forward.10} parent=0 // loop_exit
    _

// kernel: rnet_forward.13
$region0: #{rnet_forward.13}
  #allocation0 [shape = 'u32[]', space=smem, size = 0x4, offset = 0x4, fixed_abs, tag = 'smem constant byte address 0x4 - core index']
  #allocation1 [shape = 'u32[72,128]{1,0:T(1,128)}', space=vmem, size = 0x9000, scoped, tag = 'internal scratch']
  %s0 = inlined_call_operand.vmem [shape: bf16[32,128], index: 0, kind: input, shape index: {}]
  %s1 = inlined_call_operand.vmem [shape: bf16[128,128], index: 1, kind: input, shape index: {}]
  %s2 = inlined_call_operand.vmem [shape: f32[1,128], index: 2, kind: input, shape index: {}]
  %s3 = inlined_call_operand.vmem [shape: f32[32,128], index: 3, kind: output, shape index: {}]
  %s4 = sld [smem:[#allocation0]]
  $region45: #{rnet_forward.13} parent=0
    _
  %s6 = ssub.s32 1, %s4
  %s7 = scalar_select 0, %s6, %s4
  loop: start=0, step=1, limit=4
  $region2: #{rnet_forward.13} parent=0 // loop_pre_header
    _
  $region3: #{rnet_forward.13} parent=0 // loop_header
    %s9 = sphi 0, %s13
    %p10 = scmp.ge.s32.totalorder %s9, 4
    %s19 = sphi 0, %s21
    %s22 = sphi 0, %s19
    %s23 = sphi 0, %s22
    %s39 = sphi 0, %s23
    %s43 = sphi 0, %s43
    %s45 = sphi 0, %s43
    %s46 = sphi 0, %s45
    %s60 = sphi 0, %s46
    %s64 = sphi 0, %s64
    %s66 = sphi 0, %s64
    %s67 = sphi 0, %s66
    %s81 = sphi 0, %s67
    %s87 = sphi 0, %s89
    %s90 = sphi 0, %s87
    %s91 = sphi 0, %s90
    %s107 = sphi 0, %s91
  $region4: #{rnet_forward.13} parent=0 // loop_header_branch
    %12 = sbr.rel (%p10) target = $region8
  $region5: #{rnet_forward.13} parent=0 // loop_body
    %s14 = ssub.s32 %s9, 1
    %s15 = ssub.s32 %s9, 2
    %s16 = sadd.s32 %s9, 1
    %s17 = ssub.s32 %s9, %s16
    %p18 = scmp.eq.s32.totalorder %s17, 0
    %s20 = sadd.s32 %s19, 1
    %s21 = scalar_select %p18, %s19, %s20
    %p24 = pneg %p18
    %p25 = scmp.eq.s32.totalorder %s9, 1
    %p26 = por %p24, %p25
    %p27 = scmp.ne.s32.totalorder %s19, %s22
    %p28 = scmp.eq.s32.totalorder %s9, 0
    %p29 = por %p27, %p28
    %p30 = scmp.ne.s32.totalorder %s19, %s22
    %p31 = scmp.eq.s32.totalorder %s14, 1
    %p32 = por %p30, %p31
    %p33 = scmp.ne.s32.totalorder %s22, %s23
    %p34 = scmp.eq.s32.totalorder %s14, 0
    %p35 = por %p33, %p34
    %p36 = scmp.ne.s32.totalorder %s22, %s23
    %p37 = scmp.eq.s32.totalorder %s15, 1
    %p38 = por %p36, %p37
    %p40 = scmp.ne.s32.totalorder %s23, %s39
    %p41 = scmp.eq.s32.totalorder %s15, 0
    %p42 = por %p40, %p41
    %s44 = sadd.s32 %s43, 1
    %p47 = scmp.eq.s32.totalorder %s9, 1
    %p48 = scmp.ne.s32.totalorder %s43, %s45
    %p49 = scmp.eq.s32.totalorder %s9, 0
    %p50 = por %p48, %p49
    %p51 = scmp.ne.s32.totalorder %s43, %s45
    %p52 = scmp.eq.s32.totalorder %s14, 1
    %p53 = por %p51, %p52
    %p54 = scmp.ne.s32.totalorder %s45, %s46
    %p55 = scmp.eq.s32.totalorder %s14, 0
    %p56 = por %p54, %p55
    %p57 = scmp.ne.s32.totalorder %s45, %s46
    %p58 = scmp.eq.s32.totalorder %s15, 1
    %p59 = por %p57, %p58
    %p61 = scmp.ne.s32.totalorder %s46, %s60
    %p62 = scmp.eq.s32.totalorder %s15, 0
    %p63 = por %p61, %p62
    %s65 = sadd.s32 %s64, 1
    %p68 = scmp.eq.s32.totalorder %s9, 1
    %p69 = scmp.ne.s32.totalorder %s64, %s66
    %p70 = scmp.eq.s32.totalorder %s9, 0
    %p71 = por %p69, %p70
    %p72 = scmp.ne.s32.totalorder %s64, %s66
    %p73 = scmp.eq.s32.totalorder %s14, 1
    %p74 = por %p72, %p73
    %p75 = scmp.ne.s32.totalorder %s66, %s67
    %p76 = scmp.eq.s32.totalorder %s14, 0
    %p77 = por %p75, %p76
    %p78 = scmp.ne.s32.totalorder %s66, %s67
    %p79 = scmp.eq.s32.totalorder %s15, 1
    %p80 = por %p78, %p79
    %p82 = scmp.ne.s32.totalorder %s67, %s81
    %p83 = scmp.eq.s32.totalorder %s15, 0
    %p84 = por %p82, %p83
    %s85 = ssub.s32 %s9, %s16
    %p86 = scmp.eq.s32.totalorder %s85, 0
    %s88 = sadd.s32 %s87, 1
    %s89 = scalar_select %p86, %s87, %s88
    %p92 = pneg %p86
    %p93 = scmp.eq.s32.totalorder %s9, 1
    %p94 = por %p92, %p93
    %p95 = scmp.ne.s32.totalorder %s87, %s90
    %p96 = scmp.eq.s32.totalorder %s9, 0
    %p97 = por %p95, %p96
    %p98 = scmp.ne.s32.totalorder %s87, %s90
    %p99 = scmp.eq.s32.totalorder %s14, 1
    %p100 = por %p98, %p99
    %p101 = scmp.ne.s32.totalorder %s90, %s91
    %p102 = scmp.eq.s32.totalorder %s14, 0
    %p103 = por %p101, %p102
    %p104 = scmp.ne.s32.totalorder %s90, %s91
    %p105 = scmp.eq.s32.totalorder %s15, 1
    %p106 = por %p104, %p105
    %p108 = scmp.ne.s32.totalorder %s91, %s107
    %p109 = scmp.eq.s32.totalorder %s15, 0
    %p110 = por %p108, %p109
    %p111 = scmp.le.s32.totalorder 1, %s9
    %p112 = scmp.lt.s32.totalorder %s9, 3
    %p113 = pnand %p111, %p112
    %p114 = pneg %p113
    // Predicated region
    $region9: #{rnet_forward.13} parent=5 // pred_check
      _
    $region10: #{rnet_forward.13} parent=5 // pred_check_branch
      %116 = sbr.rel (%p113) target = $region12
    $region11: #{rnet_forward.13} parent=5 // pred_region
      %s117 = ssub.s32 %s9, 1
      // Predicated region
      $region13: #{rnet_forward.13} parent=11 // pred_check
        %p118 = pneg %p56
      $region14: #{rnet_forward.13} parent=11 // pred_check_branch
        %120 = sbr.rel (%p118) target = $region16
      $region15: #{rnet_forward.13} parent=11 // pred_region
        _
      $region16: #{rnet_forward.13} parent=11 // pred_fallthru
        _
      // Predicated region
      $region17: #{rnet_forward.13} parent=11 // pred_check
        %p121 = pneg %p77
      $region18: #{rnet_forward.13} parent=11 // pred_check_branch
        %123 = sbr.rel (%p121) target = $region20
      $region19: #{rnet_forward.13} parent=11 // pred_region
        _
      $region20: #{rnet_forward.13} parent=11 // pred_fallthru
        _
    $region12: #{rnet_forward.13} parent=5 // pred_fallthru
      _
    %p124 = scmp.lt.s32.totalorder %s9, 2
    // Predicated region
    $region21: #{rnet_forward.13} parent=5 // pred_check
      %p125 = pneg %p124
    $region22: #{rnet_forward.13} parent=5 // pred_check_branch
      %127 = sbr.rel (%p125) target = $region24
    $region23: #{rnet_forward.13} parent=5 // pred_region
      // Predicated region
      $region25: #{rnet_forward.13} parent=23 // pred_check
        %p128 = pneg %p29
      $region26: #{rnet_forward.13} parent=23 // pred_check_branch
        %130 = sbr.rel (%p128) target = $region28
      $region27: #{rnet_forward.13} parent=23 // pred_region
        %s131 = smul.u32 2, %s9
        %p132 = scmp.lt.s32.totalorder %s131, 3
        %s133 = scalar_select %p132, %s131, 3
        %s134 = smul.addr %s133, 4
        %s135 = scalar_lea.vmem %s0, %s134
        %s136 = smul.u32 2, %s9
      $region28: #{rnet_forward.13} parent=23 // pred_fallthru
        _
    $region24: #{rnet_forward.13} parent=5 // pred_fallthru
      _
    %p137 = scmp.le.s32.totalorder 1, %s9
    %p138 = scmp.lt.s32.totalorder %s9, 3
    %p139 = pnand %p137, %p138
    %p140 = pneg %p139
    // Predicated region
    $region29: #{rnet_forward.13} parent=5 // pred_check
      _
    $region30: #{rnet_forward.13} parent=5 // pred_check_branch
      %142 = sbr.rel (%p139) target = $region32
    $region31: #{rnet_forward.13} parent=5 // pred_region
      %s143 = ssub.s32 %s9, 1
      %s144 = smul.u32 2, %s14
      %p145 = scmp.lt.s32.totalorder %s144, 3
      %s146 = scalar_select %p145, %s144, 3
      %s147 = smul.addr %s146, 4
      %s148 = scalar_lea.vmem %s0, %s147
      %p149 = pneg %p35
      %p150 = pneg %p32
      %p151 = pneg %p56
      %p152 = pneg %p53
      %p153 = pneg %p77
      %p154 = pneg %p74
      %p155 = pneg %p103
      %p156 = pneg %p100
      %s157 = smul.u32 2, %s14
      %p158 = scmp.lt.s32.totalorder %s157, 3
      %s159 = scalar_select %p158, %s157, 3
      %s160 = smul.addr %s159, 8
      %s161 = scalar_lea.vmem %s3, %s160
      %s162 = smul.u32 2, %s14
      %p163 = scmp.lt.s32.totalorder %s162, 3
      %s164 = scalar_select %p163, %s162, 3
      %s165 = smul.addr %s164, 4
      %s166 = scalar_lea.vmem %s0, %s165
      %s167 = smul.u32 2, %s14
      %s168 = smul.u32 2, %s14
      %p169 = scmp.lt.s32.totalorder %s168, 3
      %s170 = scalar_select %p169, %s168, 3
      %s171 = smul.addr %s170, 8
      %s172 = scalar_lea.vmem %s3, %s171
      %s173 = smul.u32 2, %s14
      %v174 = vld [vmem:[%s166] sm:$0xf]
      %v175 = vld [vmem:[%s166 + $0x4] sm:$0xf]
      %v176 = vld [vmem:[%s1] sm:$0xf]
      %v177 = vld [vmem:[%s1 + $0x4] sm:$0xf]
      %v178 = vld [vmem:[%s1 + $0x8] sm:$0xf]
      %v179 = vld [vmem:[%s1 + $0xc] sm:$0xf]
      %v180 = vld [vmem:[%s1 + $0x10] sm:$0xf]
      %v181 = vld [vmem:[%s1 + $0x14] sm:$0xf]
      %v182 = vld [vmem:[%s1 + $0x18] sm:$0xf]
      %v183 = vld [vmem:[%s1 + $0x1c] sm:$0xf]
      %v184 = vld [vmem:[%s1 + $0x20] sm:$0xf]
      %v185 = vld [vmem:[%s1 + $0x24] sm:$0xf]
      %v186 = vld [vmem:[%s1 + $0x28] sm:$0xf]
      %v187 = vld [vmem:[%s1 + $0x2c] sm:$0xf]
      %v188 = vld [vmem:[%s1 + $0x30] sm:$0xf]
      %v189 = vld [vmem:[%s1 + $0x34] sm:$0xf]
      %v190 = vld [vmem:[%s1 + $0x38] sm:$0xf]
      %v191 = vld [vmem:[%s1 + $0x3c] sm:$0xf]
      %v192 = vld [vmem:[%s2] sm:$0x1]
      %v194 = vperm.slane %v192, 0
      %v198 = vunpack.c.l.b16 %v174
      %v199 = vunpack.c.l.b16 %v175
      %v200 = vpack.c.b16 %v199, %v198
      %v218 = vunpack.c.l.b16 %v176
      %v219 = vunpack.c.l.b16 %v177
      %v220 = vunpack.c.l.b16 %v178
      %v221 = vunpack.c.l.b16 %v179
      %v222 = vunpack.c.l.b16 %v180
      %v223 = vunpack.c.l.b16 %v181
      %v224 = vunpack.c.l.b16 %v182
      %v225 = vunpack.c.l.b16 %v183
      %v226 = vunpack.c.l.b16 %v184
      %v227 = vunpack.c.l.b16 %v185
      %v228 = vunpack.c.l.b16 %v186
      %v229 = vunpack.c.l.b16 %v187
      %v230 = vunpack.c.l.b16 %v188
      %v231 = vunpack.c.l.b16 %v189
      %v232 = vunpack.c.l.b16 %v190
      %v233 = vunpack.c.l.b16 %v191
      %v234 = vpack.c.b16 %v219, %v218
      %v235 = vpack.c.b16 %v221, %v220
      %v236 = vpack.c.b16 %v223, %v222
      %v237 = vpack.c.b16 %v225, %v224
      %v238 = vpack.c.b16 %v227, %v226
      %v239 = vpack.c.b16 %v229, %v228
      %v240 = vpack.c.b16 %v231, %v230
      %v241 = vpack.c.b16 %v233, %v232
      %250 = vmatpush.bf16.msra.mxu0 %v241
      %251 = vmatpush.bf16.msra.mxu0 %v240
      %252 = vmatpush.bf16.msra.mxu0 %v239
      %253 = vmatpush.bf16.msra.mxu0 %v238
      %254 = vmatpush.bf16.msra.mxu0 %v237
      %255 = vmatpush.bf16.msra.mxu0 %v236
      %256 = vmatpush.bf16.msra.mxu0 %v235
      %257 = vmatpush.bf16.msra.mxu0 %v234
      %258 = vmatmul.bf16.gmra.mxu0 %v200
      %v259 = vpop.f32.mrf.mxu0
      %v260 = vadd.f32 %v194, %v259
      %v261 = vpop.f32.mrf.mxu0
      %v262 = vadd.f32 %v194, %v261
      %263 = vdwg.mxu0
      %264 = vst [vmem:[%s172] sm:$0xff] %v260
      %265 = vst [vmem:[%s172 + $0x8] sm:$0xff] %v262
      %s266 = smul.u32 2, %s14
      %p267 = scmp.lt.s32.totalorder %s266, 3
      %s268 = scalar_select %p267, %s266, 3
      %s269 = smul.addr %s268, 8
      %s270 = scalar_lea.vmem %s3, %s269
      // Predicated region
      $region33: #{rnet_forward.13} parent=31 // pred_check
        %p271 = pneg %p100
      $region34: #{rnet_forward.13} parent=31 // pred_check_branch
        %273 = sbr.rel (%p271) target = $region36
      $region35: #{rnet_forward.13} parent=31 // pred_region
        %s274 = smul.u32 2, %s14
      $region36: #{rnet_forward.13} parent=31 // pred_fallthru
        _
    $region32: #{rnet_forward.13} parent=5 // pred_fallthru
      _
    %p275 = scmp.le.s32.totalorder 2, %s9
    // Predicated region
    $region37: #{rnet_forward.13} parent=5 // pred_check
      %p276 = pneg %p275
    $region38: #{rnet_forward.13} parent=5 // pred_check_branch
      %278 = sbr.rel (%p276) target = $region40
    $region39: #{rnet_forward.13} parent=5 // pred_region
      %s279 = ssub.s32 %s9, 2
      // Predicated region
      $region41: #{rnet_forward.13} parent=39 // pred_check
        %p280 = pneg %p106
      $region42: #{rnet_forward.13} parent=39 // pred_check_branch
        %282 = sbr.rel (%p280) target = $region44
      $region43: #{rnet_forward.13} parent=39 // pred_region
        %s283 = smul.u32 2, %s15
        %p284 = scmp.lt.s32.totalorder %s283, 3
        %s285 = scalar_select %p284, %s283, 3
        %s286 = smul.addr %s285, 8
        %s287 = scalar_lea.vmem %s3, %s286
      $region44: #{rnet_forward.13} parent=39 // pred_fallthru
        _
    $region40: #{rnet_forward.13} parent=5 // pred_fallthru
      _
  $region6: #{rnet_forward.13} parent=0 // loop_footer
    %s13 = sadd.s32 1, %s9
  $region7: #{rnet_forward.13} parent=0 // loop_footer_branch
    %8 = sbr.rel target = $region3
  $region8: #{rnet_forward.13} parent=0 // loop_exit
    _

// kernel: rnet_forward.11
$region0: #{rnet_forward.11}
  #allocation0 [shape = 'u32[]', space=smem, size = 0x4, offset = 0x4, fixed_abs, tag = 'smem constant byte address 0x4 - core index']
  #allocation1 [shape = 'u32[72,128]{1,0:T(1,128)}', space=vmem, size = 0x9000, scoped, tag = 'internal scratch']
  %s0 = inlined_call_operand.vmem [shape: bf16[128,1152], index: 0, kind: input, shape index: {}]
  %s1 = inlined_call_operand.vmem [shape: bf16[1152,128], index: 1, kind: input, shape index: {}]
  %s2 = inlined_call_operand.vmem [shape: f32[1,128], index: 2, kind: input, shape index: {}]
  %s3 = inlined_call_operand.vmem [shape: f32[128,128], index: 3, kind: input, shape index: {}]
  %s4 = inlined_call_operand.vmem [shape: f32[128,128], index: 4, kind: output, shape index: {}]
  %s5 = sld [smem:[#allocation0]]
  $region49: #{rnet_forward.11} parent=0
    _
  %s7 = ssub.s32 1, %s5
  %s8 = scalar_select 0, %s7, %s5
  loop: start=0, step=1, limit=4
  $region2: #{rnet_forward.11} parent=0 // loop_pre_header
    _
  $region3: #{rnet_forward.11} parent=0 // loop_header
    %s10 = sphi 0, %s14
    %p11 = scmp.ge.s32.totalorder %s10, 4
    %s20 = sphi 0, %s22
    %s23 = sphi 0, %s20
    %s24 = sphi 0, %s23
    %s40 = sphi 0, %s24
    %s44 = sphi 0, %s44
    %s46 = sphi 0, %s44
    %s47 = sphi 0, %s46
    %s61 = sphi 0, %s47
    %s65 = sphi 0, %s65
    %s67 = sphi 0, %s65
    %s68 = sphi 0, %s67
    %s82 = sphi 0, %s68
    %s88 = sphi 0, %s90
    %s91 = sphi 0, %s88
    %s92 = sphi 0, %s91
    %s108 = sphi 0, %s92
    %s114 = sphi 0, %s116
    %s117 = sphi 0, %s114
    %s118 = sphi 0, %s117
    %s134 = sphi 0, %s118
  $region4: #{rnet_forward.11} parent=0 // loop_header_branch
    %13 = sbr.rel (%p11) target = $region8
  $region5: #{rnet_forward.11} parent=0 // loop_body
    %s15 = ssub.s32 %s10, 1
    %s16 = ssub.s32 %s10, 2
    %s17 = sadd.s32 %s10, 1
    %s18 = ssub.s32 %s10, %s17
    %p19 = scmp.eq.s32.totalorder %s18, 0
    %s21 = sadd.s32 %s20, 1
    %s22 = scalar_select %p19, %s20, %s21
    %p25 = pneg %p19
    %p26 = scmp.eq.s32.totalorder %s10, 1
    %p27 = por %p25, %p26
    %p28 = scmp.ne.s32.totalorder %s20, %s23
    %p29 = scmp.eq.s32.totalorder %s10, 0
    %p30 = por %p28, %p29
    %p31 = scmp.ne.s32.totalorder %s20, %s23
    %p32 = scmp.eq.s32.totalorder %s15, 1
    %p33 = por %p31, %p32
    %p34 = scmp.ne.s32.totalorder %s23, %s24
    %p35 = scmp.eq.s32.totalorder %s15, 0
    %p36 = por %p34, %p35
    %p37 = scmp.ne.s32.totalorder %s23, %s24
    %p38 = scmp.eq.s32.totalorder %s16, 1
    %p39 = por %p37, %p38
    %p41 = scmp.ne.s32.totalorder %s24, %s40
    %p42 = scmp.eq.s32.totalorder %s16, 0
    %p43 = por %p41, %p42
    %s45 = sadd.s32 %s44, 1
    %p48 = scmp.eq.s32.totalorder %s10, 1
    %p49 = scmp.ne.s32.totalorder %s44, %s46
    %p50 = scmp.eq.s32.totalorder %s10, 0
    %p51 = por %p49, %p50
    %p52 = scmp.ne.s32.totalorder %s44, %s46
    %p53 = scmp.eq.s32.totalorder %s15, 1
    %p54 = por %p52, %p53
    %p55 = scmp.ne.s32.totalorder %s46, %s47
    %p56 = scmp.eq.s32.totalorder %s15, 0
    %p57 = por %p55, %p56
    %p58 = scmp.ne.s32.totalorder %s46, %s47
    %p59 = scmp.eq.s32.totalorder %s16, 1
    %p60 = por %p58, %p59
    %p62 = scmp.ne.s32.totalorder %s47, %s61
    %p63 = scmp.eq.s32.totalorder %s16, 0
    %p64 = por %p62, %p63
    %s66 = sadd.s32 %s65, 1
    %p69 = scmp.eq.s32.totalorder %s10, 1
    %p70 = scmp.ne.s32.totalorder %s65, %s67
    %p71 = scmp.eq.s32.totalorder %s10, 0
    %p72 = por %p70, %p71
    %p73 = scmp.ne.s32.totalorder %s65, %s67
    %p74 = scmp.eq.s32.totalorder %s15, 1
    %p75 = por %p73, %p74
    %p76 = scmp.ne.s32.totalorder %s67, %s68
    %p77 = scmp.eq.s32.totalorder %s15, 0
    %p78 = por %p76, %p77
    %p79 = scmp.ne.s32.totalorder %s67, %s68
    %p80 = scmp.eq.s32.totalorder %s16, 1
    %p81 = por %p79, %p80
    %p83 = scmp.ne.s32.totalorder %s68, %s82
    %p84 = scmp.eq.s32.totalorder %s16, 0
    %p85 = por %p83, %p84
    %s86 = ssub.s32 %s10, %s17
    %p87 = scmp.eq.s32.totalorder %s86, 0
    %s89 = sadd.s32 %s88, 1
    %s90 = scalar_select %p87, %s88, %s89
    %p93 = pneg %p87
    %p94 = scmp.eq.s32.totalorder %s10, 1
    %p95 = por %p93, %p94
    %p96 = scmp.ne.s32.totalorder %s88, %s91
    %p97 = scmp.eq.s32.totalorder %s10, 0
    %p98 = por %p96, %p97
    %p99 = scmp.ne.s32.totalorder %s88, %s91
    %p100 = scmp.eq.s32.totalorder %s15, 1
    %p101 = por %p99, %p100
    %p102 = scmp.ne.s32.totalorder %s91, %s92
    %p103 = scmp.eq.s32.totalorder %s15, 0
    %p104 = por %p102, %p103
    %p105 = scmp.ne.s32.totalorder %s91, %s92
    %p106 = scmp.eq.s32.totalorder %s16, 1
    %p107 = por %p105, %p106
    %p109 = scmp.ne.s32.totalorder %s92, %s108
    %p110 = scmp.eq.s32.totalorder %s16, 0
    %p111 = por %p109, %p110
    %s112 = ssub.s32 %s10, %s17
    %p113 = scmp.eq.s32.totalorder %s112, 0
    %s115 = sadd.s32 %s114, 1
    %s116 = scalar_select %p113, %s114, %s115
    %p119 = pneg %p113
    %p120 = scmp.eq.s32.totalorder %s10, 1
    %p121 = por %p119, %p120
    %p122 = scmp.ne.s32.totalorder %s114, %s117
    %p123 = scmp.eq.s32.totalorder %s10, 0
    %p124 = por %p122, %p123
    %p125 = scmp.ne.s32.totalorder %s114, %s117
    %p126 = scmp.eq.s32.totalorder %s15, 1
    %p127 = por %p125, %p126
    %p128 = scmp.ne.s32.totalorder %s117, %s118
    %p129 = scmp.eq.s32.totalorder %s15, 0
    %p130 = por %p128, %p129
    %p131 = scmp.ne.s32.totalorder %s117, %s118
    %p132 = scmp.eq.s32.totalorder %s16, 1
    %p133 = por %p131, %p132
    %p135 = scmp.ne.s32.totalorder %s118, %s134
    %p136 = scmp.eq.s32.totalorder %s16, 0
    %p137 = por %p135, %p136
    %p138 = scmp.le.s32.totalorder 1, %s10
    %p139 = scmp.lt.s32.totalorder %s10, 3
    %p140 = pnand %p138, %p139
    %p141 = pneg %p140
    // Predicated region
    $region9: #{rnet_forward.11} parent=5 // pred_check
      _
    $region10: #{rnet_forward.11} parent=5 // pred_check_branch
      %143 = sbr.rel (%p140) target = $region12
    $region11: #{rnet_forward.11} parent=5 // pred_region
      %s144 = ssub.s32 %s10, 1
      // Predicated region
      $region13: #{rnet_forward.11} parent=11 // pred_check
        %p145 = pneg %p57
      $region14: #{rnet_forward.11} parent=11 // pred_check_branch
        %147 = sbr.rel (%p145) target = $region16
      $region15: #{rnet_forward.11} parent=11 // pred_region
        _
      $region16: #{rnet_forward.11} parent=11 // pred_fallthru
        _
      // Predicated region
      $region17: #{rnet_forward.11} parent=11 // pred_check
        %p148 = pneg %p78
      $region18: #{rnet_forward.11} parent=11 // pred_check_branch
        %150 = sbr.rel (%p148) target = $region20
      $region19: #{rnet_forward.11} parent=11 // pred_region
        _
      $region20: #{rnet_forward.11} parent=11 // pred_fallthru
        _
    $region12: #{rnet_forward.11} parent=5 // pred_fallthru
      _
    %p151 = scmp.lt.s32.totalorder %s10, 2
    // Predicated region
    $region21: #{rnet_forward.11} parent=5 // pred_check
      %p152 = pneg %p151
    $region22: #{rnet_forward.11} parent=5 // pred_check_branch
      %154 = sbr.rel (%p152) target = $region24
    $region23: #{rnet_forward.11} parent=5 // pred_region
      // Predicated region
      $region25: #{rnet_forward.11} parent=23 // pred_check
        %p155 = pneg %p30
      $region26: #{rnet_forward.11} parent=23 // pred_check_branch
        %157 = sbr.rel (%p155) target = $region28
      $region27: #{rnet_forward.11} parent=23 // pred_region
        %s158 = smul.u32 8, %s10
        %p159 = scmp.lt.s32.totalorder %s158, 15
        %s160 = scalar_select %p159, %s158, 15
        %s161 = smul.addr %s160, 9
        %s162 = smul.addr %s161, 4
        %s163 = scalar_lea.vmem %s0, %s162
        %s164 = smul.u32 8, %s10
      $region28: #{rnet_forward.11} parent=23 // pred_fallthru
        _
      // Predicated region
      $region29: #{rnet_forward.11} parent=23 // pred_check
        %p165 = pneg %p98
      $region30: #{rnet_forward.11} parent=23 // pred_check_branch
        %167 = sbr.rel (%p165) target = $region32
      $region31: #{rnet_forward.11} parent=23 // pred_region
        %s168 = smul.u32 8, %s10
        %p169 = scmp.lt.s32.totalorder %s168, 15
        %s170 = scalar_select %p169, %s168, 15
        %s171 = smul.addr %s170, 8
        %s172 = scalar_lea.vmem %s3, %s171
        %s173 = smul.u32 8, %s10
      $region32: #{rnet_forward.11} parent=23 // pred_fallthru
        _
    $region24: #{rnet_forward.11} parent=5 // pred_fallthru
      _
    %p174 = scmp.le.s32.totalorder 1, %s10
    %p175 = scmp.lt.s32.totalorder %s10, 3
    %p176 = pnand %p174, %p175
    %p177 = pneg %p176
    // Predicated region
    $region33: #{rnet_forward.11} parent=5 // pred_check
      _
    $region34: #{rnet_forward.11} parent=5 // pred_check_branch
      %179 = sbr.rel (%p176) target = $region36
    $region35: #{rnet_forward.11} parent=5 // pred_region
      %s180 = ssub.s32 %s10, 1
      %s181 = smul.u32 8, %s15
      %p182 = scmp.lt.s32.totalorder %s181, 15
      %s183 = scalar_select %p182, %s181, 15
      %s184 = smul.addr %s183, 9
      %s185 = smul.addr %s184, 4
      %s186 = scalar_lea.vmem %s0, %s185
      %p187 = pneg %p36
      %p188 = pneg %p33
      %p189 = pneg %p57
      %p190 = pneg %p54
      %p191 = pneg %p78
      %p192 = pneg %p75
      %s193 = smul.u32 8, %s15
      %p194 = scmp.lt.s32.totalorder %s193, 15
      %s195 = scalar_select %p194, %s193, 15
      %s196 = smul.addr %s195, 8
      %s197 = scalar_lea.vmem %s3, %s196
      %p198 = pneg %p104
      %p199 = pneg %p101
      %p200 = pneg %p130
      %p201 = pneg %p127
      %s202 = smul.u32 8, %s15
      %p203 = scmp.lt.s32.totalorder %s202, 15
      %s204 = scalar_select %p203, %s202, 15
      %s205 = smul.addr %s204, 8
      %s206 = scalar_lea.vmem %s4, %s205
      %s207 = smul.u32 8, %s15
      %p208 = scmp.lt.s32.totalorder %s207, 15
      %s209 = scalar_select %p208, %s207, 15
      %s210 = smul.addr %s209, 9
      %s211 = smul.addr %s210, 4
      %s212 = scalar_lea.vmem %s0, %s211
      %s213 = smul.u32 8, %s15
      %s214 = smul.u32 8, %s15
      %p215 = scmp.lt.s32.totalorder %s214, 15
      %s216 = scalar_select %p215, %s214, 15
      %s217 = smul.addr %s216, 8
      %s218 = scalar_lea.vmem %s3, %s217
      %s219 = smul.u32 8, %s15
      %s220 = smul.u32 8, %s15
      %p221 = scmp.lt.s32.totalorder %s220, 15
      %s222 = scalar_select %p221, %s220, 15
      %s223 = smul.addr %s222, 8
      %s224 = scalar_lea.vmem %s4, %s223
      %s225 = smul.u32 8, %s15
      %v226 = vld [vmem:[%s212] sm:$0xff]
      %v227 = vld [vmem:[%s212 + $0x8] sm:$0xff]
      %v228 = vld [vmem:[%s212 + $0x10] sm:$0xff]
      %v229 = vld [vmem:[%s212 + $0x18] sm:$0xff]
      %v230 = vld [vmem:[%s212 + $0x20] sm:$0xf]
      %v231 = vld [vmem:[%s212 + $0x24] sm:$0xff]
      %v232 = vld [vmem:[%s212 + $0x2c] sm:$0xff]
      %v233 = vld [vmem:[%s212 + $0x34] sm:$0xff]
      %v234 = vld [vmem:[%s212 + $0x3c] sm:$0xff]
      %v235 = vld [vmem:[%s212 + $0x44] sm:$0xf]
      %v236 = vld [vmem:[%s212 + $0x48] sm:$0xff]
      %v237 = vld [vmem:[%s212 + $0x50] sm:$0xff]
      %v238 = vld [vmem:[%s212 + $0x58] sm:$0xff]
      %v239 = vld [vmem:[%s212 + $0x60] sm:$0xff]
      %v240 = vld [vmem:[%s212 + $0x68] sm:$0xf]
      %v241 = vld [vmem:[%s212 + $0x6c] sm:$0xff]
      %v242 = vld [vmem:[%s212 + $0x74] sm:$0xff]
      %v243 = vld [vmem:[%s212 + $0x7c] sm:$0xff]
      %v244 = vld [vmem:[%s212 + $0x84] sm:$0xff]
      %v245 = vld [vmem:[%s212 + $0x8c] sm:$0xf]
      %v246 = vld [vmem:[%s212 + $0x90] sm:$0xff]
      %v247 = vld [vmem:[%s212 + $0x98] sm:$0xff]
      %v248 = vld [vmem:[%s212 + $0xa0] sm:$0xff]
      %v249 = vld [vmem:[%s212 + $0xa8] sm:$0xff]
      %v250 = vld [vmem:[%s212 + $0xb0] sm:$0xf]
      %v251 = vld [vmem:[%s212 + $0xb4] sm:$0xff]
      %v252 = vld [vmem:[%s212 + $0xbc] sm:$0xff]
      %v253 = vld [vmem:[%s212 + $0xc4] sm:$0xff]
      %v254 = vld [vmem:[%s212 + $0xcc] sm:$0xff]
      %v255 = vld [vmem:[%s212 + $0xd4] sm:$0xf]
      %v256 = vld [vmem:[%s212 + $0xd8] sm:$0xff]
      %v257 = vld [vmem:[%s212 + $0xe0] sm:$0xff]
      %v258 = vld [vmem:[%s212 + $0xe8] sm:$0xff]
      %v259 = vld [vmem:[%s212 + $0xf0] sm:$0xff]
      %v260 = vld [vmem:[%s212 + $0xf8] sm:$0xf]
      %v261 = vld [vmem:[%s212 + $0xfc] sm:$0xff]
      %v262 = vld [vmem:[%s212 + $0x104] sm:$0xff]
      %v263 = vld [vmem:[%s212 + $0x10c] sm:$0xff]
      %v264 = vld [vmem:[%s212 + $0x114] sm:$0xff]
      %v265 = vld [vmem:[%s212 + $0x11c] sm:$0xf]
      %v266 = vld [vmem:[%s1] sm:$0xf]
      %v267 = vld [vmem:[%s1 + $0x4] sm:$0xf]
      %v268 = vld [vmem:[%s1 + $0x8] sm:$0xf]
      %v269 = vld [vmem:[%s1 + $0xc] sm:$0xf]
      %v270 = vld [vmem:[%s1 + $0x10] sm:$0xf]
      %v271 = vld [vmem:[%s1 + $0x14] sm:$0xf]
      %v272 = vld [vmem:[%s1 + $0x18] sm:$0xf]
      %v273 = vld [vmem:[%s1 + $0x1c] sm:$0xf]
      %v274 = vld [vmem:[%s1 + $0x20] sm:$0xf]
      %v275 = vld [vmem:[%s1 + $0x24] sm:$0xf]
      %v276 = vld [vmem:[%s1 + $0x28] sm:$0xf]
      %v277 = vld [vmem:[%s1 + $0x2c] sm:$0xf]
      %v278 = vld [vmem:[%s1 + $0x30] sm:$0xf]
      %v279 = vld [vmem:[%s1 + $0x34] sm:$0xf]
      %v280 = vld [vmem:[%s1 + $0x38] sm:$0xf]
      %v281 = vld [vmem:[%s1 + $0x3c] sm:$0xf]
      %v282 = vld [vmem:[%s1 + $0x40] sm:$0xf]
      %v283 = vld [vmem:[%s1 + $0x44] sm:$0xf]
      %v284 = vld [vmem:[%s1 + $0x48] sm:$0xf]
      %v285 = vld [vmem:[%s1 + $0x4c] sm:$0xf]
      %v286 = vld [vmem:[%s1 + $0x50] sm:$0xf]
      %v287 = vld [vmem:[%s1 + $0x54] sm:$0xf]
      %v288 = vld [vmem:[%s1 + $0x58] sm:$0xf]
      %v289 = vld [vmem:[%s1 + $0x5c] sm:$0xf]
      %v290 = vld [vmem:[%s1 + $0x60] sm:$0xf]
      %v291 = vld [vmem:[%s1 + $0x64] sm:$0xf]
      %v292 = vld [vmem:[%s1 + $0x68] sm:$0xf]
      %v293 = vld [vmem:[%s1 + $0x6c] sm:$0xf]
      %v294 = vld [vmem:[%s1 + $0x70] sm:$0xf]
      %v295 = vld [vmem:[%s1 + $0x74] sm:$0xf]
      %v296 = vld [vmem:[%s1 + $0x78] sm:$0xf]
      %v297 = vld [vmem:[%s1 + $0x7c] sm:$0xf]
      %v298 = vld [vmem:[%s1 + $0x80] sm:$0xf]
      %v299 = vld [vmem:[%s1 + $0x84] sm:$0xf]
      %v300 = vld [vmem:[%s1 + $0x88] sm:$0xf]
      %v301 = vld [vmem:[%s1 + $0x8c] sm:$0xf]
      %v302 = vld [vmem:[%s1 + $0x90] sm:$0xf]
      %v303 = vld [vmem:[%s1 + $0x94] sm:$0xf]
      %v304 = vld [vmem:[%s1 + $0x98] sm:$0xf]
      %v305 = vld [vmem:[%s1 + $0x9c] sm:$0xf]
      %v306 = vld [vmem:[%s1 + $0xa0] sm:$0xf]
      %v307 = vld [vmem:[%s1 + $0xa4] sm:$0xf]
      %v308 = vld [vmem:[%s1 + $0xa8] sm:$0xf]
      %v309 = vld [vmem:[%s1 + $0xac] sm:$0xf]
      %v310 = vld [vmem:[%s1 + $0xb0] sm:$0xf]
      %v311 = vld [vmem:[%s1 + $0xb4] sm:$0xf]
      %v312 = vld [vmem:[%s1 + $0xb8] sm:$0xf]
      %v313 = vld [vmem:[%s1 + $0xbc] sm:$0xf]
      %v314 = vld [vmem:[%s1 + $0xc0] sm:$0xf]
      %v315 = vld [vmem:[%s1 + $0xc4] sm:$0xf]
      %v316 = vld [vmem:[%s1 + $0xc8] sm:$0xf]
      %v317 = vld [vmem:[%s1 + $0xcc] sm:$0xf]
      %v318 = vld [vmem:[%s1 + $0xd0] sm:$0xf]
      %v319 = vld [vmem:[%s1 + $0xd4] sm:$0xf]
      %v320 = vld [vmem:[%s1 + $0xd8] sm:$0xf]
      %v321 = vld [vmem:[%s1 + $0xdc] sm:$0xf]
      %v322 = vld [vmem:[%s1 + $0xe0] sm:$0xf]
      %v323 = vld [vmem:[%s1 + $0xe4] sm:$0xf]
      %v324 = vld [vmem:[%s1 + $0xe8] sm:$0xf]
      %v325 = vld [vmem:[%s1 + $0xec] sm:$0xf]
      %v326 = vld [vmem:[%s1 + $0xf0] sm:$0xf]
      %v327 = vld [vmem:[%s1 + $0xf4] sm:$0xf]
      %v328 = vld [vmem:[%s1 + $0xf8] sm:$0xf]
      %v329 = vld [vmem:[%s1 + $0xfc] sm:$0xf]
      %v330 = vld [vmem:[%s1 + $0x100] sm:$0xf]
      %v331 = vld [vmem:[%s1 + $0x104] sm:$0xf]
      %v332 = vld [vmem:[%s1 + $0x108] sm:$0xf]
      %v333 = vld [vmem:[%s1 + $0x10c] sm:$0xf]
      %v334 = vld [vmem:[%s1 + $0x110] sm:$0xf]
      %v335 = vld [vmem:[%s1 + $0x114] sm:$0xf]
      %v336 = vld [vmem:[%s1 + $0x118] sm:$0xf]
      %v337 = vld [vmem:[%s1 + $0x11c] sm:$0xf]
      %v338 = vld [vmem:[%s1 + $0x120] sm:$0xf]
      %v339 = vld [vmem:[%s1 + $0x124] sm:$0xf]
      %v340 = vld [vmem:[%s1 + $0x128] sm:$0xf]
      %v341 = vld [vmem:[%s1 + $0x12c] sm:$0xf]
      %v342 = vld [vmem:[%s1 + $0x130] sm:$0xf]
      %v343 = vld [vmem:[%s1 + $0x134] sm:$0xf]
      %v344 = vld [vmem:[%s1 + $0x138] sm:$0xf]
      %v345 = vld [vmem:[%s1 + $0x13c] sm:$0xf]
      %v346 = vld [vmem:[%s1 + $0x140] sm:$0xf]
      %v347 = vld [vmem:[%s1 + $0x144] sm:$0xf]
      %v348 = vld [vmem:[%s1 + $0x148] sm:$0xf]
      %v349 = vld [vmem:[%s1 + $0x14c] sm:$0xf]
      %v350 = vld [vmem:[%s1 + $0x150] sm:$0xf]
      %v351 = vld [vmem:[%s1 + $0x154] sm:$0xf]
      %v352 = vld [vmem:[%s1 + $0x158] sm:$0xf]
      %v353 = vld [vmem:[%s1 + $0x15c] sm:$0xf]
      %v354 = vld [vmem:[%s1 + $0x160] sm:$0xf]
      %v355 = vld [vmem:[%s1 + $0x164] sm:$0xf]
      %v356 = vld [vmem:[%s1 + $0x168] sm:$0xf]
      %v357 = vld [vmem:[%s1 + $0x16c] sm:$0xf]
      %v358 = vld [vmem:[%s1 + $0x170] sm:$0xf]
      %v359 = vld [vmem:[%s1 + $0x174] sm:$0xf]
      %v360 = vld [vmem:[%s1 + $0x178] sm:$0xf]
      %v361 = vld [vmem:[%s1 + $0x17c] sm:$0xf]
      %v362 = vld [vmem:[%s1 + $0x180] sm:$0xf]
      %v363 = vld [vmem:[%s1 + $0x184] sm:$0xf]
      %v364 = vld [vmem:[%s1 + $0x188] sm:$0xf]
      %v365 = vld [vmem:[%s1 + $0x18c] sm:$0xf]
      %v366 = vld [vmem:[%s1 + $0x190] sm:$0xf]
      %v367 = vld [vmem:[%s1 + $0x194] sm:$0xf]
      %v368 = vld [vmem:[%s1 + $0x198] sm:$0xf]
      %v369 = vld [vmem:[%s1 + $0x19c] sm:$0xf]
      %v370 = vld [vmem:[%s1 + $0x1a0] sm:$0xf]
      %v371 = vld [vmem:[%s1 + $0x1a4] sm:$0xf]
      %v372 = vld [vmem:[%s1 + $0x1a8] sm:$0xf]
      %v373 = vld [vmem:[%s1 + $0x1ac] sm:$0xf]
      %v374 = vld [vmem:[%s1 + $0x1b0] sm:$0xf]
      %v375 = vld [vmem:[%s1 + $0x1b4] sm:$0xf]
      %v376 = vld [vmem:[%s1 + $0x1b8] sm:$0xf]
      %v377 = vld [vmem:[%s1 + $0x1bc] sm:$0xf]
      %v378 = vld [vmem:[%s1 + $0x1c0] sm:$0xf]
      %v379 = vld [vmem:[%s1 + $0x1c4] sm:$0xf]
      %v380 = vld [vmem:[%s1 + $0x1c8] sm:$0xf]
      %v381 = vld [vmem:[%s1 + $0x1cc] sm:$0xf]
      %v382 = vld [vmem:[%s1 + $0x1d0] sm:$0xf]
      %v383 = vld [vmem:[%s1 + $0x1d4] sm:$0xf]
      %v384 = vld [vmem:[%s1 + $0x1d8] sm:$0xf]
      %v385 = vld [vmem:[%s1 + $0x1dc] sm:$0xf]
      %v386 = vld [vmem:[%s1 + $0x1e0] sm:$0xf]
      %v387 = vld [vmem:[%s1 + $0x1e4] sm:$0xf]
      %v388 = vld [vmem:[%s1 + $0x1e8] sm:$0xf]
      %v389 = vld [vmem:[%s1 + $0x1ec] sm:$0xf]
      %v390 = vld [vmem:[%s1 + $0x1f0] sm:$0xf]
      %v391 = vld [vmem:[%s1 + $0x1f4] sm:$0xf]
      %v392 = vld [vmem:[%s1 + $0x1f8] sm:$0xf]
      %v393 = vld [vmem:[%s1 + $0x1fc] sm:$0xf]
      %v394 = vld [vmem:[%s1 + $0x200] sm:$0xf]
      %v395 = vld [vmem:[%s1 + $0x204] sm:$0xf]
      %v396 = vld [vmem:[%s1 + $0x208] sm:$0xf]
      %v397 = vld [vmem:[%s1 + $0x20c] sm:$0xf]
      %v398 = vld [vmem:[%s1 + $0x210] sm:$0xf]
      %v399 = vld [vmem:[%s1 + $0x214] sm:$0xf]
      %v400 = vld [vmem:[%s1 + $0x218] sm:$0xf]
      %v401 = vld [vmem:[%s1 + $0x21c] sm:$0xf]
      %v402 = vld [vmem:[%s1 + $0x220] sm:$0xf]
      %v403 = vld [vmem:[%s1 + $0x224] sm:$0xf]
      %v404 = vld [vmem:[%s1 + $0x228] sm:$0xf]
      %v405 = vld [vmem:[%s1 + $0x22c] sm:$0xf]
      %v406 = vld [vmem:[%s1 + $0x230] sm:$0xf]
      %v407 = vld [vmem:[%s1 + $0x234] sm:$0xf]
      %v408 = vld [vmem:[%s1 + $0x238] sm:$0xf]
      %v409 = vld [vmem:[%s1 + $0x23c] sm:$0xf]
      %v410 = vld [vmem:[%s2] sm:$0x1]
      %v412 = vperm.slane %v410, 0
      %v454 = vunpack.c.l.b16 %v226
      %v455 = vunpack.c.h.b16 %v226
      %v456 = vunpack.c.l.b16 %v227
      %v457 = vunpack.c.h.b16 %v227
      %v458 = vunpack.c.l.b16 %v228
      %v459 = vunpack.c.h.b16 %v228
      %v460 = vunpack.c.l.b16 %v229
      %v461 = vunpack.c.h.b16 %v229
      %v462 = vunpack.c.l.b16 %v230
      %v463 = vunpack.c.l.b16 %v231
      %v464 = vunpack.c.h.b16 %v231
      %v465 = vunpack.c.l.b16 %v232
      %v466 = vunpack.c.h.b16 %v232
      %v467 = vunpack.c.l.b16 %v233
      %v468 = vunpack.c.h.b16 %v233
      %v469 = vunpack.c.l.b16 %v234
      %v470 = vunpack.c.h.b16 %v234
      %v471 = vunpack.c.l.b16 %v235
      %v472 = vunpack.c.l.b16 %v236
      %v473 = vunpack.c.h.b16 %v236
      %v474 = vunpack.c.l.b16 %v237
      %v475 = vunpack.c.h.b16 %v237
      %v476 = vunpack.c.l.b16 %v238
      %v477 = vunpack.c.h.b16 %v238
      %v478 = vunpack.c.l.b16 %v239
      %v479 = vunpack.c.h.b16 %v239
      %v480 = vunpack.c.l.b16 %v240
      %v481 = vunpack.c.l.b16 %v241
      %v482 = vunpack.c.h.b16 %v241
      %v483 = vunpack.c.l.b16 %v242
      %v484 = vunpack.c.h.b16 %v242
      %v485 = vunpack.c.l.b16 %v243
      %v486 = vunpack.c.h.b16 %v243
      %v487 = vunpack.c.l.b16 %v244
      %v488 = vunpack.c.h.b16 %v244
      %v489 = vunpack.c.l.b16 %v245
      %v490 = vunpack.c.l.b16 %v246
      %v491 = vunpack.c.h.b16 %v246
      %v492 = vunpack.c.l.b16 %v247
      %v493 = vunpack.c.h.b16 %v247
      %v494 = vunpack.c.l.b16 %v248
      %v495 = vunpack.c.h.b16 %v248
      %v496 = vunpack.c.l.b16 %v249
      %v497 = vunpack.c.h.b16 %v249
      %v498 = vunpack.c.l.b16 %v250
      %v499 = vunpack.c.l.b16 %v251
      %v500 = vunpack.c.h.b16 %v251
      %v501 = vunpack.c.l.b16 %v252
      %v502 = vunpack.c.h.b16 %v252
      %v503 = vunpack.c.l.b16 %v253
      %v504 = vunpack.c.h.b16 %v253
      %v505 = vunpack.c.l.b16 %v254
      %v506 = vunpack.c.h.b16 %v254
      %v507 = vunpack.c.l.b16 %v255
      %v508 = vunpack.c.l.b16 %v256
      %v509 = vunpack.c.h.b16 %v256
      %v510 = vunpack.c.l.b16 %v257
      %v511 = vunpack.c.h.b16 %v257
      %v512 = vunpack.c.l.b16 %v258
      %v513 = vunpack.c.h.b16 %v258
      %v514 = vunpack.c.l.b16 %v259
      %v515 = vunpack.c.h.b16 %v259
      %v516 = vunpack.c.l.b16 %v260
      %v517 = vunpack.c.l.b16 %v261
      %v518 = vunpack.c.h.b16 %v261
      %v519 = vunpack.c.l.b16 %v262
      %v520 = vunpack.c.h.b16 %v262
      %v521 = vunpack.c.l.b16 %v263
      %v522 = vunpack.c.h.b16 %v263
      %v523 = vunpack.c.l.b16 %v264
      %v524 = vunpack.c.h.b16 %v264
      %v525 = vunpack.c.l.b16 %v265
      %v526 = vpack.c.b16 %v463, %v454
      %v527 = vpack.c.b16 %v464, %v455
      %v528 = vpack.c.b16 %v465, %v456
      %v529 = vpack.c.b16 %v466, %v457
      %v530 = vpack.c.b16 %v467, %v458
      %v531 = vpack.c.b16 %v468, %v459
      %v532 = vpack.c.b16 %v469, %v460
      %v533 = vpack.c.b16 %v470, %v461
      %v534 = vpack.c.b16 %v471, %v462
      %v535 = vpack.c.b16 %v481, %v472
      %v536 = vpack.c.b16 %v482, %v473
      %v537 = vpack.c.b16 %v483, %v474
      %v538 = vpack.c.b16 %v484, %v475
      %v539 = vpack.c.b16 %v485, %v476
      %v540 = vpack.c.b16 %v486, %v477
      %v541 = vpack.c.b16 %v487, %v478
      %v542 = vpack.c.b16 %v488, %v479
      %v543 = vpack.c.b16 %v489, %v480
      %v544 = vpack.c.b16 %v499, %v490
      %v545 = vpack.c.b16 %v500, %v491
      %v546 = vpack.c.b16 %v501, %v492
      %v547 = vpack.c.b16 %v502, %v493
      %v548 = vpack.c.b16 %v503, %v494
      %v549 = vpack.c.b16 %v504, %v495
      %v550 = vpack.c.b16 %v505, %v496
      %v551 = vpack.c.b16 %v506, %v497
      %v552 = vpack.c.b16 %v507, %v498
      %v553 = vpack.c.b16 %v517, %v508
      %v554 = vpack.c.b16 %v518, %v509
      %v555 = vpack.c.b16 %v519, %v510
      %v556 = vpack.c.b16 %v520, %v511
      %v557 = vpack.c.b16 %v521, %v512
      %v558 = vpack.c.b16 %v522, %v513
      %v559 = vpack.c.b16 %v523, %v514
      %v560 = vpack.c.b16 %v524, %v515
      %v561 = vpack.c.b16 %v525, %v516
      %v742 = vunpack.c.l.b16 %v266
      %v743 = vunpack.c.l.b16 %v267
      %v744 = vunpack.c.l.b16 %v268
      %v745 = vunpack.c.l.b16 %v269
      %v746 = vunpack.c.l.b16 %v270
      %v747 = vunpack.c.l.b16 %v271
      %v748 = vunpack.c.l.b16 %v272
      %v749 = vunpack.c.l.b16 %v273
      %v750 = vunpack.c.l.b16 %v274
      %v751 = vunpack.c.l.b16 %v275
      %v752 = vunpack.c.l.b16 %v276
      %v753 = vunpack.c.l.b16 %v277
      %v754 = vunpack.c.l.b16 %v278
      %v755 = vunpack.c.l.b16 %v279
      %v756 = vunpack.c.l.b16 %v280
      %v757 = vunpack.c.l.b16 %v281
      %v758 = vunpack.c.l.b16 %v282
      %v759 = vunpack.c.l.b16 %v283
      %v760 = vunpack.c.l.b16 %v284
      %v761 = vunpack.c.l.b16 %v285
      %v762 = vunpack.c.l.b16 %v286
      %v763 = vunpack.c.l.b16 %v287
      %v764 = vunpack.c.l.b16 %v288
      %v765 = vunpack.c.l.b16 %v289
      %v766 = vunpack.c.l.b16 %v290
      %v767 = vunpack.c.l.b16 %v291
      %v768 = vunpack.c.l.b16 %v292
      %v769 = vunpack.c.l.b16 %v293
      %v770 = vunpack.c.l.b16 %v294
      %v771 = vunpack.c.l.b16 %v295
      %v772 = vunpack.c.l.b16 %v296
      %v773 = vunpack.c.l.b16 %v297
      %v774 = vunpack.c.l.b16 %v298
      %v775 = vunpack.c.l.b16 %v299
      %v776 = vunpack.c.l.b16 %v300
      %v777 = vunpack.c.l.b16 %v301
      %v778 = vunpack.c.l.b16 %v302
      %v779 = vunpack.c.l.b16 %v303
      %v780 = vunpack.c.l.b16 %v304
      %v781 = vunpack.c.l.b16 %v305
      %v782 = vunpack.c.l.b16 %v306
      %v783 = vunpack.c.l.b16 %v307
      %v784 = vunpack.c.l.b16 %v308
      %v785 = vunpack.c.l.b16 %v309
      %v786 = vunpack.c.l.b16 %v310
      %v787 = vunpack.c.l.b16 %v311
      %v788 = vunpack.c.l.b16 %v312
      %v789 = vunpack.c.l.b16 %v313
      %v790 = vunpack.c.l.b16 %v314
      %v791 = vunpack.c.l.b16 %v315
      %v792 = vunpack.c.l.b16 %v316
      %v793 = vunpack.c.l.b16 %v317
      %v794 = vunpack.c.l.b16 %v318
      %v795 = vunpack.c.l.b16 %v319
      %v796 = vunpack.c.l.b16 %v320
      %v797 = vunpack.c.l.b16 %v321
      %v798 = vunpack.c.l.b16 %v322
      %v799 = vunpack.c.l.b16 %v323
      %v800 = vunpack.c.l.b16 %v324
      %v801 = vunpack.c.l.b16 %v325
      %v802 = vunpack.c.l.b16 %v326
      %v803 = vunpack.c.l.b16 %v327
      %v804 = vunpack.c.l.b16 %v328
      %v805 = vunpack.c.l.b16 %v329
      %v806 = vunpack.c.l.b16 %v330
      %v807 = vunpack.c.l.b16 %v331
      %v808 = vunpack.c.l.b16 %v332
      %v809 = vunpack.c.l.b16 %v333
      %v810 = vunpack.c.l.b16 %v334
      %v811 = vunpack.c.l.b16 %v335
      %v812 = vunpack.c.l.b16 %v336
      %v813 = vunpack.c.l.b16 %v337
      %v814 = vunpack.c.l.b16 %v338
      %v815 = vunpack.c.l.b16 %v339
      %v816 = vunpack.c.l.b16 %v340
      %v817 = vunpack.c.l.b16 %v341
      %v818 = vunpack.c.l.b16 %v342
      %v819 = vunpack.c.l.b16 %v343
      %v820 = vunpack.c.l.b16 %v344
      %v821 = vunpack.c.l.b16 %v345
      %v822 = vunpack.c.l.b16 %v346
      %v823 = vunpack.c.l.b16 %v347
      %v824 = vunpack.c.l.b16 %v348
      %v825 = vunpack.c.l.b16 %v349
      %v826 = vunpack.c.l.b16 %v350
      %v827 = vunpack.c.l.b16 %v351
      %v828 = vunpack.c.l.b16 %v352
      %v829 = vunpack.c.l.b16 %v353
      %v830 = vunpack.c.l.b16 %v354
      %v831 = vunpack.c.l.b16 %v355
      %v832 = vunpack.c.l.b16 %v356
      %v833 = vunpack.c.l.b16 %v357
      %v834 = vunpack.c.l.b16 %v358
      %v835 = vunpack.c.l.b16 %v359
      %v836 = vunpack.c.l.b16 %v360
      %v837 = vunpack.c.l.b16 %v361
      %v838 = vunpack.c.l.b16 %v362
      %v839 = vunpack.c.l.b16 %v363
      %v840 = vunpack.c.l.b16 %v364
      %v841 = vunpack.c.l.b16 %v365
      %v842 = vunpack.c.l.b16 %v366
      %v843 = vunpack.c.l.b16 %v367
      %v844 = vunpack.c.l.b16 %v368
      %v845 = vunpack.c.l.b16 %v369
      %v846 = vunpack.c.l.b16 %v370
      %v847 = vunpack.c.l.b16 %v371
      %v848 = vunpack.c.l.b16 %v372
      %v849 = vunpack.c.l.b16 %v373
      %v850 = vunpack.c.l.b16 %v374
      %v851 = vunpack.c.l.b16 %v375
      %v852 = vunpack.c.l.b16 %v376
      %v853 = vunpack.c.l.b16 %v377
      %v854 = vunpack.c.l.b16 %v378
      %v855 = vunpack.c.l.b16 %v379
      %v856 = vunpack.c.l.b16 %v380
      %v857 = vunpack.c.l.b16 %v381
      %v858 = vunpack.c.l.b16 %v382
      %v859 = vunpack.c.l.b16 %v383
      %v860 = vunpack.c.l.b16 %v384
      %v861 = vunpack.c.l.b16 %v385
      %v862 = vunpack.c.l.b16 %v386
      %v863 = vunpack.c.l.b16 %v387
      %v864 = vunpack.c.l.b16 %v388
      %v865 = vunpack.c.l.b16 %v389
      %v866 = vunpack.c.l.b16 %v390
      %v867 = vunpack.c.l.b16 %v391
      %v868 = vunpack.c.l.b16 %v392
      %v869 = vunpack.c.l.b16 %v393
      %v870 = vunpack.c.l.b16 %v394
      %v871 = vunpack.c.l.b16 %v395
      %v872 = vunpack.c.l.b16 %v396
      %v873 = vunpack.c.l.b16 %v397
      %v874 = vunpack.c.l.b16 %v398
      %v875 = vunpack.c.l.b16 %v399
      %v876 = vunpack.c.l.b16 %v400
      %v877 = vunpack.c.l.b16 %v401
      %v878 = vunpack.c.l.b16 %v402
      %v879 = vunpack.c.l.b16 %v403
      %v880 = vunpack.c.l.b16 %v404
      %v881 = vunpack.c.l.b16 %v405
      %v882 = vunpack.c.l.b16 %v406
      %v883 = vunpack.c.l.b16 %v407
      %v884 = vunpack.c.l.b16 %v408
      %v885 = vunpack.c.l.b16 %v409
      %v886 = vpack.c.b16 %v743, %v742
      %v887 = vpack.c.b16 %v745, %v744
      %v888 = vpack.c.b16 %v747, %v746
      %v889 = vpack.c.b16 %v749, %v748
      %v890 = vpack.c.b16 %v751, %v750
      %v891 = vpack.c.b16 %v753, %v752
      %v892 = vpack.c.b16 %v755, %v754
      %v893 = vpack.c.b16 %v757, %v756
      %v894 = vpack.c.b16 %v759, %v758
      %v895 = vpack.c.b16 %v761, %v760
      %v896 = vpack.c.b16 %v763, %v762
      %v897 = vpack.c.b16 %v765, %v764
      %v898 = vpack.c.b16 %v767, %v766
      %v899 = vpack.c.b16 %v769, %v768
      %v900 = vpack.c.b16 %v771, %v770
      %v901 = vpack.c.b16 %v773, %v772
      %v902 = vpack.c.b16 %v775, %v774
      %v903 = vpack.c.b16 %v777, %v776
      %v904 = vpack.c.b16 %v779, %v778
      %v905 = vpack.c.b16 %v781, %v780
      %v906 = vpack.c.b16 %v783, %v782
      %v907 = vpack.c.b16 %v785, %v784
      %v908 = vpack.c.b16 %v787, %v786
      %v909 = vpack.c.b16 %v789, %v788
      %v910 = vpack.c.b16 %v791, %v790
      %v911 = vpack.c.b16 %v793, %v792
      %v912 = vpack.c.b16 %v795, %v794
      %v913 = vpack.c.b16 %v797, %v796
      %v914 = vpack.c.b16 %v799, %v798
      %v915 = vpack.c.b16 %v801, %v800
      %v916 = vpack.c.b16 %v803, %v802
      %v917 = vpack.c.b16 %v805, %v804
      %v918 = vpack.c.b16 %v807, %v806
      %v919 = vpack.c.b16 %v809, %v808
      %v920 = vpack.c.b16 %v811, %v810
      %v921 = vpack.c.b16 %v813, %v812
      %v922 = vpack.c.b16 %v815, %v814
      %v923 = vpack.c.b16 %v817, %v816
      %v924 = vpack.c.b16 %v819, %v818
      %v925 = vpack.c.b16 %v821, %v820
      %v926 = vpack.c.b16 %v823, %v822
      %v927 = vpack.c.b16 %v825, %v824
      %v928 = vpack.c.b16 %v827, %v826
      %v929 = vpack.c.b16 %v829, %v828
      %v930 = vpack.c.b16 %v831, %v830
      %v931 = vpack.c.b16 %v833, %v832
      %v932 = vpack.c.b16 %v835, %v834
      %v933 = vpack.c.b16 %v837, %v836
      %v934 = vpack.c.b16 %v839, %v838
      %v935 = vpack.c.b16 %v841, %v840
      %v936 = vpack.c.b16 %v843, %v842
      %v937 = vpack.c.b16 %v845, %v844
      %v938 = vpack.c.b16 %v847, %v846
      %v939 = vpack.c.b16 %v849, %v848
      %v940 = vpack.c.b16 %v851, %v850
      %v941 = vpack.c.b16 %v853, %v852
      %v942 = vpack.c.b16 %v855, %v854
      %v943 = vpack.c.b16 %v857, %v856
      %v944 = vpack.c.b16 %v859, %v858
      %v945 = vpack.c.b16 %v861, %v860
      %v946 = vpack.c.b16 %v863, %v862
      %v947 = vpack.c.b16 %v865, %v864
      %v948 = vpack.c.b16 %v867, %v866
      %v949 = vpack.c.b16 %v869, %v868
      %v950 = vpack.c.b16 %v871, %v870
      %v951 = vpack.c.b16 %v873, %v872
      %v952 = vpack.c.b16 %v875, %v874
      %v953 = vpack.c.b16 %v877, %v876
      %v954 = vpack.c.b16 %v879, %v878
      %v955 = vpack.c.b16 %v881, %v880
      %v956 = vpack.c.b16 %v883, %v882
      %v957 = vpack.c.b16 %v885, %v884
      %1030 = vmatpush.bf16.msra.mxu0 %v893
      %1031 = vmatpush.bf16.msra.mxu0 %v892
      %1032 = vmatpush.bf16.msra.mxu0 %v891
      %1033 = vmatpush.bf16.msra.mxu0 %v890
      %1034 = vmatpush.bf16.msra.mxu0 %v889
      %1035 = vmatpush.bf16.msra.mxu0 %v888
      %1036 = vmatpush.bf16.msra.mxu0 %v887
      %1037 = vmatpush.bf16.msra.mxu0 %v886
      %1038 = vmatmul.bf16.gmra.mxu0 %v526
      %v1039 = vpop.f32.mrf.mxu0
      %v1040 = vadd.f32 %v412, %v1039
      %v1041 = vpop.f32.mrf.mxu0
      %v1042 = vadd.f32 %v412, %v1041
      %1043 = vmatmul.bf16.gmra.mxu0 %v535
      %v1044 = vpop.f32.mrf.mxu0
      %v1045 = vadd.f32 %v412, %v1044
      %v1046 = vpop.f32.mrf.mxu0
      %v1047 = vadd.f32 %v412, %v1046
      %1048 = vmatmul.bf16.gmra.mxu0 %v544
      %v1049 = vpop.f32.mrf.mxu0
      %v1050 = vadd.f32 %v412, %v1049
      %v1051 = vpop.f32.mrf.mxu0
      %v1052 = vadd.f32 %v412, %v1051
      %1053 = vmatmul.bf16.gmra.mxu0 %v553
      %v1054 = vpop.f32.mrf.mxu0
      %v1055 = vadd.f32 %v412, %v1054
      %v1056 = vpop.f32.mrf.mxu0
      %v1057 = vadd.f32 %v412, %v1056
      %1058 = vdwg.mxu0
      %1059 = vmatpush.bf16.msra.mxu0 %v901
      %1060 = vmatpush.bf16.msra.mxu0 %v900
      %1061 = vmatpush.bf16.msra.mxu0 %v899
      %1062 = vmatpush.bf16.msra.mxu0 %v898
      %1063 = vmatpush.bf16.msra.mxu0 %v897
      %1064 = vmatpush.bf16.msra.mxu0 %v896
      %1065 = vmatpush.bf16.msra.mxu0 %v895
      %1066 = vmatpush.bf16.msra.mxu0 %v894
      %1067 = vmatmul.bf16.gmra.mxu0 %v527
      %v1068 = vpop.f32.mrf.mxu0
      %v1069 = vadd.f32 %v1040, %v1068
      %v1070 = vpop.f32.mrf.mxu0
      %v1071 = vadd.f32 %v1042, %v1070
      %1072 = vmatmul.bf16.gmra.mxu0 %v536
      %v1073 = vpop.f32.mrf.mxu0
      %v1074 = vadd.f32 %v1045, %v1073
      %v1075 = vpop.f32.mrf.mxu0
      %v1076 = vadd.f32 %v1047, %v1075
      %1077 = vmatmul.bf16.gmra.mxu0 %v545
      %v1078 = vpop.f32.mrf.mxu0
      %v1079 = vadd.f32 %v1050, %v1078
      %v1080 = vpop.f32.mrf.mxu0
      %v1081 = vadd.f32 %v1052, %v1080
      %1082 = vmatmul.bf16.gmra.mxu0 %v554
      %v1083 = vpop.f32.mrf.mxu0
      %v1084 = vadd.f32 %v1055, %v1083
      %v1085 = vpop.f32.mrf.mxu0
      %v1086 = vadd.f32 %v1057, %v1085
      %1087 = vdwg.mxu0
      %1088 = vmatpush.bf16.msra.mxu0 %v909
      %1089 = vmatpush.bf16.msra.mxu0 %v908
      %1090 = vmatpush.bf16.msra.mxu0 %v907
      %1091 = vmatpush.bf16.msra.mxu0 %v906
      %1092 = vmatpush.bf16.msra.mxu0 %v905
      %1093 = vmatpush.bf16.msra.mxu0 %v904
      %1094 = vmatpush.bf16.msra.mxu0 %v903
      %1095 = vmatpush.bf16.msra.mxu0 %v902
      %1096 = vmatmul.bf16.gmra.mxu0 %v528
      %v1097 = vpop.f32.mrf.mxu0
      %v1098 = vadd.f32 %v1069, %v1097
      %v1099 = vpop.f32.mrf.mxu0
      %v1100 = vadd.f32 %v1071, %v1099
      %1101 = vmatmul.bf16.gmra.mxu0 %v537
      %v1102 = vpop.f32.mrf.mxu0
      %v1103 = vadd.f32 %v1074, %v1102
      %v1104 = vpop.f32.mrf.mxu0
      %v1105 = vadd.f32 %v1076, %v1104
      %1106 = vmatmul.bf16.gmra.mxu0 %v546
      %v1107 = vpop.f32.mrf.mxu0
      %v1108 = vadd.f32 %v1079, %v1107
      %v1109 = vpop.f32.mrf.mxu0
      %v1110 = vadd.f32 %v1081, %v1109
      %1111 = vmatmul.bf16.gmra.mxu0 %v555
      %v1112 = vpop.f32.mrf.mxu0
      %v1113 = vadd.f32 %v1084, %v1112
      %v1114 = vpop.f32.mrf.mxu0
      %v1115 = vadd.f32 %v1086, %v1114
      %1116 = vdwg.mxu0
      %1117 = vmatpush.bf16.msra.mxu0 %v917
      %1118 = vmatpush.bf16.msra.mxu0 %v916
      %1119 = vmatpush.bf16.msra.mxu0 %v915
      %1120 = vmatpush.bf16.msra.mxu0 %v914
      %1121 = vmatpush.bf16.msra.mxu0 %v913
      %1122 = vmatpush.bf16.msra.mxu0 %v912
      %1123 = vmatpush.bf16.msra.mxu0 %v911
      %1124 = vmatpush.bf16.msra.mxu0 %v910
      %1125 = vmatmul.bf16.gmra.mxu0 %v529
      %v1126 = vpop.f32.mrf.mxu0
      %v1127 = vadd.f32 %v1098, %v1126
      %v1128 = vpop.f32.mrf.mxu0
      %v1129 = vadd.f32 %v1100, %v1128
      %1130 = vmatmul.bf16.gmra.mxu0 %v538
      %v1131 = vpop.f32.mrf.mxu0
      %v1132 = vadd.f32 %v1103, %v1131
      %v1133 = vpop.f32.mrf.mxu0
      %v1134 = vadd.f32 %v1105, %v1133
      %1135 = vmatmul.bf16.gmra.mxu0 %v547
      %v1136 = vpop.f32.mrf.mxu0
      %v1137 = vadd.f32 %v1108, %v1136
      %v1138 = vpop.f32.mrf.mxu0
      %v1139 = vadd.f32 %v1110, %v1138
      %1140 = vmatmul.bf16.gmra.mxu0 %v556
      %v1141 = vpop.f32.mrf.mxu0
      %v1142 = vadd.f32 %v1113, %v1141
      %v1143 = vpop.f32.mrf.mxu0
      %v1144 = vadd.f32 %v1115, %v1143
      %1145 = vdwg.mxu0
      %1146 = vmatpush.bf16.msra.mxu0 %v925
      %1147 = vmatpush.bf16.msra.mxu0 %v924
      %1148 = vmatpush.bf16.msra.mxu0 %v923
      %1149 = vmatpush.bf16.msra.mxu0 %v922
      %1150 = vmatpush.bf16.msra.mxu0 %v921
      %1151 = vmatpush.bf16.msra.mxu0 %v920
      %1152 = vmatpush.bf16.msra.mxu0 %v919
      %1153 = vmatpush.bf16.msra.mxu0 %v918
      %1154 = vmatmul.bf16.gmra.mxu0 %v530
      %v1155 = vpop.f32.mrf.mxu0
      %v1156 = vadd.f32 %v1127, %v1155
      %v1157 = vpop.f32.mrf.mxu0
      %v1158 = vadd.f32 %v1129, %v1157
      %1159 = vmatmul.bf16.gmra.mxu0 %v539
      %v1160 = vpop.f32.mrf.mxu0
      %v1161 = vadd.f32 %v1132, %v1160
      %v1162 = vpop.f32.mrf.mxu0
      %v1163 = vadd.f32 %v1134, %v1162
      %1164 = vmatmul.bf16.gmra.mxu0 %v548
      %v1165 = vpop.f32.mrf.mxu0
      %v1166 = vadd.f32 %v1137, %v1165
      %v1167 = vpop.f32.mrf.mxu0
      %v1168 = vadd.f32 %v1139, %v1167
      %1169 = vmatmul.bf16.gmra.mxu0 %v557
      %v1170 = vpop.f32.mrf.mxu0
      %v1171 = vadd.f32 %v1142, %v1170
      %v1172 = vpop.f32.mrf.mxu0
      %v1173 = vadd.f32 %v1144, %v1172
      %1174 = vdwg.mxu0
      %1175 = vmatpush.bf16.msra.mxu0 %v933
      %1176 = vmatpush.bf16.msra.mxu0 %v932
      %1177 = vmatpush.bf16.msra.mxu0 %v931
      %1178 = vmatpush.bf16.msra.mxu0 %v930
      %1179 = vmatpush.bf16.msra.mxu0 %v929
      %1180 = vmatpush.bf16.msra.mxu0 %v928
      %1181 = vmatpush.bf16.msra.mxu0 %v927
      %1182 = vmatpush.bf16.msra.mxu0 %v926
      %1183 = vmatmul.bf16.gmra.mxu0 %v531
      %v1184 = vpop.f32.mrf.mxu0
      %v1185 = vadd.f32 %v1156, %v1184
      %v1186 = vpop.f32.mrf.mxu0
      %v1187 = vadd.f32 %v1158, %v1186
      %1188 = vmatmul.bf16.gmra.mxu0 %v540
      %v1189 = vpop.f32.mrf.mxu0
      %v1190 = vadd.f32 %v1161, %v1189
      %v1191 = vpop.f32.mrf.mxu0
      %v1192 = vadd.f32 %v1163, %v1191
      %1193 = vmatmul.bf16.gmra.mxu0 %v549
      %v1194 = vpop.f32.mrf.mxu0
      %v1195 = vadd.f32 %v1166, %v1194
      %v1196 = vpop.f32.mrf.mxu0
      %v1197 = vadd.f32 %v1168, %v1196
      %1198 = vmatmul.bf16.gmra.mxu0 %v558
      %v1199 = vpop.f32.mrf.mxu0
      %v1200 = vadd.f32 %v1171, %v1199
      %v1201 = vpop.f32.mrf.mxu0
      %v1202 = vadd.f32 %v1173, %v1201
      %1203 = vdwg.mxu0
      %1204 = vmatpush.bf16.msra.mxu0 %v941
      %1205 = vmatpush.bf16.msra.mxu0 %v940
      %1206 = vmatpush.bf16.msra.mxu0 %v939
      %1207 = vmatpush.bf16.msra.mxu0 %v938
      %1208 = vmatpush.bf16.msra.mxu0 %v937
      %1209 = vmatpush.bf16.msra.mxu0 %v936
      %1210 = vmatpush.bf16.msra.mxu0 %v935
      %1211 = vmatpush.bf16.msra.mxu0 %v934
      %1212 = vmatmul.bf16.gmra.mxu0 %v532
      %v1213 = vpop.f32.mrf.mxu0
      %v1214 = vadd.f32 %v1185, %v1213
      %v1215 = vpop.f32.mrf.mxu0
      %v1216 = vadd.f32 %v1187, %v1215
      %1217 = vmatmul.bf16.gmra.mxu0 %v541
      %v1218 = vpop.f32.mrf.mxu0
      %v1219 = vadd.f32 %v1190, %v1218
      %v1220 = vpop.f32.mrf.mxu0
      %v1221 = vadd.f32 %v1192, %v1220
      %1222 = vmatmul.bf16.gmra.mxu0 %v550
      %v1223 = vpop.f32.mrf.mxu0
      %v1224 = vadd.f32 %v1195, %v1223
      %v1225 = vpop.f32.mrf.mxu0
      %v1226 = vadd.f32 %v1197, %v1225
      %1227 = vmatmul.bf16.gmra.mxu0 %v559
      %v1228 = vpop.f32.mrf.mxu0
      %v1229 = vadd.f32 %v1200, %v1228
      %v1230 = vpop.f32.mrf.mxu0
      %v1231 = vadd.f32 %v1202, %v1230
      %1232 = vdwg.mxu0
      %1233 = vmatpush.bf16.msra.mxu0 %v949
      %1234 = vmatpush.bf16.msra.mxu0 %v948
      %1235 = vmatpush.bf16.msra.mxu0 %v947
      %1236 = vmatpush.bf16.msra.mxu0 %v946
      %1237 = vmatpush.bf16.msra.mxu0 %v945
      %1238 = vmatpush.bf16.msra.mxu0 %v944
      %1239 = vmatpush.bf16.msra.mxu0 %v943
      %1240 = vmatpush.bf16.msra.mxu0 %v942
      %1241 = vmatmul.bf16.gmra.mxu0 %v533
      %v1242 = vpop.f32.mrf.mxu0
      %v1243 = vadd.f32 %v1214, %v1242
      %v1244 = vpop.f32.mrf.mxu0
      %v1245 = vadd.f32 %v1216, %v1244
      %1246 = vmatmul.bf16.gmra.mxu0 %v542
      %v1247 = vpop.f32.mrf.mxu0
      %v1248 = vadd.f32 %v1219, %v1247
      %v1249 = vpop.f32.mrf.mxu0
      %v1250 = vadd.f32 %v1221, %v1249
      %1251 = vmatmul.bf16.gmra.mxu0 %v551
      %v1252 = vpop.f32.mrf.mxu0
      %v1253 = vadd.f32 %v1224, %v1252
      %v1254 = vpop.f32.mrf.mxu0
      %v1255 = vadd.f32 %v1226, %v1254
      %1256 = vmatmul.bf16.gmra.mxu0 %v560
      %v1257 = vpop.f32.mrf.mxu0
      %v1258 = vadd.f32 %v1229, %v1257
      %v1259 = vpop.f32.mrf.mxu0
      %v1260 = vadd.f32 %v1231, %v1259
      %1261 = vdwg.mxu0
      %1262 = vmatpush.bf16.msra.mxu0 %v957
      %1263 = vmatpush.bf16.msra.mxu0 %v956
      %1264 = vmatpush.bf16.msra.mxu0 %v955
      %1265 = vmatpush.bf16.msra.mxu0 %v954
      %1266 = vmatpush.bf16.msra.mxu0 %v953
      %1267 = vmatpush.bf16.msra.mxu0 %v952
      %1268 = vmatpush.bf16.msra.mxu0 %v951
      %1269 = vmatpush.bf16.msra.mxu0 %v950
      %1270 = vmatmul.bf16.gmra.mxu0 %v534
      %v1271 = vpop.f32.mrf.mxu0
      %v1272 = vadd.f32 %v1243, %v1271
      %v1273 = vpop.f32.mrf.mxu0
      %v1274 = vadd.f32 %v1245, %v1273
      %1275 = vmatmul.bf16.gmra.mxu0 %v543
      %v1276 = vpop.f32.mrf.mxu0
      %v1277 = vadd.f32 %v1248, %v1276
      %v1278 = vpop.f32.mrf.mxu0
      %v1279 = vadd.f32 %v1250, %v1278
      %1280 = vmatmul.bf16.gmra.mxu0 %v552
      %v1281 = vpop.f32.mrf.mxu0
      %v1282 = vadd.f32 %v1253, %v1281
      %v1283 = vpop.f32.mrf.mxu0
      %v1284 = vadd.f32 %v1255, %v1283
      %1285 = vmatmul.bf16.gmra.mxu0 %v561
      %v1286 = vpop.f32.mrf.mxu0
      %v1287 = vadd.f32 %v1258, %v1286
      %v1288 = vpop.f32.mrf.mxu0
      %v1289 = vadd.f32 %v1260, %v1288
      %1290 = vdwg.mxu0
      %v1291 = vld [vmem:[%s218] sm:$0xff]
      %v1292 = vld [vmem:[%s218 + $0x8] sm:$0xff]
      %v1293 = vld [vmem:[%s218 + $0x10] sm:$0xff]
      %v1294 = vld [vmem:[%s218 + $0x18] sm:$0xff]
      %v1295 = vld [vmem:[%s218 + $0x20] sm:$0xff]
      %v1296 = vld [vmem:[%s218 + $0x28] sm:$0xff]
      %v1297 = vld [vmem:[%s218 + $0x30] sm:$0xff]
      %v1298 = vld [vmem:[%s218 + $0x38] sm:$0xff]
      %v1299 = vadd.f32 %v1272, %v1291
      %v1300 = vadd.f32 %v1274, %v1292
      %v1301 = vadd.f32 %v1277, %v1293
      %v1302 = vadd.f32 %v1279, %v1294
      %v1303 = vadd.f32 %v1282, %v1295
      %v1304 = vadd.f32 %v1284, %v1296
      %v1305 = vadd.f32 %v1287, %v1297
      %v1306 = vadd.f32 %v1289, %v1298
      %v1307 = vmax.f32 %v1299, 0.0
      %v1308 = vmax.f32 %v1300, 0.0
      %v1309 = vmax.f32 %v1301, 0.0
      %v1310 = vmax.f32 %v1302, 0.0
      %v1311 = vmax.f32 %v1303, 0.0
      %v1312 = vmax.f32 %v1304, 0.0
      %v1313 = vmax.f32 %v1305, 0.0
      %v1314 = vmax.f32 %v1306, 0.0
      %1315 = vst [vmem:[%s224] sm:$0xff] %v1307
      %1316 = vst [vmem:[%s224 + $0x8] sm:$0xff] %v1308
      %1317 = vst [vmem:[%s224 + $0x10] sm:$0xff] %v1309
      %1318 = vst [vmem:[%s224 + $0x18] sm:$0xff] %v1310
      %1319 = vst [vmem:[%s224 + $0x20] sm:$0xff] %v1311
      %1320 = vst [vmem:[%s224 + $0x28] sm:$0xff] %v1312
      %1321 = vst [vmem:[%s224 + $0x30] sm:$0xff] %v1313
      %1322 = vst [vmem:[%s224 + $0x38] sm:$0xff] %v1314
      %s1323 = smul.u32 8, %s15
      %p1324 = scmp.lt.s32.totalorder %s1323, 15
      %s1325 = scalar_select %p1324, %s1323, 15
      %s1326 = smul.addr %s1325, 8
      %s1327 = scalar_lea.vmem %s4, %s1326
      // Predicated region
      $region37: #{rnet_forward.11} parent=35 // pred_check
        %p1328 = pneg %p127
      $region38: #{rnet_forward.11} parent=35 // pred_check_branch
        %1330 = sbr.rel (%p1328) target = $region40
      $region39: #{rnet_forward.11} parent=35 // pred_region
        %s1331 = smul.u32 8, %s15
      $region40: #{rnet_forward.11} parent=35 // pred_fallthru
        _
    $region36: #{rnet_forward.11} parent=5 // pred_fallthru
      _
    %p1332 = scmp.le.s32.totalorder 2, %s10
    // Predicated region
    $region41: #{rnet_forward.11} parent=5 // pred_check
      %p1333 = pneg %p1332
    $region42: #{rnet_forward.11} parent=5 // pred_check_branch
      %1335 = sbr.rel (%p1333) target = $region44
    $region43: #{rnet_forward.11} parent=5 // pred_region
      %s1336 = ssub.s32 %s10, 2
      // Predicated region
      $region45: #{rnet_forward.11} parent=43 // pred_check
        %p1337 = pneg %p133
      $region46: #{rnet_forward.11} parent=43 // pred_check_branch
        %1339 = sbr.rel (%p1337) target = $region48
      $region47: #{rnet_forward.11} parent=43 // pred_region
        %s1340 = smul.u32 8, %s16
        %p1341 = scmp.lt.s32.totalorder %s1340, 15
        %s1342 = scalar_select %p1341, %s1340, 15
        %s1343 = smul.addr %s1342, 8
        %s1344 = scalar_lea.vmem %s4, %s1343
      $region48: #{rnet_forward.11} parent=43 // pred_fallthru
        _
    $region44: #{rnet_forward.11} parent=5 // pred_fallthru
      _
  $region6: #{rnet_forward.11} parent=0 // loop_footer
    %s14 = sadd.s32 1, %s10
  $region7: #{rnet_forward.11} parent=0 // loop_footer_branch
    %9 = sbr.rel target = $region3
  $region8: #{rnet_forward.11} parent=0 // loop_exit
    _

// kernel: rnet_forward.12
$region0: #{rnet_forward.12}
  #allocation0 [shape = 'u32[]', space=smem, size = 0x4, offset = 0x4, fixed_abs, tag = 'smem constant byte address 0x4 - core index']
  #allocation1 [shape = 'u32[72,128]{1,0:T(1,128)}', space=vmem, size = 0x9000, scoped, tag = 'internal scratch']
  %s0 = inlined_call_operand.vmem [shape: bf16[32,1152], index: 0, kind: input, shape index: {}]
  %s1 = inlined_call_operand.vmem [shape: bf16[1152,128], index: 1, kind: input, shape index: {}]
  %s2 = inlined_call_operand.vmem [shape: f32[1,128], index: 2, kind: input, shape index: {}]
  %s3 = inlined_call_operand.vmem [shape: f32[32,128], index: 3, kind: output, shape index: {}]
  %s4 = sld [smem:[#allocation0]]
  $region45: #{rnet_forward.12} parent=0
    _
  %s6 = ssub.s32 1, %s4
  %s7 = scalar_select 0, %s6, %s4
  loop: start=0, step=1, limit=4
  $region2: #{rnet_forward.12} parent=0 // loop_pre_header
    _
  $region3: #{rnet_forward.12} parent=0 // loop_header
    %s9 = sphi 0, %s13
    %p10 = scmp.ge.s32.totalorder %s9, 4
    %s19 = sphi 0, %s21
    %s22 = sphi 0, %s19
    %s23 = sphi 0, %s22
    %s39 = sphi 0, %s23
    %s43 = sphi 0, %s43
    %s45 = sphi 0, %s43
    %s46 = sphi 0, %s45
    %s60 = sphi 0, %s46
    %s64 = sphi 0, %s64
    %s66 = sphi 0, %s64
    %s67 = sphi 0, %s66
    %s81 = sphi 0, %s67
    %s87 = sphi 0, %s89
    %s90 = sphi 0, %s87
    %s91 = sphi 0, %s90
    %s107 = sphi 0, %s91
  $region4: #{rnet_forward.12} parent=0 // loop_header_branch
    %12 = sbr.rel (%p10) target = $region8
  $region5: #{rnet_forward.12} parent=0 // loop_body
    %s14 = ssub.s32 %s9, 1
    %s15 = ssub.s32 %s9, 2
    %s16 = sadd.s32 %s9, 1
    %s17 = ssub.s32 %s9, %s16
    %p18 = scmp.eq.s32.totalorder %s17, 0
    %s20 = sadd.s32 %s19, 1
    %s21 = scalar_select %p18, %s19, %s20
    %p24 = pneg %p18
    %p25 = scmp.eq.s32.totalorder %s9, 1
    %p26 = por %p24, %p25
    %p27 = scmp.ne.s32.totalorder %s19, %s22
    %p28 = scmp.eq.s32.totalorder %s9, 0
    %p29 = por %p27, %p28
    %p30 = scmp.ne.s32.totalorder %s19, %s22
    %p31 = scmp.eq.s32.totalorder %s14, 1
    %p32 = por %p30, %p31
    %p33 = scmp.ne.s32.totalorder %s22, %s23
    %p34 = scmp.eq.s32.totalorder %s14, 0
    %p35 = por %p33, %p34
    %p36 = scmp.ne.s32.totalorder %s22, %s23
    %p37 = scmp.eq.s32.totalorder %s15, 1
    %p38 = por %p36, %p37
    %p40 = scmp.ne.s32.totalorder %s23, %s39
    %p41 = scmp.eq.s32.totalorder %s15, 0
    %p42 = por %p40, %p41
    %s44 = sadd.s32 %s43, 1
    %p47 = scmp.eq.s32.totalorder %s9, 1
    %p48 = scmp.ne.s32.totalorder %s43, %s45
    %p49 = scmp.eq.s32.totalorder %s9, 0
    %p50 = por %p48, %p49
    %p51 = scmp.ne.s32.totalorder %s43, %s45
    %p52 = scmp.eq.s32.totalorder %s14, 1
    %p53 = por %p51, %p52
    %p54 = scmp.ne.s32.totalorder %s45, %s46
    %p55 = scmp.eq.s32.totalorder %s14, 0
    %p56 = por %p54, %p55
    %p57 = scmp.ne.s32.totalorder %s45, %s46
    %p58 = scmp.eq.s32.totalorder %s15, 1
    %p59 = por %p57, %p58
    %p61 = scmp.ne.s32.totalorder %s46, %s60
    %p62 = scmp.eq.s32.totalorder %s15, 0
    %p63 = por %p61, %p62
    %s65 = sadd.s32 %s64, 1
    %p68 = scmp.eq.s32.totalorder %s9, 1
    %p69 = scmp.ne.s32.totalorder %s64, %s66
    %p70 = scmp.eq.s32.totalorder %s9, 0
    %p71 = por %p69, %p70
    %p72 = scmp.ne.s32.totalorder %s64, %s66
    %p73 = scmp.eq.s32.totalorder %s14, 1
    %p74 = por %p72, %p73
    %p75 = scmp.ne.s32.totalorder %s66, %s67
    %p76 = scmp.eq.s32.totalorder %s14, 0
    %p77 = por %p75, %p76
    %p78 = scmp.ne.s32.totalorder %s66, %s67
    %p79 = scmp.eq.s32.totalorder %s15, 1
    %p80 = por %p78, %p79
    %p82 = scmp.ne.s32.totalorder %s67, %s81
    %p83 = scmp.eq.s32.totalorder %s15, 0
    %p84 = por %p82, %p83
    %s85 = ssub.s32 %s9, %s16
    %p86 = scmp.eq.s32.totalorder %s85, 0
    %s88 = sadd.s32 %s87, 1
    %s89 = scalar_select %p86, %s87, %s88
    %p92 = pneg %p86
    %p93 = scmp.eq.s32.totalorder %s9, 1
    %p94 = por %p92, %p93
    %p95 = scmp.ne.s32.totalorder %s87, %s90
    %p96 = scmp.eq.s32.totalorder %s9, 0
    %p97 = por %p95, %p96
    %p98 = scmp.ne.s32.totalorder %s87, %s90
    %p99 = scmp.eq.s32.totalorder %s14, 1
    %p100 = por %p98, %p99
    %p101 = scmp.ne.s32.totalorder %s90, %s91
    %p102 = scmp.eq.s32.totalorder %s14, 0
    %p103 = por %p101, %p102
    %p104 = scmp.ne.s32.totalorder %s90, %s91
    %p105 = scmp.eq.s32.totalorder %s15, 1
    %p106 = por %p104, %p105
    %p108 = scmp.ne.s32.totalorder %s91, %s107
    %p109 = scmp.eq.s32.totalorder %s15, 0
    %p110 = por %p108, %p109
    %p111 = scmp.le.s32.totalorder 1, %s9
    %p112 = scmp.lt.s32.totalorder %s9, 3
    %p113 = pnand %p111, %p112
    %p114 = pneg %p113
    // Predicated region
    $region9: #{rnet_forward.12} parent=5 // pred_check
      _
    $region10: #{rnet_forward.12} parent=5 // pred_check_branch
      %116 = sbr.rel (%p113) target = $region12
    $region11: #{rnet_forward.12} parent=5 // pred_region
      %s117 = ssub.s32 %s9, 1
      // Predicated region
      $region13: #{rnet_forward.12} parent=11 // pred_check
        %p118 = pneg %p56
      $region14: #{rnet_forward.12} parent=11 // pred_check_branch
        %120 = sbr.rel (%p118) target = $region16
      $region15: #{rnet_forward.12} parent=11 // pred_region
        _
      $region16: #{rnet_forward.12} parent=11 // pred_fallthru
        _
      // Predicated region
      $region17: #{rnet_forward.12} parent=11 // pred_check
        %p121 = pneg %p77
      $region18: #{rnet_forward.12} parent=11 // pred_check_branch
        %123 = sbr.rel (%p121) target = $region20
      $region19: #{rnet_forward.12} parent=11 // pred_region
        _
      $region20: #{rnet_forward.12} parent=11 // pred_fallthru
        _
    $region12: #{rnet_forward.12} parent=5 // pred_fallthru
      _
    %p124 = scmp.lt.s32.totalorder %s9, 2
    // Predicated region
    $region21: #{rnet_forward.12} parent=5 // pred_check
      %p125 = pneg %p124
    $region22: #{rnet_forward.12} parent=5 // pred_check_branch
      %127 = sbr.rel (%p125) target = $region24
    $region23: #{rnet_forward.12} parent=5 // pred_region
      // Predicated region
      $region25: #{rnet_forward.12} parent=23 // pred_check
        %p128 = pneg %p29
      $region26: #{rnet_forward.12} parent=23 // pred_check_branch
        %130 = sbr.rel (%p128) target = $region28
      $region27: #{rnet_forward.12} parent=23 // pred_region
        %s131 = smul.u32 2, %s9
        %p132 = scmp.lt.s32.totalorder %s131, 3
        %s133 = scalar_select %p132, %s131, 3
        %s134 = smul.addr %s133, 9
        %s135 = smul.addr %s134, 4
        %s136 = scalar_lea.vmem %s0, %s135
        %s137 = smul.u32 2, %s9
      $region28: #{rnet_forward.12} parent=23 // pred_fallthru
        _
    $region24: #{rnet_forward.12} parent=5 // pred_fallthru
      _
    %p138 = scmp.le.s32.totalorder 1, %s9
    %p139 = scmp.lt.s32.totalorder %s9, 3
    %p140 = pnand %p138, %p139
    %p141 = pneg %p140
    // Predicated region
    $region29: #{rnet_forward.12} parent=5 // pred_check
      _
    $region30: #{rnet_forward.12} parent=5 // pred_check_branch
      %143 = sbr.rel (%p140) target = $region32
    $region31: #{rnet_forward.12} parent=5 // pred_region
      %s144 = ssub.s32 %s9, 1
      %s145 = smul.u32 2, %s14
      %p146 = scmp.lt.s32.totalorder %s145, 3
      %s147 = scalar_select %p146, %s145, 3
      %s148 = smul.addr %s147, 9
      %s149 = smul.addr %s148, 4
      %s150 = scalar_lea.vmem %s0, %s149
      %p151 = pneg %p35
      %p152 = pneg %p32
      %p153 = pneg %p56
      %p154 = pneg %p53
      %p155 = pneg %p77
      %p156 = pneg %p74
      %p157 = pneg %p103
      %p158 = pneg %p100
      %s159 = smul.u32 2, %s14
      %p160 = scmp.lt.s32.totalorder %s159, 3
      %s161 = scalar_select %p160, %s159, 3
      %s162 = smul.addr %s161, 8
      %s163 = scalar_lea.vmem %s3, %s162
      %s164 = smul.u32 2, %s14
      %p165 = scmp.lt.s32.totalorder %s164, 3
      %s166 = scalar_select %p165, %s164, 3
      %s167 = smul.addr %s166, 9
      %s168 = smul.addr %s167, 4
      %s169 = scalar_lea.vmem %s0, %s168
      %s170 = smul.u32 2, %s14
      %s171 = smul.u32 2, %s14
      %p172 = scmp.lt.s32.totalorder %s171, 3
      %s173 = scalar_select %p172, %s171, 3
      %s174 = smul.addr %s173, 8
      %s175 = scalar_lea.vmem %s3, %s174
      %s176 = smul.u32 2, %s14
      %v177 = vld [vmem:[%s169] sm:$0xff]
      %v178 = vld [vmem:[%s169 + $0x8] sm:$0xff]
      %v179 = vld [vmem:[%s169 + $0x10] sm:$0xff]
      %v180 = vld [vmem:[%s169 + $0x18] sm:$0xff]
      %v181 = vld [vmem:[%s169 + $0x20] sm:$0xf]
      %v182 = vld [vmem:[%s169 + $0x24] sm:$0xff]
      %v183 = vld [vmem:[%s169 + $0x2c] sm:$0xff]
      %v184 = vld [vmem:[%s169 + $0x34] sm:$0xff]
      %v185 = vld [vmem:[%s169 + $0x3c] sm:$0xff]
      %v186 = vld [vmem:[%s169 + $0x44] sm:$0xf]
      %v187 = vld [vmem:[%s1] sm:$0xf]
      %v188 = vld [vmem:[%s1 + $0x4] sm:$0xf]
      %v189 = vld [vmem:[%s1 + $0x8] sm:$0xf]
      %v190 = vld [vmem:[%s1 + $0xc] sm:$0xf]
      %v191 = vld [vmem:[%s1 + $0x10] sm:$0xf]
      %v192 = vld [vmem:[%s1 + $0x14] sm:$0xf]
      %v193 = vld [vmem:[%s1 + $0x18] sm:$0xf]
      %v194 = vld [vmem:[%s1 + $0x1c] sm:$0xf]
      %v195 = vld [vmem:[%s1 + $0x20] sm:$0xf]
      %v196 = vld [vmem:[%s1 + $0x24] sm:$0xf]
      %v197 = vld [vmem:[%s1 + $0x28] sm:$0xf]
      %v198 = vld [vmem:[%s1 + $0x2c] sm:$0xf]
      %v199 = vld [vmem:[%s1 + $0x30] sm:$0xf]
      %v200 = vld [vmem:[%s1 + $0x34] sm:$0xf]
      %v201 = vld [vmem:[%s1 + $0x38] sm:$0xf]
      %v202 = vld [vmem:[%s1 + $0x3c] sm:$0xf]
      %v203 = vld [vmem:[%s1 + $0x40] sm:$0xf]
      %v204 = vld [vmem:[%s1 + $0x44] sm:$0xf]
      %v205 = vld [vmem:[%s1 + $0x48] sm:$0xf]
      %v206 = vld [vmem:[%s1 + $0x4c] sm:$0xf]
      %v207 = vld [vmem:[%s1 + $0x50] sm:$0xf]
      %v208 = vld [vmem:[%s1 + $0x54] sm:$0xf]
      %v209 = vld [vmem:[%s1 + $0x58] sm:$0xf]
      %v210 = vld [vmem:[%s1 + $0x5c] sm:$0xf]
      %v211 = vld [vmem:[%s1 + $0x60] sm:$0xf]
      %v212 = vld [vmem:[%s1 + $0x64] sm:$0xf]
      %v213 = vld [vmem:[%s1 + $0x68] sm:$0xf]
      %v214 = vld [vmem:[%s1 + $0x6c] sm:$0xf]
      %v215 = vld [vmem:[%s1 + $0x70] sm:$0xf]
      %v216 = vld [vmem:[%s1 + $0x74] sm:$0xf]
      %v217 = vld [vmem:[%s1 + $0x78] sm:$0xf]
      %v218 = vld [vmem:[%s1 + $0x7c] sm:$0xf]
      %v219 = vld [vmem:[%s1 + $0x80] sm:$0xf]
      %v220 = vld [vmem:[%s1 + $0x84] sm:$0xf]
      %v221 = vld [vmem:[%s1 + $0x88] sm:$0xf]
      %v222 = vld [vmem:[%s1 + $0x8c] sm:$0xf]
      %v223 = vld [vmem:[%s1 + $0x90] sm:$0xf]
      %v224 = vld [vmem:[%s1 + $0x94] sm:$0xf]
      %v225 = vld [vmem:[%s1 + $0x98] sm:$0xf]
      %v226 = vld [vmem:[%s1 + $0x9c] sm:$0xf]
      %v227 = vld [vmem:[%s1 + $0xa0] sm:$0xf]
      %v228 = vld [vmem:[%s1 + $0xa4] sm:$0xf]
      %v229 = vld [vmem:[%s1 + $0xa8] sm:$0xf]
      %v230 = vld [vmem:[%s1 + $0xac] sm:$0xf]
      %v231 = vld [vmem:[%s1 + $0xb0] sm:$0xf]
      %v232 = vld [vmem:[%s1 + $0xb4] sm:$0xf]
      %v233 = vld [vmem:[%s1 + $0xb8] sm:$0xf]
      %v234 = vld [vmem:[%s1 + $0xbc] sm:$0xf]
      %v235 = vld [vmem:[%s1 + $0xc0] sm:$0xf]
      %v236 = vld [vmem:[%s1 + $0xc4] sm:$0xf]
      %v237 = vld [vmem:[%s1 + $0xc8] sm:$0xf]
      %v238 = vld [vmem:[%s1 + $0xcc] sm:$0xf]
      %v239 = vld [vmem:[%s1 + $0xd0] sm:$0xf]
      %v240 = vld [vmem:[%s1 + $0xd4] sm:$0xf]
      %v241 = vld [vmem:[%s1 + $0xd8] sm:$0xf]
      %v242 = vld [vmem:[%s1 + $0xdc] sm:$0xf]
      %v243 = vld [vmem:[%s1 + $0xe0] sm:$0xf]
      %v244 = vld [vmem:[%s1 + $0xe4] sm:$0xf]
      %v245 = vld [vmem:[%s1 + $0xe8] sm:$0xf]
      %v246 = vld [vmem:[%s1 + $0xec] sm:$0xf]
      %v247 = vld [vmem:[%s1 + $0xf0] sm:$0xf]
      %v248 = vld [vmem:[%s1 + $0xf4] sm:$0xf]
      %v249 = vld [vmem:[%s1 + $0xf8] sm:$0xf]
      %v250 = vld [vmem:[%s1 + $0xfc] sm:$0xf]
      %v251 = vld [vmem:[%s1 + $0x100] sm:$0xf]
      %v252 = vld [vmem:[%s1 + $0x104] sm:$0xf]
      %v253 = vld [vmem:[%s1 + $0x108] sm:$0xf]
      %v254 = vld [vmem:[%s1 + $0x10c] sm:$0xf]
      %v255 = vld [vmem:[%s1 + $0x110] sm:$0xf]
      %v256 = vld [vmem:[%s1 + $0x114] sm:$0xf]
      %v257 = vld [vmem:[%s1 + $0x118] sm:$0xf]
      %v258 = vld [vmem:[%s1 + $0x11c] sm:$0xf]
      %v259 = vld [vmem:[%s1 + $0x120] sm:$0xf]
      %v260 = vld [vmem:[%s1 + $0x124] sm:$0xf]
      %v261 = vld [vmem:[%s1 + $0x128] sm:$0xf]
      %v262 = vld [vmem:[%s1 + $0x12c] sm:$0xf]
      %v263 = vld [vmem:[%s1 + $0x130] sm:$0xf]
      %v264 = vld [vmem:[%s1 + $0x134] sm:$0xf]
      %v265 = vld [vmem:[%s1 + $0x138] sm:$0xf]
      %v266 = vld [vmem:[%s1 + $0x13c] sm:$0xf]
      %v267 = vld [vmem:[%s1 + $0x140] sm:$0xf]
      %v268 = vld [vmem:[%s1 + $0x144] sm:$0xf]
      %v269 = vld [vmem:[%s1 + $0x148] sm:$0xf]
      %v270 = vld [vmem:[%s1 + $0x14c] sm:$0xf]
      %v271 = vld [vmem:[%s1 + $0x150] sm:$0xf]
      %v272 = vld [vmem:[%s1 + $0x154] sm:$0xf]
      %v273 = vld [vmem:[%s1 + $0x158] sm:$0xf]
      %v274 = vld [vmem:[%s1 + $0x15c] sm:$0xf]
      %v275 = vld [vmem:[%s1 + $0x160] sm:$0xf]
      %v276 = vld [vmem:[%s1 + $0x164] sm:$0xf]
      %v277 = vld [vmem:[%s1 + $0x168] sm:$0xf]
      %v278 = vld [vmem:[%s1 + $0x16c] sm:$0xf]
      %v279 = vld [vmem:[%s1 + $0x170] sm:$0xf]
      %v280 = vld [vmem:[%s1 + $0x174] sm:$0xf]
      %v281 = vld [vmem:[%s1 + $0x178] sm:$0xf]
      %v282 = vld [vmem:[%s1 + $0x17c] sm:$0xf]
      %v283 = vld [vmem:[%s1 + $0x180] sm:$0xf]
      %v284 = vld [vmem:[%s1 + $0x184] sm:$0xf]
      %v285 = vld [vmem:[%s1 + $0x188] sm:$0xf]
      %v286 = vld [vmem:[%s1 + $0x18c] sm:$0xf]
      %v287 = vld [vmem:[%s1 + $0x190] sm:$0xf]
      %v288 = vld [vmem:[%s1 + $0x194] sm:$0xf]
      %v289 = vld [vmem:[%s1 + $0x198] sm:$0xf]
      %v290 = vld [vmem:[%s1 + $0x19c] sm:$0xf]
      %v291 = vld [vmem:[%s1 + $0x1a0] sm:$0xf]
      %v292 = vld [vmem:[%s1 + $0x1a4] sm:$0xf]
      %v293 = vld [vmem:[%s1 + $0x1a8] sm:$0xf]
      %v294 = vld [vmem:[%s1 + $0x1ac] sm:$0xf]
      %v295 = vld [vmem:[%s1 + $0x1b0] sm:$0xf]
      %v296 = vld [vmem:[%s1 + $0x1b4] sm:$0xf]
      %v297 = vld [vmem:[%s1 + $0x1b8] sm:$0xf]
      %v298 = vld [vmem:[%s1 + $0x1bc] sm:$0xf]
      %v299 = vld [vmem:[%s1 + $0x1c0] sm:$0xf]
      %v300 = vld [vmem:[%s1 + $0x1c4] sm:$0xf]
      %v301 = vld [vmem:[%s1 + $0x1c8] sm:$0xf]
      %v302 = vld [vmem:[%s1 + $0x1cc] sm:$0xf]
      %v303 = vld [vmem:[%s1 + $0x1d0] sm:$0xf]
      %v304 = vld [vmem:[%s1 + $0x1d4] sm:$0xf]
      %v305 = vld [vmem:[%s1 + $0x1d8] sm:$0xf]
      %v306 = vld [vmem:[%s1 + $0x1dc] sm:$0xf]
      %v307 = vld [vmem:[%s1 + $0x1e0] sm:$0xf]
      %v308 = vld [vmem:[%s1 + $0x1e4] sm:$0xf]
      %v309 = vld [vmem:[%s1 + $0x1e8] sm:$0xf]
      %v310 = vld [vmem:[%s1 + $0x1ec] sm:$0xf]
      %v311 = vld [vmem:[%s1 + $0x1f0] sm:$0xf]
      %v312 = vld [vmem:[%s1 + $0x1f4] sm:$0xf]
      %v313 = vld [vmem:[%s1 + $0x1f8] sm:$0xf]
      %v314 = vld [vmem:[%s1 + $0x1fc] sm:$0xf]
      %v315 = vld [vmem:[%s1 + $0x200] sm:$0xf]
      %v316 = vld [vmem:[%s1 + $0x204] sm:$0xf]
      %v317 = vld [vmem:[%s1 + $0x208] sm:$0xf]
      %v318 = vld [vmem:[%s1 + $0x20c] sm:$0xf]
      %v319 = vld [vmem:[%s1 + $0x210] sm:$0xf]
      %v320 = vld [vmem:[%s1 + $0x214] sm:$0xf]
      %v321 = vld [vmem:[%s1 + $0x218] sm:$0xf]
      %v322 = vld [vmem:[%s1 + $0x21c] sm:$0xf]
      %v323 = vld [vmem:[%s1 + $0x220] sm:$0xf]
      %v324 = vld [vmem:[%s1 + $0x224] sm:$0xf]
      %v325 = vld [vmem:[%s1 + $0x228] sm:$0xf]
      %v326 = vld [vmem:[%s1 + $0x22c] sm:$0xf]
      %v327 = vld [vmem:[%s1 + $0x230] sm:$0xf]
      %v328 = vld [vmem:[%s1 + $0x234] sm:$0xf]
      %v329 = vld [vmem:[%s1 + $0x238] sm:$0xf]
      %v330 = vld [vmem:[%s1 + $0x23c] sm:$0xf]
      %v331 = vld [vmem:[%s2] sm:$0x1]
      %v333 = vperm.slane %v331, 0
      %v345 = vunpack.c.l.b16 %v177
      %v346 = vunpack.c.h.b16 %v177
      %v347 = vunpack.c.l.b16 %v178
      %v348 = vunpack.c.h.b16 %v178
      %v349 = vunpack.c.l.b16 %v179
      %v350 = vunpack.c.h.b16 %v179
      %v351 = vunpack.c.l.b16 %v180
      %v352 = vunpack.c.h.b16 %v180
      %v353 = vunpack.c.l.b16 %v181
      %v354 = vunpack.c.l.b16 %v182
      %v355 = vunpack.c.h.b16 %v182
      %v356 = vunpack.c.l.b16 %v183
      %v357 = vunpack.c.h.b16 %v183
      %v358 = vunpack.c.l.b16 %v184
      %v359 = vunpack.c.h.b16 %v184
      %v360 = vunpack.c.l.b16 %v185
      %v361 = vunpack.c.h.b16 %v185
      %v362 = vunpack.c.l.b16 %v186
      %v363 = vpack.c.b16 %v354, %v345
      %v364 = vpack.c.b16 %v355, %v346
      %v365 = vpack.c.b16 %v356, %v347
      %v366 = vpack.c.b16 %v357, %v348
      %v367 = vpack.c.b16 %v358, %v349
      %v368 = vpack.c.b16 %v359, %v350
      %v369 = vpack.c.b16 %v360, %v351
      %v370 = vpack.c.b16 %v361, %v352
      %v371 = vpack.c.b16 %v362, %v353
      %v525 = vunpack.c.l.b16 %v187
      %v526 = vunpack.c.l.b16 %v188
      %v527 = vunpack.c.l.b16 %v189
      %v528 = vunpack.c.l.b16 %v190
      %v529 = vunpack.c.l.b16 %v191
      %v530 = vunpack.c.l.b16 %v192
      %v531 = vunpack.c.l.b16 %v193
      %v532 = vunpack.c.l.b16 %v194
      %v533 = vunpack.c.l.b16 %v195
      %v534 = vunpack.c.l.b16 %v196
      %v535 = vunpack.c.l.b16 %v197
      %v536 = vunpack.c.l.b16 %v198
      %v537 = vunpack.c.l.b16 %v199
      %v538 = vunpack.c.l.b16 %v200
      %v539 = vunpack.c.l.b16 %v201
      %v540 = vunpack.c.l.b16 %v202
      %v541 = vunpack.c.l.b16 %v203
      %v542 = vunpack.c.l.b16 %v204
      %v543 = vunpack.c.l.b16 %v205
      %v544 = vunpack.c.l.b16 %v206
      %v545 = vunpack.c.l.b16 %v207
      %v546 = vunpack.c.l.b16 %v208
      %v547 = vunpack.c.l.b16 %v209
      %v548 = vunpack.c.l.b16 %v210
      %v549 = vunpack.c.l.b16 %v211
      %v550 = vunpack.c.l.b16 %v212
      %v551 = vunpack.c.l.b16 %v213
      %v552 = vunpack.c.l.b16 %v214
      %v553 = vunpack.c.l.b16 %v215
      %v554 = vunpack.c.l.b16 %v216
      %v555 = vunpack.c.l.b16 %v217
      %v556 = vunpack.c.l.b16 %v218
      %v557 = vunpack.c.l.b16 %v219
      %v558 = vunpack.c.l.b16 %v220
      %v559 = vunpack.c.l.b16 %v221
      %v560 = vunpack.c.l.b16 %v222
      %v561 = vunpack.c.l.b16 %v223
      %v562 = vunpack.c.l.b16 %v224
      %v563 = vunpack.c.l.b16 %v225
      %v564 = vunpack.c.l.b16 %v226
      %v565 = vunpack.c.l.b16 %v227
      %v566 = vunpack.c.l.b16 %v228
      %v567 = vunpack.c.l.b16 %v229
      %v568 = vunpack.c.l.b16 %v230
      %v569 = vunpack.c.l.b16 %v231
      %v570 = vunpack.c.l.b16 %v232
      %v571 = vunpack.c.l.b16 %v233
      %v572 = vunpack.c.l.b16 %v234
      %v573 = vunpack.c.l.b16 %v235
      %v574 = vunpack.c.l.b16 %v236
      %v575 = vunpack.c.l.b16 %v237
      %v576 = vunpack.c.l.b16 %v238
      %v577 = vunpack.c.l.b16 %v239
      %v578 = vunpack.c.l.b16 %v240
      %v579 = vunpack.c.l.b16 %v241
      %v580 = vunpack.c.l.b16 %v242
      %v581 = vunpack.c.l.b16 %v243
      %v582 = vunpack.c.l.b16 %v244
      %v583 = vunpack.c.l.b16 %v245
      %v584 = vunpack.c.l.b16 %v246
      %v585 = vunpack.c.l.b16 %v247
      %v586 = vunpack.c.l.b16 %v248
      %v587 = vunpack.c.l.b16 %v249
      %v588 = vunpack.c.l.b16 %v250
      %v589 = vunpack.c.l.b16 %v251
      %v590 = vunpack.c.l.b16 %v252
      %v591 = vunpack.c.l.b16 %v253
      %v592 = vunpack.c.l.b16 %v254
      %v593 = vunpack.c.l.b16 %v255
      %v594 = vunpack.c.l.b16 %v256
      %v595 = vunpack.c.l.b16 %v257
      %v596 = vunpack.c.l.b16 %v258
      %v597 = vunpack.c.l.b16 %v259
      %v598 = vunpack.c.l.b16 %v260
      %v599 = vunpack.c.l.b16 %v261
      %v600 = vunpack.c.l.b16 %v262
      %v601 = vunpack.c.l.b16 %v263
      %v602 = vunpack.c.l.b16 %v264
      %v603 = vunpack.c.l.b16 %v265
      %v604 = vunpack.c.l.b16 %v266
      %v605 = vunpack.c.l.b16 %v267
      %v606 = vunpack.c.l.b16 %v268
      %v607 = vunpack.c.l.b16 %v269
      %v608 = vunpack.c.l.b16 %v270
      %v609 = vunpack.c.l.b16 %v271
      %v610 = vunpack.c.l.b16 %v272
      %v611 = vunpack.c.l.b16 %v273
      %v612 = vunpack.c.l.b16 %v274
      %v613 = vunpack.c.l.b16 %v275
      %v614 = vunpack.c.l.b16 %v276
      %v615 = vunpack.c.l.b16 %v277
      %v616 = vunpack.c.l.b16 %v278
      %v617 = vunpack.c.l.b16 %v279
      %v618 = vunpack.c.l.b16 %v280
      %v619 = vunpack.c.l.b16 %v281
      %v620 = vunpack.c.l.b16 %v282
      %v621 = vunpack.c.l.b16 %v283
      %v622 = vunpack.c.l.b16 %v284
      %v623 = vunpack.c.l.b16 %v285
      %v624 = vunpack.c.l.b16 %v286
      %v625 = vunpack.c.l.b16 %v287
      %v626 = vunpack.c.l.b16 %v288
      %v627 = vunpack.c.l.b16 %v289
      %v628 = vunpack.c.l.b16 %v290
      %v629 = vunpack.c.l.b16 %v291
      %v630 = vunpack.c.l.b16 %v292
      %v631 = vunpack.c.l.b16 %v293
      %v632 = vunpack.c.l.b16 %v294
      %v633 = vunpack.c.l.b16 %v295
      %v634 = vunpack.c.l.b16 %v296
      %v635 = vunpack.c.l.b16 %v297
      %v636 = vunpack.c.l.b16 %v298
      %v637 = vunpack.c.l.b16 %v299
      %v638 = vunpack.c.l.b16 %v300
      %v639 = vunpack.c.l.b16 %v301
      %v640 = vunpack.c.l.b16 %v302
      %v641 = vunpack.c.l.b16 %v303
      %v642 = vunpack.c.l.b16 %v304
      %v643 = vunpack.c.l.b16 %v305
      %v644 = vunpack.c.l.b16 %v306
      %v645 = vunpack.c.l.b16 %v307
      %v646 = vunpack.c.l.b16 %v308
      %v647 = vunpack.c.l.b16 %v309
      %v648 = vunpack.c.l.b16 %v310
      %v649 = vunpack.c.l.b16 %v311
      %v650 = vunpack.c.l.b16 %v312
      %v651 = vunpack.c.l.b16 %v313
      %v652 = vunpack.c.l.b16 %v314
      %v653 = vunpack.c.l.b16 %v315
      %v654 = vunpack.c.l.b16 %v316
      %v655 = vunpack.c.l.b16 %v317
      %v656 = vunpack.c.l.b16 %v318
      %v657 = vunpack.c.l.b16 %v319
      %v658 = vunpack.c.l.b16 %v320
      %v659 = vunpack.c.l.b16 %v321
      %v660 = vunpack.c.l.b16 %v322
      %v661 = vunpack.c.l.b16 %v323
      %v662 = vunpack.c.l.b16 %v324
      %v663 = vunpack.c.l.b16 %v325
      %v664 = vunpack.c.l.b16 %v326
      %v665 = vunpack.c.l.b16 %v327
      %v666 = vunpack.c.l.b16 %v328
      %v667 = vunpack.c.l.b16 %v329
      %v668 = vunpack.c.l.b16 %v330
      %v669 = vpack.c.b16 %v526, %v525
      %v670 = vpack.c.b16 %v528, %v527
      %v671 = vpack.c.b16 %v530, %v529
      %v672 = vpack.c.b16 %v532, %v531
      %v673 = vpack.c.b16 %v534, %v533
      %v674 = vpack.c.b16 %v536, %v535
      %v675 = vpack.c.b16 %v538, %v537
      %v676 = vpack.c.b16 %v540, %v539
      %v677 = vpack.c.b16 %v542, %v541
      %v678 = vpack.c.b16 %v544, %v543
      %v679 = vpack.c.b16 %v546, %v545
      %v680 = vpack.c.b16 %v548, %v547
      %v681 = vpack.c.b16 %v550, %v549
      %v682 = vpack.c.b16 %v552, %v551
      %v683 = vpack.c.b16 %v554, %v553
      %v684 = vpack.c.b16 %v556, %v555
      %v685 = vpack.c.b16 %v558, %v557
      %v686 = vpack.c.b16 %v560, %v559
      %v687 = vpack.c.b16 %v562, %v561
      %v688 = vpack.c.b16 %v564, %v563
      %v689 = vpack.c.b16 %v566, %v565
      %v690 = vpack.c.b16 %v568, %v567
      %v691 = vpack.c.b16 %v570, %v569
      %v692 = vpack.c.b16 %v572, %v571
      %v693 = vpack.c.b16 %v574, %v573
      %v694 = vpack.c.b16 %v576, %v575
      %v695 = vpack.c.b16 %v578, %v577
      %v696 = vpack.c.b16 %v580, %v579
      %v697 = vpack.c.b16 %v582, %v581
      %v698 = vpack.c.b16 %v584, %v583
      %v699 = vpack.c.b16 %v586, %v585
      %v700 = vpack.c.b16 %v588, %v587
      %v701 = vpack.c.b16 %v590, %v589
      %v702 = vpack.c.b16 %v592, %v591
      %v703 = vpack.c.b16 %v594, %v593
      %v704 = vpack.c.b16 %v596, %v595
      %v705 = vpack.c.b16 %v598, %v597
      %v706 = vpack.c.b16 %v600, %v599
      %v707 = vpack.c.b16 %v602, %v601
      %v708 = vpack.c.b16 %v604, %v603
      %v709 = vpack.c.b16 %v606, %v605
      %v710 = vpack.c.b16 %v608, %v607
      %v711 = vpack.c.b16 %v610, %v609
      %v712 = vpack.c.b16 %v612, %v611
      %v713 = vpack.c.b16 %v614, %v613
      %v714 = vpack.c.b16 %v616, %v615
      %v715 = vpack.c.b16 %v618, %v617
      %v716 = vpack.c.b16 %v620, %v619
      %v717 = vpack.c.b16 %v622, %v621
      %v718 = vpack.c.b16 %v624, %v623
      %v719 = vpack.c.b16 %v626, %v625
      %v720 = vpack.c.b16 %v628, %v627
      %v721 = vpack.c.b16 %v630, %v629
      %v722 = vpack.c.b16 %v632, %v631
      %v723 = vpack.c.b16 %v634, %v633
      %v724 = vpack.c.b16 %v636, %v635
      %v725 = vpack.c.b16 %v638, %v637
      %v726 = vpack.c.b16 %v640, %v639
      %v727 = vpack.c.b16 %v642, %v641
      %v728 = vpack.c.b16 %v644, %v643
      %v729 = vpack.c.b16 %v646, %v645
      %v730 = vpack.c.b16 %v648, %v647
      %v731 = vpack.c.b16 %v650, %v649
      %v732 = vpack.c.b16 %v652, %v651
      %v733 = vpack.c.b16 %v654, %v653
      %v734 = vpack.c.b16 %v656, %v655
      %v735 = vpack.c.b16 %v658, %v657
      %v736 = vpack.c.b16 %v660, %v659
      %v737 = vpack.c.b16 %v662, %v661
      %v738 = vpack.c.b16 %v664, %v663
      %v739 = vpack.c.b16 %v666, %v665
      %v740 = vpack.c.b16 %v668, %v667
      %813 = vmatpush.bf16.msra.mxu0 %v676
      %814 = vmatpush.bf16.msra.mxu0 %v675
      %815 = vmatpush.bf16.msra.mxu0 %v674
      %816 = vmatpush.bf16.msra.mxu0 %v673
      %817 = vmatpush.bf16.msra.mxu0 %v672
      %818 = vmatpush.bf16.msra.mxu0 %v671
      %819 = vmatpush.bf16.msra.mxu0 %v670
      %820 = vmatpush.bf16.msra.mxu0 %v669
      %821 = vmatmul.bf16.gmra.mxu0 %v363
      %v822 = vpop.f32.mrf.mxu0
      %v823 = vadd.f32 %v333, %v822
      %v824 = vpop.f32.mrf.mxu0
      %v825 = vadd.f32 %v333, %v824
      %826 = vdwg.mxu0
      %827 = vmatpush.bf16.msra.mxu0 %v684
      %828 = vmatpush.bf16.msra.mxu0 %v683
      %829 = vmatpush.bf16.msra.mxu0 %v682
      %830 = vmatpush.bf16.msra.mxu0 %v681
      %831 = vmatpush.bf16.msra.mxu0 %v680
      %832 = vmatpush.bf16.msra.mxu0 %v679
      %833 = vmatpush.bf16.msra.mxu0 %v678
      %834 = vmatpush.bf16.msra.mxu0 %v677
      %835 = vmatmul.bf16.gmra.mxu0 %v364
      %v836 = vpop.f32.mrf.mxu0
      %v837 = vadd.f32 %v823, %v836
      %v838 = vpop.f32.mrf.mxu0
      %v839 = vadd.f32 %v825, %v838
      %840 = vdwg.mxu0
      %841 = vmatpush.bf16.msra.mxu0 %v692
      %842 = vmatpush.bf16.msra.mxu0 %v691
      %843 = vmatpush.bf16.msra.mxu0 %v690
      %844 = vmatpush.bf16.msra.mxu0 %v689
      %845 = vmatpush.bf16.msra.mxu0 %v688
      %846 = vmatpush.bf16.msra.mxu0 %v687
      %847 = vmatpush.bf16.msra.mxu0 %v686
      %848 = vmatpush.bf16.msra.mxu0 %v685
      %849 = vmatmul.bf16.gmra.mxu0 %v365
      %v850 = vpop.f32.mrf.mxu0
      %v851 = vadd.f32 %v837, %v850
      %v852 = vpop.f32.mrf.mxu0
      %v853 = vadd.f32 %v839, %v852
      %854 = vdwg.mxu0
      %855 = vmatpush.bf16.msra.mxu0 %v700
      %856 = vmatpush.bf16.msra.mxu0 %v699
      %857 = vmatpush.bf16.msra.mxu0 %v698
      %858 = vmatpush.bf16.msra.mxu0 %v697
      %859 = vmatpush.bf16.msra.mxu0 %v696
      %860 = vmatpush.bf16.msra.mxu0 %v695
      %861 = vmatpush.bf16.msra.mxu0 %v694
      %862 = vmatpush.bf16.msra.mxu0 %v693
      %863 = vmatmul.bf16.gmra.mxu0 %v366
      %v864 = vpop.f32.mrf.mxu0
      %v865 = vadd.f32 %v851, %v864
      %v866 = vpop.f32.mrf.mxu0
      %v867 = vadd.f32 %v853, %v866
      %868 = vdwg.mxu0
      %869 = vmatpush.bf16.msra.mxu0 %v708
      %870 = vmatpush.bf16.msra.mxu0 %v707
      %871 = vmatpush.bf16.msra.mxu0 %v706
      %872 = vmatpush.bf16.msra.mxu0 %v705
      %873 = vmatpush.bf16.msra.mxu0 %v704
      %874 = vmatpush.bf16.msra.mxu0 %v703
      %875 = vmatpush.bf16.msra.mxu0 %v702
      %876 = vmatpush.bf16.msra.mxu0 %v701
      %877 = vmatmul.bf16.gmra.mxu0 %v367
      %v878 = vpop.f32.mrf.mxu0
      %v879 = vadd.f32 %v865, %v878
      %v880 = vpop.f32.mrf.mxu0
      %v881 = vadd.f32 %v867, %v880
      %882 = vdwg.mxu0
      %883 = vmatpush.bf16.msra.mxu0 %v716
      %884 = vmatpush.bf16.msra.mxu0 %v715
      %885 = vmatpush.bf16.msra.mxu0 %v714
      %886 = vmatpush.bf16.msra.mxu0 %v713
      %887 = vmatpush.bf16.msra.mxu0 %v712
      %888 = vmatpush.bf16.msra.mxu0 %v711
      %889 = vmatpush.bf16.msra.mxu0 %v710
      %890 = vmatpush.bf16.msra.mxu0 %v709
      %891 = vmatmul.bf16.gmra.mxu0 %v368
      %v892 = vpop.f32.mrf.mxu0
      %v893 = vadd.f32 %v879, %v892
      %v894 = vpop.f32.mrf.mxu0
      %v895 = vadd.f32 %v881, %v894
      %896 = vdwg.mxu0
      %897 = vmatpush.bf16.msra.mxu0 %v724
      %898 = vmatpush.bf16.msra.mxu0 %v723
      %899 = vmatpush.bf16.msra.mxu0 %v722
      %900 = vmatpush.bf16.msra.mxu0 %v721
      %901 = vmatpush.bf16.msra.mxu0 %v720
      %902 = vmatpush.bf16.msra.mxu0 %v719
      %903 = vmatpush.bf16.msra.mxu0 %v718
      %904 = vmatpush.bf16.msra.mxu0 %v717
      %905 = vmatmul.bf16.gmra.mxu0 %v369
      %v906 = vpop.f32.mrf.mxu0
      %v907 = vadd.f32 %v893, %v906
      %v908 = vpop.f32.mrf.mxu0
      %v909 = vadd.f32 %v895, %v908
      %910 = vdwg.mxu0
      %911 = vmatpush.bf16.msra.mxu0 %v732
      %912 = vmatpush.bf16.msra.mxu0 %v731
      %913 = vmatpush.bf16.msra.mxu0 %v730
      %914 = vmatpush.bf16.msra.mxu0 %v729
      %915 = vmatpush.bf16.msra.mxu0 %v728
      %916 = vmatpush.bf16.msra.mxu0 %v727
      %917 = vmatpush.bf16.msra.mxu0 %v726
      %918 = vmatpush.bf16.msra.mxu0 %v725
      %919 = vmatmul.bf16.gmra.mxu0 %v370
      %v920 = vpop.f32.mrf.mxu0
      %v921 = vadd.f32 %v907, %v920
      %v922 = vpop.f32.mrf.mxu0
      %v923 = vadd.f32 %v909, %v922
      %924 = vdwg.mxu0
      %925 = vmatpush.bf16.msra.mxu0 %v740
      %926 = vmatpush.bf16.msra.mxu0 %v739
      %927 = vmatpush.bf16.msra.mxu0 %v738
      %928 = vmatpush.bf16.msra.mxu0 %v737
      %929 = vmatpush.bf16.msra.mxu0 %v736
      %930 = vmatpush.bf16.msra.mxu0 %v735
      %931 = vmatpush.bf16.msra.mxu0 %v734
      %932 = vmatpush.bf16.msra.mxu0 %v733
      %933 = vmatmul.bf16.gmra.mxu0 %v371
      %v934 = vpop.f32.mrf.mxu0
      %v935 = vadd.f32 %v921, %v934
      %v936 = vpop.f32.mrf.mxu0
      %v937 = vadd.f32 %v923, %v936
      %938 = vdwg.mxu0
      %v939 = vmax.f32 %v935, 0.0
      %v940 = vmax.f32 %v937, 0.0
      %941 = vst [vmem:[%s175] sm:$0xff] %v939
      %942 = vst [vmem:[%s175 + $0x8] sm:$0xff] %v940
      %s943 = smul.u32 2, %s14
      %p944 = scmp.lt.s32.totalorder %s943, 3
      %s945 = scalar_select %p944, %s943, 3
      %s946 = smul.addr %s945, 8
      %s947 = scalar_lea.vmem %s3, %s946
      // Predicated region
      $region33: #{rnet_forward.12} parent=31 // pred_check
        %p948 = pneg %p100
      $region34: #{rnet_forward.12} parent=31 // pred_check_branch
        %950 = sbr.rel (%p948) target = $region36
      $region35: #{rnet_forward.12} parent=31 // pred_region
        %s951 = smul.u32 2, %s14
      $region36: #{rnet_forward.12} parent=31 // pred_fallthru
        _
    $region32: #{rnet_forward.12} parent=5 // pred_fallthru
      _
    %p952 = scmp.le.s32.totalorder 2, %s9
    // Predicated region
    $region37: #{rnet_forward.12} parent=5 // pred_check
      %p953 = pneg %p952
    $region38: #{rnet_forward.12} parent=5 // pred_check_branch
      %955 = sbr.rel (%p953) target = $region40
    $region39: #{rnet_forward.12} parent=5 // pred_region
      %s956 = ssub.s32 %s9, 2
      // Predicated region
      $region41: #{rnet_forward.12} parent=39 // pred_check
        %p957 = pneg %p106
      $region42: #{rnet_forward.12} parent=39 // pred_check_branch
        %959 = sbr.rel (%p957) target = $region44
      $region43: #{rnet_forward.12} parent=39 // pred_region
        %s960 = smul.u32 2, %s15
        %p961 = scmp.lt.s32.totalorder %s960, 3
        %s962 = scalar_select %p961, %s960, 3
        %s963 = smul.addr %s962, 8
        %s964 = scalar_lea.vmem %s3, %s963
      $region44: #{rnet_forward.12} parent=39 // pred_fallthru
        _
    $region40: #{rnet_forward.12} parent=5 // pred_fallthru
      _
  $region6: #{rnet_forward.12} parent=0 // loop_footer
    %s13 = sadd.s32 1, %s9
  $region7: #{rnet_forward.12} parent=0 // loop_footer_branch
    %8 = sbr.rel target = $region3
  $region8: #{rnet_forward.12} parent=0 // loop_exit
    _

// kernel: rnet_forward.16
$region0: #{rnet_forward.16}
  #allocation0 [shape = 'u32[]', space=smem, size = 0x4, offset = 0x4, fixed_abs, tag = 'smem constant byte address 0x4 - core index']
  #allocation1 [shape = 'u32[72,128]{1,0:T(1,128)}', space=vmem, size = 0x9000, scoped, tag = 'internal scratch']
  %s0 = inlined_call_operand.vmem [shape: bf16[8,128], index: 0, kind: input, shape index: {}]
  %s1 = inlined_call_operand.vmem [shape: bf16[128,128], index: 1, kind: input, shape index: {}]
  %s2 = inlined_call_operand.vmem [shape: f32[1,128], index: 2, kind: input, shape index: {}]
  %s3 = inlined_call_operand.vmem [shape: f32[8,128], index: 3, kind: output, shape index: {}]
  %s4 = sld [smem:[#allocation0]]
  $region22: #{rnet_forward.16} parent=0
    _
  %s6 = ssub.s32 1, %s4
  %s7 = scalar_select 0, %s6, %s4
  // Predicated region
  $region2: #{rnet_forward.16} parent=0 // pred_check
    _
  $region3: #{rnet_forward.16} parent=0 // pred_check_branch
    %9 = sbr.rel (0) target = $region5
  $region4: #{rnet_forward.16} parent=0 // pred_region
    _
  $region5: #{rnet_forward.16} parent=0 // pred_fallthru
    _
  // Predicated region
  $region6: #{rnet_forward.16} parent=0 // pred_check
    _
  $region7: #{rnet_forward.16} parent=0 // pred_check_branch
    %11 = sbr.rel (0) target = $region9
  $region8: #{rnet_forward.16} parent=0 // pred_region
    _
  $region9: #{rnet_forward.16} parent=0 // pred_fallthru
    _
  // Predicated region
  $region10: #{rnet_forward.16} parent=0 // pred_check
    _
  $region11: #{rnet_forward.16} parent=0 // pred_check_branch
    %13 = sbr.rel (0) target = $region13
  $region12: #{rnet_forward.16} parent=0 // pred_region
    _
  $region13: #{rnet_forward.16} parent=0 // pred_fallthru
    _
  %v14 = vld [vmem:[%s0] sm:$0xf]
  %v15 = vld [vmem:[%s1] sm:$0xf]
  %v16 = vld [vmem:[%s1 + $0x4] sm:$0xf]
  %v17 = vld [vmem:[%s1 + $0x8] sm:$0xf]
  %v18 = vld [vmem:[%s1 + $0xc] sm:$0xf]
  %v19 = vld [vmem:[%s1 + $0x10] sm:$0xf]
  %v20 = vld [vmem:[%s1 + $0x14] sm:$0xf]
  %v21 = vld [vmem:[%s1 + $0x18] sm:$0xf]
  %v22 = vld [vmem:[%s1 + $0x1c] sm:$0xf]
  %v23 = vld [vmem:[%s1 + $0x20] sm:$0xf]
  %v24 = vld [vmem:[%s1 + $0x24] sm:$0xf]
  %v25 = vld [vmem:[%s1 + $0x28] sm:$0xf]
  %v26 = vld [vmem:[%s1 + $0x2c] sm:$0xf]
  %v27 = vld [vmem:[%s1 + $0x30] sm:$0xf]
  %v28 = vld [vmem:[%s1 + $0x34] sm:$0xf]
  %v29 = vld [vmem:[%s1 + $0x38] sm:$0xf]
  %v30 = vld [vmem:[%s1 + $0x3c] sm:$0xf]
  %v31 = vld [vmem:[%s2] sm:$0x1]
  %v33 = vperm.slane %v31, 0
  %v51 = vunpack.c.l.b16 %v15
  %v52 = vunpack.c.l.b16 %v16
  %v53 = vunpack.c.l.b16 %v17
  %v54 = vunpack.c.l.b16 %v18
  %v55 = vunpack.c.l.b16 %v19
  %v56 = vunpack.c.l.b16 %v20
  %v57 = vunpack.c.l.b16 %v21
  %v58 = vunpack.c.l.b16 %v22
  %v59 = vunpack.c.l.b16 %v23
  %v60 = vunpack.c.l.b16 %v24
  %v61 = vunpack.c.l.b16 %v25
  %v62 = vunpack.c.l.b16 %v26
  %v63 = vunpack.c.l.b16 %v27
  %v64 = vunpack.c.l.b16 %v28
  %v65 = vunpack.c.l.b16 %v29
  %v66 = vunpack.c.l.b16 %v30
  %v67 = vpack.c.b16 %v52, %v51
  %v68 = vpack.c.b16 %v54, %v53
  %v69 = vpack.c.b16 %v56, %v55
  %v70 = vpack.c.b16 %v58, %v57
  %v71 = vpack.c.b16 %v60, %v59
  %v72 = vpack.c.b16 %v62, %v61
  %v73 = vpack.c.b16 %v64, %v63
  %v74 = vpack.c.b16 %v66, %v65
  %83 = vmatpush.bf16.msra.mxu0 %v74
  %84 = vmatpush.bf16.msra.mxu0 %v73
  %85 = vmatpush.bf16.msra.mxu0 %v72
  %86 = vmatpush.bf16.msra.mxu0 %v71
  %87 = vmatpush.bf16.msra.mxu0 %v70
  %88 = vmatpush.bf16.msra.mxu0 %v69
  %89 = vmatpush.bf16.msra.mxu0 %v68
  %90 = vmatpush.bf16.msra.mxu0 %v67
  %91 = vmatmul.bf16.gmra.mxu0 %v14
  %v92 = vpop.f32.mrf.mxu0
  %v93 = vadd.f32 %v33, %v92
  %v94 = vpop.f32.mrf.mxu0
  %95 = vdwg.mxu0
  %96 = vst [vmem:[%s3] sm:$0xff] %v93
  // Predicated region
  $region14: #{rnet_forward.16} parent=0 // pred_check
    _
  $region15: #{rnet_forward.16} parent=0 // pred_check_branch
    %98 = sbr.rel (0) target = $region17
  $region16: #{rnet_forward.16} parent=0 // pred_region
    _
  $region17: #{rnet_forward.16} parent=0 // pred_fallthru
    _
  // Predicated region
  $region18: #{rnet_forward.16} parent=0 // pred_check
    _
  $region19: #{rnet_forward.16} parent=0 // pred_check_branch
    %100 = sbr.rel (0) target = $region21
  $region20: #{rnet_forward.16} parent=0 // pred_region
    _
  $region21: #{rnet_forward.16} parent=0 // pred_fallthru
    _

// kernel: rnet_forward.14
$region0: #{rnet_forward.14}
  #allocation0 [shape = 'u32[]', space=smem, size = 0x4, offset = 0x4, fixed_abs, tag = 'smem constant byte address 0x4 - core index']
  #allocation1 [shape = 'u32[72,128]{1,0:T(1,128)}', space=vmem, size = 0x9000, scoped, tag = 'internal scratch']
  %s0 = inlined_call_operand.vmem [shape: bf16[32,1152], index: 0, kind: input, shape index: {}]
  %s1 = inlined_call_operand.vmem [shape: bf16[1152,128], index: 1, kind: input, shape index: {}]
  %s2 = inlined_call_operand.vmem [shape: f32[1,128], index: 2, kind: input, shape index: {}]
  %s3 = inlined_call_operand.vmem [shape: f32[32,128], index: 3, kind: input, shape index: {}]
  %s4 = inlined_call_operand.vmem [shape: f32[32,128], index: 4, kind: output, shape index: {}]
  %s5 = sld [smem:[#allocation0]]
  $region49: #{rnet_forward.14} parent=0
    _
  %s7 = ssub.s32 1, %s5
  %s8 = scalar_select 0, %s7, %s5
  loop: start=0, step=1, limit=4
  $region2: #{rnet_forward.14} parent=0 // loop_pre_header
    _
  $region3: #{rnet_forward.14} parent=0 // loop_header
    %s10 = sphi 0, %s14
    %p11 = scmp.ge.s32.totalorder %s10, 4
    %s20 = sphi 0, %s22
    %s23 = sphi 0, %s20
    %s24 = sphi 0, %s23
    %s40 = sphi 0, %s24
    %s44 = sphi 0, %s44
    %s46 = sphi 0, %s44
    %s47 = sphi 0, %s46
    %s61 = sphi 0, %s47
    %s65 = sphi 0, %s65
    %s67 = sphi 0, %s65
    %s68 = sphi 0, %s67
    %s82 = sphi 0, %s68
    %s88 = sphi 0, %s90
    %s91 = sphi 0, %s88
    %s92 = sphi 0, %s91
    %s108 = sphi 0, %s92
    %s114 = sphi 0, %s116
    %s117 = sphi 0, %s114
    %s118 = sphi 0, %s117
    %s134 = sphi 0, %s118
  $region4: #{rnet_forward.14} parent=0 // loop_header_branch
    %13 = sbr.rel (%p11) target = $region8
  $region5: #{rnet_forward.14} parent=0 // loop_body
    %s15 = ssub.s32 %s10, 1
    %s16 = ssub.s32 %s10, 2
    %s17 = sadd.s32 %s10, 1
    %s18 = ssub.s32 %s10, %s17
    %p19 = scmp.eq.s32.totalorder %s18, 0
    %s21 = sadd.s32 %s20, 1
    %s22 = scalar_select %p19, %s20, %s21
    %p25 = pneg %p19
    %p26 = scmp.eq.s32.totalorder %s10, 1
    %p27 = por %p25, %p26
    %p28 = scmp.ne.s32.totalorder %s20, %s23
    %p29 = scmp.eq.s32.totalorder %s10, 0
    %p30 = por %p28, %p29
    %p31 = scmp.ne.s32.totalorder %s20, %s23
    %p32 = scmp.eq.s32.totalorder %s15, 1
    %p33 = por %p31, %p32
    %p34 = scmp.ne.s32.totalorder %s23, %s24
    %p35 = scmp.eq.s32.totalorder %s15, 0
    %p36 = por %p34, %p35
    %p37 = scmp.ne.s32.totalorder %s23, %s24
    %p38 = scmp.eq.s32.totalorder %s16, 1
    %p39 = por %p37, %p38
    %p41 = scmp.ne.s32.totalorder %s24, %s40
    %p42 = scmp.eq.s32.totalorder %s16, 0
    %p43 = por %p41, %p42
    %s45 = sadd.s32 %s44, 1
    %p48 = scmp.eq.s32.totalorder %s10, 1
    %p49 = scmp.ne.s32.totalorder %s44, %s46
    %p50 = scmp.eq.s32.totalorder %s10, 0
    %p51 = por %p49, %p50
    %p52 = scmp.ne.s32.totalorder %s44, %s46
    %p53 = scmp.eq.s32.totalorder %s15, 1
    %p54 = por %p52, %p53
    %p55 = scmp.ne.s32.totalorder %s46, %s47
    %p56 = scmp.eq.s32.totalorder %s15, 0
    %p57 = por %p55, %p56
    %p58 = scmp.ne.s32.totalorder %s46, %s47
    %p59 = scmp.eq.s32.totalorder %s16, 1
    %p60 = por %p58, %p59
    %p62 = scmp.ne.s32.totalorder %s47, %s61
    %p63 = scmp.eq.s32.totalorder %s16, 0
    %p64 = por %p62, %p63
    %s66 = sadd.s32 %s65, 1
    %p69 = scmp.eq.s32.totalorder %s10, 1
    %p70 = scmp.ne.s32.totalorder %s65, %s67
    %p71 = scmp.eq.s32.totalorder %s10, 0
    %p72 = por %p70, %p71
    %p73 = scmp.ne.s32.totalorder %s65, %s67
    %p74 = scmp.eq.s32.totalorder %s15, 1
    %p75 = por %p73, %p74
    %p76 = scmp.ne.s32.totalorder %s67, %s68
    %p77 = scmp.eq.s32.totalorder %s15, 0
    %p78 = por %p76, %p77
    %p79 = scmp.ne.s32.totalorder %s67, %s68
    %p80 = scmp.eq.s32.totalorder %s16, 1
    %p81 = por %p79, %p80
    %p83 = scmp.ne.s32.totalorder %s68, %s82
    %p84 = scmp.eq.s32.totalorder %s16, 0
    %p85 = por %p83, %p84
    %s86 = ssub.s32 %s10, %s17
    %p87 = scmp.eq.s32.totalorder %s86, 0
    %s89 = sadd.s32 %s88, 1
    %s90 = scalar_select %p87, %s88, %s89
    %p93 = pneg %p87
    %p94 = scmp.eq.s32.totalorder %s10, 1
    %p95 = por %p93, %p94
    %p96 = scmp.ne.s32.totalorder %s88, %s91
    %p97 = scmp.eq.s32.totalorder %s10, 0
    %p98 = por %p96, %p97
    %p99 = scmp.ne.s32.totalorder %s88, %s91
    %p100 = scmp.eq.s32.totalorder %s15, 1
    %p101 = por %p99, %p100
    %p102 = scmp.ne.s32.totalorder %s91, %s92
    %p103 = scmp.eq.s32.totalorder %s15, 0
    %p104 = por %p102, %p103
    %p105 = scmp.ne.s32.totalorder %s91, %s92
    %p106 = scmp.eq.s32.totalorder %s16, 1
    %p107 = por %p105, %p106
    %p109 = scmp.ne.s32.totalorder %s92, %s108
    %p110 = scmp.eq.s32.totalorder %s16, 0
    %p111 = por %p109, %p110
    %s112 = ssub.s32 %s10, %s17
    %p113 = scmp.eq.s32.totalorder %s112, 0
    %s115 = sadd.s32 %s114, 1
    %s116 = scalar_select %p113, %s114, %s115
    %p119 = pneg %p113
    %p120 = scmp.eq.s32.totalorder %s10, 1
    %p121 = por %p119, %p120
    %p122 = scmp.ne.s32.totalorder %s114, %s117
    %p123 = scmp.eq.s32.totalorder %s10, 0
    %p124 = por %p122, %p123
    %p125 = scmp.ne.s32.totalorder %s114, %s117
    %p126 = scmp.eq.s32.totalorder %s15, 1
    %p127 = por %p125, %p126
    %p128 = scmp.ne.s32.totalorder %s117, %s118
    %p129 = scmp.eq.s32.totalorder %s15, 0
    %p130 = por %p128, %p129
    %p131 = scmp.ne.s32.totalorder %s117, %s118
    %p132 = scmp.eq.s32.totalorder %s16, 1
    %p133 = por %p131, %p132
    %p135 = scmp.ne.s32.totalorder %s118, %s134
    %p136 = scmp.eq.s32.totalorder %s16, 0
    %p137 = por %p135, %p136
    %p138 = scmp.le.s32.totalorder 1, %s10
    %p139 = scmp.lt.s32.totalorder %s10, 3
    %p140 = pnand %p138, %p139
    %p141 = pneg %p140
    // Predicated region
    $region9: #{rnet_forward.14} parent=5 // pred_check
      _
    $region10: #{rnet_forward.14} parent=5 // pred_check_branch
      %143 = sbr.rel (%p140) target = $region12
    $region11: #{rnet_forward.14} parent=5 // pred_region
      %s144 = ssub.s32 %s10, 1
      // Predicated region
      $region13: #{rnet_forward.14} parent=11 // pred_check
        %p145 = pneg %p57
      $region14: #{rnet_forward.14} parent=11 // pred_check_branch
        %147 = sbr.rel (%p145) target = $region16
      $region15: #{rnet_forward.14} parent=11 // pred_region
        _
      $region16: #{rnet_forward.14} parent=11 // pred_fallthru
        _
      // Predicated region
      $region17: #{rnet_forward.14} parent=11 // pred_check
        %p148 = pneg %p78
      $region18: #{rnet_forward.14} parent=11 // pred_check_branch
        %150 = sbr.rel (%p148) target = $region20
      $region19: #{rnet_forward.14} parent=11 // pred_region
        _
      $region20: #{rnet_forward.14} parent=11 // pred_fallthru
        _
    $region12: #{rnet_forward.14} parent=5 // pred_fallthru
      _
    %p151 = scmp.lt.s32.totalorder %s10, 2
    // Predicated region
    $region21: #{rnet_forward.14} parent=5 // pred_check
      %p152 = pneg %p151
    $region22: #{rnet_forward.14} parent=5 // pred_check_branch
      %154 = sbr.rel (%p152) target = $region24
    $region23: #{rnet_forward.14} parent=5 // pred_region
      // Predicated region
      $region25: #{rnet_forward.14} parent=23 // pred_check
        %p155 = pneg %p30
      $region26: #{rnet_forward.14} parent=23 // pred_check_branch
        %157 = sbr.rel (%p155) target = $region28
      $region27: #{rnet_forward.14} parent=23 // pred_region
        %s158 = smul.u32 2, %s10
        %p159 = scmp.lt.s32.totalorder %s158, 3
        %s160 = scalar_select %p159, %s158, 3
        %s161 = smul.addr %s160, 9
        %s162 = smul.addr %s161, 4
        %s163 = scalar_lea.vmem %s0, %s162
        %s164 = smul.u32 2, %s10
      $region28: #{rnet_forward.14} parent=23 // pred_fallthru
        _
      // Predicated region
      $region29: #{rnet_forward.14} parent=23 // pred_check
        %p165 = pneg %p98
      $region30: #{rnet_forward.14} parent=23 // pred_check_branch
        %167 = sbr.rel (%p165) target = $region32
      $region31: #{rnet_forward.14} parent=23 // pred_region
        %s168 = smul.u32 2, %s10
        %p169 = scmp.lt.s32.totalorder %s168, 3
        %s170 = scalar_select %p169, %s168, 3
        %s171 = smul.addr %s170, 8
        %s172 = scalar_lea.vmem %s3, %s171
        %s173 = smul.u32 2, %s10
      $region32: #{rnet_forward.14} parent=23 // pred_fallthru
        _
    $region24: #{rnet_forward.14} parent=5 // pred_fallthru
      _
    %p174 = scmp.le.s32.totalorder 1, %s10
    %p175 = scmp.lt.s32.totalorder %s10, 3
    %p176 = pnand %p174, %p175
    %p177 = pneg %p176
    // Predicated region
    $region33: #{rnet_forward.14} parent=5 // pred_check
      _
    $region34: #{rnet_forward.14} parent=5 // pred_check_branch
      %179 = sbr.rel (%p176) target = $region36
    $region35: #{rnet_forward.14} parent=5 // pred_region
      %s180 = ssub.s32 %s10, 1
      %s181 = smul.u32 2, %s15
      %p182 = scmp.lt.s32.totalorder %s181, 3
      %s183 = scalar_select %p182, %s181, 3
      %s184 = smul.addr %s183, 9
      %s185 = smul.addr %s184, 4
      %s186 = scalar_lea.vmem %s0, %s185
      %p187 = pneg %p36
      %p188 = pneg %p33
      %p189 = pneg %p57
      %p190 = pneg %p54
      %p191 = pneg %p78
      %p192 = pneg %p75
      %s193 = smul.u32 2, %s15
      %p194 = scmp.lt.s32.totalorder %s193, 3
      %s195 = scalar_select %p194, %s193, 3
      %s196 = smul.addr %s195, 8
      %s197 = scalar_lea.vmem %s3, %s196
      %p198 = pneg %p104
      %p199 = pneg %p101
      %p200 = pneg %p130
      %p201 = pneg %p127
      %s202 = smul.u32 2, %s15
      %p203 = scmp.lt.s32.totalorder %s202, 3
      %s204 = scalar_select %p203, %s202, 3
      %s205 = smul.addr %s204, 8
      %s206 = scalar_lea.vmem %s4, %s205
      %s207 = smul.u32 2, %s15
      %p208 = scmp.lt.s32.totalorder %s207, 3
      %s209 = scalar_select %p208, %s207, 3
      %s210 = smul.addr %s209, 9
      %s211 = smul.addr %s210, 4
      %s212 = scalar_lea.vmem %s0, %s211
      %s213 = smul.u32 2, %s15
      %s214 = smul.u32 2, %s15
      %p215 = scmp.lt.s32.totalorder %s214, 3
      %s216 = scalar_select %p215, %s214, 3
      %s217 = smul.addr %s216, 8
      %s218 = scalar_lea.vmem %s3, %s217
      %s219 = smul.u32 2, %s15
      %s220 = smul.u32 2, %s15
      %p221 = scmp.lt.s32.totalorder %s220, 3
      %s222 = scalar_select %p221, %s220, 3
      %s223 = smul.addr %s222, 8
      %s224 = scalar_lea.vmem %s4, %s223
      %s225 = smul.u32 2, %s15
      %v226 = vld [vmem:[%s212] sm:$0xff]
      %v227 = vld [vmem:[%s212 + $0x8] sm:$0xff]
      %v228 = vld [vmem:[%s212 + $0x10] sm:$0xff]
      %v229 = vld [vmem:[%s212 + $0x18] sm:$0xff]
      %v230 = vld [vmem:[%s212 + $0x20] sm:$0xf]
      %v231 = vld [vmem:[%s212 + $0x24] sm:$0xff]
      %v232 = vld [vmem:[%s212 + $0x2c] sm:$0xff]
      %v233 = vld [vmem:[%s212 + $0x34] sm:$0xff]
      %v234 = vld [vmem:[%s212 + $0x3c] sm:$0xff]
      %v235 = vld [vmem:[%s212 + $0x44] sm:$0xf]
      %v236 = vld [vmem:[%s1] sm:$0xf]
      %v237 = vld [vmem:[%s1 + $0x4] sm:$0xf]
      %v238 = vld [vmem:[%s1 + $0x8] sm:$0xf]
      %v239 = vld [vmem:[%s1 + $0xc] sm:$0xf]
      %v240 = vld [vmem:[%s1 + $0x10] sm:$0xf]
      %v241 = vld [vmem:[%s1 + $0x14] sm:$0xf]
      %v242 = vld [vmem:[%s1 + $0x18] sm:$0xf]
      %v243 = vld [vmem:[%s1 + $0x1c] sm:$0xf]
      %v244 = vld [vmem:[%s1 + $0x20] sm:$0xf]
      %v245 = vld [vmem:[%s1 + $0x24] sm:$0xf]
      %v246 = vld [vmem:[%s1 + $0x28] sm:$0xf]
      %v247 = vld [vmem:[%s1 + $0x2c] sm:$0xf]
      %v248 = vld [vmem:[%s1 + $0x30] sm:$0xf]
      %v249 = vld [vmem:[%s1 + $0x34] sm:$0xf]
      %v250 = vld [vmem:[%s1 + $0x38] sm:$0xf]
      %v251 = vld [vmem:[%s1 + $0x3c] sm:$0xf]
      %v252 = vld [vmem:[%s1 + $0x40] sm:$0xf]
      %v253 = vld [vmem:[%s1 + $0x44] sm:$0xf]
      %v254 = vld [vmem:[%s1 + $0x48] sm:$0xf]
      %v255 = vld [vmem:[%s1 + $0x4c] sm:$0xf]
      %v256 = vld [vmem:[%s1 + $0x50] sm:$0xf]
      %v257 = vld [vmem:[%s1 + $0x54] sm:$0xf]
      %v258 = vld [vmem:[%s1 + $0x58] sm:$0xf]
      %v259 = vld [vmem:[%s1 + $0x5c] sm:$0xf]
      %v260 = vld [vmem:[%s1 + $0x60] sm:$0xf]
      %v261 = vld [vmem:[%s1 + $0x64] sm:$0xf]
      %v262 = vld [vmem:[%s1 + $0x68] sm:$0xf]
      %v263 = vld [vmem:[%s1 + $0x6c] sm:$0xf]
      %v264 = vld [vmem:[%s1 + $0x70] sm:$0xf]
      %v265 = vld [vmem:[%s1 + $0x74] sm:$0xf]
      %v266 = vld [vmem:[%s1 + $0x78] sm:$0xf]
      %v267 = vld [vmem:[%s1 + $0x7c] sm:$0xf]
      %v268 = vld [vmem:[%s1 + $0x80] sm:$0xf]
      %v269 = vld [vmem:[%s1 + $0x84] sm:$0xf]
      %v270 = vld [vmem:[%s1 + $0x88] sm:$0xf]
      %v271 = vld [vmem:[%s1 + $0x8c] sm:$0xf]
      %v272 = vld [vmem:[%s1 + $0x90] sm:$0xf]
      %v273 = vld [vmem:[%s1 + $0x94] sm:$0xf]
      %v274 = vld [vmem:[%s1 + $0x98] sm:$0xf]
      %v275 = vld [vmem:[%s1 + $0x9c] sm:$0xf]
      %v276 = vld [vmem:[%s1 + $0xa0] sm:$0xf]
      %v277 = vld [vmem:[%s1 + $0xa4] sm:$0xf]
      %v278 = vld [vmem:[%s1 + $0xa8] sm:$0xf]
      %v279 = vld [vmem:[%s1 + $0xac] sm:$0xf]
      %v280 = vld [vmem:[%s1 + $0xb0] sm:$0xf]
      %v281 = vld [vmem:[%s1 + $0xb4] sm:$0xf]
      %v282 = vld [vmem:[%s1 + $0xb8] sm:$0xf]
      %v283 = vld [vmem:[%s1 + $0xbc] sm:$0xf]
      %v284 = vld [vmem:[%s1 + $0xc0] sm:$0xf]
      %v285 = vld [vmem:[%s1 + $0xc4] sm:$0xf]
      %v286 = vld [vmem:[%s1 + $0xc8] sm:$0xf]
      %v287 = vld [vmem:[%s1 + $0xcc] sm:$0xf]
      %v288 = vld [vmem:[%s1 + $0xd0] sm:$0xf]
      %v289 = vld [vmem:[%s1 + $0xd4] sm:$0xf]
      %v290 = vld [vmem:[%s1 + $0xd8] sm:$0xf]
      %v291 = vld [vmem:[%s1 + $0xdc] sm:$0xf]
      %v292 = vld [vmem:[%s1 + $0xe0] sm:$0xf]
      %v293 = vld [vmem:[%s1 + $0xe4] sm:$0xf]
      %v294 = vld [vmem:[%s1 + $0xe8] sm:$0xf]
      %v295 = vld [vmem:[%s1 + $0xec] sm:$0xf]
      %v296 = vld [vmem:[%s1 + $0xf0] sm:$0xf]
      %v297 = vld [vmem:[%s1 + $0xf4] sm:$0xf]
      %v298 = vld [vmem:[%s1 + $0xf8] sm:$0xf]
      %v299 = vld [vmem:[%s1 + $0xfc] sm:$0xf]
      %v300 = vld [vmem:[%s1 + $0x100] sm:$0xf]
      %v301 = vld [vmem:[%s1 + $0x104] sm:$0xf]
      %v302 = vld [vmem:[%s1 + $0x108] sm:$0xf]
      %v303 = vld [vmem:[%s1 + $0x10c] sm:$0xf]
      %v304 = vld [vmem:[%s1 + $0x110] sm:$0xf]
      %v305 = vld [vmem:[%s1 + $0x114] sm:$0xf]
      %v306 = vld [vmem:[%s1 + $0x118] sm:$0xf]
      %v307 = vld [vmem:[%s1 + $0x11c] sm:$0xf]
      %v308 = vld [vmem:[%s1 + $0x120] sm:$0xf]
      %v309 = vld [vmem:[%s1 + $0x124] sm:$0xf]
      %v310 = vld [vmem:[%s1 + $0x128] sm:$0xf]
      %v311 = vld [vmem:[%s1 + $0x12c] sm:$0xf]
      %v312 = vld [vmem:[%s1 + $0x130] sm:$0xf]
      %v313 = vld [vmem:[%s1 + $0x134] sm:$0xf]
      %v314 = vld [vmem:[%s1 + $0x138] sm:$0xf]
      %v315 = vld [vmem:[%s1 + $0x13c] sm:$0xf]
      %v316 = vld [vmem:[%s1 + $0x140] sm:$0xf]
      %v317 = vld [vmem:[%s1 + $0x144] sm:$0xf]
      %v318 = vld [vmem:[%s1 + $0x148] sm:$0xf]
      %v319 = vld [vmem:[%s1 + $0x14c] sm:$0xf]
      %v320 = vld [vmem:[%s1 + $0x150] sm:$0xf]
      %v321 = vld [vmem:[%s1 + $0x154] sm:$0xf]
      %v322 = vld [vmem:[%s1 + $0x158] sm:$0xf]
      %v323 = vld [vmem:[%s1 + $0x15c] sm:$0xf]
      %v324 = vld [vmem:[%s1 + $0x160] sm:$0xf]
      %v325 = vld [vmem:[%s1 + $0x164] sm:$0xf]
      %v326 = vld [vmem:[%s1 + $0x168] sm:$0xf]
      %v327 = vld [vmem:[%s1 + $0x16c] sm:$0xf]
      %v328 = vld [vmem:[%s1 + $0x170] sm:$0xf]
      %v329 = vld [vmem:[%s1 + $0x174] sm:$0xf]
      %v330 = vld [vmem:[%s1 + $0x178] sm:$0xf]
      %v331 = vld [vmem:[%s1 + $0x17c] sm:$0xf]
      %v332 = vld [vmem:[%s1 + $0x180] sm:$0xf]
      %v333 = vld [vmem:[%s1 + $0x184] sm:$0xf]
      %v334 = vld [vmem:[%s1 + $0x188] sm:$0xf]
      %v335 = vld [vmem:[%s1 + $0x18c] sm:$0xf]
      %v336 = vld [vmem:[%s1 + $0x190] sm:$0xf]
      %v337 = vld [vmem:[%s1 + $0x194] sm:$0xf]
      %v338 = vld [vmem:[%s1 + $0x198] sm:$0xf]
      %v339 = vld [vmem:[%s1 + $0x19c] sm:$0xf]
      %v340 = vld [vmem:[%s1 + $0x1a0] sm:$0xf]
      %v341 = vld [vmem:[%s1 + $0x1a4] sm:$0xf]
      %v342 = vld [vmem:[%s1 + $0x1a8] sm:$0xf]
      %v343 = vld [vmem:[%s1 + $0x1ac] sm:$0xf]
      %v344 = vld [vmem:[%s1 + $0x1b0] sm:$0xf]
      %v345 = vld [vmem:[%s1 + $0x1b4] sm:$0xf]
      %v346 = vld [vmem:[%s1 + $0x1b8] sm:$0xf]
      %v347 = vld [vmem:[%s1 + $0x1bc] sm:$0xf]
      %v348 = vld [vmem:[%s1 + $0x1c0] sm:$0xf]
      %v349 = vld [vmem:[%s1 + $0x1c4] sm:$0xf]
      %v350 = vld [vmem:[%s1 + $0x1c8] sm:$0xf]
      %v351 = vld [vmem:[%s1 + $0x1cc] sm:$0xf]
      %v352 = vld [vmem:[%s1 + $0x1d0] sm:$0xf]
      %v353 = vld [vmem:[%s1 + $0x1d4] sm:$0xf]
      %v354 = vld [vmem:[%s1 + $0x1d8] sm:$0xf]
      %v355 = vld [vmem:[%s1 + $0x1dc] sm:$0xf]
      %v356 = vld [vmem:[%s1 + $0x1e0] sm:$0xf]
      %v357 = vld [vmem:[%s1 + $0x1e4] sm:$0xf]
      %v358 = vld [vmem:[%s1 + $0x1e8] sm:$0xf]
      %v359 = vld [vmem:[%s1 + $0x1ec] sm:$0xf]
      %v360 = vld [vmem:[%s1 + $0x1f0] sm:$0xf]
      %v361 = vld [vmem:[%s1 + $0x1f4] sm:$0xf]
      %v362 = vld [vmem:[%s1 + $0x1f8] sm:$0xf]
      %v363 = vld [vmem:[%s1 + $0x1fc] sm:$0xf]
      %v364 = vld [vmem:[%s1 + $0x200] sm:$0xf]
      %v365 = vld [vmem:[%s1 + $0x204] sm:$0xf]
      %v366 = vld [vmem:[%s1 + $0x208] sm:$0xf]
      %v367 = vld [vmem:[%s1 + $0x20c] sm:$0xf]
      %v368 = vld [vmem:[%s1 + $0x210] sm:$0xf]
      %v369 = vld [vmem:[%s1 + $0x214] sm:$0xf]
      %v370 = vld [vmem:[%s1 + $0x218] sm:$0xf]
      %v371 = vld [vmem:[%s1 + $0x21c] sm:$0xf]
      %v372 = vld [vmem:[%s1 + $0x220] sm:$0xf]
      %v373 = vld [vmem:[%s1 + $0x224] sm:$0xf]
      %v374 = vld [vmem:[%s1 + $0x228] sm:$0xf]
      %v375 = vld [vmem:[%s1 + $0x22c] sm:$0xf]
      %v376 = vld [vmem:[%s1 + $0x230] sm:$0xf]
      %v377 = vld [vmem:[%s1 + $0x234] sm:$0xf]
      %v378 = vld [vmem:[%s1 + $0x238] sm:$0xf]
      %v379 = vld [vmem:[%s1 + $0x23c] sm:$0xf]
      %v380 = vld [vmem:[%s2] sm:$0x1]
      %v382 = vperm.slane %v380, 0
      %v394 = vunpack.c.l.b16 %v226
      %v395 = vunpack.c.h.b16 %v226
      %v396 = vunpack.c.l.b16 %v227
      %v397 = vunpack.c.h.b16 %v227
      %v398 = vunpack.c.l.b16 %v228
      %v399 = vunpack.c.h.b16 %v228
      %v400 = vunpack.c.l.b16 %v229
      %v401 = vunpack.c.h.b16 %v229
      %v402 = vunpack.c.l.b16 %v230
      %v403 = vunpack.c.l.b16 %v231
      %v404 = vunpack.c.h.b16 %v231
      %v405 = vunpack.c.l.b16 %v232
      %v406 = vunpack.c.h.b16 %v232
      %v407 = vunpack.c.l.b16 %v233
      %v408 = vunpack.c.h.b16 %v233
      %v409 = vunpack.c.l.b16 %v234
      %v410 = vunpack.c.h.b16 %v234
      %v411 = vunpack.c.l.b16 %v235
      %v412 = vpack.c.b16 %v403, %v394
      %v413 = vpack.c.b16 %v404, %v395
      %v414 = vpack.c.b16 %v405, %v396
      %v415 = vpack.c.b16 %v406, %v397
      %v416 = vpack.c.b16 %v407, %v398
      %v417 = vpack.c.b16 %v408, %v399
      %v418 = vpack.c.b16 %v409, %v400
      %v419 = vpack.c.b16 %v410, %v401
      %v420 = vpack.c.b16 %v411, %v402
      %v574 = vunpack.c.l.b16 %v236
      %v575 = vunpack.c.l.b16 %v237
      %v576 = vunpack.c.l.b16 %v238
      %v577 = vunpack.c.l.b16 %v239
      %v578 = vunpack.c.l.b16 %v240
      %v579 = vunpack.c.l.b16 %v241
      %v580 = vunpack.c.l.b16 %v242
      %v581 = vunpack.c.l.b16 %v243
      %v582 = vunpack.c.l.b16 %v244
      %v583 = vunpack.c.l.b16 %v245
      %v584 = vunpack.c.l.b16 %v246
      %v585 = vunpack.c.l.b16 %v247
      %v586 = vunpack.c.l.b16 %v248
      %v587 = vunpack.c.l.b16 %v249
      %v588 = vunpack.c.l.b16 %v250
      %v589 = vunpack.c.l.b16 %v251
      %v590 = vunpack.c.l.b16 %v252
      %v591 = vunpack.c.l.b16 %v253
      %v592 = vunpack.c.l.b16 %v254
      %v593 = vunpack.c.l.b16 %v255
      %v594 = vunpack.c.l.b16 %v256
      %v595 = vunpack.c.l.b16 %v257
      %v596 = vunpack.c.l.b16 %v258
      %v597 = vunpack.c.l.b16 %v259
      %v598 = vunpack.c.l.b16 %v260
      %v599 = vunpack.c.l.b16 %v261
      %v600 = vunpack.c.l.b16 %v262
      %v601 = vunpack.c.l.b16 %v263
      %v602 = vunpack.c.l.b16 %v264
      %v603 = vunpack.c.l.b16 %v265
      %v604 = vunpack.c.l.b16 %v266
      %v605 = vunpack.c.l.b16 %v267
      %v606 = vunpack.c.l.b16 %v268
      %v607 = vunpack.c.l.b16 %v269
      %v608 = vunpack.c.l.b16 %v270
      %v609 = vunpack.c.l.b16 %v271
      %v610 = vunpack.c.l.b16 %v272
      %v611 = vunpack.c.l.b16 %v273
      %v612 = vunpack.c.l.b16 %v274
      %v613 = vunpack.c.l.b16 %v275
      %v614 = vunpack.c.l.b16 %v276
      %v615 = vunpack.c.l.b16 %v277
      %v616 = vunpack.c.l.b16 %v278
      %v617 = vunpack.c.l.b16 %v279
      %v618 = vunpack.c.l.b16 %v280
      %v619 = vunpack.c.l.b16 %v281
      %v620 = vunpack.c.l.b16 %v282
      %v621 = vunpack.c.l.b16 %v283
      %v622 = vunpack.c.l.b16 %v284
      %v623 = vunpack.c.l.b16 %v285
      %v624 = vunpack.c.l.b16 %v286
      %v625 = vunpack.c.l.b16 %v287
      %v626 = vunpack.c.l.b16 %v288
      %v627 = vunpack.c.l.b16 %v289
      %v628 = vunpack.c.l.b16 %v290
      %v629 = vunpack.c.l.b16 %v291
      %v630 = vunpack.c.l.b16 %v292
      %v631 = vunpack.c.l.b16 %v293
      %v632 = vunpack.c.l.b16 %v294
      %v633 = vunpack.c.l.b16 %v295
      %v634 = vunpack.c.l.b16 %v296
      %v635 = vunpack.c.l.b16 %v297
      %v636 = vunpack.c.l.b16 %v298
      %v637 = vunpack.c.l.b16 %v299
      %v638 = vunpack.c.l.b16 %v300
      %v639 = vunpack.c.l.b16 %v301
      %v640 = vunpack.c.l.b16 %v302
      %v641 = vunpack.c.l.b16 %v303
      %v642 = vunpack.c.l.b16 %v304
      %v643 = vunpack.c.l.b16 %v305
      %v644 = vunpack.c.l.b16 %v306
      %v645 = vunpack.c.l.b16 %v307
      %v646 = vunpack.c.l.b16 %v308
      %v647 = vunpack.c.l.b16 %v309
      %v648 = vunpack.c.l.b16 %v310
      %v649 = vunpack.c.l.b16 %v311
      %v650 = vunpack.c.l.b16 %v312
      %v651 = vunpack.c.l.b16 %v313
      %v652 = vunpack.c.l.b16 %v314
      %v653 = vunpack.c.l.b16 %v315
      %v654 = vunpack.c.l.b16 %v316
      %v655 = vunpack.c.l.b16 %v317
      %v656 = vunpack.c.l.b16 %v318
      %v657 = vunpack.c.l.b16 %v319
      %v658 = vunpack.c.l.b16 %v320
      %v659 = vunpack.c.l.b16 %v321
      %v660 = vunpack.c.l.b16 %v322
      %v661 = vunpack.c.l.b16 %v323
      %v662 = vunpack.c.l.b16 %v324
      %v663 = vunpack.c.l.b16 %v325
      %v664 = vunpack.c.l.b16 %v326
      %v665 = vunpack.c.l.b16 %v327
      %v666 = vunpack.c.l.b16 %v328
      %v667 = vunpack.c.l.b16 %v329
      %v668 = vunpack.c.l.b16 %v330
      %v669 = vunpack.c.l.b16 %v331
      %v670 = vunpack.c.l.b16 %v332
      %v671 = vunpack.c.l.b16 %v333
      %v672 = vunpack.c.l.b16 %v334
      %v673 = vunpack.c.l.b16 %v335
      %v674 = vunpack.c.l.b16 %v336
      %v675 = vunpack.c.l.b16 %v337
      %v676 = vunpack.c.l.b16 %v338
      %v677 = vunpack.c.l.b16 %v339
      %v678 = vunpack.c.l.b16 %v340
      %v679 = vunpack.c.l.b16 %v341
      %v680 = vunpack.c.l.b16 %v342
      %v681 = vunpack.c.l.b16 %v343
      %v682 = vunpack.c.l.b16 %v344
      %v683 = vunpack.c.l.b16 %v345
      %v684 = vunpack.c.l.b16 %v346
      %v685 = vunpack.c.l.b16 %v347
      %v686 = vunpack.c.l.b16 %v348
      %v687 = vunpack.c.l.b16 %v349
      %v688 = vunpack.c.l.b16 %v350
      %v689 = vunpack.c.l.b16 %v351
      %v690 = vunpack.c.l.b16 %v352
      %v691 = vunpack.c.l.b16 %v353
      %v692 = vunpack.c.l.b16 %v354
      %v693 = vunpack.c.l.b16 %v355
      %v694 = vunpack.c.l.b16 %v356
      %v695 = vunpack.c.l.b16 %v357
      %v696 = vunpack.c.l.b16 %v358
      %v697 = vunpack.c.l.b16 %v359
      %v698 = vunpack.c.l.b16 %v360
      %v699 = vunpack.c.l.b16 %v361
      %v700 = vunpack.c.l.b16 %v362
      %v701 = vunpack.c.l.b16 %v363
      %v702 = vunpack.c.l.b16 %v364
      %v703 = vunpack.c.l.b16 %v365
      %v704 = vunpack.c.l.b16 %v366
      %v705 = vunpack.c.l.b16 %v367
      %v706 = vunpack.c.l.b16 %v368
      %v707 = vunpack.c.l.b16 %v369
      %v708 = vunpack.c.l.b16 %v370
      %v709 = vunpack.c.l.b16 %v371
      %v710 = vunpack.c.l.b16 %v372
      %v711 = vunpack.c.l.b16 %v373
      %v712 = vunpack.c.l.b16 %v374
      %v713 = vunpack.c.l.b16 %v375
      %v714 = vunpack.c.l.b16 %v376
      %v715 = vunpack.c.l.b16 %v377
      %v716 = vunpack.c.l.b16 %v378
      %v717 = vunpack.c.l.b16 %v379
      %v718 = vpack.c.b16 %v575, %v574
      %v719 = vpack.c.b16 %v577, %v576
      %v720 = vpack.c.b16 %v579, %v578
      %v721 = vpack.c.b16 %v581, %v580
      %v722 = vpack.c.b16 %v583, %v582
      %v723 = vpack.c.b16 %v585, %v584
      %v724 = vpack.c.b16 %v587, %v586
      %v725 = vpack.c.b16 %v589, %v588
      %v726 = vpack.c.b16 %v591, %v590
      %v727 = vpack.c.b16 %v593, %v592
      %v728 = vpack.c.b16 %v595, %v594
      %v729 = vpack.c.b16 %v597, %v596
      %v730 = vpack.c.b16 %v599, %v598
      %v731 = vpack.c.b16 %v601, %v600
      %v732 = vpack.c.b16 %v603, %v602
      %v733 = vpack.c.b16 %v605, %v604
      %v734 = vpack.c.b16 %v607, %v606
      %v735 = vpack.c.b16 %v609, %v608
      %v736 = vpack.c.b16 %v611, %v610
      %v737 = vpack.c.b16 %v613, %v612
      %v738 = vpack.c.b16 %v615, %v614
      %v739 = vpack.c.b16 %v617, %v616
      %v740 = vpack.c.b16 %v619, %v618
      %v741 = vpack.c.b16 %v621, %v620
      %v742 = vpack.c.b16 %v623, %v622
      %v743 = vpack.c.b16 %v625, %v624
      %v744 = vpack.c.b16 %v627, %v626
      %v745 = vpack.c.b16 %v629, %v628
      %v746 = vpack.c.b16 %v631, %v630
      %v747 = vpack.c.b16 %v633, %v632
      %v748 = vpack.c.b16 %v635, %v634
      %v749 = vpack.c.b16 %v637, %v636
      %v750 = vpack.c.b16 %v639, %v638
      %v751 = vpack.c.b16 %v641, %v640
      %v752 = vpack.c.b16 %v643, %v642
      %v753 = vpack.c.b16 %v645, %v644
      %v754 = vpack.c.b16 %v647, %v646
      %v755 = vpack.c.b16 %v649, %v648
      %v756 = vpack.c.b16 %v651, %v650
      %v757 = vpack.c.b16 %v653, %v652
      %v758 = vpack.c.b16 %v655, %v654
      %v759 = vpack.c.b16 %v657, %v656
      %v760 = vpack.c.b16 %v659, %v658
      %v761 = vpack.c.b16 %v661, %v660
      %v762 = vpack.c.b16 %v663, %v662
      %v763 = vpack.c.b16 %v665, %v664
      %v764 = vpack.c.b16 %v667, %v666
      %v765 = vpack.c.b16 %v669, %v668
      %v766 = vpack.c.b16 %v671, %v670
      %v767 = vpack.c.b16 %v673, %v672
      %v768 = vpack.c.b16 %v675, %v674
      %v769 = vpack.c.b16 %v677, %v676
      %v770 = vpack.c.b16 %v679, %v678
      %v771 = vpack.c.b16 %v681, %v680
      %v772 = vpack.c.b16 %v683, %v682
      %v773 = vpack.c.b16 %v685, %v684
      %v774 = vpack.c.b16 %v687, %v686
      %v775 = vpack.c.b16 %v689, %v688
      %v776 = vpack.c.b16 %v691, %v690
      %v777 = vpack.c.b16 %v693, %v692
      %v778 = vpack.c.b16 %v695, %v694
      %v779 = vpack.c.b16 %v697, %v696
      %v780 = vpack.c.b16 %v699, %v698
      %v781 = vpack.c.b16 %v701, %v700
      %v782 = vpack.c.b16 %v703, %v702
      %v783 = vpack.c.b16 %v705, %v704
      %v784 = vpack.c.b16 %v707, %v706
      %v785 = vpack.c.b16 %v709, %v708
      %v786 = vpack.c.b16 %v711, %v710
      %v787 = vpack.c.b16 %v713, %v712
      %v788 = vpack.c.b16 %v715, %v714
      %v789 = vpack.c.b16 %v717, %v716
      %862 = vmatpush.bf16.msra.mxu0 %v725
      %863 = vmatpush.bf16.msra.mxu0 %v724
      %864 = vmatpush.bf16.msra.mxu0 %v723
      %865 = vmatpush.bf16.msra.mxu0 %v722
      %866 = vmatpush.bf16.msra.mxu0 %v721
      %867 = vmatpush.bf16.msra.mxu0 %v720
      %868 = vmatpush.bf16.msra.mxu0 %v719
      %869 = vmatpush.bf16.msra.mxu0 %v718
      %870 = vmatmul.bf16.gmra.mxu0 %v412
      %v871 = vpop.f32.mrf.mxu0
      %v872 = vadd.f32 %v382, %v871
      %v873 = vpop.f32.mrf.mxu0
      %v874 = vadd.f32 %v382, %v873
      %875 = vdwg.mxu0
      %876 = vmatpush.bf16.msra.mxu0 %v733
      %877 = vmatpush.bf16.msra.mxu0 %v732
      %878 = vmatpush.bf16.msra.mxu0 %v731
      %879 = vmatpush.bf16.msra.mxu0 %v730
      %880 = vmatpush.bf16.msra.mxu0 %v729
      %881 = vmatpush.bf16.msra.mxu0 %v728
      %882 = vmatpush.bf16.msra.mxu0 %v727
      %883 = vmatpush.bf16.msra.mxu0 %v726
      %884 = vmatmul.bf16.gmra.mxu0 %v413
      %v885 = vpop.f32.mrf.mxu0
      %v886 = vadd.f32 %v872, %v885
      %v887 = vpop.f32.mrf.mxu0
      %v888 = vadd.f32 %v874, %v887
      %889 = vdwg.mxu0
      %890 = vmatpush.bf16.msra.mxu0 %v741
      %891 = vmatpush.bf16.msra.mxu0 %v740
      %892 = vmatpush.bf16.msra.mxu0 %v739
      %893 = vmatpush.bf16.msra.mxu0 %v738
      %894 = vmatpush.bf16.msra.mxu0 %v737
      %895 = vmatpush.bf16.msra.mxu0 %v736
      %896 = vmatpush.bf16.msra.mxu0 %v735
      %897 = vmatpush.bf16.msra.mxu0 %v734
      %898 = vmatmul.bf16.gmra.mxu0 %v414
      %v899 = vpop.f32.mrf.mxu0
      %v900 = vadd.f32 %v886, %v899
      %v901 = vpop.f32.mrf.mxu0
      %v902 = vadd.f32 %v888, %v901
      %903 = vdwg.mxu0
      %904 = vmatpush.bf16.msra.mxu0 %v749
      %905 = vmatpush.bf16.msra.mxu0 %v748
      %906 = vmatpush.bf16.msra.mxu0 %v747
      %907 = vmatpush.bf16.msra.mxu0 %v746
      %908 = vmatpush.bf16.msra.mxu0 %v745
      %909 = vmatpush.bf16.msra.mxu0 %v744
      %910 = vmatpush.bf16.msra.mxu0 %v743
      %911 = vmatpush.bf16.msra.mxu0 %v742
      %912 = vmatmul.bf16.gmra.mxu0 %v415
      %v913 = vpop.f32.mrf.mxu0
      %v914 = vadd.f32 %v900, %v913
      %v915 = vpop.f32.mrf.mxu0
      %v916 = vadd.f32 %v902, %v915
      %917 = vdwg.mxu0
      %918 = vmatpush.bf16.msra.mxu0 %v757
      %919 = vmatpush.bf16.msra.mxu0 %v756
      %920 = vmatpush.bf16.msra.mxu0 %v755
      %921 = vmatpush.bf16.msra.mxu0 %v754
      %922 = vmatpush.bf16.msra.mxu0 %v753
      %923 = vmatpush.bf16.msra.mxu0 %v752
      %924 = vmatpush.bf16.msra.mxu0 %v751
      %925 = vmatpush.bf16.msra.mxu0 %v750
      %926 = vmatmul.bf16.gmra.mxu0 %v416
      %v927 = vpop.f32.mrf.mxu0
      %v928 = vadd.f32 %v914, %v927
      %v929 = vpop.f32.mrf.mxu0
      %v930 = vadd.f32 %v916, %v929
      %931 = vdwg.mxu0
      %932 = vmatpush.bf16.msra.mxu0 %v765
      %933 = vmatpush.bf16.msra.mxu0 %v764
      %934 = vmatpush.bf16.msra.mxu0 %v763
      %935 = vmatpush.bf16.msra.mxu0 %v762
      %936 = vmatpush.bf16.msra.mxu0 %v761
      %937 = vmatpush.bf16.msra.mxu0 %v760
      %938 = vmatpush.bf16.msra.mxu0 %v759
      %939 = vmatpush.bf16.msra.mxu0 %v758
      %940 = vmatmul.bf16.gmra.mxu0 %v417
      %v941 = vpop.f32.mrf.mxu0
      %v942 = vadd.f32 %v928, %v941
      %v943 = vpop.f32.mrf.mxu0
      %v944 = vadd.f32 %v930, %v943
      %945 = vdwg.mxu0
      %946 = vmatpush.bf16.msra.mxu0 %v773
      %947 = vmatpush.bf16.msra.mxu0 %v772
      %948 = vmatpush.bf16.msra.mxu0 %v771
      %949 = vmatpush.bf16.msra.mxu0 %v770
      %950 = vmatpush.bf16.msra.mxu0 %v769
      %951 = vmatpush.bf16.msra.mxu0 %v768
      %952 = vmatpush.bf16.msra.mxu0 %v767
      %953 = vmatpush.bf16.msra.mxu0 %v766
      %954 = vmatmul.bf16.gmra.mxu0 %v418
      %v955 = vpop.f32.mrf.mxu0
      %v956 = vadd.f32 %v942, %v955
      %v957 = vpop.f32.mrf.mxu0
      %v958 = vadd.f32 %v944, %v957
      %959 = vdwg.mxu0
      %960 = vmatpush.bf16.msra.mxu0 %v781
      %961 = vmatpush.bf16.msra.mxu0 %v780
      %962 = vmatpush.bf16.msra.mxu0 %v779
      %963 = vmatpush.bf16.msra.mxu0 %v778
      %964 = vmatpush.bf16.msra.mxu0 %v777
      %965 = vmatpush.bf16.msra.mxu0 %v776
      %966 = vmatpush.bf16.msra.mxu0 %v775
      %967 = vmatpush.bf16.msra.mxu0 %v774
      %968 = vmatmul.bf16.gmra.mxu0 %v419
      %v969 = vpop.f32.mrf.mxu0
      %v970 = vadd.f32 %v956, %v969
      %v971 = vpop.f32.mrf.mxu0
      %v972 = vadd.f32 %v958, %v971
      %973 = vdwg.mxu0
      %974 = vmatpush.bf16.msra.mxu0 %v789
      %975 = vmatpush.bf16.msra.mxu0 %v788
      %976 = vmatpush.bf16.msra.mxu0 %v787
      %977 = vmatpush.bf16.msra.mxu0 %v786
      %978 = vmatpush.bf16.msra.mxu0 %v785
      %979 = vmatpush.bf16.msra.mxu0 %v784
      %980 = vmatpush.bf16.msra.mxu0 %v783
      %981 = vmatpush.bf16.msra.mxu0 %v782
      %982 = vmatmul.bf16.gmra.mxu0 %v420
      %v983 = vpop.f32.mrf.mxu0
      %v984 = vadd.f32 %v970, %v983
      %v985 = vpop.f32.mrf.mxu0
      %v986 = vadd.f32 %v972, %v985
      %987 = vdwg.mxu0
      %v988 = vld [vmem:[%s218] sm:$0xff]
      %v989 = vld [vmem:[%s218 + $0x8] sm:$0xff]
      %v990 = vadd.f32 %v984, %v988
      %v991 = vadd.f32 %v986, %v989
      %v992 = vmax.f32 %v990, 0.0
      %v993 = vmax.f32 %v991, 0.0
      %994 = vst [vmem:[%s224] sm:$0xff] %v992
      %995 = vst [vmem:[%s224 + $0x8] sm:$0xff] %v993
      %s996 = smul.u32 2, %s15
      %p997 = scmp.lt.s32.totalorder %s996, 3
      %s998 = scalar_select %p997, %s996, 3
      %s999 = smul.addr %s998, 8
      %s1000 = scalar_lea.vmem %s4, %s999
      // Predicated region
      $region37: #{rnet_forward.14} parent=35 // pred_check
        %p1001 = pneg %p127
      $region38: #{rnet_forward.14} parent=35 // pred_check_branch
        %1003 = sbr.rel (%p1001) target = $region40
      $region39: #{rnet_forward.14} parent=35 // pred_region
        %s1004 = smul.u32 2, %s15
      $region40: #{rnet_forward.14} parent=35 // pred_fallthru
        _
    $region36: #{rnet_forward.14} parent=5 // pred_fallthru
      _
    %p1005 = scmp.le.s32.totalorder 2, %s10
    // Predicated region
    $region41: #{rnet_forward.14} parent=5 // pred_check
      %p1006 = pneg %p1005
    $region42: #{rnet_forward.14} parent=5 // pred_check_branch
      %1008 = sbr.rel (%p1006) target = $region44
    $region43: #{rnet_forward.14} parent=5 // pred_region
      %s1009 = ssub.s32 %s10, 2
      // Predicated region
      $region45: #{rnet_forward.14} parent=43 // pred_check
        %p1010 = pneg %p133
      $region46: #{rnet_forward.14} parent=43 // pred_check_branch
        %1012 = sbr.rel (%p1010) target = $region48
      $region47: #{rnet_forward.14} parent=43 // pred_region
        %s1013 = smul.u32 2, %s16
        %p1014 = scmp.lt.s32.totalorder %s1013, 3
        %s1015 = scalar_select %p1014, %s1013, 3
        %s1016 = smul.addr %s1015, 8
        %s1017 = scalar_lea.vmem %s4, %s1016
      $region48: #{rnet_forward.14} parent=43 // pred_fallthru
        _
    $region44: #{rnet_forward.14} parent=5 // pred_fallthru
      _
  $region6: #{rnet_forward.14} parent=0 // loop_footer
    %s14 = sadd.s32 1, %s10
  $region7: #{rnet_forward.14} parent=0 // loop_footer_branch
    %9 = sbr.rel target = $region3
  $region8: #{rnet_forward.14} parent=0 // loop_exit
    _

// kernel: rnet_forward.15
$region0: #{rnet_forward.15}
  #allocation0 [shape = 'u32[]', space=smem, size = 0x4, offset = 0x4, fixed_abs, tag = 'smem constant byte address 0x4 - core index']
  #allocation1 [shape = 'u32[72,128]{1,0:T(1,128)}', space=vmem, size = 0x9000, scoped, tag = 'internal scratch']
  %s0 = inlined_call_operand.vmem [shape: bf16[8,1152], index: 0, kind: input, shape index: {}]
  %s1 = inlined_call_operand.vmem [shape: bf16[1152,128], index: 1, kind: input, shape index: {}]
  %s2 = inlined_call_operand.vmem [shape: f32[1,128], index: 2, kind: input, shape index: {}]
  %s3 = inlined_call_operand.vmem [shape: f32[8,128], index: 3, kind: output, shape index: {}]
  %s4 = sld [smem:[#allocation0]]
  $region22: #{rnet_forward.15} parent=0
    _
  %s6 = ssub.s32 1, %s4
  %s7 = scalar_select 0, %s6, %s4
  // Predicated region
  $region2: #{rnet_forward.15} parent=0 // pred_check
    _
  $region3: #{rnet_forward.15} parent=0 // pred_check_branch
    %9 = sbr.rel (0) target = $region5
  $region4: #{rnet_forward.15} parent=0 // pred_region
    _
  $region5: #{rnet_forward.15} parent=0 // pred_fallthru
    _
  // Predicated region
  $region6: #{rnet_forward.15} parent=0 // pred_check
    _
  $region7: #{rnet_forward.15} parent=0 // pred_check_branch
    %11 = sbr.rel (0) target = $region9
  $region8: #{rnet_forward.15} parent=0 // pred_region
    _
  $region9: #{rnet_forward.15} parent=0 // pred_fallthru
    _
  // Predicated region
  $region10: #{rnet_forward.15} parent=0 // pred_check
    _
  $region11: #{rnet_forward.15} parent=0 // pred_check_branch
    %13 = sbr.rel (0) target = $region13
  $region12: #{rnet_forward.15} parent=0 // pred_region
    _
  $region13: #{rnet_forward.15} parent=0 // pred_fallthru
    _
  %v14 = vld [vmem:[%s0] sm:$0xff]
  %v15 = vld [vmem:[%s0 + $0x8] sm:$0xff]
  %v16 = vld [vmem:[%s0 + $0x10] sm:$0xff]
  %v17 = vld [vmem:[%s0 + $0x18] sm:$0xff]
  %v18 = vld [vmem:[%s0 + $0x20] sm:$0xf]
  %v19 = vld [vmem:[%s1] sm:$0xf]
  %v20 = vld [vmem:[%s1 + $0x4] sm:$0xf]
  %v21 = vld [vmem:[%s1 + $0x8] sm:$0xf]
  %v22 = vld [vmem:[%s1 + $0xc] sm:$0xf]
  %v23 = vld [vmem:[%s1 + $0x10] sm:$0xf]
  %v24 = vld [vmem:[%s1 + $0x14] sm:$0xf]
  %v25 = vld [vmem:[%s1 + $0x18] sm:$0xf]
  %v26 = vld [vmem:[%s1 + $0x1c] sm:$0xf]
  %v27 = vld [vmem:[%s1 + $0x20] sm:$0xf]
  %v28 = vld [vmem:[%s1 + $0x24] sm:$0xf]
  %v29 = vld [vmem:[%s1 + $0x28] sm:$0xf]
  %v30 = vld [vmem:[%s1 + $0x2c] sm:$0xf]
  %v31 = vld [vmem:[%s1 + $0x30] sm:$0xf]
  %v32 = vld [vmem:[%s1 + $0x34] sm:$0xf]
  %v33 = vld [vmem:[%s1 + $0x38] sm:$0xf]
  %v34 = vld [vmem:[%s1 + $0x3c] sm:$0xf]
  %v35 = vld [vmem:[%s1 + $0x40] sm:$0xf]
  %v36 = vld [vmem:[%s1 + $0x44] sm:$0xf]
  %v37 = vld [vmem:[%s1 + $0x48] sm:$0xf]
  %v38 = vld [vmem:[%s1 + $0x4c] sm:$0xf]
  %v39 = vld [vmem:[%s1 + $0x50] sm:$0xf]
  %v40 = vld [vmem:[%s1 + $0x54] sm:$0xf]
  %v41 = vld [vmem:[%s1 + $0x58] sm:$0xf]
  %v42 = vld [vmem:[%s1 + $0x5c] sm:$0xf]
  %v43 = vld [vmem:[%s1 + $0x60] sm:$0xf]
  %v44 = vld [vmem:[%s1 + $0x64] sm:$0xf]
  %v45 = vld [vmem:[%s1 + $0x68] sm:$0xf]
  %v46 = vld [vmem:[%s1 + $0x6c] sm:$0xf]
  %v47 = vld [vmem:[%s1 + $0x70] sm:$0xf]
  %v48 = vld [vmem:[%s1 + $0x74] sm:$0xf]
  %v49 = vld [vmem:[%s1 + $0x78] sm:$0xf]
  %v50 = vld [vmem:[%s1 + $0x7c] sm:$0xf]
  %v51 = vld [vmem:[%s1 + $0x80] sm:$0xf]
  %v52 = vld [vmem:[%s1 + $0x84] sm:$0xf]
  %v53 = vld [vmem:[%s1 + $0x88] sm:$0xf]
  %v54 = vld [vmem:[%s1 + $0x8c] sm:$0xf]
  %v55 = vld [vmem:[%s1 + $0x90] sm:$0xf]
  %v56 = vld [vmem:[%s1 + $0x94] sm:$0xf]
  %v57 = vld [vmem:[%s1 + $0x98] sm:$0xf]
  %v58 = vld [vmem:[%s1 + $0x9c] sm:$0xf]
  %v59 = vld [vmem:[%s1 + $0xa0] sm:$0xf]
  %v60 = vld [vmem:[%s1 + $0xa4] sm:$0xf]
  %v61 = vld [vmem:[%s1 + $0xa8] sm:$0xf]
  %v62 = vld [vmem:[%s1 + $0xac] sm:$0xf]
  %v63 = vld [vmem:[%s1 + $0xb0] sm:$0xf]
  %v64 = vld [vmem:[%s1 + $0xb4] sm:$0xf]
  %v65 = vld [vmem:[%s1 + $0xb8] sm:$0xf]
  %v66 = vld [vmem:[%s1 + $0xbc] sm:$0xf]
  %v67 = vld [vmem:[%s1 + $0xc0] sm:$0xf]
  %v68 = vld [vmem:[%s1 + $0xc4] sm:$0xf]
  %v69 = vld [vmem:[%s1 + $0xc8] sm:$0xf]
  %v70 = vld [vmem:[%s1 + $0xcc] sm:$0xf]
  %v71 = vld [vmem:[%s1 + $0xd0] sm:$0xf]
  %v72 = vld [vmem:[%s1 + $0xd4] sm:$0xf]
  %v73 = vld [vmem:[%s1 + $0xd8] sm:$0xf]
  %v74 = vld [vmem:[%s1 + $0xdc] sm:$0xf]
  %v75 = vld [vmem:[%s1 + $0xe0] sm:$0xf]
  %v76 = vld [vmem:[%s1 + $0xe4] sm:$0xf]
  %v77 = vld [vmem:[%s1 + $0xe8] sm:$0xf]
  %v78 = vld [vmem:[%s1 + $0xec] sm:$0xf]
  %v79 = vld [vmem:[%s1 + $0xf0] sm:$0xf]
  %v80 = vld [vmem:[%s1 + $0xf4] sm:$0xf]
  %v81 = vld [vmem:[%s1 + $0xf8] sm:$0xf]
  %v82 = vld [vmem:[%s1 + $0xfc] sm:$0xf]
  %v83 = vld [vmem:[%s1 + $0x100] sm:$0xf]
  %v84 = vld [vmem:[%s1 + $0x104] sm:$0xf]
  %v85 = vld [vmem:[%s1 + $0x108] sm:$0xf]
  %v86 = vld [vmem:[%s1 + $0x10c] sm:$0xf]
  %v87 = vld [vmem:[%s1 + $0x110] sm:$0xf]
  %v88 = vld [vmem:[%s1 + $0x114] sm:$0xf]
  %v89 = vld [vmem:[%s1 + $0x118] sm:$0xf]
  %v90 = vld [vmem:[%s1 + $0x11c] sm:$0xf]
  %v91 = vld [vmem:[%s1 + $0x120] sm:$0xf]
  %v92 = vld [vmem:[%s1 + $0x124] sm:$0xf]
  %v93 = vld [vmem:[%s1 + $0x128] sm:$0xf]
  %v94 = vld [vmem:[%s1 + $0x12c] sm:$0xf]
  %v95 = vld [vmem:[%s1 + $0x130] sm:$0xf]
  %v96 = vld [vmem:[%s1 + $0x134] sm:$0xf]
  %v97 = vld [vmem:[%s1 + $0x138] sm:$0xf]
  %v98 = vld [vmem:[%s1 + $0x13c] sm:$0xf]
  %v99 = vld [vmem:[%s1 + $0x140] sm:$0xf]
  %v100 = vld [vmem:[%s1 + $0x144] sm:$0xf]
  %v101 = vld [vmem:[%s1 + $0x148] sm:$0xf]
  %v102 = vld [vmem:[%s1 + $0x14c] sm:$0xf]
  %v103 = vld [vmem:[%s1 + $0x150] sm:$0xf]
  %v104 = vld [vmem:[%s1 + $0x154] sm:$0xf]
  %v105 = vld [vmem:[%s1 + $0x158] sm:$0xf]
  %v106 = vld [vmem:[%s1 + $0x15c] sm:$0xf]
  %v107 = vld [vmem:[%s1 + $0x160] sm:$0xf]
  %v108 = vld [vmem:[%s1 + $0x164] sm:$0xf]
  %v109 = vld [vmem:[%s1 + $0x168] sm:$0xf]
  %v110 = vld [vmem:[%s1 + $0x16c] sm:$0xf]
  %v111 = vld [vmem:[%s1 + $0x170] sm:$0xf]
  %v112 = vld [vmem:[%s1 + $0x174] sm:$0xf]
  %v113 = vld [vmem:[%s1 + $0x178] sm:$0xf]
  %v114 = vld [vmem:[%s1 + $0x17c] sm:$0xf]
  %v115 = vld [vmem:[%s1 + $0x180] sm:$0xf]
  %v116 = vld [vmem:[%s1 + $0x184] sm:$0xf]
  %v117 = vld [vmem:[%s1 + $0x188] sm:$0xf]
  %v118 = vld [vmem:[%s1 + $0x18c] sm:$0xf]
  %v119 = vld [vmem:[%s1 + $0x190] sm:$0xf]
  %v120 = vld [vmem:[%s1 + $0x194] sm:$0xf]
  %v121 = vld [vmem:[%s1 + $0x198] sm:$0xf]
  %v122 = vld [vmem:[%s1 + $0x19c] sm:$0xf]
  %v123 = vld [vmem:[%s1 + $0x1a0] sm:$0xf]
  %v124 = vld [vmem:[%s1 + $0x1a4] sm:$0xf]
  %v125 = vld [vmem:[%s1 + $0x1a8] sm:$0xf]
  %v126 = vld [vmem:[%s1 + $0x1ac] sm:$0xf]
  %v127 = vld [vmem:[%s1 + $0x1b0] sm:$0xf]
  %v128 = vld [vmem:[%s1 + $0x1b4] sm:$0xf]
  %v129 = vld [vmem:[%s1 + $0x1b8] sm:$0xf]
  %v130 = vld [vmem:[%s1 + $0x1bc] sm:$0xf]
  %v131 = vld [vmem:[%s1 + $0x1c0] sm:$0xf]
  %v132 = vld [vmem:[%s1 + $0x1c4] sm:$0xf]
  %v133 = vld [vmem:[%s1 + $0x1c8] sm:$0xf]
  %v134 = vld [vmem:[%s1 + $0x1cc] sm:$0xf]
  %v135 = vld [vmem:[%s1 + $0x1d0] sm:$0xf]
  %v136 = vld [vmem:[%s1 + $0x1d4] sm:$0xf]
  %v137 = vld [vmem:[%s1 + $0x1d8] sm:$0xf]
  %v138 = vld [vmem:[%s1 + $0x1dc] sm:$0xf]
  %v139 = vld [vmem:[%s1 + $0x1e0] sm:$0xf]
  %v140 = vld [vmem:[%s1 + $0x1e4] sm:$0xf]
  %v141 = vld [vmem:[%s1 + $0x1e8] sm:$0xf]
  %v142 = vld [vmem:[%s1 + $0x1ec] sm:$0xf]
  %v143 = vld [vmem:[%s1 + $0x1f0] sm:$0xf]
  %v144 = vld [vmem:[%s1 + $0x1f4] sm:$0xf]
  %v145 = vld [vmem:[%s1 + $0x1f8] sm:$0xf]
  %v146 = vld [vmem:[%s1 + $0x1fc] sm:$0xf]
  %v147 = vld [vmem:[%s1 + $0x200] sm:$0xf]
  %v148 = vld [vmem:[%s1 + $0x204] sm:$0xf]
  %v149 = vld [vmem:[%s1 + $0x208] sm:$0xf]
  %v150 = vld [vmem:[%s1 + $0x20c] sm:$0xf]
  %v151 = vld [vmem:[%s1 + $0x210] sm:$0xf]
  %v152 = vld [vmem:[%s1 + $0x214] sm:$0xf]
  %v153 = vld [vmem:[%s1 + $0x218] sm:$0xf]
  %v154 = vld [vmem:[%s1 + $0x21c] sm:$0xf]
  %v155 = vld [vmem:[%s1 + $0x220] sm:$0xf]
  %v156 = vld [vmem:[%s1 + $0x224] sm:$0xf]
  %v157 = vld [vmem:[%s1 + $0x228] sm:$0xf]
  %v158 = vld [vmem:[%s1 + $0x22c] sm:$0xf]
  %v159 = vld [vmem:[%s1 + $0x230] sm:$0xf]
  %v160 = vld [vmem:[%s1 + $0x234] sm:$0xf]
  %v161 = vld [vmem:[%s1 + $0x238] sm:$0xf]
  %v162 = vld [vmem:[%s1 + $0x23c] sm:$0xf]
  %v163 = vld [vmem:[%s2] sm:$0x1]
  %v165 = vperm.slane %v163, 0
  %v172 = vunpack.c.l.b16 %v14
  %v173 = vunpack.c.h.b16 %v14
  %v174 = vunpack.c.l.b16 %v15
  %v175 = vunpack.c.h.b16 %v15
  %v176 = vunpack.c.l.b16 %v16
  %v177 = vunpack.c.h.b16 %v16
  %v178 = vunpack.c.l.b16 %v17
  %v179 = vunpack.c.h.b16 %v17
  %v180 = vunpack.c.l.b16 %v18
  %v181 = vpack.c.b16 %v172, %v172
  %v182 = vpack.c.b16 %v173, %v173
  %v183 = vpack.c.b16 %v174, %v174
  %v184 = vpack.c.b16 %v175, %v175
  %v185 = vpack.c.b16 %v176, %v176
  %v186 = vpack.c.b16 %v177, %v177
  %v187 = vpack.c.b16 %v178, %v178
  %v188 = vpack.c.b16 %v179, %v179
  %v189 = vpack.c.b16 %v180, %v180
  %v343 = vunpack.c.l.b16 %v19
  %v344 = vunpack.c.l.b16 %v20
  %v345 = vunpack.c.l.b16 %v21
  %v346 = vunpack.c.l.b16 %v22
  %v347 = vunpack.c.l.b16 %v23
  %v348 = vunpack.c.l.b16 %v24
  %v349 = vunpack.c.l.b16 %v25
  %v350 = vunpack.c.l.b16 %v26
  %v351 = vunpack.c.l.b16 %v27
  %v352 = vunpack.c.l.b16 %v28
  %v353 = vunpack.c.l.b16 %v29
  %v354 = vunpack.c.l.b16 %v30
  %v355 = vunpack.c.l.b16 %v31
  %v356 = vunpack.c.l.b16 %v32
  %v357 = vunpack.c.l.b16 %v33
  %v358 = vunpack.c.l.b16 %v34
  %v359 = vunpack.c.l.b16 %v35
  %v360 = vunpack.c.l.b16 %v36
  %v361 = vunpack.c.l.b16 %v37
  %v362 = vunpack.c.l.b16 %v38
  %v363 = vunpack.c.l.b16 %v39
  %v364 = vunpack.c.l.b16 %v40
  %v365 = vunpack.c.l.b16 %v41
  %v366 = vunpack.c.l.b16 %v42
  %v367 = vunpack.c.l.b16 %v43
  %v368 = vunpack.c.l.b16 %v44
  %v369 = vunpack.c.l.b16 %v45
  %v370 = vunpack.c.l.b16 %v46
  %v371 = vunpack.c.l.b16 %v47
  %v372 = vunpack.c.l.b16 %v48
  %v373 = vunpack.c.l.b16 %v49
  %v374 = vunpack.c.l.b16 %v50
  %v375 = vunpack.c.l.b16 %v51
  %v376 = vunpack.c.l.b16 %v52
  %v377 = vunpack.c.l.b16 %v53
  %v378 = vunpack.c.l.b16 %v54
  %v379 = vunpack.c.l.b16 %v55
  %v380 = vunpack.c.l.b16 %v56
  %v381 = vunpack.c.l.b16 %v57
  %v382 = vunpack.c.l.b16 %v58
  %v383 = vunpack.c.l.b16 %v59
  %v384 = vunpack.c.l.b16 %v60
  %v385 = vunpack.c.l.b16 %v61
  %v386 = vunpack.c.l.b16 %v62
  %v387 = vunpack.c.l.b16 %v63
  %v388 = vunpack.c.l.b16 %v64
  %v389 = vunpack.c.l.b16 %v65
  %v390 = vunpack.c.l.b16 %v66
  %v391 = vunpack.c.l.b16 %v67
  %v392 = vunpack.c.l.b16 %v68
  %v393 = vunpack.c.l.b16 %v69
  %v394 = vunpack.c.l.b16 %v70
  %v395 = vunpack.c.l.b16 %v71
  %v396 = vunpack.c.l.b16 %v72
  %v397 = vunpack.c.l.b16 %v73
  %v398 = vunpack.c.l.b16 %v74
  %v399 = vunpack.c.l.b16 %v75
  %v400 = vunpack.c.l.b16 %v76
  %v401 = vunpack.c.l.b16 %v77
  %v402 = vunpack.c.l.b16 %v78
  %v403 = vunpack.c.l.b16 %v79
  %v404 = vunpack.c.l.b16 %v80
  %v405 = vunpack.c.l.b16 %v81
  %v406 = vunpack.c.l.b16 %v82
  %v407 = vunpack.c.l.b16 %v83
  %v408 = vunpack.c.l.b16 %v84
  %v409 = vunpack.c.l.b16 %v85
  %v410 = vunpack.c.l.b16 %v86
  %v411 = vunpack.c.l.b16 %v87
  %v412 = vunpack.c.l.b16 %v88
  %v413 = vunpack.c.l.b16 %v89
  %v414 = vunpack.c.l.b16 %v90
  %v415 = vunpack.c.l.b16 %v91
  %v416 = vunpack.c.l.b16 %v92
  %v417 = vunpack.c.l.b16 %v93
  %v418 = vunpack.c.l.b16 %v94
  %v419 = vunpack.c.l.b16 %v95
  %v420 = vunpack.c.l.b16 %v96
  %v421 = vunpack.c.l.b16 %v97
  %v422 = vunpack.c.l.b16 %v98
  %v423 = vunpack.c.l.b16 %v99
  %v424 = vunpack.c.l.b16 %v100
  %v425 = vunpack.c.l.b16 %v101
  %v426 = vunpack.c.l.b16 %v102
  %v427 = vunpack.c.l.b16 %v103
  %v428 = vunpack.c.l.b16 %v104
  %v429 = vunpack.c.l.b16 %v105
  %v430 = vunpack.c.l.b16 %v106
  %v431 = vunpack.c.l.b16 %v107
  %v432 = vunpack.c.l.b16 %v108
  %v433 = vunpack.c.l.b16 %v109
  %v434 = vunpack.c.l.b16 %v110
  %v435 = vunpack.c.l.b16 %v111
  %v436 = vunpack.c.l.b16 %v112
  %v437 = vunpack.c.l.b16 %v113
  %v438 = vunpack.c.l.b16 %v114
  %v439 = vunpack.c.l.b16 %v115
  %v440 = vunpack.c.l.b16 %v116
  %v441 = vunpack.c.l.b16 %v117
  %v442 = vunpack.c.l.b16 %v118
  %v443 = vunpack.c.l.b16 %v119
  %v444 = vunpack.c.l.b16 %v120
  %v445 = vunpack.c.l.b16 %v121
  %v446 = vunpack.c.l.b16 %v122
  %v447 = vunpack.c.l.b16 %v123
  %v448 = vunpack.c.l.b16 %v124
  %v449 = vunpack.c.l.b16 %v125
  %v450 = vunpack.c.l.b16 %v126
  %v451 = vunpack.c.l.b16 %v127
  %v452 = vunpack.c.l.b16 %v128
  %v453 = vunpack.c.l.b16 %v129
  %v454 = vunpack.c.l.b16 %v130
  %v455 = vunpack.c.l.b16 %v131
  %v456 = vunpack.c.l.b16 %v132
  %v457 = vunpack.c.l.b16 %v133
  %v458 = vunpack.c.l.b16 %v134
  %v459 = vunpack.c.l.b16 %v135
  %v460 = vunpack.c.l.b16 %v136
  %v461 = vunpack.c.l.b16 %v137
  %v462 = vunpack.c.l.b16 %v138
  %v463 = vunpack.c.l.b16 %v139
  %v464 = vunpack.c.l.b16 %v140
  %v465 = vunpack.c.l.b16 %v141
  %v466 = vunpack.c.l.b16 %v142
  %v467 = vunpack.c.l.b16 %v143
  %v468 = vunpack.c.l.b16 %v144
  %v469 = vunpack.c.l.b16 %v145
  %v470 = vunpack.c.l.b16 %v146
  %v471 = vunpack.c.l.b16 %v147
  %v472 = vunpack.c.l.b16 %v148
  %v473 = vunpack.c.l.b16 %v149
  %v474 = vunpack.c.l.b16 %v150
  %v475 = vunpack.c.l.b16 %v151
  %v476 = vunpack.c.l.b16 %v152
  %v477 = vunpack.c.l.b16 %v153
  %v478 = vunpack.c.l.b16 %v154
  %v479 = vunpack.c.l.b16 %v155
  %v480 = vunpack.c.l.b16 %v156
  %v481 = vunpack.c.l.b16 %v157
  %v482 = vunpack.c.l.b16 %v158
  %v483 = vunpack.c.l.b16 %v159
  %v484 = vunpack.c.l.b16 %v160
  %v485 = vunpack.c.l.b16 %v161
  %v486 = vunpack.c.l.b16 %v162
  %v487 = vpack.c.b16 %v344, %v343
  %v488 = vpack.c.b16 %v346, %v345
  %v489 = vpack.c.b16 %v348, %v347
  %v490 = vpack.c.b16 %v350, %v349
  %v491 = vpack.c.b16 %v352, %v351
  %v492 = vpack.c.b16 %v354, %v353
  %v493 = vpack.c.b16 %v356, %v355
  %v494 = vpack.c.b16 %v358, %v357
  %v495 = vpack.c.b16 %v360, %v359
  %v496 = vpack.c.b16 %v362, %v361
  %v497 = vpack.c.b16 %v364, %v363
  %v498 = vpack.c.b16 %v366, %v365
  %v499 = vpack.c.b16 %v368, %v367
  %v500 = vpack.c.b16 %v370, %v369
  %v501 = vpack.c.b16 %v372, %v371
  %v502 = vpack.c.b16 %v374, %v373
  %v503 = vpack.c.b16 %v376, %v375
  %v504 = vpack.c.b16 %v378, %v377
  %v505 = vpack.c.b16 %v380, %v379
  %v506 = vpack.c.b16 %v382, %v381
  %v507 = vpack.c.b16 %v384, %v383
  %v508 = vpack.c.b16 %v386, %v385
  %v509 = vpack.c.b16 %v388, %v387
  %v510 = vpack.c.b16 %v390, %v389
  %v511 = vpack.c.b16 %v392, %v391
  %v512 = vpack.c.b16 %v394, %v393
  %v513 = vpack.c.b16 %v396, %v395
  %v514 = vpack.c.b16 %v398, %v397
  %v515 = vpack.c.b16 %v400, %v399
  %v516 = vpack.c.b16 %v402, %v401
  %v517 = vpack.c.b16 %v404, %v403
  %v518 = vpack.c.b16 %v406, %v405
  %v519 = vpack.c.b16 %v408, %v407
  %v520 = vpack.c.b16 %v410, %v409
  %v521 = vpack.c.b16 %v412, %v411
  %v522 = vpack.c.b16 %v414, %v413
  %v523 = vpack.c.b16 %v416, %v415
  %v524 = vpack.c.b16 %v418, %v417
  %v525 = vpack.c.b16 %v420, %v419
  %v526 = vpack.c.b16 %v422, %v421
  %v527 = vpack.c.b16 %v424, %v423
  %v528 = vpack.c.b16 %v426, %v425
  %v529 = vpack.c.b16 %v428, %v427
  %v530 = vpack.c.b16 %v430, %v429
  %v531 = vpack.c.b16 %v432, %v431
  %v532 = vpack.c.b16 %v434, %v433
  %v533 = vpack.c.b16 %v436, %v435
  %v534 = vpack.c.b16 %v438, %v437
  %v535 = vpack.c.b16 %v440, %v439
  %v536 = vpack.c.b16 %v442, %v441
  %v537 = vpack.c.b16 %v444, %v443
  %v538 = vpack.c.b16 %v446, %v445
  %v539 = vpack.c.b16 %v448, %v447
  %v540 = vpack.c.b16 %v450, %v449
  %v541 = vpack.c.b16 %v452, %v451
  %v542 = vpack.c.b16 %v454, %v453
  %v543 = vpack.c.b16 %v456, %v455
  %v544 = vpack.c.b16 %v458, %v457
  %v545 = vpack.c.b16 %v460, %v459
  %v546 = vpack.c.b16 %v462, %v461
  %v547 = vpack.c.b16 %v464, %v463
  %v548 = vpack.c.b16 %v466, %v465
  %v549 = vpack.c.b16 %v468, %v467
  %v550 = vpack.c.b16 %v470, %v469
  %v551 = vpack.c.b16 %v472, %v471
  %v552 = vpack.c.b16 %v474, %v473
  %v553 = vpack.c.b16 %v476, %v475
  %v554 = vpack.c.b16 %v478, %v477
  %v555 = vpack.c.b16 %v480, %v479
  %v556 = vpack.c.b16 %v482, %v481
  %v557 = vpack.c.b16 %v484, %v483
  %v558 = vpack.c.b16 %v486, %v485
  %631 = vmatpush.bf16.msra.mxu0 %v494
  %632 = vmatpush.bf16.msra.mxu0 %v493
  %633 = vmatpush.bf16.msra.mxu0 %v492
  %634 = vmatpush.bf16.msra.mxu0 %v491
  %635 = vmatpush.bf16.msra.mxu0 %v490
  %636 = vmatpush.bf16.msra.mxu0 %v489
  %637 = vmatpush.bf16.msra.mxu0 %v488
  %638 = vmatpush.bf16.msra.mxu0 %v487
  %639 = vmatmul.bf16.gmra.mxu0 %v181
  %v640 = vpop.f32.mrf.mxu0
  %v641 = vadd.f32 %v165, %v640
  %v642 = vpop.f32.mrf.mxu0
  %643 = vdwg.mxu0
  %644 = vmatpush.bf16.msra.mxu0 %v502
  %645 = vmatpush.bf16.msra.mxu0 %v501
  %646 = vmatpush.bf16.msra.mxu0 %v500
  %647 = vmatpush.bf16.msra.mxu0 %v499
  %648 = vmatpush.bf16.msra.mxu0 %v498
  %649 = vmatpush.bf16.msra.mxu0 %v497
  %650 = vmatpush.bf16.msra.mxu0 %v496
  %651 = vmatpush.bf16.msra.mxu0 %v495
  %652 = vmatmul.bf16.gmra.mxu0 %v182
  %v653 = vpop.f32.mrf.mxu0
  %v654 = vadd.f32 %v641, %v653
  %v655 = vpop.f32.mrf.mxu0
  %656 = vdwg.mxu0
  %657 = vmatpush.bf16.msra.mxu0 %v510
  %658 = vmatpush.bf16.msra.mxu0 %v509
  %659 = vmatpush.bf16.msra.mxu0 %v508
  %660 = vmatpush.bf16.msra.mxu0 %v507
  %661 = vmatpush.bf16.msra.mxu0 %v506
  %662 = vmatpush.bf16.msra.mxu0 %v505
  %663 = vmatpush.bf16.msra.mxu0 %v504
  %664 = vmatpush.bf16.msra.mxu0 %v503
  %665 = vmatmul.bf16.gmra.mxu0 %v183
  %v666 = vpop.f32.mrf.mxu0
  %v667 = vadd.f32 %v654, %v666
  %v668 = vpop.f32.mrf.mxu0
  %669 = vdwg.mxu0
  %670 = vmatpush.bf16.msra.mxu0 %v518
  %671 = vmatpush.bf16.msra.mxu0 %v517
  %672 = vmatpush.bf16.msra.mxu0 %v516
  %673 = vmatpush.bf16.msra.mxu0 %v515
  %674 = vmatpush.bf16.msra.mxu0 %v514
  %675 = vmatpush.bf16.msra.mxu0 %v513
  %676 = vmatpush.bf16.msra.mxu0 %v512
  %677 = vmatpush.bf16.msra.mxu0 %v511
  %678 = vmatmul.bf16.gmra.mxu0 %v184
  %v679 = vpop.f32.mrf.mxu0
  %v680 = vadd.f32 %v667, %v679
  %v681 = vpop.f32.mrf.mxu0
  %682 = vdwg.mxu0
  %683 = vmatpush.bf16.msra.mxu0 %v526
  %684 = vmatpush.bf16.msra.mxu0 %v525
  %685 = vmatpush.bf16.msra.mxu0 %v524
  %686 = vmatpush.bf16.msra.mxu0 %v523
  %687 = vmatpush.bf16.msra.mxu0 %v522
  %688 = vmatpush.bf16.msra.mxu0 %v521
  %689 = vmatpush.bf16.msra.mxu0 %v520
  %690 = vmatpush.bf16.msra.mxu0 %v519
  %691 = vmatmul.bf16.gmra.mxu0 %v185
  %v692 = vpop.f32.mrf.mxu0
  %v693 = vadd.f32 %v680, %v692
  %v694 = vpop.f32.mrf.mxu0
  %695 = vdwg.mxu0
  %696 = vmatpush.bf16.msra.mxu0 %v534
  %697 = vmatpush.bf16.msra.mxu0 %v533
  %698 = vmatpush.bf16.msra.mxu0 %v532
  %699 = vmatpush.bf16.msra.mxu0 %v531
  %700 = vmatpush.bf16.msra.mxu0 %v530
  %701 = vmatpush.bf16.msra.mxu0 %v529
  %702 = vmatpush.bf16.msra.mxu0 %v528
  %703 = vmatpush.bf16.msra.mxu0 %v527
  %704 = vmatmul.bf16.gmra.mxu0 %v186
  %v705 = vpop.f32.mrf.mxu0
  %v706 = vadd.f32 %v693, %v705
  %v707 = vpop.f32.mrf.mxu0
  %708 = vdwg.mxu0
  %709 = vmatpush.bf16.msra.mxu0 %v542
  %710 = vmatpush.bf16.msra.mxu0 %v541
  %711 = vmatpush.bf16.msra.mxu0 %v540
  %712 = vmatpush.bf16.msra.mxu0 %v539
  %713 = vmatpush.bf16.msra.mxu0 %v538
  %714 = vmatpush.bf16.msra.mxu0 %v537
  %715 = vmatpush.bf16.msra.mxu0 %v536
  %716 = vmatpush.bf16.msra.mxu0 %v535
  %717 = vmatmul.bf16.gmra.mxu0 %v187
  %v718 = vpop.f32.mrf.mxu0
  %v719 = vadd.f32 %v706, %v718
  %v720 = vpop.f32.mrf.mxu0
  %721 = vdwg.mxu0
  %722 = vmatpush.bf16.msra.mxu0 %v550
  %723 = vmatpush.bf16.msra.mxu0 %v549
  %724 = vmatpush.bf16.msra.mxu0 %v548
  %725 = vmatpush.bf16.msra.mxu0 %v547
  %726 = vmatpush.bf16.msra.mxu0 %v546
  %727 = vmatpush.bf16.msra.mxu0 %v545
  %728 = vmatpush.bf16.msra.mxu0 %v544
  %729 = vmatpush.bf16.msra.mxu0 %v543
  %730 = vmatmul.bf16.gmra.mxu0 %v188
  %v731 = vpop.f32.mrf.mxu0
  %v732 = vadd.f32 %v719, %v731
  %v733 = vpop.f32.mrf.mxu0
  %734 = vdwg.mxu0
  %735 = vmatpush.bf16.msra.mxu0 %v558
  %736 = vmatpush.bf16.msra.mxu0 %v557
  %737 = vmatpush.bf16.msra.mxu0 %v556
  %738 = vmatpush.bf16.msra.mxu0 %v555
  %739 = vmatpush.bf16.msra.mxu0 %v554
  %740 = vmatpush.bf16.msra.mxu0 %v553
  %741 = vmatpush.bf16.msra.mxu0 %v552
  %742 = vmatpush.bf16.msra.mxu0 %v551
  %743 = vmatmul.bf16.gmra.mxu0 %v189
  %v744 = vpop.f32.mrf.mxu0
  %v745 = vadd.f32 %v732, %v744
  %v746 = vpop.f32.mrf.mxu0
  %747 = vdwg.mxu0
  %v748 = vmax.f32 %v745, 0.0
  %749 = vst [vmem:[%s3] sm:$0xff] %v748
  // Predicated region
  $region14: #{rnet_forward.15} parent=0 // pred_check
    _
  $region15: #{rnet_forward.15} parent=0 // pred_check_branch
    %751 = sbr.rel (0) target = $region17
  $region16: #{rnet_forward.15} parent=0 // pred_region
    _
  $region17: #{rnet_forward.15} parent=0 // pred_fallthru
    _
  // Predicated region
  $region18: #{rnet_forward.15} parent=0 // pred_check
    _
  $region19: #{rnet_forward.15} parent=0 // pred_check_branch
    %753 = sbr.rel (0) target = $region21
  $region20: #{rnet_forward.15} parent=0 // pred_region
    _
  $region21: #{rnet_forward.15} parent=0 // pred_fallthru
    _

// kernel: rnet_forward.17
$region0: #{rnet_forward.17}
  #allocation0 [shape = 'u32[]', space=smem, size = 0x4, offset = 0x4, fixed_abs, tag = 'smem constant byte address 0x4 - core index']
  #allocation1 [shape = 'u32[72,128]{1,0:T(1,128)}', space=vmem, size = 0x9000, scoped, tag = 'internal scratch']
  %s0 = inlined_call_operand.vmem [shape: bf16[8,1152], index: 0, kind: input, shape index: {}]
  %s1 = inlined_call_operand.vmem [shape: bf16[1152,128], index: 1, kind: input, shape index: {}]
  %s2 = inlined_call_operand.vmem [shape: f32[1,128], index: 2, kind: input, shape index: {}]
  %s3 = inlined_call_operand.vmem [shape: f32[8,128], index: 3, kind: input, shape index: {}]
  %s4 = inlined_call_operand.vmem [shape: f32[8,128], index: 4, kind: output, shape index: {}]
  %s5 = sld [smem:[#allocation0]]
  $region26: #{rnet_forward.17} parent=0
    _
  %s7 = ssub.s32 1, %s5
  %s8 = scalar_select 0, %s7, %s5
  // Predicated region
  $region2: #{rnet_forward.17} parent=0 // pred_check
    _
  $region3: #{rnet_forward.17} parent=0 // pred_check_branch
    %10 = sbr.rel (0) target = $region5
  $region4: #{rnet_forward.17} parent=0 // pred_region
    _
  $region5: #{rnet_forward.17} parent=0 // pred_fallthru
    _
  // Predicated region
  $region6: #{rnet_forward.17} parent=0 // pred_check
    _
  $region7: #{rnet_forward.17} parent=0 // pred_check_branch
    %12 = sbr.rel (0) target = $region9
  $region8: #{rnet_forward.17} parent=0 // pred_region
    _
  $region9: #{rnet_forward.17} parent=0 // pred_fallthru
    _
  // Predicated region
  $region10: #{rnet_forward.17} parent=0 // pred_check
    _
  $region11: #{rnet_forward.17} parent=0 // pred_check_branch
    %14 = sbr.rel (0) target = $region13
  $region12: #{rnet_forward.17} parent=0 // pred_region
    _
  $region13: #{rnet_forward.17} parent=0 // pred_fallthru
    _
  // Predicated region
  $region14: #{rnet_forward.17} parent=0 // pred_check
    _
  $region15: #{rnet_forward.17} parent=0 // pred_check_branch
    %16 = sbr.rel (0) target = $region17
  $region16: #{rnet_forward.17} parent=0 // pred_region
    _
  $region17: #{rnet_forward.17} parent=0 // pred_fallthru
    _
  %v17 = vld [vmem:[%s0] sm:$0xff]
  %v18 = vld [vmem:[%s0 + $0x8] sm:$0xff]
  %v19 = vld [vmem:[%s0 + $0x10] sm:$0xff]
  %v20 = vld [vmem:[%s0 + $0x18] sm:$0xff]
  %v21 = vld [vmem:[%s0 + $0x20] sm:$0xf]
  %v22 = vld [vmem:[%s1] sm:$0xf]
  %v23 = vld [vmem:[%s1 + $0x4] sm:$0xf]
  %v24 = vld [vmem:[%s1 + $0x8] sm:$0xf]
  %v25 = vld [vmem:[%s1 + $0xc] sm:$0xf]
  %v26 = vld [vmem:[%s1 + $0x10] sm:$0xf]
  %v27 = vld [vmem:[%s1 + $0x14] sm:$0xf]
  %v28 = vld [vmem:[%s1 + $0x18] sm:$0xf]
  %v29 = vld [vmem:[%s1 + $0x1c] sm:$0xf]
  %v30 = vld [vmem:[%s1 + $0x20] sm:$0xf]
  %v31 = vld [vmem:[%s1 + $0x24] sm:$0xf]
  %v32 = vld [vmem:[%s1 + $0x28] sm:$0xf]
  %v33 = vld [vmem:[%s1 + $0x2c] sm:$0xf]
  %v34 = vld [vmem:[%s1 + $0x30] sm:$0xf]
  %v35 = vld [vmem:[%s1 + $0x34] sm:$0xf]
  %v36 = vld [vmem:[%s1 + $0x38] sm:$0xf]
  %v37 = vld [vmem:[%s1 + $0x3c] sm:$0xf]
  %v38 = vld [vmem:[%s1 + $0x40] sm:$0xf]
  %v39 = vld [vmem:[%s1 + $0x44] sm:$0xf]
  %v40 = vld [vmem:[%s1 + $0x48] sm:$0xf]
  %v41 = vld [vmem:[%s1 + $0x4c] sm:$0xf]
  %v42 = vld [vmem:[%s1 + $0x50] sm:$0xf]
  %v43 = vld [vmem:[%s1 + $0x54] sm:$0xf]
  %v44 = vld [vmem:[%s1 + $0x58] sm:$0xf]
  %v45 = vld [vmem:[%s1 + $0x5c] sm:$0xf]
  %v46 = vld [vmem:[%s1 + $0x60] sm:$0xf]
  %v47 = vld [vmem:[%s1 + $0x64] sm:$0xf]
  %v48 = vld [vmem:[%s1 + $0x68] sm:$0xf]
  %v49 = vld [vmem:[%s1 + $0x6c] sm:$0xf]
  %v50 = vld [vmem:[%s1 + $0x70] sm:$0xf]
  %v51 = vld [vmem:[%s1 + $0x74] sm:$0xf]
  %v52 = vld [vmem:[%s1 + $0x78] sm:$0xf]
  %v53 = vld [vmem:[%s1 + $0x7c] sm:$0xf]
  %v54 = vld [vmem:[%s1 + $0x80] sm:$0xf]
  %v55 = vld [vmem:[%s1 + $0x84] sm:$0xf]
  %v56 = vld [vmem:[%s1 + $0x88] sm:$0xf]
  %v57 = vld [vmem:[%s1 + $0x8c] sm:$0xf]
  %v58 = vld [vmem:[%s1 + $0x90] sm:$0xf]
  %v59 = vld [vmem:[%s1 + $0x94] sm:$0xf]
  %v60 = vld [vmem:[%s1 + $0x98] sm:$0xf]
  %v61 = vld [vmem:[%s1 + $0x9c] sm:$0xf]
  %v62 = vld [vmem:[%s1 + $0xa0] sm:$0xf]
  %v63 = vld [vmem:[%s1 + $0xa4] sm:$0xf]
  %v64 = vld [vmem:[%s1 + $0xa8] sm:$0xf]
  %v65 = vld [vmem:[%s1 + $0xac] sm:$0xf]
  %v66 = vld [vmem:[%s1 + $0xb0] sm:$0xf]
  %v67 = vld [vmem:[%s1 + $0xb4] sm:$0xf]
  %v68 = vld [vmem:[%s1 + $0xb8] sm:$0xf]
  %v69 = vld [vmem:[%s1 + $0xbc] sm:$0xf]
  %v70 = vld [vmem:[%s1 + $0xc0] sm:$0xf]
  %v71 = vld [vmem:[%s1 + $0xc4] sm:$0xf]
  %v72 = vld [vmem:[%s1 + $0xc8] sm:$0xf]
  %v73 = vld [vmem:[%s1 + $0xcc] sm:$0xf]
  %v74 = vld [vmem:[%s1 + $0xd0] sm:$0xf]
  %v75 = vld [vmem:[%s1 + $0xd4] sm:$0xf]
  %v76 = vld [vmem:[%s1 + $0xd8] sm:$0xf]
  %v77 = vld [vmem:[%s1 + $0xdc] sm:$0xf]
  %v78 = vld [vmem:[%s1 + $0xe0] sm:$0xf]
  %v79 = vld [vmem:[%s1 + $0xe4] sm:$0xf]
  %v80 = vld [vmem:[%s1 + $0xe8] sm:$0xf]
  %v81 = vld [vmem:[%s1 + $0xec] sm:$0xf]
  %v82 = vld [vmem:[%s1 + $0xf0] sm:$0xf]
  %v83 = vld [vmem:[%s1 + $0xf4] sm:$0xf]
  %v84 = vld [vmem:[%s1 + $0xf8] sm:$0xf]
  %v85 = vld [vmem:[%s1 + $0xfc] sm:$0xf]
  %v86 = vld [vmem:[%s1 + $0x100] sm:$0xf]
  %v87 = vld [vmem:[%s1 + $0x104] sm:$0xf]
  %v88 = vld [vmem:[%s1 + $0x108] sm:$0xf]
  %v89 = vld [vmem:[%s1 + $0x10c] sm:$0xf]
  %v90 = vld [vmem:[%s1 + $0x110] sm:$0xf]
  %v91 = vld [vmem:[%s1 + $0x114] sm:$0xf]
  %v92 = vld [vmem:[%s1 + $0x118] sm:$0xf]
  %v93 = vld [vmem:[%s1 + $0x11c] sm:$0xf]
  %v94 = vld [vmem:[%s1 + $0x120] sm:$0xf]
  %v95 = vld [vmem:[%s1 + $0x124] sm:$0xf]
  %v96 = vld [vmem:[%s1 + $0x128] sm:$0xf]
  %v97 = vld [vmem:[%s1 + $0x12c] sm:$0xf]
  %v98 = vld [vmem:[%s1 + $0x130] sm:$0xf]
  %v99 = vld [vmem:[%s1 + $0x134] sm:$0xf]
  %v100 = vld [vmem:[%s1 + $0x138] sm:$0xf]
  %v101 = vld [vmem:[%s1 + $0x13c] sm:$0xf]
  %v102 = vld [vmem:[%s1 + $0x140] sm:$0xf]
  %v103 = vld [vmem:[%s1 + $0x144] sm:$0xf]
  %v104 = vld [vmem:[%s1 + $0x148] sm:$0xf]
  %v105 = vld [vmem:[%s1 + $0x14c] sm:$0xf]
  %v106 = vld [vmem:[%s1 + $0x150] sm:$0xf]
  %v107 = vld [vmem:[%s1 + $0x154] sm:$0xf]
  %v108 = vld [vmem:[%s1 + $0x158] sm:$0xf]
  %v109 = vld [vmem:[%s1 + $0x15c] sm:$0xf]
  %v110 = vld [vmem:[%s1 + $0x160] sm:$0xf]
  %v111 = vld [vmem:[%s1 + $0x164] sm:$0xf]
  %v112 = vld [vmem:[%s1 + $0x168] sm:$0xf]
  %v113 = vld [vmem:[%s1 + $0x16c] sm:$0xf]
  %v114 = vld [vmem:[%s1 + $0x170] sm:$0xf]
  %v115 = vld [vmem:[%s1 + $0x174] sm:$0xf]
  %v116 = vld [vmem:[%s1 + $0x178] sm:$0xf]
  %v117 = vld [vmem:[%s1 + $0x17c] sm:$0xf]
  %v118 = vld [vmem:[%s1 + $0x180] sm:$0xf]
  %v119 = vld [vmem:[%s1 + $0x184] sm:$0xf]
  %v120 = vld [vmem:[%s1 + $0x188] sm:$0xf]
  %v121 = vld [vmem:[%s1 + $0x18c] sm:$0xf]
  %v122 = vld [vmem:[%s1 + $0x190] sm:$0xf]
  %v123 = vld [vmem:[%s1 + $0x194] sm:$0xf]
  %v124 = vld [vmem:[%s1 + $0x198] sm:$0xf]
  %v125 = vld [vmem:[%s1 + $0x19c] sm:$0xf]
  %v126 = vld [vmem:[%s1 + $0x1a0] sm:$0xf]
  %v127 = vld [vmem:[%s1 + $0x1a4] sm:$0xf]
  %v128 = vld [vmem:[%s1 + $0x1a8] sm:$0xf]
  %v129 = vld [vmem:[%s1 + $0x1ac] sm:$0xf]
  %v130 = vld [vmem:[%s1 + $0x1b0] sm:$0xf]
  %v131 = vld [vmem:[%s1 + $0x1b4] sm:$0xf]
  %v132 = vld [vmem:[%s1 + $0x1b8] sm:$0xf]
  %v133 = vld [vmem:[%s1 + $0x1bc] sm:$0xf]
  %v134 = vld [vmem:[%s1 + $0x1c0] sm:$0xf]
  %v135 = vld [vmem:[%s1 + $0x1c4] sm:$0xf]
  %v136 = vld [vmem:[%s1 + $0x1c8] sm:$0xf]
  %v137 = vld [vmem:[%s1 + $0x1cc] sm:$0xf]
  %v138 = vld [vmem:[%s1 + $0x1d0] sm:$0xf]
  %v139 = vld [vmem:[%s1 + $0x1d4] sm:$0xf]
  %v140 = vld [vmem:[%s1 + $0x1d8] sm:$0xf]
  %v141 = vld [vmem:[%s1 + $0x1dc] sm:$0xf]
  %v142 = vld [vmem:[%s1 + $0x1e0] sm:$0xf]
  %v143 = vld [vmem:[%s1 + $0x1e4] sm:$0xf]
  %v144 = vld [vmem:[%s1 + $0x1e8] sm:$0xf]
  %v145 = vld [vmem:[%s1 + $0x1ec] sm:$0xf]
  %v146 = vld [vmem:[%s1 + $0x1f0] sm:$0xf]
  %v147 = vld [vmem:[%s1 + $0x1f4] sm:$0xf]
  %v148 = vld [vmem:[%s1 + $0x1f8] sm:$0xf]
  %v149 = vld [vmem:[%s1 + $0x1fc] sm:$0xf]
  %v150 = vld [vmem:[%s1 + $0x200] sm:$0xf]
  %v151 = vld [vmem:[%s1 + $0x204] sm:$0xf]
  %v152 = vld [vmem:[%s1 + $0x208] sm:$0xf]
  %v153 = vld [vmem:[%s1 + $0x20c] sm:$0xf]
  %v154 = vld [vmem:[%s1 + $0x210] sm:$0xf]
  %v155 = vld [vmem:[%s1 + $0x214] sm:$0xf]
  %v156 = vld [vmem:[%s1 + $0x218] sm:$0xf]
  %v157 = vld [vmem:[%s1 + $0x21c] sm:$0xf]
  %v158 = vld [vmem:[%s1 + $0x220] sm:$0xf]
  %v159 = vld [vmem:[%s1 + $0x224] sm:$0xf]
  %v160 = vld [vmem:[%s1 + $0x228] sm:$0xf]
  %v161 = vld [vmem:[%s1 + $0x22c] sm:$0xf]
  %v162 = vld [vmem:[%s1 + $0x230] sm:$0xf]
  %v163 = vld [vmem:[%s1 + $0x234] sm:$0xf]
  %v164 = vld [vmem:[%s1 + $0x238] sm:$0xf]
  %v165 = vld [vmem:[%s1 + $0x23c] sm:$0xf]
  %v166 = vld [vmem:[%s2] sm:$0x1]
  %v168 = vperm.slane %v166, 0
  %v175 = vunpack.c.l.b16 %v17
  %v176 = vunpack.c.h.b16 %v17
  %v177 = vunpack.c.l.b16 %v18
  %v178 = vunpack.c.h.b16 %v18
  %v179 = vunpack.c.l.b16 %v19
  %v180 = vunpack.c.h.b16 %v19
  %v181 = vunpack.c.l.b16 %v20
  %v182 = vunpack.c.h.b16 %v20
  %v183 = vunpack.c.l.b16 %v21
  %v184 = vpack.c.b16 %v175, %v175
  %v185 = vpack.c.b16 %v176, %v176
  %v186 = vpack.c.b16 %v177, %v177
  %v187 = vpack.c.b16 %v178, %v178
  %v188 = vpack.c.b16 %v179, %v179
  %v189 = vpack.c.b16 %v180, %v180
  %v190 = vpack.c.b16 %v181, %v181
  %v191 = vpack.c.b16 %v182, %v182
  %v192 = vpack.c.b16 %v183, %v183
  %v346 = vunpack.c.l.b16 %v22
  %v347 = vunpack.c.l.b16 %v23
  %v348 = vunpack.c.l.b16 %v24
  %v349 = vunpack.c.l.b16 %v25
  %v350 = vunpack.c.l.b16 %v26
  %v351 = vunpack.c.l.b16 %v27
  %v352 = vunpack.c.l.b16 %v28
  %v353 = vunpack.c.l.b16 %v29
  %v354 = vunpack.c.l.b16 %v30
  %v355 = vunpack.c.l.b16 %v31
  %v356 = vunpack.c.l.b16 %v32
  %v357 = vunpack.c.l.b16 %v33
  %v358 = vunpack.c.l.b16 %v34
  %v359 = vunpack.c.l.b16 %v35
  %v360 = vunpack.c.l.b16 %v36
  %v361 = vunpack.c.l.b16 %v37
  %v362 = vunpack.c.l.b16 %v38
  %v363 = vunpack.c.l.b16 %v39
  %v364 = vunpack.c.l.b16 %v40
  %v365 = vunpack.c.l.b16 %v41
  %v366 = vunpack.c.l.b16 %v42
  %v367 = vunpack.c.l.b16 %v43
  %v368 = vunpack.c.l.b16 %v44
  %v369 = vunpack.c.l.b16 %v45
  %v370 = vunpack.c.l.b16 %v46
  %v371 = vunpack.c.l.b16 %v47
  %v372 = vunpack.c.l.b16 %v48
  %v373 = vunpack.c.l.b16 %v49
  %v374 = vunpack.c.l.b16 %v50
  %v375 = vunpack.c.l.b16 %v51
  %v376 = vunpack.c.l.b16 %v52
  %v377 = vunpack.c.l.b16 %v53
  %v378 = vunpack.c.l.b16 %v54
  %v379 = vunpack.c.l.b16 %v55
  %v380 = vunpack.c.l.b16 %v56
  %v381 = vunpack.c.l.b16 %v57
  %v382 = vunpack.c.l.b16 %v58
  %v383 = vunpack.c.l.b16 %v59
  %v384 = vunpack.c.l.b16 %v60
  %v385 = vunpack.c.l.b16 %v61
  %v386 = vunpack.c.l.b16 %v62
  %v387 = vunpack.c.l.b16 %v63
  %v388 = vunpack.c.l.b16 %v64
  %v389 = vunpack.c.l.b16 %v65
  %v390 = vunpack.c.l.b16 %v66
  %v391 = vunpack.c.l.b16 %v67
  %v392 = vunpack.c.l.b16 %v68
  %v393 = vunpack.c.l.b16 %v69
  %v394 = vunpack.c.l.b16 %v70
  %v395 = vunpack.c.l.b16 %v71
  %v396 = vunpack.c.l.b16 %v72
  %v397 = vunpack.c.l.b16 %v73
  %v398 = vunpack.c.l.b16 %v74
  %v399 = vunpack.c.l.b16 %v75
  %v400 = vunpack.c.l.b16 %v76
  %v401 = vunpack.c.l.b16 %v77
  %v402 = vunpack.c.l.b16 %v78
  %v403 = vunpack.c.l.b16 %v79
  %v404 = vunpack.c.l.b16 %v80
  %v405 = vunpack.c.l.b16 %v81
  %v406 = vunpack.c.l.b16 %v82
  %v407 = vunpack.c.l.b16 %v83
  %v408 = vunpack.c.l.b16 %v84
  %v409 = vunpack.c.l.b16 %v85
  %v410 = vunpack.c.l.b16 %v86
  %v411 = vunpack.c.l.b16 %v87
  %v412 = vunpack.c.l.b16 %v88
  %v413 = vunpack.c.l.b16 %v89
  %v414 = vunpack.c.l.b16 %v90
  %v415 = vunpack.c.l.b16 %v91
  %v416 = vunpack.c.l.b16 %v92
  %v417 = vunpack.c.l.b16 %v93
  %v418 = vunpack.c.l.b16 %v94
  %v419 = vunpack.c.l.b16 %v95
  %v420 = vunpack.c.l.b16 %v96
  %v421 = vunpack.c.l.b16 %v97
  %v422 = vunpack.c.l.b16 %v98
  %v423 = vunpack.c.l.b16 %v99
  %v424 = vunpack.c.l.b16 %v100
  %v425 = vunpack.c.l.b16 %v101
  %v426 = vunpack.c.l.b16 %v102
  %v427 = vunpack.c.l.b16 %v103
  %v428 = vunpack.c.l.b16 %v104
  %v429 = vunpack.c.l.b16 %v105
  %v430 = vunpack.c.l.b16 %v106
  %v431 = vunpack.c.l.b16 %v107
  %v432 = vunpack.c.l.b16 %v108
  %v433 = vunpack.c.l.b16 %v109
  %v434 = vunpack.c.l.b16 %v110
  %v435 = vunpack.c.l.b16 %v111
  %v436 = vunpack.c.l.b16 %v112
  %v437 = vunpack.c.l.b16 %v113
  %v438 = vunpack.c.l.b16 %v114
  %v439 = vunpack.c.l.b16 %v115
  %v440 = vunpack.c.l.b16 %v116
  %v441 = vunpack.c.l.b16 %v117
  %v442 = vunpack.c.l.b16 %v118
  %v443 = vunpack.c.l.b16 %v119
  %v444 = vunpack.c.l.b16 %v120
  %v445 = vunpack.c.l.b16 %v121
  %v446 = vunpack.c.l.b16 %v122
  %v447 = vunpack.c.l.b16 %v123
  %v448 = vunpack.c.l.b16 %v124
  %v449 = vunpack.c.l.b16 %v125
  %v450 = vunpack.c.l.b16 %v126
  %v451 = vunpack.c.l.b16 %v127
  %v452 = vunpack.c.l.b16 %v128
  %v453 = vunpack.c.l.b16 %v129
  %v454 = vunpack.c.l.b16 %v130
  %v455 = vunpack.c.l.b16 %v131
  %v456 = vunpack.c.l.b16 %v132
  %v457 = vunpack.c.l.b16 %v133
  %v458 = vunpack.c.l.b16 %v134
  %v459 = vunpack.c.l.b16 %v135
  %v460 = vunpack.c.l.b16 %v136
  %v461 = vunpack.c.l.b16 %v137
  %v462 = vunpack.c.l.b16 %v138
  %v463 = vunpack.c.l.b16 %v139
  %v464 = vunpack.c.l.b16 %v140
  %v465 = vunpack.c.l.b16 %v141
  %v466 = vunpack.c.l.b16 %v142
  %v467 = vunpack.c.l.b16 %v143
  %v468 = vunpack.c.l.b16 %v144
  %v469 = vunpack.c.l.b16 %v145
  %v470 = vunpack.c.l.b16 %v146
  %v471 = vunpack.c.l.b16 %v147
  %v472 = vunpack.c.l.b16 %v148
  %v473 = vunpack.c.l.b16 %v149
  %v474 = vunpack.c.l.b16 %v150
  %v475 = vunpack.c.l.b16 %v151
  %v476 = vunpack.c.l.b16 %v152
  %v477 = vunpack.c.l.b16 %v153
  %v478 = vunpack.c.l.b16 %v154
  %v479 = vunpack.c.l.b16 %v155
  %v480 = vunpack.c.l.b16 %v156
  %v481 = vunpack.c.l.b16 %v157
  %v482 = vunpack.c.l.b16 %v158
  %v483 = vunpack.c.l.b16 %v159
  %v484 = vunpack.c.l.b16 %v160
  %v485 = vunpack.c.l.b16 %v161
  %v486 = vunpack.c.l.b16 %v162
  %v487 = vunpack.c.l.b16 %v163
  %v488 = vunpack.c.l.b16 %v164
  %v489 = vunpack.c.l.b16 %v165
  %v490 = vpack.c.b16 %v347, %v346
  %v491 = vpack.c.b16 %v349, %v348
  %v492 = vpack.c.b16 %v351, %v350
  %v493 = vpack.c.b16 %v353, %v352
  %v494 = vpack.c.b16 %v355, %v354
  %v495 = vpack.c.b16 %v357, %v356
  %v496 = vpack.c.b16 %v359, %v358
  %v497 = vpack.c.b16 %v361, %v360
  %v498 = vpack.c.b16 %v363, %v362
  %v499 = vpack.c.b16 %v365, %v364
  %v500 = vpack.c.b16 %v367, %v366
  %v501 = vpack.c.b16 %v369, %v368
  %v502 = vpack.c.b16 %v371, %v370
  %v503 = vpack.c.b16 %v373, %v372
  %v504 = vpack.c.b16 %v375, %v374
  %v505 = vpack.c.b16 %v377, %v376
  %v506 = vpack.c.b16 %v379, %v378
  %v507 = vpack.c.b16 %v381, %v380
  %v508 = vpack.c.b16 %v383, %v382
  %v509 = vpack.c.b16 %v385, %v384
  %v510 = vpack.c.b16 %v387, %v386
  %v511 = vpack.c.b16 %v389, %v388
  %v512 = vpack.c.b16 %v391, %v390
  %v513 = vpack.c.b16 %v393, %v392
  %v514 = vpack.c.b16 %v395, %v394
  %v515 = vpack.c.b16 %v397, %v396
  %v516 = vpack.c.b16 %v399, %v398
  %v517 = vpack.c.b16 %v401, %v400
  %v518 = vpack.c.b16 %v403, %v402
  %v519 = vpack.c.b16 %v405, %v404
  %v520 = vpack.c.b16 %v407, %v406
  %v521 = vpack.c.b16 %v409, %v408
  %v522 = vpack.c.b16 %v411, %v410
  %v523 = vpack.c.b16 %v413, %v412
  %v524 = vpack.c.b16 %v415, %v414
  %v525 = vpack.c.b16 %v417, %v416
  %v526 = vpack.c.b16 %v419, %v418
  %v527 = vpack.c.b16 %v421, %v420
  %v528 = vpack.c.b16 %v423, %v422
  %v529 = vpack.c.b16 %v425, %v424
  %v530 = vpack.c.b16 %v427, %v426
  %v531 = vpack.c.b16 %v429, %v428
  %v532 = vpack.c.b16 %v431, %v430
  %v533 = vpack.c.b16 %v433, %v432
  %v534 = vpack.c.b16 %v435, %v434
  %v535 = vpack.c.b16 %v437, %v436
  %v536 = vpack.c.b16 %v439, %v438
  %v537 = vpack.c.b16 %v441, %v440
  %v538 = vpack.c.b16 %v443, %v442
  %v539 = vpack.c.b16 %v445, %v444
  %v540 = vpack.c.b16 %v447, %v446
  %v541 = vpack.c.b16 %v449, %v448
  %v542 = vpack.c.b16 %v451, %v450
  %v543 = vpack.c.b16 %v453, %v452
  %v544 = vpack.c.b16 %v455, %v454
  %v545 = vpack.c.b16 %v457, %v456
  %v546 = vpack.c.b16 %v459, %v458
  %v547 = vpack.c.b16 %v461, %v460
  %v548 = vpack.c.b16 %v463, %v462
  %v549 = vpack.c.b16 %v465, %v464
  %v550 = vpack.c.b16 %v467, %v466
  %v551 = vpack.c.b16 %v469, %v468
  %v552 = vpack.c.b16 %v471, %v470
  %v553 = vpack.c.b16 %v473, %v472
  %v554 = vpack.c.b16 %v475, %v474
  %v555 = vpack.c.b16 %v477, %v476
  %v556 = vpack.c.b16 %v479, %v478
  %v557 = vpack.c.b16 %v481, %v480
  %v558 = vpack.c.b16 %v483, %v482
  %v559 = vpack.c.b16 %v485, %v484
  %v560 = vpack.c.b16 %v487, %v486
  %v561 = vpack.c.b16 %v489, %v488
  %634 = vmatpush.bf16.msra.mxu0 %v497
  %635 = vmatpush.bf16.msra.mxu0 %v496
  %636 = vmatpush.bf16.msra.mxu0 %v495
  %637 = vmatpush.bf16.msra.mxu0 %v494
  %638 = vmatpush.bf16.msra.mxu0 %v493
  %639 = vmatpush.bf16.msra.mxu0 %v492
  %640 = vmatpush.bf16.msra.mxu0 %v491
  %641 = vmatpush.bf16.msra.mxu0 %v490
  %642 = vmatmul.bf16.gmra.mxu0 %v184
  %v643 = vpop.f32.mrf.mxu0
  %v644 = vadd.f32 %v168, %v643
  %v645 = vpop.f32.mrf.mxu0
  %646 = vdwg.mxu0
  %647 = vmatpush.bf16.msra.mxu0 %v505
  %648 = vmatpush.bf16.msra.mxu0 %v504
  %649 = vmatpush.bf16.msra.mxu0 %v503
  %650 = vmatpush.bf16.msra.mxu0 %v502
  %651 = vmatpush.bf16.msra.mxu0 %v501
  %652 = vmatpush.bf16.msra.mxu0 %v500
  %653 = vmatpush.bf16.msra.mxu0 %v499
  %654 = vmatpush.bf16.msra.mxu0 %v498
  %655 = vmatmul.bf16.gmra.mxu0 %v185
  %v656 = vpop.f32.mrf.mxu0
  %v657 = vadd.f32 %v644, %v656
  %v658 = vpop.f32.mrf.mxu0
  %659 = vdwg.mxu0
  %660 = vmatpush.bf16.msra.mxu0 %v513
  %661 = vmatpush.bf16.msra.mxu0 %v512
  %662 = vmatpush.bf16.msra.mxu0 %v511
  %663 = vmatpush.bf16.msra.mxu0 %v510
  %664 = vmatpush.bf16.msra.mxu0 %v509
  %665 = vmatpush.bf16.msra.mxu0 %v508
  %666 = vmatpush.bf16.msra.mxu0 %v507
  %667 = vmatpush.bf16.msra.mxu0 %v506
  %668 = vmatmul.bf16.gmra.mxu0 %v186
  %v669 = vpop.f32.mrf.mxu0
  %v670 = vadd.f32 %v657, %v669
  %v671 = vpop.f32.mrf.mxu0
  %672 = vdwg.mxu0
  %673 = vmatpush.bf16.msra.mxu0 %v521
  %674 = vmatpush.bf16.msra.mxu0 %v520
  %675 = vmatpush.bf16.msra.mxu0 %v519
  %676 = vmatpush.bf16.msra.mxu0 %v518
  %677 = vmatpush.bf16.msra.mxu0 %v517
  %678 = vmatpush.bf16.msra.mxu0 %v516
  %679 = vmatpush.bf16.msra.mxu0 %v515
  %680 = vmatpush.bf16.msra.mxu0 %v514
  %681 = vmatmul.bf16.gmra.mxu0 %v187
  %v682 = vpop.f32.mrf.mxu0
  %v683 = vadd.f32 %v670, %v682
  %v684 = vpop.f32.mrf.mxu0
  %685 = vdwg.mxu0
  %686 = vmatpush.bf16.msra.mxu0 %v529
  %687 = vmatpush.bf16.msra.mxu0 %v528
  %688 = vmatpush.bf16.msra.mxu0 %v527
  %689 = vmatpush.bf16.msra.mxu0 %v526
  %690 = vmatpush.bf16.msra.mxu0 %v525
  %691 = vmatpush.bf16.msra.mxu0 %v524
  %692 = vmatpush.bf16.msra.mxu0 %v523
  %693 = vmatpush.bf16.msra.mxu0 %v522
  %694 = vmatmul.bf16.gmra.mxu0 %v188
  %v695 = vpop.f32.mrf.mxu0
  %v696 = vadd.f32 %v683, %v695
  %v697 = vpop.f32.mrf.mxu0
  %698 = vdwg.mxu0
  %699 = vmatpush.bf16.msra.mxu0 %v537
  %700 = vmatpush.bf16.msra.mxu0 %v536
  %701 = vmatpush.bf16.msra.mxu0 %v535
  %702 = vmatpush.bf16.msra.mxu0 %v534
  %703 = vmatpush.bf16.msra.mxu0 %v533
  %704 = vmatpush.bf16.msra.mxu0 %v532
  %705 = vmatpush.bf16.msra.mxu0 %v531
  %706 = vmatpush.bf16.msra.mxu0 %v530
  %707 = vmatmul.bf16.gmra.mxu0 %v189
  %v708 = vpop.f32.mrf.mxu0
  %v709 = vadd.f32 %v696, %v708
  %v710 = vpop.f32.mrf.mxu0
  %711 = vdwg.mxu0
  %712 = vmatpush.bf16.msra.mxu0 %v545
  %713 = vmatpush.bf16.msra.mxu0 %v544
  %714 = vmatpush.bf16.msra.mxu0 %v543
  %715 = vmatpush.bf16.msra.mxu0 %v542
  %716 = vmatpush.bf16.msra.mxu0 %v541
  %717 = vmatpush.bf16.msra.mxu0 %v540
  %718 = vmatpush.bf16.msra.mxu0 %v539
  %719 = vmatpush.bf16.msra.mxu0 %v538
  %720 = vmatmul.bf16.gmra.mxu0 %v190
  %v721 = vpop.f32.mrf.mxu0
  %v722 = vadd.f32 %v709, %v721
  %v723 = vpop.f32.mrf.mxu0
  %724 = vdwg.mxu0
  %725 = vmatpush.bf16.msra.mxu0 %v553
  %726 = vmatpush.bf16.msra.mxu0 %v552
  %727 = vmatpush.bf16.msra.mxu0 %v551
  %728 = vmatpush.bf16.msra.mxu0 %v550
  %729 = vmatpush.bf16.msra.mxu0 %v549
  %730 = vmatpush.bf16.msra.mxu0 %v548
  %731 = vmatpush.bf16.msra.mxu0 %v547
  %732 = vmatpush.bf16.msra.mxu0 %v546
  %733 = vmatmul.bf16.gmra.mxu0 %v191
  %v734 = vpop.f32.mrf.mxu0
  %v735 = vadd.f32 %v722, %v734
  %v736 = vpop.f32.mrf.mxu0
  %737 = vdwg.mxu0
  %738 = vmatpush.bf16.msra.mxu0 %v561
  %739 = vmatpush.bf16.msra.mxu0 %v560
  %740 = vmatpush.bf16.msra.mxu0 %v559
  %741 = vmatpush.bf16.msra.mxu0 %v558
  %742 = vmatpush.bf16.msra.mxu0 %v557
  %743 = vmatpush.bf16.msra.mxu0 %v556
  %744 = vmatpush.bf16.msra.mxu0 %v555
  %745 = vmatpush.bf16.msra.mxu0 %v554
  %746 = vmatmul.bf16.gmra.mxu0 %v192
  %v747 = vpop.f32.mrf.mxu0
  %v748 = vadd.f32 %v735, %v747
  %v749 = vpop.f32.mrf.mxu0
  %750 = vdwg.mxu0
  %v751 = vld [vmem:[%s3] sm:$0xff]
  %v752 = vadd.f32 %v748, %v751
  %v753 = vmax.f32 %v752, 0.0
  %754 = vst [vmem:[%s4] sm:$0xff] %v753
  // Predicated region
  $region18: #{rnet_forward.17} parent=0 // pred_check
    _
  $region19: #{rnet_forward.17} parent=0 // pred_check_branch
    %756 = sbr.rel (0) target = $region21
  $region20: #{rnet_forward.17} parent=0 // pred_region
    _
  $region21: #{rnet_forward.17} parent=0 // pred_fallthru
    _
  // Predicated region
  $region22: #{rnet_forward.17} parent=0 // pred_check
    _
  $region23: #{rnet_forward.17} parent=0 // pred_check_branch
    %758 = sbr.rel (0) target = $region25
  $region24: #{rnet_forward.17} parent=0 // pred_region
    _
  $region25: #{rnet_forward.17} parent=0 // pred_fallthru
    _

</llo_original>
